<compile_context>
chip_gen: v7x
topology: tpu7x:2x2x1
jax: 0.10.0
libtpu: 0.0.40
codegen_flags: <defaults>
</compile_context>

<pallas_src>
import functools
import inspect
import math

import jax
import jax.numpy as jnp
from jax import lax
from jax.experimental import pallas as pl
from jax.experimental.pallas import tpu as pltpu

EPS = 1e-6
NEG_INF = -1e9


def _supports_single_buffering():
    if not hasattr(pl, "Buffered"):
        return False
    try:
        return "pipeline_mode" in inspect.signature(pl.BlockSpec).parameters
    except (TypeError, ValueError):
        return True


_SUPPORTS_BUFFERED = _supports_single_buffering()


# ---------------------------------------------------------------------------
# Shared math: works on kernel Refs and on plain arrays (pure-JAX reference)
# ---------------------------------------------------------------------------
def _layer_norm(v, gain, bias, *, d_model):
    # Module semantics: gain * (x - mean) / (x.std(-1, unbiased) + eps) + bias
    # (matches DecoderBlock.normalize, NOT torch.nn.LayerNorm: unbiased
    #  variance, eps added to the std outside the sqrt).
    mean = jnp.mean(v, axis=-1, keepdims=True)
    c = v - mean
    var = jnp.sum(c * c, axis=-1, keepdims=True) * (1.0 / (d_model - 1))
    return gain * (c / (jnp.sqrt(var) + EPS)) + bias


def _project_kv(src_cd, w, b, *, compute_dtype):
    """K/V projections src @ w[1|2] + b[1|2] (w already pre-transposed)."""
    cd = compute_dtype
    k = jnp.dot(src_cd, w[1], preferred_element_type=jnp.float32) + b[1]
    v = jnp.dot(src_cd, w[2], preferred_element_type=jnp.float32) + b[2]
    return k.astype(cd), v.astype(cd)


def _mha(q_in, k, v, bias, w, b, *, h, d_k, compute_dtype, fast_recip):
    """Multi-head attention with pre-projected K/V.

    q_in : (TQ, D) query-side activations (already layer-normed).
    k, v : Ref or array, (S_kv, D) in compute dtype, already projected+biased.
    bias : (TQ, S_kv) additive f32 mask bias (0 = visible, -1e9 = masked).
           Equivalent to masked_fill(mask==0, -1e9) whenever a row has at
           least one visible key (fully-masked rows are degenerate anyway).
    w    : indexable (4, D, D) = [Wq*1/sqrt(d_k), Wk, Wv, Wo] pre-transposed.
    b    : indexable (4, D)    = [bq*1/sqrt(d_k), bk, bv, bo].
    """
    cd = compute_dtype
    k = k[...]
    v = v[...]
    # 1/sqrt(d_k) was folded into w[0]/b[0] at param-prep time.
    q = jnp.dot(q_in.astype(cd), w[0], preferred_element_type=jnp.float32) + b[0]

    nt = (((1,), (1,)), ((), ()))          # q @ k^T without materializing k.T
    single_wo = (d_k % 128 == 0) and h > 1
    ctxs = []
    out = b[3]
    for hi in range(h):                    # static unroll over heads
        sl = slice(hi * d_k, (hi + 1) * d_k)
        s = lax.dot_general(q[:, sl].astype(cd), k[:, sl], nt,
                            preferred_element_type=jnp.float32)
        s = s + bias                       # mask bias hoisted out of the loop
        s = s - jnp.max(s, axis=-1, keepdims=True)
        p = jnp.exp(s)
        denom = jnp.sum(p, axis=-1, keepdims=True)
        if fast_recip:
            p = p * pl.reciprocal(denom, approx=True)   # EUP slot, VALU-free
        else:
            p = p / denom
        ctx = jnp.dot(p.astype(cd), v[:, sl], preferred_element_type=jnp.float32)
        if single_wo:
            ctxs.append(ctx.astype(cd))
        else:
            # d_k < 128: fold Wo into the head loop (no lane-splitting concat).
            out = out + jnp.dot(ctx.astype(cd), w[3, sl, :],
                                preferred_element_type=jnp.float32)
    if single_wo:
        # Lane-aligned heads: one full-K Wo matmul fills the MXU better than
        # h K=d_k matmuls plus h-1 accumulate adds.
        out = out + jnp.dot(jnp.concatenate(ctxs, axis=-1), w[3],
                            preferred_element_type=jnp.float32)
    return out


def _decoder_block_tile(x_q, ln1_q, k_self, v_self, k_mem, v_mem,
                        tgt_bias, src_bias,
                        self_w, self_b, src_w, src_b,
                        ff_w1, ff_b1, ff_w2, ff_b2, ln_g, ln_b, *,
                        h, d_k, d_model, compute_dtype, fast_recip):
    # TODO(synk): nn.Dropout layers are treated as identity (eval mode only).
    cd = compute_dtype
    mha = functools.partial(_mha, h=h, d_k=d_k,
                            compute_dtype=cd, fast_recip=fast_recip)

    # 1) self-attention: queries from this tile, K/V precomputed over full x.
    x1 = x_q + mha(ln1_q, k_self, v_self, tgt_bias, self_w, self_b)

    # 2) cross-attention over the encoder memory (K/V precomputed).
    ln2 = _layer_norm(x1, ln_g[1], ln_b[1], d_model=d_model)
    x2 = x1 + mha(ln2, k_mem, v_mem, src_bias, src_w, src_b)

    # 3) position-wise feed-forward (ReLU); weights loaded right at the matmul.
    ln3 = _layer_norm(x2, ln_g[2], ln_b[2], d_model=d_model)
    hid = jnp.maximum(
        jnp.dot(ln3.astype(cd), ff_w1[...],
                preferred_element_type=jnp.float32) + ff_b1, 0.0)
    return x2 + jnp.dot(hid.astype(cd), ff_w2[...],
                        preferred_element_type=jnp.float32) + ff_b2


# ---------------------------------------------------------------------------
# Pallas kernel
# ---------------------------------------------------------------------------
def decoder_block_kernel(x_ref, mem_ref, srcm_ref, tgtm_ref,
                         self_w_ref, self_b_ref, src_w_ref, src_b_ref,
                         ff_w1_ref, ff_b1_ref, ff_w2_ref, ff_b2_ref,
                         ln_g_ref, ln_b_ref,
                         o_ref,
                         ln1x_ref, k_self_ref, v_self_ref, k_mem_ref, v_mem_ref,
                         *, h, d_k, d_model, q_tile, compute_dtype, fast_recip):
    cd = compute_dtype

    # K/V + ln1(x) caches: computed once per batch row (q == 0) and reused by
    # every query tile of that row.  The q axis is "arbitrary" so producer and
    # consumers stay on the same TensorCore (per-core VMEM scratch).
    @pl.when(pl.program_id(1) == 0)
    def _():
        ln1x = _layer_norm(x_ref[0], ln_g_ref[0], ln_b_ref[0], d_model=d_model)
        ln1x_cd = ln1x.astype(cd)
        ln1x_ref[...] = ln1x_cd
        k_s, v_s = _project_kv(ln1x_cd, self_w_ref, self_b_ref,
                               compute_dtype=cd)
        k_self_ref[...] = k_s
        v_self_ref[...] = v_s
        k_m, v_m = _project_kv(mem_ref[0].astype(cd), src_w_ref, src_b_ref,
                               compute_dtype=cd)
        k_mem_ref[...] = k_m
        v_mem_ref[...] = v_m

    q0 = pl.multiple_of(pl.program_id(1) * q_tile, q_tile)
    x_q = x_ref[0, pl.ds(q0, q_tile), :]        # (TQ, D) residual stream
    ln1_q = ln1x_ref[pl.ds(q0, q_tile), :]      # (TQ, D) cached LN1 queries

    # Additive mask biases, computed once per tile and shared by all heads.
    tgt_bias = jnp.where(tgtm_ref[0] == 0, NEG_INF, 0.0).astype(jnp.float32)
    src_bias = jnp.where(srcm_ref[0] == 0, NEG_INF, 0.0).astype(jnp.float32)

    out = _decoder_block_tile(
        x_q, ln1_q, k_self_ref, v_self_ref, k_mem_ref, v_mem_ref,
        tgt_bias, src_bias,
        self_w_ref, self_b_ref, src_w_ref, src_b_ref,
        ff_w1_ref, ff_b1_ref[0], ff_w2_ref, ff_b2_ref[0],
        ln_g_ref, ln_b_ref,
        h=h, d_k=d_k, d_model=d_model,
        compute_dtype=cd, fast_recip=fast_recip)
    o_ref[0] = out.astype(o_ref.dtype)


def _prep_params(params, compute_dtype, *, h):
    """Pre-transpose nn.Linear weights (kernel never computes W.T), fold the
    1/sqrt(d_k) attention scale into the query projection, and cast matmul
    operands to the compute dtype (biases / LayerNorm params stay f32)."""
    cd = compute_dtype
    d_model = params["self_w"].shape[-1]
    scale = 1.0 / math.sqrt(d_model // h)

    def attn_w(w):   # (4, D, D): [Wq, Wk, Wv, Wo] in torch (out, in) layout
        wt = jnp.transpose(w, (0, 2, 1)).astype(jnp.float32)
        return wt.at[0].multiply(scale).astype(cd)

    def attn_b(b):   # (4, D)
        return b.astype(jnp.float32).at[0].multiply(scale)

    return dict(
        self_w=attn_w(params["self_w"]), self_b=attn_b(params["self_b"]),
        src_w=attn_w(params["src_w"]), src_b=attn_b(params["src_b"]),
        ff_w1=jnp.transpose(params["ff_w1"]).astype(cd),     # (D, Dff)
        ff_b1=params["ff_b1"].astype(jnp.float32),           # (1, Dff)
        ff_w2=jnp.transpose(params["ff_w2"]).astype(cd),     # (Dff, D)
        ff_b2=params["ff_b2"].astype(jnp.float32),           # (1, D)
        ln_g=params["ln_g"].astype(jnp.float32),              # (3, D)
        ln_b=params["ln_b"].astype(jnp.float32),
    )


def decoder_block_pallas(x, memory, src_mask, tgt_mask, params, *, h,
                         q_tile=None, compute_dtype=jnp.bfloat16,
                         fast_recip=None):
    """compute_dtype: MXU operand dtype (accumulation is always f32).  bf16 by
    default (2x MXU rate + half the weight DMA on v6e/v7x); pass jnp.float32
    for exact parity with the f32 reference.  fast_recip (softmax only)
    defaults to True on the bf16 path."""
    B, S, D = x.shape
    M = memory.shape[1]
    assert D % h == 0
    d_k = D // h
    cd = compute_dtype
    cd_dtype = jnp.dtype(cd)
    if fast_recip is None:
        fast_recip = cd_dtype != jnp.dtype(jnp.float32)

    p = _prep_params(params, cd, h=h)
    Dff = p["ff_w1"].shape[1]

    # Masks stream in the compute dtype on the bf16 path (halves their HBM
    # traffic); exact 0/1 masks survive the downcast exactly.
    # TODO(synk): x/memory are kept f32 so the residual stream stays exact.
    mask_dtype = jnp.dtype(jnp.float32) if cd_dtype == jnp.dtype(jnp.float32) else cd_dtype
    src_mask_k = src_mask.astype(mask_dtype)
    tgt_mask_k = tgt_mask.astype(mask_dtype)

    # ---- generation-aware VMEM budget & query-tile choice -------------------
    try:
        vmem_cap = int(pltpu.get_tpu_info().vmem_capacity_bytes)
    except Exception:                       # interpret mode / older runtimes
        vmem_cap = 128 * 1024 * 1024
    vmem_limit = int(min((vmem_cap * 3) // 4, 100 * 1024 * 1024))

    cd_size = cd_dtype.itemsize
    x_size = jnp.dtype(x.dtype).itemsize
    m_size = mask_dtype.itemsize

    def vmem_estimate(tq, s_pad):
        weights = (8 * D * D + 2 * D * Dff) * cd_size + (15 * D + Dff) * 4
        streams = 2 * ((s_pad + M) * D * x_size        # x, memory (2-buffered)
                       + tq * (s_pad + M) * m_size     # mask tiles
                       + tq * D * x_size)              # output tile
        scratch = (3 * s_pad + 2 * M) * D * cd_size    # ln1(x) + K/V caches
        live = (2 * tq * max(s_pad, M) + tq * Dff + 8 * tq * D) * 4
        return weights + streams + scratch + live

    if q_tile is None:
        if S <= 128:
            q_tile = S
        else:
            q_tile = 128
            for cand in (512, 256, 128):
                if vmem_estimate(cand, cand * pl.cdiv(S, cand)) <= int(0.9 * vmem_limit):
                    q_tile = cand
                    break
    else:
        q_tile = int(max(8, min(q_tile, S)))
        if q_tile < S:
            q_tile -= q_tile % 8            # sublane alignment for partial tiles

    # Pad S up to a q_tile multiple: padded keys are masked out (zero mask),
    # padded query rows are computed but sliced away at the end.
    S_pad = q_tile * pl.cdiv(S, q_tile)
    nq = S_pad // q_tile
    if S_pad != S:
        ps = S_pad - S
        x_k = jnp.pad(x, ((0, 0), (0, ps), (0, 0)))
        tgt_mask_k = jnp.pad(tgt_mask_k, ((0, 0), (0, ps), (0, ps)))
        src_mask_k = jnp.pad(src_mask_k, ((0, 0), (0, ps), (0, 0)))
    else:
        x_k = x

    kernel = functools.partial(
        decoder_block_kernel, h=h, d_k=d_k, d_model=D, q_tile=q_tile,
        compute_dtype=cd, fast_recip=fast_recip)

    def build(single_buffer_weights):
        def const_spec(shape):
            n = len(shape)
            idx = lambda b, q, _n=n: (0,) * _n
            if single_buffer_weights:
                # Constant-index blocks: double-buffering only doubles VMEM.
                return pl.BlockSpec(shape, idx, pipeline_mode=pl.Buffered(1))
            return pl.BlockSpec(shape, idx)

        return pl.pallas_call(
            kernel,
            out_shape=jax.ShapeDtypeStruct((B, S_pad, D), x.dtype),
            grid=(B, nq),
            in_specs=[
                pl.BlockSpec((1, S_pad, D), lambda b, q: (b, 0, 0)),       # x
                pl.BlockSpec((1, M, D), lambda b, q: (b, 0, 0)),           # memory
                pl.BlockSpec((1, q_tile, M), lambda b, q: (b, q, 0)),      # src_mask
                pl.BlockSpec((1, q_tile, S_pad), lambda b, q: (b, q, 0)),  # tgt_mask
                const_spec((4, D, D)), const_spec((4, D)),                 # self-attn
                const_spec((4, D, D)), const_spec((4, D)),                 # cross-attn
                const_spec((D, Dff)), const_spec((1, Dff)),                # ff_w_1^T
                const_spec((Dff, D)), const_spec((1, D)),                  # ff_w_2^T
                const_spec((3, D)), const_spec((3, D)),                    # layernorms
            ],
            out_specs=pl.BlockSpec((1, q_tile, D), lambda b, q: (b, q, 0)),
            scratch_shapes=[
                pltpu.VMEM((S_pad, D), cd),   # ln1(x) cache
                pltpu.VMEM((S_pad, D), cd),   # K_self cache
                pltpu.VMEM((S_pad, D), cd),   # V_self cache
                pltpu.VMEM((M, D), cd),       # K_mem cache
                pltpu.VMEM((M, D), cd),       # V_mem cache
            ],
            compiler_params=pltpu.CompilerParams(
                # The q axis must stay sequential on one core: the K/V caches
                # live in per-core VMEM scratch produced at q == 0.  The batch
                # axis still feeds both v7x TensorCores for B >= 2.
                dimension_semantics=("parallel", "arbitrary"),
                vmem_limit_bytes=vmem_limit),
        )

    args = (x_k, memory, src_mask_k, tgt_mask_k,
            p["self_w"], p["self_b"], p["src_w"], p["src_b"],
            p["ff_w1"], p["ff_b1"], p["ff_w2"], p["ff_b2"],
            p["ln_g"], p["ln_b"])

    if _SUPPORTS_BUFFERED:
        try:
            out = build(True)(*args)
        except Exception:                   # fallback: default double buffering
            out = build(False)(*args)
    else:
        out = build(False)(*args)
    return out[:, :S, :] if S_pad != S else out


# ---------------------------------------------------------------------------
# Pure-JAX reference (same math, f32, vmapped over batch)
# ---------------------------------------------------------------------------
def decoder_block_ref(x, memory, src_mask, tgt_mask, params, *, h):
    D = x.shape[-1]
    d_k = D // h
    p = _prep_params(params, jnp.float32, h=h)

    def one(xb, mb, sm, tm):
        ln1x = _layer_norm(xb, p["ln_g"][0], p["ln_b"][0], d_model=D)
        k_s, v_s = _project_kv(ln1x, p["self_w"], p["self_b"],
                               compute_dtype=jnp.float32)
        k_m, v_m = _project_kv(mb, p["src_w"], p["src_b"],
                               compute_dtype=jnp.float32)
        tgt_bias = jnp.where(tm == 0, NEG_INF, 0.0).astype(jnp.float32)
        src_bias = jnp.where(sm == 0, NEG_INF, 0.0).astype(jnp.float32)
        return _decoder_block_tile(
            xb, ln1x, k_s, v_s, k_m, v_m, tgt_bias, src_bias,
            p["self_w"], p["self_b"], p["src_w"], p["src_b"],
            p["ff_w1"], p["ff_b1"][0], p["ff_w2"], p["ff_b2"][0],
            p["ln_g"], p["ln_b"],
            h=h, d_k=d_k, d_model=D,
            compute_dtype=jnp.float32, fast_recip=False)

    return jax.vmap(one)(x, memory, src_mask, tgt_mask)


# ---------------------------------------------------------------------------
def _make_inputs(key, B, S, M, D, DFF):
    keys = jax.random.split(key, 10)
    params = {
        "self_w": 0.05 * jax.random.normal(keys[0], (4, D, D), jnp.float32),
        "self_b": 0.05 * jax.random.normal(keys[1], (4, D), jnp.float32),
        "src_w":  0.05 * jax.random.normal(keys[2], (4, D, D), jnp.float32),
        "src_b":  0.05 * jax.random.normal(keys[3], (4, D), jnp.float32),
        "ff_w1":  0.05 * jax.random.normal(keys[4], (DFF, D), jnp.float32),
        "ff_b1":  0.05 * jax.random.normal(keys[5], (1, DFF), jnp.float32),
        "ff_w2":  0.05 * jax.random.normal(keys[6], (D, DFF), jnp.float32),
        "ff_b2":  0.05 * jax.random.normal(keys[7], (1, D), jnp.float32),
        "ln_g":   jnp.ones((3, D), jnp.float32),    # module init: ones
        "ln_b":   jnp.zeros((3, D), jnp.float32),   # module init: zeros
    }
    x = jax.random.normal(keys[8], (B, S, D), jnp.float32)
    memory = jax.random.normal(keys[9], (B, M, D), jnp.float32)
    # causal target mask; src mask with the last two memory keys masked (b=1)
    tgt_mask = jnp.broadcast_to(jnp.tril(jnp.ones((S, S), jnp.float32)),
                                (B, S, S))
    src_mask = jnp.ones((B, S, M), jnp.float32).at[1, :, M - 2:].set(0.0)
    return params, x, memory, src_mask, tgt_mask


if __name__ == "__main__":
    H = 4
    D, DFF = 32, 64

    # 1) small canonical shapes, exact f32 path.
    B, S, M = 2, 8, 8
    params, x, memory, src_mask, tgt_mask = _make_inputs(
        jax.random.PRNGKey(0), B, S, M, D, DFF)
    out = jax.block_until_ready(decoder_block_pallas(
        x, memory, src_mask, tgt_mask, params, h=H,
        compute_dtype=jnp.float32))
    ref = jax.block_until_ready(decoder_block_ref(
        x, memory, src_mask, tgt_mask, params, h=H))
    assert out.shape == (B, S, D) and out.dtype == jnp.float32
    err = jnp.max(jnp.abs(out - ref))
    assert jnp.allclose(out, ref, atol=1e-4, rtol=1e-4), f"f32 max abs err = {err}"

    # 2) multi-tile + padded last tile: exercises the q==0 K/V cache reuse and
    #    the S -> S_pad padding path (S=40, q_tile=16 -> 3 tiles, 8 pad rows).
    B2, S2, M2 = 2, 40, 24
    params2, x2, memory2, src_mask2, tgt_mask2 = _make_inputs(
        jax.random.PRNGKey(1), B2, S2, M2, D, DFF)
    out2 = jax.block_until_ready(decoder_block_pallas(
        x2, memory2, src_mask2, tgt_mask2, params2, h=H,
        q_tile=16, compute_dtype=jnp.float32))
    ref2 = jax.block_until_ready(decoder_block_ref(
        x2, memory2, src_mask2, tgt_mask2, params2, h=H))
    assert out2.shape == (B2, S2, D)
    err2 = jnp.max(jnp.abs(out2 - ref2))
    assert jnp.allclose(out2, ref2, atol=1e-4, rtol=1e-4), \
        f"tiled max abs err = {err2}"

    # 3) default fast path: bf16 MXU operands (f32 accumulation) + EUP
    #    approximate reciprocal in the softmax; looser tolerance vs f32 ref.
    out_fast = jax.block_until_ready(decoder_block_pallas(
        x, memory, src_mask, tgt_mask, params, h=H))
    err_fast = jnp.max(jnp.abs(out_fast - ref))
    assert jnp.allclose(out_fast, ref, atol=5e-2, rtol=5e-2), (
        f"bf16 max abs err = {err_fast}")

    print("KERNEL_OK")
</pallas_src>

<mosaic_0001>
module attributes {stable_mosaic.version = 11 : i64} {
  func.func @decoder_block_kernel(%arg0: i32, %arg1: i32, %arg2: memref<1x8x32xf32, #tpu.memory_space<vmem>>, %arg3: memref<1x8x32xf32, #tpu.memory_space<vmem>>, %arg4: memref<1x8x8xf32, #tpu.memory_space<vmem>>, %arg5: memref<1x8x8xf32, #tpu.memory_space<vmem>>, %arg6: memref<4x32x32xf32, #tpu.memory_space<vmem>>, %arg7: memref<4x32xf32, #tpu.memory_space<vmem>>, %arg8: memref<4x32x32xf32, #tpu.memory_space<vmem>>, %arg9: memref<4x32xf32, #tpu.memory_space<vmem>>, %arg10: memref<32x64xf32, #tpu.memory_space<vmem>>, %arg11: memref<1x64xf32, #tpu.memory_space<vmem>>, %arg12: memref<64x32xf32, #tpu.memory_space<vmem>>, %arg13: memref<1x32xf32, #tpu.memory_space<vmem>>, %arg14: memref<3x32xf32, #tpu.memory_space<vmem>>, %arg15: memref<3x32xf32, #tpu.memory_space<vmem>>, %arg16: memref<1x8x32xf32, #tpu.memory_space<vmem>>, %arg17: memref<8x32xf32, #tpu.memory_space<vmem>>, %arg18: memref<8x32xf32, #tpu.memory_space<vmem>>, %arg19: memref<8x32xf32, #tpu.memory_space<vmem>>, %arg20: memref<8x32xf32, #tpu.memory_space<vmem>>, %arg21: memref<8x32xf32, #tpu.memory_space<vmem>>) attributes {dimension_semantics = [#tpu.dimension_semantics<parallel>, #tpu.dimension_semantics<arbitrary>], iteration_bounds = array<i64: 2, 1>, scalar_prefetch = 0 : i64, scratch_operands = 5 : i64, tpu.core_type = #tpu.core_type<tc>, window_params = [{transform_indices = @transform_0, window_bounds = array<i64: 1, 8, 32>}, {transform_indices = @transform_1, window_bounds = array<i64: 1, 8, 32>}, {transform_indices = @transform_2, window_bounds = array<i64: 1, 8, 8>}, {transform_indices = @transform_3, window_bounds = array<i64: 1, 8, 8>}, {pipeline_mode = #tpu.pipeline_mode<synchronous>, transform_indices = @transform_4, window_bounds = array<i64: 4, 32, 32>}, {pipeline_mode = #tpu.pipeline_mode<synchronous>, transform_indices = @transform_5, window_bounds = array<i64: 4, 32>}, {pipeline_mode = #tpu.pipeline_mode<synchronous>, transform_indices = @transform_6, window_bounds = array<i64: 4, 32, 32>}, {pipeline_mode = #tpu.pipeline_mode<synchronous>, transform_indices = @transform_7, window_bounds = array<i64: 4, 32>}, {pipeline_mode = #tpu.pipeline_mode<synchronous>, transform_indices = @transform_8, window_bounds = array<i64: 32, 64>}, {pipeline_mode = #tpu.pipeline_mode<synchronous>, transform_indices = @transform_9, window_bounds = array<i64: 1, 64>}, {pipeline_mode = #tpu.pipeline_mode<synchronous>, transform_indices = @transform_10, window_bounds = array<i64: 64, 32>}, {pipeline_mode = #tpu.pipeline_mode<synchronous>, transform_indices = @transform_11, window_bounds = array<i64: 1, 32>}, {pipeline_mode = #tpu.pipeline_mode<synchronous>, transform_indices = @transform_12, window_bounds = array<i64: 3, 32>}, {pipeline_mode = #tpu.pipeline_mode<synchronous>, transform_indices = @transform_13, window_bounds = array<i64: 3, 32>}, {transform_indices = @transform_14, window_bounds = array<i64: 1, 8, 32>}]} {
    %c0_i32 = arith.constant 0 : i32
    %0 = arith.cmpi eq, %arg1, %c0_i32 : i32
    %1 = arith.extui %0 : i1 to i32
    %c0_i32_0 = arith.constant 0 : i32
    %2 = arith.cmpi ne, %1, %c0_i32_0 : i32
    scf.if %2 {
      %c0_128 = arith.constant 0 : index
      %c0_129 = arith.constant 0 : index
      %c0_130 = arith.constant 0 : index
      %278 = vector.load %arg2[%c0_128, %c0_129, %c0_130] : memref<1x8x32xf32, #tpu.memory_space<vmem>>, vector<1x8x32xf32>
      %279 = vector.shape_cast %278 : vector<1x8x32xf32> to vector<8x32xf32>
      %c0_131 = arith.constant 0 : index
      %c0_132 = arith.constant 0 : index
      %280 = vector.load %arg14[%c0_131, %c0_132] : memref<3x32xf32, #tpu.memory_space<vmem>>, vector<1x32xf32>
      %281 = vector.shape_cast %280 : vector<1x32xf32> to vector<32xf32>
      %c0_133 = arith.constant 0 : index
      %c0_134 = arith.constant 0 : index
      %282 = vector.load %arg15[%c0_133, %c0_134] : memref<3x32xf32, #tpu.memory_space<vmem>>, vector<1x32xf32>
      %283 = vector.shape_cast %282 : vector<1x32xf32> to vector<32xf32>
      %cst_135 = arith.constant dense<0.000000e+00> : vector<8xf32>
      %284 = vector.multi_reduction <add>, %279, %cst_135 [1] : vector<8x32xf32> to vector<8xf32>
      %285 = vector.shape_cast %284 : vector<8xf32> to vector<8x1xf32>
      %cst_136 = arith.constant 3.200000e+01 : f32
      %286 = vector.broadcast %cst_136 : f32 to vector<8x1xf32>
      %287 = arith.divf %285, %286 : vector<8x1xf32>
      %288 = vector.broadcast %287 : vector<8x1xf32> to vector<8x32xf32>
      %289 = arith.subf %279, %288 : vector<8x32xf32>
      %290 = arith.mulf %289, %289 : vector<8x32xf32>
      %cst_137 = arith.constant dense<0.000000e+00> : vector<8xf32>
      %291 = vector.multi_reduction <add>, %290, %cst_137 [1] : vector<8x32xf32> to vector<8xf32>
      %292 = vector.shape_cast %291 : vector<8xf32> to vector<8x1xf32>
      %cst_138 = arith.constant 0.0322580636 : f32
      %293 = vector.broadcast %cst_138 : f32 to vector<8x1xf32>
      %294 = arith.mulf %292, %293 : vector<8x1xf32>
      %295 = math.sqrt %294 : vector<8x1xf32>
      %cst_139 = arith.constant 9.99999997E-7 : f32
      %296 = vector.broadcast %cst_139 : f32 to vector<8x1xf32>
      %297 = arith.addf %295, %296 : vector<8x1xf32>
      %298 = vector.broadcast %297 : vector<8x1xf32> to vector<8x32xf32>
      %299 = arith.divf %289, %298 : vector<8x32xf32>
      %300 = vector.shape_cast %281 : vector<32xf32> to vector<1x32xf32>
      %301 = vector.broadcast %300 : vector<1x32xf32> to vector<8x32xf32>
      %302 = arith.mulf %301, %299 : vector<8x32xf32>
      %303 = vector.shape_cast %283 : vector<32xf32> to vector<1x32xf32>
      %304 = vector.broadcast %303 : vector<1x32xf32> to vector<8x32xf32>
      %305 = arith.addf %302, %304 : vector<8x32xf32>
      %c0_140 = arith.constant 0 : index
      %c0_141 = arith.constant 0 : index
      %306 = vector.load %arg17[%c0_140, %c0_141] : memref<8x32xf32, #tpu.memory_space<vmem>>, vector<8x32xf32>
      tpu.vector_store %arg17[%c0_140, %c0_141], %305 {strides = array<i32>} : memref<8x32xf32, #tpu.memory_space<vmem>>, vector<8x32xf32>,
      %c1_142 = arith.constant 1 : index
      %c0_143 = arith.constant 0 : index
      %c0_144 = arith.constant 0 : index
      %307 = vector.load %arg6[%c1_142, %c0_143, %c0_144] : memref<4x32x32xf32, #tpu.memory_space<vmem>>, vector<1x32x32xf32>
      %308 = vector.shape_cast %307 : vector<1x32x32xf32> to vector<32x32xf32>
      %cst_145 = arith.constant dense<0.000000e+00> : vector<8x32xf32>
      %309 = tpu.matmul %305, %308, %cst_145 {dimension_numbers = #tpu.dot_dimension_numbers<[1], [0], [0], [1], [0, 0, 1, 1], [], []>} : vector<8x32xf32>, vector<32x32xf32>, vector<8x32xf32> -> vector<8x32xf32>
      %c1_146 = arith.constant 1 : index
      %c0_147 = arith.constant 0 : index
      %310 = vector.load %arg7[%c1_146, %c0_147] : memref<4x32xf32, #tpu.memory_space<vmem>>, vector<1x32xf32>
      %311 = vector.shape_cast %310 : vector<1x32xf32> to vector<32xf32>
      %312 = vector.shape_cast %311 : vector<32xf32> to vector<1x32xf32>
      %313 = vector.broadcast %312 : vector<1x32xf32> to vector<8x32xf32>
      %314 = arith.addf %309, %313 : vector<8x32xf32>
      %c2_148 = arith.constant 2 : index
      %c0_149 = arith.constant 0 : index
      %c0_150 = arith.constant 0 : index
      %315 = vector.load %arg6[%c2_148, %c0_149, %c0_150] : memref<4x32x32xf32, #tpu.memory_space<vmem>>, vector<1x32x32xf32>
      %316 = vector.shape_cast %315 : vector<1x32x32xf32> to vector<32x32xf32>
      %cst_151 = arith.constant dense<0.000000e+00> : vector<8x32xf32>
      %317 = tpu.matmul %305, %316, %cst_151 {dimension_numbers = #tpu.dot_dimension_numbers<[1], [0], [0], [1], [0, 0, 1, 1], [], []>} : vector<8x32xf32>, vector<32x32xf32>, vector<8x32xf32> -> vector<8x32xf32>
      %c2_152 = arith.constant 2 : index
      %c0_153 = arith.constant 0 : index
      %318 = vector.load %arg7[%c2_152, %c0_153] : memref<4x32xf32, #tpu.memory_space<vmem>>, vector<1x32xf32>
      %319 = vector.shape_cast %318 : vector<1x32xf32> to vector<32xf32>
      %320 = vector.shape_cast %319 : vector<32xf32> to vector<1x32xf32>
      %321 = vector.broadcast %320 : vector<1x32xf32> to vector<8x32xf32>
      %322 = arith.addf %317, %321 : vector<8x32xf32>
      %c0_154 = arith.constant 0 : index
      %c0_155 = arith.constant 0 : index
      %323 = vector.load %arg18[%c0_154, %c0_155] : memref<8x32xf32, #tpu.memory_space<vmem>>, vector<8x32xf32>
      tpu.vector_store %arg18[%c0_154, %c0_155], %314 {strides = array<i32>} : memref<8x32xf32, #tpu.memory_space<vmem>>, vector<8x32xf32>,
      %c0_156 = arith.constant 0 : index
      %c0_157 = arith.constant 0 : index
      %324 = vector.load %arg19[%c0_156, %c0_157] : memref<8x32xf32, #tpu.memory_space<vmem>>, vector<8x32xf32>
      tpu.vector_store %arg19[%c0_156, %c0_157], %322 {strides = array<i32>} : memref<8x32xf32, #tpu.memory_space<vmem>>, vector<8x32xf32>,
      %c0_158 = arith.constant 0 : index
      %c0_159 = arith.constant 0 : index
      %c0_160 = arith.constant 0 : index
      %325 = vector.load %arg3[%c0_158, %c0_159, %c0_160] : memref<1x8x32xf32, #tpu.memory_space<vmem>>, vector<1x8x32xf32>
      %326 = vector.shape_cast %325 : vector<1x8x32xf32> to vector<8x32xf32>
      %c1_161 = arith.constant 1 : index
      %c0_162 = arith.constant 0 : index
      %c0_163 = arith.constant 0 : index
      %327 = vector.load %arg8[%c1_161, %c0_162, %c0_163] : memref<4x32x32xf32, #tpu.memory_space<vmem>>, vector<1x32x32xf32>
      %328 = vector.shape_cast %327 : vector<1x32x32xf32> to vector<32x32xf32>
      %cst_164 = arith.constant dense<0.000000e+00> : vector<8x32xf32>
      %329 = tpu.matmul %326, %328, %cst_164 {dimension_numbers = #tpu.dot_dimension_numbers<[1], [0], [0], [1], [0, 0, 1, 1], [], []>} : vector<8x32xf32>, vector<32x32xf32>, vector<8x32xf32> -> vector<8x32xf32>
      %c1_165 = arith.constant 1 : index
      %c0_166 = arith.constant 0 : index
      %330 = vector.load %arg9[%c1_165, %c0_166] : memref<4x32xf32, #tpu.memory_space<vmem>>, vector<1x32xf32>
      %331 = vector.shape_cast %330 : vector<1x32xf32> to vector<32xf32>
      %332 = vector.shape_cast %331 : vector<32xf32> to vector<1x32xf32>
      %333 = vector.broadcast %332 : vector<1x32xf32> to vector<8x32xf32>
      %334 = arith.addf %329, %333 : vector<8x32xf32>
      %c2_167 = arith.constant 2 : index
      %c0_168 = arith.constant 0 : index
      %c0_169 = arith.constant 0 : index
      %335 = vector.load %arg8[%c2_167, %c0_168, %c0_169] : memref<4x32x32xf32, #tpu.memory_space<vmem>>, vector<1x32x32xf32>
      %336 = vector.shape_cast %335 : vector<1x32x32xf32> to vector<32x32xf32>
      %cst_170 = arith.constant dense<0.000000e+00> : vector<8x32xf32>
      %337 = tpu.matmul %326, %336, %cst_170 {dimension_numbers = #tpu.dot_dimension_numbers<[1], [0], [0], [1], [0, 0, 1, 1], [], []>} : vector<8x32xf32>, vector<32x32xf32>, vector<8x32xf32> -> vector<8x32xf32>
      %c2_171 = arith.constant 2 : index
      %c0_172 = arith.constant 0 : index
      %338 = vector.load %arg9[%c2_171, %c0_172] : memref<4x32xf32, #tpu.memory_space<vmem>>, vector<1x32xf32>
      %339 = vector.shape_cast %338 : vector<1x32xf32> to vector<32xf32>
      %340 = vector.shape_cast %339 : vector<32xf32> to vector<1x32xf32>
      %341 = vector.broadcast %340 : vector<1x32xf32> to vector<8x32xf32>
      %342 = arith.addf %337, %341 : vector<8x32xf32>
      %c0_173 = arith.constant 0 : index
      %c0_174 = arith.constant 0 : index
      %343 = vector.load %arg20[%c0_173, %c0_174] : memref<8x32xf32, #tpu.memory_space<vmem>>, vector<8x32xf32>
      tpu.vector_store %arg20[%c0_173, %c0_174], %334 {strides = array<i32>} : memref<8x32xf32, #tpu.memory_space<vmem>>, vector<8x32xf32>,
      %c0_175 = arith.constant 0 : index
      %c0_176 = arith.constant 0 : index
      %344 = vector.load %arg21[%c0_175, %c0_176] : memref<8x32xf32, #tpu.memory_space<vmem>>, vector<8x32xf32>
      tpu.vector_store %arg21[%c0_175, %c0_176], %342 {strides = array<i32>} : memref<8x32xf32, #tpu.memory_space<vmem>>, vector<8x32xf32>,
    } else {
    }
    %c8_i32 = arith.constant 8 : i32
    %3 = arith.muli %arg1, %c8_i32 : i32
    %4 = tpu.assume_multiple %3, 8 : i32
    %c0 = arith.constant 0 : index
    %5 = arith.index_cast %4 : i32 to index
    %c0_1 = arith.constant 0 : index
    %6 = vector.load %arg2[%c0, %5, %c0_1] : memref<1x8x32xf32, #tpu.memory_space<vmem>>, vector<1x8x32xf32>
    %7 = vector.shape_cast %6 : vector<1x8x32xf32> to vector<8x32xf32>
    %8 = arith.index_cast %4 : i32 to index
    %c0_2 = arith.constant 0 : index
    %9 = vector.load %arg17[%8, %c0_2] : memref<8x32xf32, #tpu.memory_space<vmem>>, vector<8x32xf32>
    %c0_3 = arith.constant 0 : index
    %c0_4 = arith.constant 0 : index
    %c0_5 = arith.constant 0 : index
    %10 = vector.load %arg5[%c0_3, %c0_4, %c0_5] : memref<1x8x8xf32, #tpu.memory_space<vmem>>, vector<1x8x8xf32>
    %11 = vector.shape_cast %10 : vector<1x8x8xf32> to vector<8x8xf32>
    %cst = arith.constant 0.000000e+00 : f32
    %12 = vector.broadcast %cst : f32 to vector<8x8xf32>
    %13 = arith.cmpf oeq, %11, %12 : vector<8x8xf32>
    %cst_6 = arith.constant -1.000000e+09 : f32
    %cst_7 = arith.constant 0.000000e+00 : f32
    %14 = vector.broadcast %cst_6 : f32 to vector<8x8xf32>
    %15 = vector.broadcast %cst_7 : f32 to vector<8x8xf32>
    %16 = arith.select %13, %14, %15 : vector<8x8xi1>, vector<8x8xf32>
    %c0_8 = arith.constant 0 : index
    %c0_9 = arith.constant 0 : index
    %c0_10 = arith.constant 0 : index
    %17 = vector.load %arg4[%c0_8, %c0_9, %c0_10] : memref<1x8x8xf32, #tpu.memory_space<vmem>>, vector<1x8x8xf32>
    %18 = vector.shape_cast %17 : vector<1x8x8xf32> to vector<8x8xf32>
    %cst_11 = arith.constant 0.000000e+00 : f32
    %19 = vector.broadcast %cst_11 : f32 to vector<8x8xf32>
    %20 = arith.cmpf oeq, %18, %19 : vector<8x8xf32>
    %cst_12 = arith.constant -1.000000e+09 : f32
    %cst_13 = arith.constant 0.000000e+00 : f32
    %21 = vector.broadcast %cst_12 : f32 to vector<8x8xf32>
    %22 = vector.broadcast %cst_13 : f32 to vector<8x8xf32>
    %23 = arith.select %20, %21, %22 : vector<8x8xi1>, vector<8x8xf32>
    %c0_14 = arith.constant 0 : index
    %c0_15 = arith.constant 0 : index
    %24 = vector.load %arg11[%c0_14, %c0_15] : memref<1x64xf32, #tpu.memory_space<vmem>>, vector<1x64xf32>
    %25 = vector.shape_cast %24 : vector<1x64xf32> to vector<64xf32>
    %c0_16 = arith.constant 0 : index
    %c0_17 = arith.constant 0 : index
    %26 = vector.load %arg13[%c0_16, %c0_17] : memref<1x32xf32, #tpu.memory_space<vmem>>, vector<1x32xf32>
    %27 = vector.shape_cast %26 : vector<1x32xf32> to vector<32xf32>
    %c0_18 = arith.constant 0 : index
    %c0_19 = arith.constant 0 : index
    %28 = vector.load %arg18[%c0_18, %c0_19] : memref<8x32xf32, #tpu.memory_space<vmem>>, vector<8x32xf32>
    %c0_20 = arith.constant 0 : index
    %c0_21 = arith.constant 0 : index
    %29 = vector.load %arg19[%c0_20, %c0_21] : memref<8x32xf32, #tpu.memory_space<vmem>>, vector<8x32xf32>
    %c0_22 = arith.constant 0 : index
    %c0_23 = arith.constant 0 : index
    %c0_24 = arith.constant 0 : index
    %30 = vector.load %arg6[%c0_22, %c0_23, %c0_24] : memref<4x32x32xf32, #tpu.memory_space<vmem>>, vector<1x32x32xf32>
    %31 = vector.shape_cast %30 : vector<1x32x32xf32> to vector<32x32xf32>
    %cst_25 = arith.constant dense<0.000000e+00> : vector<8x32xf32>
    %32 = tpu.matmul %9, %31, %cst_25 {dimension_numbers = #tpu.dot_dimension_numbers<[1], [0], [0], [1], [0, 0, 1, 1], [], []>} : vector<8x32xf32>, vector<32x32xf32>, vector<8x32xf32> -> vector<8x32xf32>
    %c0_26 = arith.constant 0 : index
    %c0_27 = arith.constant 0 : index
    %33 = vector.load %arg7[%c0_26, %c0_27] : memref<4x32xf32, #tpu.memory_space<vmem>>, vector<1x32xf32>
    %34 = vector.shape_cast %33 : vector<1x32xf32> to vector<32xf32>
    %35 = vector.shape_cast %34 : vector<32xf32> to vector<1x32xf32>
    %36 = vector.broadcast %35 : vector<1x32xf32> to vector<8x32xf32>
    %37 = arith.addf %32, %36 : vector<8x32xf32>
    %c3 = arith.constant 3 : index
    %c0_28 = arith.constant 0 : index
    %38 = vector.load %arg7[%c3, %c0_28] : memref<4x32xf32, #tpu.memory_space<vmem>>, vector<1x32xf32>
    %39 = vector.shape_cast %38 : vector<1x32xf32> to vector<32xf32>
    %40 = vector.extract_strided_slice %37 {offsets = [0, 0], sizes = [8, 8], strides = [1, 1]} : vector<8x32xf32> to vector<8x8xf32>
    %41 = vector.extract_strided_slice %28 {offsets = [0, 0], sizes = [8, 8], strides = [1, 1]} : vector<8x32xf32> to vector<8x8xf32>
    %cst_29 = arith.constant dense<0.000000e+00> : vector<8x8xf32>
    %42 = tpu.matmul %40, %41, %cst_29 {dimension_numbers = #tpu.dot_dimension_numbers<[1], [1], [0], [0], [0, 0, 1, 0], [], []>} : vector<8x8xf32>, vector<8x8xf32>, vector<8x8xf32> -> vector<8x8xf32>
    %43 = arith.addf %42, %16 : vector<8x8xf32>
    %cst_30 = arith.constant dense<0xFF800000> : vector<8xf32>
    %44 = vector.multi_reduction <maximumf>, %43, %cst_30 [1] : vector<8x8xf32> to vector<8xf32>
    %45 = vector.shape_cast %44 : vector<8xf32> to vector<8x1xf32>
    %46 = vector.broadcast %45 : vector<8x1xf32> to vector<8x8xf32>
    %47 = arith.subf %43, %46 : vector<8x8xf32>
    %48 = math.exp %47 : vector<8x8xf32>
    %cst_31 = arith.constant dense<0.000000e+00> : vector<8xf32>
    %49 = vector.multi_reduction <add>, %48, %cst_31 [1] : vector<8x8xf32> to vector<8xf32>
    %50 = vector.shape_cast %49 : vector<8xf32> to vector<8x1xf32>
    %51 = vector.broadcast %50 : vector<8x1xf32> to vector<8x8xf32>
    %52 = arith.divf %48, %51 : vector<8x8xf32>
    %53 = vector.extract_strided_slice %29 {offsets = [0, 0], sizes = [8, 8], strides = [1, 1]} : vector<8x32xf32> to vector<8x8xf32>
    %cst_32 = arith.constant dense<0.000000e+00> : vector<8x8xf32>
    %54 = tpu.matmul %52, %53, %cst_32 {dimension_numbers = #tpu.dot_dimension_numbers<[1], [0], [0], [1], [0, 0, 1, 1], [], []>} : vector<8x8xf32>, vector<8x8xf32>, vector<8x8xf32> -> vector<8x8xf32>
    %c3_33 = arith.constant 3 : index
    %c0_34 = arith.constant 0 : index
    %c0_35 = arith.constant 0 : index
    %55 = vector.load %arg6[%c3_33, %c0_34, %c0_35] : memref<4x32x32xf32, #tpu.memory_space<vmem>>, vector<1x8x32xf32>
    %56 = vector.shape_cast %55 : vector<1x8x32xf32> to vector<8x32xf32>
    %cst_36 = arith.constant dense<0.000000e+00> : vector<8x32xf32>
    %57 = tpu.matmul %54, %56, %cst_36 {dimension_numbers = #tpu.dot_dimension_numbers<[1], [0], [0], [1], [0, 0, 1, 1], [], []>} : vector<8x8xf32>, vector<8x32xf32>, vector<8x32xf32> -> vector<8x32xf32>
    %58 = vector.shape_cast %39 : vector<32xf32> to vector<1x32xf32>
    %59 = vector.broadcast %58 : vector<1x32xf32> to vector<8x32xf32>
    %60 = arith.addf %59, %57 : vector<8x32xf32>
    %61 = vector.extract_strided_slice %37 {offsets = [0, 8], sizes = [8, 8], strides = [1, 1]} : vector<8x32xf32> to vector<8x8xf32>
    %62 = vector.extract_strided_slice %28 {offsets = [0, 8], sizes = [8, 8], strides = [1, 1]} : vector<8x32xf32> to vector<8x8xf32>
    %cst_37 = arith.constant dense<0.000000e+00> : vector<8x8xf32>
    %63 = tpu.matmul %61, %62, %cst_37 {dimension_numbers = #tpu.dot_dimension_numbers<[1], [1], [0], [0], [0, 0, 1, 0], [], []>} : vector<8x8xf32>, vector<8x8xf32>, vector<8x8xf32> -> vector<8x8xf32>
    %64 = arith.addf %63, %16 : vector<8x8xf32>
    %cst_38 = arith.constant dense<0xFF800000> : vector<8xf32>
    %65 = vector.multi_reduction <maximumf>, %64, %cst_38 [1] : vector<8x8xf32> to vector<8xf32>
    %66 = vector.shape_cast %65 : vector<8xf32> to vector<8x1xf32>
    %67 = vector.broadcast %66 : vector<8x1xf32> to vector<8x8xf32>
    %68 = arith.subf %64, %67 : vector<8x8xf32>
    %69 = math.exp %68 : vector<8x8xf32>
    %cst_39 = arith.constant dense<0.000000e+00> : vector<8xf32>
    %70 = vector.multi_reduction <add>, %69, %cst_39 [1] : vector<8x8xf32> to vector<8xf32>
    %71 = vector.shape_cast %70 : vector<8xf32> to vector<8x1xf32>
    %72 = vector.broadcast %71 : vector<8x1xf32> to vector<8x8xf32>
    %73 = arith.divf %69, %72 : vector<8x8xf32>
    %74 = vector.extract_strided_slice %29 {offsets = [0, 8], sizes = [8, 8], strides = [1, 1]} : vector<8x32xf32> to vector<8x8xf32>
    %cst_40 = arith.constant dense<0.000000e+00> : vector<8x8xf32>
    %75 = tpu.matmul %73, %74, %cst_40 {dimension_numbers = #tpu.dot_dimension_numbers<[1], [0], [0], [1], [0, 0, 1, 1], [], []>} : vector<8x8xf32>, vector<8x8xf32>, vector<8x8xf32> -> vector<8x8xf32>
    %c3_41 = arith.constant 3 : index
    %c8 = arith.constant 8 : index
    %c0_42 = arith.constant 0 : index
    %76 = vector.load %arg6[%c3_41, %c8, %c0_42] : memref<4x32x32xf32, #tpu.memory_space<vmem>>, vector<1x8x32xf32>
    %77 = vector.shape_cast %76 : vector<1x8x32xf32> to vector<8x32xf32>
    %cst_43 = arith.constant dense<0.000000e+00> : vector<8x32xf32>
    %78 = tpu.matmul %75, %77, %cst_43 {dimension_numbers = #tpu.dot_dimension_numbers<[1], [0], [0], [1], [0, 0, 1, 1], [], []>} : vector<8x8xf32>, vector<8x32xf32>, vector<8x32xf32> -> vector<8x32xf32>
    %79 = arith.addf %60, %78 : vector<8x32xf32>
    %80 = vector.extract_strided_slice %37 {offsets = [0, 16], sizes = [8, 8], strides = [1, 1]} : vector<8x32xf32> to vector<8x8xf32>
    %81 = vector.extract_strided_slice %28 {offsets = [0, 16], sizes = [8, 8], strides = [1, 1]} : vector<8x32xf32> to vector<8x8xf32>
    %cst_44 = arith.constant dense<0.000000e+00> : vector<8x8xf32>
    %82 = tpu.matmul %80, %81, %cst_44 {dimension_numbers = #tpu.dot_dimension_numbers<[1], [1], [0], [0], [0, 0, 1, 0], [], []>} : vector<8x8xf32>, vector<8x8xf32>, vector<8x8xf32> -> vector<8x8xf32>
    %83 = arith.addf %82, %16 : vector<8x8xf32>
    %cst_45 = arith.constant dense<0xFF800000> : vector<8xf32>
    %84 = vector.multi_reduction <maximumf>, %83, %cst_45 [1] : vector<8x8xf32> to vector<8xf32>
    %85 = vector.shape_cast %84 : vector<8xf32> to vector<8x1xf32>
    %86 = vector.broadcast %85 : vector<8x1xf32> to vector<8x8xf32>
    %87 = arith.subf %83, %86 : vector<8x8xf32>
    %88 = math.exp %87 : vector<8x8xf32>
    %cst_46 = arith.constant dense<0.000000e+00> : vector<8xf32>
    %89 = vector.multi_reduction <add>, %88, %cst_46 [1] : vector<8x8xf32> to vector<8xf32>
    %90 = vector.shape_cast %89 : vector<8xf32> to vector<8x1xf32>
    %91 = vector.broadcast %90 : vector<8x1xf32> to vector<8x8xf32>
    %92 = arith.divf %88, %91 : vector<8x8xf32>
    %93 = vector.extract_strided_slice %29 {offsets = [0, 16], sizes = [8, 8], strides = [1, 1]} : vector<8x32xf32> to vector<8x8xf32>
    %cst_47 = arith.constant dense<0.000000e+00> : vector<8x8xf32>
    %94 = tpu.matmul %92, %93, %cst_47 {dimension_numbers = #tpu.dot_dimension_numbers<[1], [0], [0], [1], [0, 0, 1, 1], [], []>} : vector<8x8xf32>, vector<8x8xf32>, vector<8x8xf32> -> vector<8x8xf32>
    %c3_48 = arith.constant 3 : index
    %c16 = arith.constant 16 : index
    %c0_49 = arith.constant 0 : index
    %95 = vector.load %arg6[%c3_48, %c16, %c0_49] : memref<4x32x32xf32, #tpu.memory_space<vmem>>, vector<1x8x32xf32>
    %96 = vector.shape_cast %95 : vector<1x8x32xf32> to vector<8x32xf32>
    %cst_50 = arith.constant dense<0.000000e+00> : vector<8x32xf32>
    %97 = tpu.matmul %94, %96, %cst_50 {dimension_numbers = #tpu.dot_dimension_numbers<[1], [0], [0], [1], [0, 0, 1, 1], [], []>} : vector<8x8xf32>, vector<8x32xf32>, vector<8x32xf32> -> vector<8x32xf32>
    %98 = arith.addf %79, %97 : vector<8x32xf32>
    %99 = vector.extract_strided_slice %37 {offsets = [0, 24], sizes = [8, 8], strides = [1, 1]} : vector<8x32xf32> to vector<8x8xf32>
    %100 = vector.extract_strided_slice %28 {offsets = [0, 24], sizes = [8, 8], strides = [1, 1]} : vector<8x32xf32> to vector<8x8xf32>
    %cst_51 = arith.constant dense<0.000000e+00> : vector<8x8xf32>
    %101 = tpu.matmul %99, %100, %cst_51 {dimension_numbers = #tpu.dot_dimension_numbers<[1], [1], [0], [0], [0, 0, 1, 0], [], []>} : vector<8x8xf32>, vector<8x8xf32>, vector<8x8xf32> -> vector<8x8xf32>
    %102 = arith.addf %101, %16 : vector<8x8xf32>
    %cst_52 = arith.constant dense<0xFF800000> : vector<8xf32>
    %103 = vector.multi_reduction <maximumf>, %102, %cst_52 [1] : vector<8x8xf32> to vector<8xf32>
    %104 = vector.shape_cast %103 : vector<8xf32> to vector<8x1xf32>
    %105 = vector.broadcast %104 : vector<8x1xf32> to vector<8x8xf32>
    %106 = arith.subf %102, %105 : vector<8x8xf32>
    %107 = math.exp %106 : vector<8x8xf32>
    %cst_53 = arith.constant dense<0.000000e+00> : vector<8xf32>
    %108 = vector.multi_reduction <add>, %107, %cst_53 [1] : vector<8x8xf32> to vector<8xf32>
    %109 = vector.shape_cast %108 : vector<8xf32> to vector<8x1xf32>
    %110 = vector.broadcast %109 : vector<8x1xf32> to vector<8x8xf32>
    %111 = arith.divf %107, %110 : vector<8x8xf32>
    %112 = vector.extract_strided_slice %29 {offsets = [0, 24], sizes = [8, 8], strides = [1, 1]} : vector<8x32xf32> to vector<8x8xf32>
    %cst_54 = arith.constant dense<0.000000e+00> : vector<8x8xf32>
    %113 = tpu.matmul %111, %112, %cst_54 {dimension_numbers = #tpu.dot_dimension_numbers<[1], [0], [0], [1], [0, 0, 1, 1], [], []>} : vector<8x8xf32>, vector<8x8xf32>, vector<8x8xf32> -> vector<8x8xf32>
    %c3_55 = arith.constant 3 : index
    %c24 = arith.constant 24 : index
    %c0_56 = arith.constant 0 : index
    %114 = vector.load %arg6[%c3_55, %c24, %c0_56] : memref<4x32x32xf32, #tpu.memory_space<vmem>>, vector<1x8x32xf32>
    %115 = vector.shape_cast %114 : vector<1x8x32xf32> to vector<8x32xf32>
    %cst_57 = arith.constant dense<0.000000e+00> : vector<8x32xf32>
    %116 = tpu.matmul %113, %115, %cst_57 {dimension_numbers = #tpu.dot_dimension_numbers<[1], [0], [0], [1], [0, 0, 1, 1], [], []>} : vector<8x8xf32>, vector<8x32xf32>, vector<8x32xf32> -> vector<8x32xf32>
    %117 = arith.addf %98, %116 : vector<8x32xf32>
    %118 = arith.addf %7, %117 : vector<8x32xf32>
    %c1 = arith.constant 1 : index
    %c0_58 = arith.constant 0 : index
    %119 = vector.load %arg14[%c1, %c0_58] : memref<3x32xf32, #tpu.memory_space<vmem>>, vector<1x32xf32>
    %120 = vector.shape_cast %119 : vector<1x32xf32> to vector<32xf32>
    %c1_59 = arith.constant 1 : index
    %c0_60 = arith.constant 0 : index
    %121 = vector.load %arg15[%c1_59, %c0_60] : memref<3x32xf32, #tpu.memory_space<vmem>>, vector<1x32xf32>
    %122 = vector.shape_cast %121 : vector<1x32xf32> to vector<32xf32>
    %cst_61 = arith.constant dense<0.000000e+00> : vector<8xf32>
    %123 = vector.multi_reduction <add>, %118, %cst_61 [1] : vector<8x32xf32> to vector<8xf32>
    %124 = vector.shape_cast %123 : vector<8xf32> to vector<8x1xf32>
    %cst_62 = arith.constant 3.200000e+01 : f32
    %125 = vector.broadcast %cst_62 : f32 to vector<8x1xf32>
    %126 = arith.divf %124, %125 : vector<8x1xf32>
    %127 = vector.broadcast %126 : vector<8x1xf32> to vector<8x32xf32>
    %128 = arith.subf %118, %127 : vector<8x32xf32>
    %129 = arith.mulf %128, %128 : vector<8x32xf32>
    %cst_63 = arith.constant dense<0.000000e+00> : vector<8xf32>
    %130 = vector.multi_reduction <add>, %129, %cst_63 [1] : vector<8x32xf32> to vector<8xf32>
    %131 = vector.shape_cast %130 : vector<8xf32> to vector<8x1xf32>
    %cst_64 = arith.constant 0.0322580636 : f32
    %132 = vector.broadcast %cst_64 : f32 to vector<8x1xf32>
    %133 = arith.mulf %131, %132 : vector<8x1xf32>
    %134 = math.sqrt %133 : vector<8x1xf32>
    %cst_65 = arith.constant 9.99999997E-7 : f32
    %135 = vector.broadcast %cst_65 : f32 to vector<8x1xf32>
    %136 = arith.addf %134, %135 : vector<8x1xf32>
    %137 = vector.broadcast %136 : vector<8x1xf32> to vector<8x32xf32>
    %138 = arith.divf %128, %137 : vector<8x32xf32>
    %139 = vector.shape_cast %120 : vector<32xf32> to vector<1x32xf32>
    %140 = vector.broadcast %139 : vector<1x32xf32> to vector<8x32xf32>
    %141 = arith.mulf %140, %138 : vector<8x32xf32>
    %142 = vector.shape_cast %122 : vector<32xf32> to vector<1x32xf32>
    %143 = vector.broadcast %142 : vector<1x32xf32> to vector<8x32xf32>
    %144 = arith.addf %141, %143 : vector<8x32xf32>
    %c0_66 = arith.constant 0 : index
    %c0_67 = arith.constant 0 : index
    %145 = vector.load %arg20[%c0_66, %c0_67] : memref<8x32xf32, #tpu.memory_space<vmem>>, vector<8x32xf32>
    %c0_68 = arith.constant 0 : index
    %c0_69 = arith.constant 0 : index
    %146 = vector.load %arg21[%c0_68, %c0_69] : memref<8x32xf32, #tpu.memory_space<vmem>>, vector<8x32xf32>
    %c0_70 = arith.constant 0 : index
    %c0_71 = arith.constant 0 : index
    %c0_72 = arith.constant 0 : index
    %147 = vector.load %arg8[%c0_70, %c0_71, %c0_72] : memref<4x32x32xf32, #tpu.memory_space<vmem>>, vector<1x32x32xf32>
    %148 = vector.shape_cast %147 : vector<1x32x32xf32> to vector<32x32xf32>
    %cst_73 = arith.constant dense<0.000000e+00> : vector<8x32xf32>
    %149 = tpu.matmul %144, %148, %cst_73 {dimension_numbers = #tpu.dot_dimension_numbers<[1], [0], [0], [1], [0, 0, 1, 1], [], []>} : vector<8x32xf32>, vector<32x32xf32>, vector<8x32xf32> -> vector<8x32xf32>
    %c0_74 = arith.constant 0 : index
    %c0_75 = arith.constant 0 : index
    %150 = vector.load %arg9[%c0_74, %c0_75] : memref<4x32xf32, #tpu.memory_space<vmem>>, vector<1x32xf32>
    %151 = vector.shape_cast %150 : vector<1x32xf32> to vector<32xf32>
    %152 = vector.shape_cast %151 : vector<32xf32> to vector<1x32xf32>
    %153 = vector.broadcast %152 : vector<1x32xf32> to vector<8x32xf32>
    %154 = arith.addf %149, %153 : vector<8x32xf32>
    %c3_76 = arith.constant 3 : index
    %c0_77 = arith.constant 0 : index
    %155 = vector.load %arg9[%c3_76, %c0_77] : memref<4x32xf32, #tpu.memory_space<vmem>>, vector<1x32xf32>
    %156 = vector.shape_cast %155 : vector<1x32xf32> to vector<32xf32>
    %157 = vector.extract_strided_slice %154 {offsets = [0, 0], sizes = [8, 8], strides = [1, 1]} : vector<8x32xf32> to vector<8x8xf32>
    %158 = vector.extract_strided_slice %145 {offsets = [0, 0], sizes = [8, 8], strides = [1, 1]} : vector<8x32xf32> to vector<8x8xf32>
    %cst_78 = arith.constant dense<0.000000e+00> : vector<8x8xf32>
    %159 = tpu.matmul %157, %158, %cst_78 {dimension_numbers = #tpu.dot_dimension_numbers<[1], [1], [0], [0], [0, 0, 1, 0], [], []>} : vector<8x8xf32>, vector<8x8xf32>, vector<8x8xf32> -> vector<8x8xf32>
    %160 = arith.addf %159, %23 : vector<8x8xf32>
    %cst_79 = arith.constant dense<0xFF800000> : vector<8xf32>
    %161 = vector.multi_reduction <maximumf>, %160, %cst_79 [1] : vector<8x8xf32> to vector<8xf32>
    %162 = vector.shape_cast %161 : vector<8xf32> to vector<8x1xf32>
    %163 = vector.broadcast %162 : vector<8x1xf32> to vector<8x8xf32>
    %164 = arith.subf %160, %163 : vector<8x8xf32>
    %165 = math.exp %164 : vector<8x8xf32>
    %cst_80 = arith.constant dense<0.000000e+00> : vector<8xf32>
    %166 = vector.multi_reduction <add>, %165, %cst_80 [1] : vector<8x8xf32> to vector<8xf32>
    %167 = vector.shape_cast %166 : vector<8xf32> to vector<8x1xf32>
    %168 = vector.broadcast %167 : vector<8x1xf32> to vector<8x8xf32>
    %169 = arith.divf %165, %168 : vector<8x8xf32>
    %170 = vector.extract_strided_slice %146 {offsets = [0, 0], sizes = [8, 8], strides = [1, 1]} : vector<8x32xf32> to vector<8x8xf32>
    %cst_81 = arith.constant dense<0.000000e+00> : vector<8x8xf32>
    %171 = tpu.matmul %169, %170, %cst_81 {dimension_numbers = #tpu.dot_dimension_numbers<[1], [0], [0], [1], [0, 0, 1, 1], [], []>} : vector<8x8xf32>, vector<8x8xf32>, vector<8x8xf32> -> vector<8x8xf32>
    %c3_82 = arith.constant 3 : index
    %c0_83 = arith.constant 0 : index
    %c0_84 = arith.constant 0 : index
    %172 = vector.load %arg8[%c3_82, %c0_83, %c0_84] : memref<4x32x32xf32, #tpu.memory_space<vmem>>, vector<1x8x32xf32>
    %173 = vector.shape_cast %172 : vector<1x8x32xf32> to vector<8x32xf32>
    %cst_85 = arith.constant dense<0.000000e+00> : vector<8x32xf32>
    %174 = tpu.matmul %171, %173, %cst_85 {dimension_numbers = #tpu.dot_dimension_numbers<[1], [0], [0], [1], [0, 0, 1, 1], [], []>} : vector<8x8xf32>, vector<8x32xf32>, vector<8x32xf32> -> vector<8x32xf32>
    %175 = vector.shape_cast %156 : vector<32xf32> to vector<1x32xf32>
    %176 = vector.broadcast %175 : vector<1x32xf32> to vector<8x32xf32>
    %177 = arith.addf %176, %174 : vector<8x32xf32>
    %178 = vector.extract_strided_slice %154 {offsets = [0, 8], sizes = [8, 8], strides = [1, 1]} : vector<8x32xf32> to vector<8x8xf32>
    %179 = vector.extract_strided_slice %145 {offsets = [0, 8], sizes = [8, 8], strides = [1, 1]} : vector<8x32xf32> to vector<8x8xf32>
    %cst_86 = arith.constant dense<0.000000e+00> : vector<8x8xf32>
    %180 = tpu.matmul %178, %179, %cst_86 {dimension_numbers = #tpu.dot_dimension_numbers<[1], [1], [0], [0], [0, 0, 1, 0], [], []>} : vector<8x8xf32>, vector<8x8xf32>, vector<8x8xf32> -> vector<8x8xf32>
    %181 = arith.addf %180, %23 : vector<8x8xf32>
    %cst_87 = arith.constant dense<0xFF800000> : vector<8xf32>
    %182 = vector.multi_reduction <maximumf>, %181, %cst_87 [1] : vector<8x8xf32> to vector<8xf32>
    %183 = vector.shape_cast %182 : vector<8xf32> to vector<8x1xf32>
    %184 = vector.broadcast %183 : vector<8x1xf32> to vector<8x8xf32>
    %185 = arith.subf %181, %184 : vector<8x8xf32>
    %186 = math.exp %185 : vector<8x8xf32>
    %cst_88 = arith.constant dense<0.000000e+00> : vector<8xf32>
    %187 = vector.multi_reduction <add>, %186, %cst_88 [1] : vector<8x8xf32> to vector<8xf32>
    %188 = vector.shape_cast %187 : vector<8xf32> to vector<8x1xf32>
    %189 = vector.broadcast %188 : vector<8x1xf32> to vector<8x8xf32>
    %190 = arith.divf %186, %189 : vector<8x8xf32>
    %191 = vector.extract_strided_slice %146 {offsets = [0, 8], sizes = [8, 8], strides = [1, 1]} : vector<8x32xf32> to vector<8x8xf32>
    %cst_89 = arith.constant dense<0.000000e+00> : vector<8x8xf32>
    %192 = tpu.matmul %190, %191, %cst_89 {dimension_numbers = #tpu.dot_dimension_numbers<[1], [0], [0], [1], [0, 0, 1, 1], [], []>} : vector<8x8xf32>, vector<8x8xf32>, vector<8x8xf32> -> vector<8x8xf32>
    %c3_90 = arith.constant 3 : index
    %c8_91 = arith.constant 8 : index
    %c0_92 = arith.constant 0 : index
    %193 = vector.load %arg8[%c3_90, %c8_91, %c0_92] : memref<4x32x32xf32, #tpu.memory_space<vmem>>, vector<1x8x32xf32>
    %194 = vector.shape_cast %193 : vector<1x8x32xf32> to vector<8x32xf32>
    %cst_93 = arith.constant dense<0.000000e+00> : vector<8x32xf32>
    %195 = tpu.matmul %192, %194, %cst_93 {dimension_numbers = #tpu.dot_dimension_numbers<[1], [0], [0], [1], [0, 0, 1, 1], [], []>} : vector<8x8xf32>, vector<8x32xf32>, vector<8x32xf32> -> vector<8x32xf32>
    %196 = arith.addf %177, %195 : vector<8x32xf32>
    %197 = vector.extract_strided_slice %154 {offsets = [0, 16], sizes = [8, 8], strides = [1, 1]} : vector<8x32xf32> to vector<8x8xf32>
    %198 = vector.extract_strided_slice %145 {offsets = [0, 16], sizes = [8, 8], strides = [1, 1]} : vector<8x32xf32> to vector<8x8xf32>
    %cst_94 = arith.constant dense<0.000000e+00> : vector<8x8xf32>
    %199 = tpu.matmul %197, %198, %cst_94 {dimension_numbers = #tpu.dot_dimension_numbers<[1], [1], [0], [0], [0, 0, 1, 0], [], []>} : vector<8x8xf32>, vector<8x8xf32>, vector<8x8xf32> -> vector<8x8xf32>
    %200 = arith.addf %199, %23 : vector<8x8xf32>
    %cst_95 = arith.constant dense<0xFF800000> : vector<8xf32>
    %201 = vector.multi_reduction <maximumf>, %200, %cst_95 [1] : vector<8x8xf32> to vector<8xf32>
    %202 = vector.shape_cast %201 : vector<8xf32> to vector<8x1xf32>
    %203 = vector.broadcast %202 : vector<8x1xf32> to vector<8x8xf32>
    %204 = arith.subf %200, %203 : vector<8x8xf32>
    %205 = math.exp %204 : vector<8x8xf32>
    %cst_96 = arith.constant dense<0.000000e+00> : vector<8xf32>
    %206 = vector.multi_reduction <add>, %205, %cst_96 [1] : vector<8x8xf32> to vector<8xf32>
    %207 = vector.shape_cast %206 : vector<8xf32> to vector<8x1xf32>
    %208 = vector.broadcast %207 : vector<8x1xf32> to vector<8x8xf32>
    %209 = arith.divf %205, %208 : vector<8x8xf32>
    %210 = vector.extract_strided_slice %146 {offsets = [0, 16], sizes = [8, 8], strides = [1, 1]} : vector<8x32xf32> to vector<8x8xf32>
    %cst_97 = arith.constant dense<0.000000e+00> : vector<8x8xf32>
    %211 = tpu.matmul %209, %210, %cst_97 {dimension_numbers = #tpu.dot_dimension_numbers<[1], [0], [0], [1], [0, 0, 1, 1], [], []>} : vector<8x8xf32>, vector<8x8xf32>, vector<8x8xf32> -> vector<8x8xf32>
    %c3_98 = arith.constant 3 : index
    %c16_99 = arith.constant 16 : index
    %c0_100 = arith.constant 0 : index
    %212 = vector.load %arg8[%c3_98, %c16_99, %c0_100] : memref<4x32x32xf32, #tpu.memory_space<vmem>>, vector<1x8x32xf32>
    %213 = vector.shape_cast %212 : vector<1x8x32xf32> to vector<8x32xf32>
    %cst_101 = arith.constant dense<0.000000e+00> : vector<8x32xf32>
    %214 = tpu.matmul %211, %213, %cst_101 {dimension_numbers = #tpu.dot_dimension_numbers<[1], [0], [0], [1], [0, 0, 1, 1], [], []>} : vector<8x8xf32>, vector<8x32xf32>, vector<8x32xf32> -> vector<8x32xf32>
    %215 = arith.addf %196, %214 : vector<8x32xf32>
    %216 = vector.extract_strided_slice %154 {offsets = [0, 24], sizes = [8, 8], strides = [1, 1]} : vector<8x32xf32> to vector<8x8xf32>
    %217 = vector.extract_strided_slice %145 {offsets = [0, 24], sizes = [8, 8], strides = [1, 1]} : vector<8x32xf32> to vector<8x8xf32>
    %cst_102 = arith.constant dense<0.000000e+00> : vector<8x8xf32>
    %218 = tpu.matmul %216, %217, %cst_102 {dimension_numbers = #tpu.dot_dimension_numbers<[1], [1], [0], [0], [0, 0, 1, 0], [], []>} : vector<8x8xf32>, vector<8x8xf32>, vector<8x8xf32> -> vector<8x8xf32>
    %219 = arith.addf %218, %23 : vector<8x8xf32>
    %cst_103 = arith.constant dense<0xFF800000> : vector<8xf32>
    %220 = vector.multi_reduction <maximumf>, %219, %cst_103 [1] : vector<8x8xf32> to vector<8xf32>
    %221 = vector.shape_cast %220 : vector<8xf32> to vector<8x1xf32>
    %222 = vector.broadcast %221 : vector<8x1xf32> to vector<8x8xf32>
    %223 = arith.subf %219, %222 : vector<8x8xf32>
    %224 = math.exp %223 : vector<8x8xf32>
    %cst_104 = arith.constant dense<0.000000e+00> : vector<8xf32>
    %225 = vector.multi_reduction <add>, %224, %cst_104 [1] : vector<8x8xf32> to vector<8xf32>
    %226 = vector.shape_cast %225 : vector<8xf32> to vector<8x1xf32>
    %227 = vector.broadcast %226 : vector<8x1xf32> to vector<8x8xf32>
    %228 = arith.divf %224, %227 : vector<8x8xf32>
    %229 = vector.extract_strided_slice %146 {offsets = [0, 24], sizes = [8, 8], strides = [1, 1]} : vector<8x32xf32> to vector<8x8xf32>
    %cst_105 = arith.constant dense<0.000000e+00> : vector<8x8xf32>
    %230 = tpu.matmul %228, %229, %cst_105 {dimension_numbers = #tpu.dot_dimension_numbers<[1], [0], [0], [1], [0, 0, 1, 1], [], []>} : vector<8x8xf32>, vector<8x8xf32>, vector<8x8xf32> -> vector<8x8xf32>
    %c3_106 = arith.constant 3 : index
    %c24_107 = arith.constant 24 : index
    %c0_108 = arith.constant 0 : index
    %231 = vector.load %arg8[%c3_106, %c24_107, %c0_108] : memref<4x32x32xf32, #tpu.memory_space<vmem>>, vector<1x8x32xf32>
    %232 = vector.shape_cast %231 : vector<1x8x32xf32> to vector<8x32xf32>
    %cst_109 = arith.constant dense<0.000000e+00> : vector<8x32xf32>
    %233 = tpu.matmul %230, %232, %cst_109 {dimension_numbers = #tpu.dot_dimension_numbers<[1], [0], [0], [1], [0, 0, 1, 1], [], []>} : vector<8x8xf32>, vector<8x32xf32>, vector<8x32xf32> -> vector<8x32xf32>
    %234 = arith.addf %215, %233 : vector<8x32xf32>
    %235 = arith.addf %118, %234 : vector<8x32xf32>
    %c2 = arith.constant 2 : index
    %c0_110 = arith.constant 0 : index
    %236 = vector.load %arg14[%c2, %c0_110] : memref<3x32xf32, #tpu.memory_space<vmem>>, vector<1x32xf32>
    %237 = vector.shape_cast %236 : vector<1x32xf32> to vector<32xf32>
    %c2_111 = arith.constant 2 : index
    %c0_112 = arith.constant 0 : index
    %238 = vector.load %arg15[%c2_111, %c0_112] : memref<3x32xf32, #tpu.memory_space<vmem>>, vector<1x32xf32>
    %239 = vector.shape_cast %238 : vector<1x32xf32> to vector<32xf32>
    %cst_113 = arith.constant dense<0.000000e+00> : vector<8xf32>
    %240 = vector.multi_reduction <add>, %235, %cst_113 [1] : vector<8x32xf32> to vector<8xf32>
    %241 = vector.shape_cast %240 : vector<8xf32> to vector<8x1xf32>
    %cst_114 = arith.constant 3.200000e+01 : f32
    %242 = vector.broadcast %cst_114 : f32 to vector<8x1xf32>
    %243 = arith.divf %241, %242 : vector<8x1xf32>
    %244 = vector.broadcast %243 : vector<8x1xf32> to vector<8x32xf32>
    %245 = arith.subf %235, %244 : vector<8x32xf32>
    %246 = arith.mulf %245, %245 : vector<8x32xf32>
    %cst_115 = arith.constant dense<0.000000e+00> : vector<8xf32>
    %247 = vector.multi_reduction <add>, %246, %cst_115 [1] : vector<8x32xf32> to vector<8xf32>
    %248 = vector.shape_cast %247 : vector<8xf32> to vector<8x1xf32>
    %cst_116 = arith.constant 0.0322580636 : f32
    %249 = vector.broadcast %cst_116 : f32 to vector<8x1xf32>
    %250 = arith.mulf %248, %249 : vector<8x1xf32>
    %251 = math.sqrt %250 : vector<8x1xf32>
    %cst_117 = arith.constant 9.99999997E-7 : f32
    %252 = vector.broadcast %cst_117 : f32 to vector<8x1xf32>
    %253 = arith.addf %251, %252 : vector<8x1xf32>
    %254 = vector.broadcast %253 : vector<8x1xf32> to vector<8x32xf32>
    %255 = arith.divf %245, %254 : vector<8x32xf32>
    %256 = vector.shape_cast %237 : vector<32xf32> to vector<1x32xf32>
    %257 = vector.broadcast %256 : vector<1x32xf32> to vector<8x32xf32>
    %258 = arith.mulf %257, %255 : vector<8x32xf32>
    %259 = vector.shape_cast %239 : vector<32xf32> to vector<1x32xf32>
    %260 = vector.broadcast %259 : vector<1x32xf32> to vector<8x32xf32>
    %261 = arith.addf %258, %260 : vector<8x32xf32>
    %c0_118 = arith.constant 0 : index
    %c0_119 = arith.constant 0 : index
    %262 = vector.load %arg10[%c0_118, %c0_119] : memref<32x64xf32, #tpu.memory_space<vmem>>, vector<32x64xf32>
    %cst_120 = arith.constant dense<0.000000e+00> : vector<8x64xf32>
    %263 = tpu.matmul %261, %262, %cst_120 {dimension_numbers = #tpu.dot_dimension_numbers<[1], [0], [0], [1], [0, 0, 1, 1], [], []>} : vector<8x32xf32>, vector<32x64xf32>, vector<8x64xf32> -> vector<8x64xf32>
    %264 = vector.shape_cast %25 : vector<64xf32> to vector<1x64xf32>
    %265 = vector.broadcast %264 : vector<1x64xf32> to vector<8x64xf32>
    %266 = arith.addf %263, %265 : vector<8x64xf32>
    %cst_121 = arith.constant 0.000000e+00 : f32
    %267 = vector.broadcast %cst_121 : f32 to vector<8x64xf32>
    %268 = arith.maximumf %266, %267 : vector<8x64xf32>
    %c0_122 = arith.constant 0 : index
    %c0_123 = arith.constant 0 : index
    %269 = vector.load %arg12[%c0_122, %c0_123] : memref<64x32xf32, #tpu.memory_space<vmem>>, vector<64x32xf32>
    %cst_124 = arith.constant dense<0.000000e+00> : vector<8x32xf32>
    %270 = tpu.matmul %268, %269, %cst_124 {dimension_numbers = #tpu.dot_dimension_numbers<[1], [0], [0], [1], [0, 0, 1, 1], [], []>} : vector<8x64xf32>, vector<64x32xf32>, vector<8x32xf32> -> vector<8x32xf32>
    %271 = arith.addf %235, %270 : vector<8x32xf32>
    %272 = vector.shape_cast %27 : vector<32xf32> to vector<1x32xf32>
    %273 = vector.broadcast %272 : vector<1x32xf32> to vector<8x32xf32>
    %274 = arith.addf %271, %273 : vector<8x32xf32>
    %c0_125 = arith.constant 0 : index
    %c0_126 = arith.constant 0 : index
    %c0_127 = arith.constant 0 : index
    %275 = vector.load %arg16[%c0_125, %c0_126, %c0_127] : memref<1x8x32xf32, #tpu.memory_space<vmem>>, vector<1x8x32xf32>
    %276 = vector.shape_cast %275 : vector<1x8x32xf32> to vector<8x32xf32>
    %277 = vector.shape_cast %274 : vector<8x32xf32> to vector<1x8x32xf32>
    tpu.vector_store %arg16[%c0_125, %c0_126, %c0_127], %277 {strides = array<i32>} : memref<1x8x32xf32, #tpu.memory_space<vmem>>, vector<1x8x32xf32>,
    return
  }
  func.func @transform_0(%arg0: i32, %arg1: i32) -> (i32, i32, i32) {
    %c0_i32 = arith.constant 0 : i32
    %c0_i32_0 = arith.constant 0 : i32
    %c0_i32_1 = arith.constant 0 : i32
    return %arg0, %c0_i32, %c0_i32_0 : i32, i32, i32
  }
  func.func @transform_1(%arg0: i32, %arg1: i32) -> (i32, i32, i32) {
    %c0_i32 = arith.constant 0 : i32
    %c0_i32_0 = arith.constant 0 : i32
    %c0_i32_1 = arith.constant 0 : i32
    return %arg0, %c0_i32, %c0_i32_0 : i32, i32, i32
  }
  func.func @transform_2(%arg0: i32, %arg1: i32) -> (i32, i32, i32) {
    %c0_i32 = arith.constant 0 : i32
    %c0_i32_0 = arith.constant 0 : i32
    return %arg0, %arg1, %c0_i32 : i32, i32, i32
  }
  func.func @transform_3(%arg0: i32, %arg1: i32) -> (i32, i32, i32) {
    %c0_i32 = arith.constant 0 : i32
    %c0_i32_0 = arith.constant 0 : i32
    return %arg0, %arg1, %c0_i32 : i32, i32, i32
  }
  func.func @transform_4(%arg0: i32, %arg1: i32) -> (i32, i32, i32) {
    %c0_i32 = arith.constant 0 : i32
    %c0_i32_0 = arith.constant 0 : i32
    %c0_i32_1 = arith.constant 0 : i32
    %c0_i32_2 = arith.constant 0 : i32
    return %c0_i32, %c0_i32_0, %c0_i32_1 : i32, i32, i32
  }
  func.func @transform_5(%arg0: i32, %arg1: i32) -> (i32, i32) {
    %c0_i32 = arith.constant 0 : i32
    %c0_i32_0 = arith.constant 0 : i32
    %c0_i32_1 = arith.constant 0 : i32
    return %c0_i32, %c0_i32_0 : i32, i32
  }
  func.func @transform_6(%arg0: i32, %arg1: i32) -> (i32, i32, i32) {
    %c0_i32 = arith.constant 0 : i32
    %c0_i32_0 = arith.constant 0 : i32
    %c0_i32_1 = arith.constant 0 : i32
    %c0_i32_2 = arith.constant 0 : i32
    return %c0_i32, %c0_i32_0, %c0_i32_1 : i32, i32, i32
  }
  func.func @transform_7(%arg0: i32, %arg1: i32) -> (i32, i32) {
    %c0_i32 = arith.constant 0 : i32
    %c0_i32_0 = arith.constant 0 : i32
    %c0_i32_1 = arith.constant 0 : i32
    return %c0_i32, %c0_i32_0 : i32, i32
  }
  func.func @transform_8(%arg0: i32, %arg1: i32) -> (i32, i32) {
    %c0_i32 = arith.constant 0 : i32
    %c0_i32_0 = arith.constant 0 : i32
    %c0_i32_1 = arith.constant 0 : i32
    return %c0_i32, %c0_i32_0 : i32, i32
  }
  func.func @transform_9(%arg0: i32, %arg1: i32) -> (i32, i32) {
    %c0_i32 = arith.constant 0 : i32
    %c0_i32_0 = arith.constant 0 : i32
    %c0_i32_1 = arith.constant 0 : i32
    return %c0_i32, %c0_i32_0 : i32, i32
  }
  func.func @transform_10(%arg0: i32, %arg1: i32) -> (i32, i32) {
    %c0_i32 = arith.constant 0 : i32
    %c0_i32_0 = arith.constant 0 : i32
    %c0_i32_1 = arith.constant 0 : i32
    return %c0_i32, %c0_i32_0 : i32, i32
  }
  func.func @transform_11(%arg0: i32, %arg1: i32) -> (i32, i32) {
    %c0_i32 = arith.constant 0 : i32
    %c0_i32_0 = arith.constant 0 : i32
    %c0_i32_1 = arith.constant 0 : i32
    return %c0_i32, %c0_i32_0 : i32, i32
  }
  func.func @transform_12(%arg0: i32, %arg1: i32) -> (i32, i32) {
    %c0_i32 = arith.constant 0 : i32
    %c0_i32_0 = arith.constant 0 : i32
    %c0_i32_1 = arith.constant 0 : i32
    return %c0_i32, %c0_i32_0 : i32, i32
  }
  func.func @transform_13(%arg0: i32, %arg1: i32) -> (i32, i32) {
    %c0_i32 = arith.constant 0 : i32
    %c0_i32_0 = arith.constant 0 : i32
    %c0_i32_1 = arith.constant 0 : i32
    return %c0_i32, %c0_i32_0 : i32, i32
  }
  func.func @transform_14(%arg0: i32, %arg1: i32) -> (i32, i32, i32) {
    %c0_i32 = arith.constant 0 : i32
    %c0_i32_0 = arith.constant 0 : i32
    return %arg0, %arg1, %c0_i32 : i32, i32, i32
  }
}

module attributes {stable_mosaic.version = 11 : i64} {
  func.func @decoder_block_kernel(%arg0: i32, %arg1: i32, %arg2: memref<1x8x32xf32, #tpu.memory_space<vmem>>, %arg3: memref<1x8x32xf32, #tpu.memory_space<vmem>>, %arg4: memref<1x8x8xf32, #tpu.memory_space<vmem>>, %arg5: memref<1x8x8xf32, #tpu.memory_space<vmem>>, %arg6: memref<4x32x32xf32, #tpu.memory_space<vmem>>, %arg7: memref<4x32xf32, #tpu.memory_space<vmem>>, %arg8: memref<4x32x32xf32, #tpu.memory_space<vmem>>, %arg9: memref<4x32xf32, #tpu.memory_space<vmem>>, %arg10: memref<32x64xf32, #tpu.memory_space<vmem>>, %arg11: memref<1x64xf32, #tpu.memory_space<vmem>>, %arg12: memref<64x32xf32, #tpu.memory_space<vmem>>, %arg13: memref<1x32xf32, #tpu.memory_space<vmem>>, %arg14: memref<3x32xf32, #tpu.memory_space<vmem>>, %arg15: memref<3x32xf32, #tpu.memory_space<vmem>>, %arg16: memref<1x8x32xf32, #tpu.memory_space<vmem>>, %arg17: memref<8x32xf32, #tpu.memory_space<vmem>>, %arg18: memref<8x32xf32, #tpu.memory_space<vmem>>, %arg19: memref<8x32xf32, #tpu.memory_space<vmem>>, %arg20: memref<8x32xf32, #tpu.memory_space<vmem>>, %arg21: memref<8x32xf32, #tpu.memory_space<vmem>>) attributes {dimension_semantics = [#tpu.dimension_semantics<parallel>, #tpu.dimension_semantics<arbitrary>], iteration_bounds = array<i64: 2, 1>, scalar_prefetch = 0 : i64, scratch_operands = 5 : i64, tpu.core_type = #tpu.core_type<tc>, window_params = [{transform_indices = @transform_0, window_bounds = array<i64: 1, 8, 32>}, {transform_indices = @transform_1, window_bounds = array<i64: 1, 8, 32>}, {transform_indices = @transform_2, window_bounds = array<i64: 1, 8, 8>}, {transform_indices = @transform_3, window_bounds = array<i64: 1, 8, 8>}, {pipeline_mode = #tpu.pipeline_mode<synchronous>, transform_indices = @transform_4, window_bounds = array<i64: 4, 32, 32>}, {pipeline_mode = #tpu.pipeline_mode<synchronous>, transform_indices = @transform_5, window_bounds = array<i64: 4, 32>}, {pipeline_mode = #tpu.pipeline_mode<synchronous>, transform_indices = @transform_6, window_bounds = array<i64: 4, 32, 32>}, {pipeline_mode = #tpu.pipeline_mode<synchronous>, transform_indices = @transform_7, window_bounds = array<i64: 4, 32>}, {pipeline_mode = #tpu.pipeline_mode<synchronous>, transform_indices = @transform_8, window_bounds = array<i64: 32, 64>}, {pipeline_mode = #tpu.pipeline_mode<synchronous>, transform_indices = @transform_9, window_bounds = array<i64: 1, 64>}, {pipeline_mode = #tpu.pipeline_mode<synchronous>, transform_indices = @transform_10, window_bounds = array<i64: 64, 32>}, {pipeline_mode = #tpu.pipeline_mode<synchronous>, transform_indices = @transform_11, window_bounds = array<i64: 1, 32>}, {pipeline_mode = #tpu.pipeline_mode<synchronous>, transform_indices = @transform_12, window_bounds = array<i64: 3, 32>}, {pipeline_mode = #tpu.pipeline_mode<synchronous>, transform_indices = @transform_13, window_bounds = array<i64: 3, 32>}, {transform_indices = @transform_14, window_bounds = array<i64: 1, 8, 32>}]} {
    %c0_i32 = arith.constant 0 : i32
    %0 = arith.cmpi eq, %arg1, %c0_i32 : i32
    %1 = arith.extui %0 : i1 to i32
    %c0_i32_0 = arith.constant 0 : i32
    %2 = arith.cmpi ne, %1, %c0_i32_0 : i32
    scf.if %2 {
      %c0_128 = arith.constant 0 : index
      %c0_129 = arith.constant 0 : index
      %c0_130 = arith.constant 0 : index
      %278 = vector.load %arg2[%c0_128, %c0_129, %c0_130] : memref<1x8x32xf32, #tpu.memory_space<vmem>>, vector<1x8x32xf32>
      %279 = vector.shape_cast %278 : vector<1x8x32xf32> to vector<8x32xf32>
      %c0_131 = arith.constant 0 : index
      %c0_132 = arith.constant 0 : index
      %280 = vector.load %arg14[%c0_131, %c0_132] : memref<3x32xf32, #tpu.memory_space<vmem>>, vector<1x32xf32>
      %281 = vector.shape_cast %280 : vector<1x32xf32> to vector<32xf32>
      %c0_133 = arith.constant 0 : index
      %c0_134 = arith.constant 0 : index
      %282 = vector.load %arg15[%c0_133, %c0_134] : memref<3x32xf32, #tpu.memory_space<vmem>>, vector<1x32xf32>
      %283 = vector.shape_cast %282 : vector<1x32xf32> to vector<32xf32>
      %cst_135 = arith.constant dense<0.000000e+00> : vector<8xf32>
      %284 = vector.multi_reduction <add>, %279, %cst_135 [1] : vector<8x32xf32> to vector<8xf32>
      %285 = vector.shape_cast %284 : vector<8xf32> to vector<8x1xf32>
      %cst_136 = arith.constant 3.200000e+01 : f32
      %286 = vector.broadcast %cst_136 : f32 to vector<8x1xf32>
      %287 = arith.divf %285, %286 : vector<8x1xf32>
      %288 = vector.broadcast %287 : vector<8x1xf32> to vector<8x32xf32>
      %289 = arith.subf %279, %288 : vector<8x32xf32>
      %290 = arith.mulf %289, %289 : vector<8x32xf32>
      %cst_137 = arith.constant dense<0.000000e+00> : vector<8xf32>
      %291 = vector.multi_reduction <add>, %290, %cst_137 [1] : vector<8x32xf32> to vector<8xf32>
      %292 = vector.shape_cast %291 : vector<8xf32> to vector<8x1xf32>
      %cst_138 = arith.constant 0.0322580636 : f32
      %293 = vector.broadcast %cst_138 : f32 to vector<8x1xf32>
      %294 = arith.mulf %292, %293 : vector<8x1xf32>
      %295 = math.sqrt %294 : vector<8x1xf32>
      %cst_139 = arith.constant 9.99999997E-7 : f32
      %296 = vector.broadcast %cst_139 : f32 to vector<8x1xf32>
      %297 = arith.addf %295, %296 : vector<8x1xf32>
      %298 = vector.broadcast %297 : vector<8x1xf32> to vector<8x32xf32>
      %299 = arith.divf %289, %298 : vector<8x32xf32>
      %300 = vector.shape_cast %281 : vector<32xf32> to vector<1x32xf32>
      %301 = vector.broadcast %300 : vector<1x32xf32> to vector<8x32xf32>
      %302 = arith.mulf %301, %299 : vector<8x32xf32>
      %303 = vector.shape_cast %283 : vector<32xf32> to vector<1x32xf32>
      %304 = vector.broadcast %303 : vector<1x32xf32> to vector<8x32xf32>
      %305 = arith.addf %302, %304 : vector<8x32xf32>
      %c0_140 = arith.constant 0 : index
      %c0_141 = arith.constant 0 : index
      %306 = vector.load %arg17[%c0_140, %c0_141] : memref<8x32xf32, #tpu.memory_space<vmem>>, vector<8x32xf32>
      tpu.vector_store %arg17[%c0_140, %c0_141], %305 {strides = array<i32>} : memref<8x32xf32, #tpu.memory_space<vmem>>, vector<8x32xf32>,
      %c1_142 = arith.constant 1 : index
      %c0_143 = arith.constant 0 : index
      %c0_144 = arith.constant 0 : index
      %307 = vector.load %arg6[%c1_142, %c0_143, %c0_144] : memref<4x32x32xf32, #tpu.memory_space<vmem>>, vector<1x32x32xf32>
      %308 = vector.shape_cast %307 : vector<1x32x32xf32> to vector<32x32xf32>
      %cst_145 = arith.constant dense<0.000000e+00> : vector<8x32xf32>
      %309 = tpu.matmul %305, %308, %cst_145 {dimension_numbers = #tpu.dot_dimension_numbers<[1], [0], [0], [1], [0, 0, 1, 1], [], []>} : vector<8x32xf32>, vector<32x32xf32>, vector<8x32xf32> -> vector<8x32xf32>
      %c1_146 = arith.constant 1 : index
      %c0_147 = arith.constant 0 : index
      %310 = vector.load %arg7[%c1_146, %c0_147] : memref<4x32xf32, #tpu.memory_space<vmem>>, vector<1x32xf32>
      %311 = vector.shape_cast %310 : vector<1x32xf32> to vector<32xf32>
      %312 = vector.shape_cast %311 : vector<32xf32> to vector<1x32xf32>
      %313 = vector.broadcast %312 : vector<1x32xf32> to vector<8x32xf32>
      %314 = arith.addf %309, %313 : vector<8x32xf32>
      %c2_148 = arith.constant 2 : index
      %c0_149 = arith.constant 0 : index
      %c0_150 = arith.constant 0 : index
      %315 = vector.load %arg6[%c2_148, %c0_149, %c0_150] : memref<4x32x32xf32, #tpu.memory_space<vmem>>, vector<1x32x32xf32>
      %316 = vector.shape_cast %315 : vector<1x32x32xf32> to vector<32x32xf32>
      %cst_151 = arith.constant dense<0.000000e+00> : vector<8x32xf32>
      %317 = tpu.matmul %305, %316, %cst_151 {dimension_numbers = #tpu.dot_dimension_numbers<[1], [0], [0], [1], [0, 0, 1, 1], [], []>} : vector<8x32xf32>, vector<32x32xf32>, vector<8x32xf32> -> vector<8x32xf32>
      %c2_152 = arith.constant 2 : index
      %c0_153 = arith.constant 0 : index
      %318 = vector.load %arg7[%c2_152, %c0_153] : memref<4x32xf32, #tpu.memory_space<vmem>>, vector<1x32xf32>
      %319 = vector.shape_cast %318 : vector<1x32xf32> to vector<32xf32>
      %320 = vector.shape_cast %319 : vector<32xf32> to vector<1x32xf32>
      %321 = vector.broadcast %320 : vector<1x32xf32> to vector<8x32xf32>
      %322 = arith.addf %317, %321 : vector<8x32xf32>
      %c0_154 = arith.constant 0 : index
      %c0_155 = arith.constant 0 : index
      %323 = vector.load %arg18[%c0_154, %c0_155] : memref<8x32xf32, #tpu.memory_space<vmem>>, vector<8x32xf32>
      tpu.vector_store %arg18[%c0_154, %c0_155], %314 {strides = array<i32>} : memref<8x32xf32, #tpu.memory_space<vmem>>, vector<8x32xf32>,
      %c0_156 = arith.constant 0 : index
      %c0_157 = arith.constant 0 : index
      %324 = vector.load %arg19[%c0_156, %c0_157] : memref<8x32xf32, #tpu.memory_space<vmem>>, vector<8x32xf32>
      tpu.vector_store %arg19[%c0_156, %c0_157], %322 {strides = array<i32>} : memref<8x32xf32, #tpu.memory_space<vmem>>, vector<8x32xf32>,
      %c0_158 = arith.constant 0 : index
      %c0_159 = arith.constant 0 : index
      %c0_160 = arith.constant 0 : index
      %325 = vector.load %arg3[%c0_158, %c0_159, %c0_160] : memref<1x8x32xf32, #tpu.memory_space<vmem>>, vector<1x8x32xf32>
      %326 = vector.shape_cast %325 : vector<1x8x32xf32> to vector<8x32xf32>
      %c1_161 = arith.constant 1 : index
      %c0_162 = arith.constant 0 : index
      %c0_163 = arith.constant 0 : index
      %327 = vector.load %arg8[%c1_161, %c0_162, %c0_163] : memref<4x32x32xf32, #tpu.memory_space<vmem>>, vector<1x32x32xf32>
      %328 = vector.shape_cast %327 : vector<1x32x32xf32> to vector<32x32xf32>
      %cst_164 = arith.constant dense<0.000000e+00> : vector<8x32xf32>
      %329 = tpu.matmul %326, %328, %cst_164 {dimension_numbers = #tpu.dot_dimension_numbers<[1], [0], [0], [1], [0, 0, 1, 1], [], []>} : vector<8x32xf32>, vector<32x32xf32>, vector<8x32xf32> -> vector<8x32xf32>
      %c1_165 = arith.constant 1 : index
      %c0_166 = arith.constant 0 : index
      %330 = vector.load %arg9[%c1_165, %c0_166] : memref<4x32xf32, #tpu.memory_space<vmem>>, vector<1x32xf32>
      %331 = vector.shape_cast %330 : vector<1x32xf32> to vector<32xf32>
      %332 = vector.shape_cast %331 : vector<32xf32> to vector<1x32xf32>
      %333 = vector.broadcast %332 : vector<1x32xf32> to vector<8x32xf32>
      %334 = arith.addf %329, %333 : vector<8x32xf32>
      %c2_167 = arith.constant 2 : index
      %c0_168 = arith.constant 0 : index
      %c0_169 = arith.constant 0 : index
      %335 = vector.load %arg8[%c2_167, %c0_168, %c0_169] : memref<4x32x32xf32, #tpu.memory_space<vmem>>, vector<1x32x32xf32>
      %336 = vector.shape_cast %335 : vector<1x32x32xf32> to vector<32x32xf32>
      %cst_170 = arith.constant dense<0.000000e+00> : vector<8x32xf32>
      %337 = tpu.matmul %326, %336, %cst_170 {dimension_numbers = #tpu.dot_dimension_numbers<[1], [0], [0], [1], [0, 0, 1, 1], [], []>} : vector<8x32xf32>, vector<32x32xf32>, vector<8x32xf32> -> vector<8x32xf32>
      %c2_171 = arith.constant 2 : index
      %c0_172 = arith.constant 0 : index
      %338 = vector.load %arg9[%c2_171, %c0_172] : memref<4x32xf32, #tpu.memory_space<vmem>>, vector<1x32xf32>
      %339 = vector.shape_cast %338 : vector<1x32xf32> to vector<32xf32>
      %340 = vector.shape_cast %339 : vector<32xf32> to vector<1x32xf32>
      %341 = vector.broadcast %340 : vector<1x32xf32> to vector<8x32xf32>
      %342 = arith.addf %337, %341 : vector<8x32xf32>
      %c0_173 = arith.constant 0 : index
      %c0_174 = arith.constant 0 : index
      %343 = vector.load %arg20[%c0_173, %c0_174] : memref<8x32xf32, #tpu.memory_space<vmem>>, vector<8x32xf32>
      tpu.vector_store %arg20[%c0_173, %c0_174], %334 {strides = array<i32>} : memref<8x32xf32, #tpu.memory_space<vmem>>, vector<8x32xf32>,
      %c0_175 = arith.constant 0 : index
      %c0_176 = arith.constant 0 : index
      %344 = vector.load %arg21[%c0_175, %c0_176] : memref<8x32xf32, #tpu.memory_space<vmem>>, vector<8x32xf32>
      tpu.vector_store %arg21[%c0_175, %c0_176], %342 {strides = array<i32>} : memref<8x32xf32, #tpu.memory_space<vmem>>, vector<8x32xf32>,
    } else {
    }
    %c8_i32 = arith.constant 8 : i32
    %3 = arith.muli %arg1, %c8_i32 : i32
    %4 = tpu.assume_multiple %3, 8 : i32
    %c0 = arith.constant 0 : index
    %5 = arith.index_cast %4 : i32 to index
    %c0_1 = arith.constant 0 : index
    %6 = vector.load %arg2[%c0, %5, %c0_1] : memref<1x8x32xf32, #tpu.memory_space<vmem>>, vector<1x8x32xf32>
    %7 = vector.shape_cast %6 : vector<1x8x32xf32> to vector<8x32xf32>
    %8 = arith.index_cast %4 : i32 to index
    %c0_2 = arith.constant 0 : index
    %9 = vector.load %arg17[%8, %c0_2] : memref<8x32xf32, #tpu.memory_space<vmem>>, vector<8x32xf32>
    %c0_3 = arith.constant 0 : index
    %c0_4 = arith.constant 0 : index
    %c0_5 = arith.constant 0 : index
    %10 = vector.load %arg5[%c0_3, %c0_4, %c0_5] : memref<1x8x8xf32, #tpu.memory_space<vmem>>, vector<1x8x8xf32>
    %11 = vector.shape_cast %10 : vector<1x8x8xf32> to vector<8x8xf32>
    %cst = arith.constant 0.000000e+00 : f32
    %12 = vector.broadcast %cst : f32 to vector<8x8xf32>
    %13 = arith.cmpf oeq, %11, %12 : vector<8x8xf32>
    %cst_6 = arith.constant -1.000000e+09 : f32
    %cst_7 = arith.constant 0.000000e+00 : f32
    %14 = vector.broadcast %cst_6 : f32 to vector<8x8xf32>
    %15 = vector.broadcast %cst_7 : f32 to vector<8x8xf32>
    %16 = arith.select %13, %14, %15 : vector<8x8xi1>, vector<8x8xf32>
    %c0_8 = arith.constant 0 : index
    %c0_9 = arith.constant 0 : index
    %c0_10 = arith.constant 0 : index
    %17 = vector.load %arg4[%c0_8, %c0_9, %c0_10] : memref<1x8x8xf32, #tpu.memory_space<vmem>>, vector<1x8x8xf32>
    %18 = vector.shape_cast %17 : vector<1x8x8xf32> to vector<8x8xf32>
    %cst_11 = arith.constant 0.000000e+00 : f32
    %19 = vector.broadcast %cst_11 : f32 to vector<8x8xf32>
    %20 = arith.cmpf oeq, %18, %19 : vector<8x8xf32>
    %cst_12 = arith.constant -1.000000e+09 : f32
    %cst_13 = arith.constant 0.000000e+00 : f32
    %21 = vector.broadcast %cst_12 : f32 to vector<8x8xf32>
    %22 = vector.broadcast %cst_13 : f32 to vector<8x8xf32>
    %23 = arith.select %20, %21, %22 : vector<8x8xi1>, vector<8x8xf32>
    %c0_14 = arith.constant 0 : index
    %c0_15 = arith.constant 0 : index
    %24 = vector.load %arg11[%c0_14, %c0_15] : memref<1x64xf32, #tpu.memory_space<vmem>>, vector<1x64xf32>
    %25 = vector.shape_cast %24 : vector<1x64xf32> to vector<64xf32>
    %c0_16 = arith.constant 0 : index
    %c0_17 = arith.constant 0 : index
    %26 = vector.load %arg13[%c0_16, %c0_17] : memref<1x32xf32, #tpu.memory_space<vmem>>, vector<1x32xf32>
    %27 = vector.shape_cast %26 : vector<1x32xf32> to vector<32xf32>
    %c0_18 = arith.constant 0 : index
    %c0_19 = arith.constant 0 : index
    %28 = vector.load %arg18[%c0_18, %c0_19] : memref<8x32xf32, #tpu.memory_space<vmem>>, vector<8x32xf32>
    %c0_20 = arith.constant 0 : index
    %c0_21 = arith.constant 0 : index
    %29 = vector.load %arg19[%c0_20, %c0_21] : memref<8x32xf32, #tpu.memory_space<vmem>>, vector<8x32xf32>
    %c0_22 = arith.constant 0 : index
    %c0_23 = arith.constant 0 : index
    %c0_24 = arith.constant 0 : index
    %30 = vector.load %arg6[%c0_22, %c0_23, %c0_24] : memref<4x32x32xf32, #tpu.memory_space<vmem>>, vector<1x32x32xf32>
    %31 = vector.shape_cast %30 : vector<1x32x32xf32> to vector<32x32xf32>
    %cst_25 = arith.constant dense<0.000000e+00> : vector<8x32xf32>
    %32 = tpu.matmul %9, %31, %cst_25 {dimension_numbers = #tpu.dot_dimension_numbers<[1], [0], [0], [1], [0, 0, 1, 1], [], []>} : vector<8x32xf32>, vector<32x32xf32>, vector<8x32xf32> -> vector<8x32xf32>
    %c0_26 = arith.constant 0 : index
    %c0_27 = arith.constant 0 : index
    %33 = vector.load %arg7[%c0_26, %c0_27] : memref<4x32xf32, #tpu.memory_space<vmem>>, vector<1x32xf32>
    %34 = vector.shape_cast %33 : vector<1x32xf32> to vector<32xf32>
    %35 = vector.shape_cast %34 : vector<32xf32> to vector<1x32xf32>
    %36 = vector.broadcast %35 : vector<1x32xf32> to vector<8x32xf32>
    %37 = arith.addf %32, %36 : vector<8x32xf32>
    %c3 = arith.constant 3 : index
    %c0_28 = arith.constant 0 : index
    %38 = vector.load %arg7[%c3, %c0_28] : memref<4x32xf32, #tpu.memory_space<vmem>>, vector<1x32xf32>
    %39 = vector.shape_cast %38 : vector<1x32xf32> to vector<32xf32>
    %40 = vector.extract_strided_slice %37 {offsets = [0, 0], sizes = [8, 8], strides = [1, 1]} : vector<8x32xf32> to vector<8x8xf32>
    %41 = vector.extract_strided_slice %28 {offsets = [0, 0], sizes = [8, 8], strides = [1, 1]} : vector<8x32xf32> to vector<8x8xf32>
    %cst_29 = arith.constant dense<0.000000e+00> : vector<8x8xf32>
    %42 = tpu.matmul %40, %41, %cst_29 {dimension_numbers = #tpu.dot_dimension_numbers<[1], [1], [0], [0], [0, 0, 1, 0], [], []>} : vector<8x8xf32>, vector<8x8xf32>, vector<8x8xf32> -> vector<8x8xf32>
    %43 = arith.addf %42, %16 : vector<8x8xf32>
    %cst_30 = arith.constant dense<0xFF800000> : vector<8xf32>
    %44 = vector.multi_reduction <maximumf>, %43, %cst_30 [1] : vector<8x8xf32> to vector<8xf32>
    %45 = vector.shape_cast %44 : vector<8xf32> to vector<8x1xf32>
    %46 = vector.broadcast %45 : vector<8x1xf32> to vector<8x8xf32>
    %47 = arith.subf %43, %46 : vector<8x8xf32>
    %48 = math.exp %47 : vector<8x8xf32>
    %cst_31 = arith.constant dense<0.000000e+00> : vector<8xf32>
    %49 = vector.multi_reduction <add>, %48, %cst_31 [1] : vector<8x8xf32> to vector<8xf32>
    %50 = vector.shape_cast %49 : vector<8xf32> to vector<8x1xf32>
    %51 = vector.broadcast %50 : vector<8x1xf32> to vector<8x8xf32>
    %52 = arith.divf %48, %51 : vector<8x8xf32>
    %53 = vector.extract_strided_slice %29 {offsets = [0, 0], sizes = [8, 8], strides = [1, 1]} : vector<8x32xf32> to vector<8x8xf32>
    %cst_32 = arith.constant dense<0.000000e+00> : vector<8x8xf32>
    %54 = tpu.matmul %52, %53, %cst_32 {dimension_numbers = #tpu.dot_dimension_numbers<[1], [0], [0], [1], [0, 0, 1, 1], [], []>} : vector<8x8xf32>, vector<8x8xf32>, vector<8x8xf32> -> vector<8x8xf32>
    %c3_33 = arith.constant 3 : index
    %c0_34 = arith.constant 0 : index
    %c0_35 = arith.constant 0 : index
    %55 = vector.load %arg6[%c3_33, %c0_34, %c0_35] : memref<4x32x32xf32, #tpu.memory_space<vmem>>, vector<1x8x32xf32>
    %56 = vector.shape_cast %55 : vector<1x8x32xf32> to vector<8x32xf32>
    %cst_36 = arith.constant dense<0.000000e+00> : vector<8x32xf32>
    %57 = tpu.matmul %54, %56, %cst_36 {dimension_numbers = #tpu.dot_dimension_numbers<[1], [0], [0], [1], [0, 0, 1, 1], [], []>} : vector<8x8xf32>, vector<8x32xf32>, vector<8x32xf32> -> vector<8x32xf32>
    %58 = vector.shape_cast %39 : vector<32xf32> to vector<1x32xf32>
    %59 = vector.broadcast %58 : vector<1x32xf32> to vector<8x32xf32>
    %60 = arith.addf %59, %57 : vector<8x32xf32>
    %61 = vector.extract_strided_slice %37 {offsets = [0, 8], sizes = [8, 8], strides = [1, 1]} : vector<8x32xf32> to vector<8x8xf32>
    %62 = vector.extract_strided_slice %28 {offsets = [0, 8], sizes = [8, 8], strides = [1, 1]} : vector<8x32xf32> to vector<8x8xf32>
    %cst_37 = arith.constant dense<0.000000e+00> : vector<8x8xf32>
    %63 = tpu.matmul %61, %62, %cst_37 {dimension_numbers = #tpu.dot_dimension_numbers<[1], [1], [0], [0], [0, 0, 1, 0], [], []>} : vector<8x8xf32>, vector<8x8xf32>, vector<8x8xf32> -> vector<8x8xf32>
    %64 = arith.addf %63, %16 : vector<8x8xf32>
    %cst_38 = arith.constant dense<0xFF800000> : vector<8xf32>
    %65 = vector.multi_reduction <maximumf>, %64, %cst_38 [1] : vector<8x8xf32> to vector<8xf32>
    %66 = vector.shape_cast %65 : vector<8xf32> to vector<8x1xf32>
    %67 = vector.broadcast %66 : vector<8x1xf32> to vector<8x8xf32>
    %68 = arith.subf %64, %67 : vector<8x8xf32>
    %69 = math.exp %68 : vector<8x8xf32>
    %cst_39 = arith.constant dense<0.000000e+00> : vector<8xf32>
    %70 = vector.multi_reduction <add>, %69, %cst_39 [1] : vector<8x8xf32> to vector<8xf32>
    %71 = vector.shape_cast %70 : vector<8xf32> to vector<8x1xf32>
    %72 = vector.broadcast %71 : vector<8x1xf32> to vector<8x8xf32>
    %73 = arith.divf %69, %72 : vector<8x8xf32>
    %74 = vector.extract_strided_slice %29 {offsets = [0, 8], sizes = [8, 8], strides = [1, 1]} : vector<8x32xf32> to vector<8x8xf32>
    %cst_40 = arith.constant dense<0.000000e+00> : vector<8x8xf32>
    %75 = tpu.matmul %73, %74, %cst_40 {dimension_numbers = #tpu.dot_dimension_numbers<[1], [0], [0], [1], [0, 0, 1, 1], [], []>} : vector<8x8xf32>, vector<8x8xf32>, vector<8x8xf32> -> vector<8x8xf32>
    %c3_41 = arith.constant 3 : index
    %c8 = arith.constant 8 : index
    %c0_42 = arith.constant 0 : index
    %76 = vector.load %arg6[%c3_41, %c8, %c0_42] : memref<4x32x32xf32, #tpu.memory_space<vmem>>, vector<1x8x32xf32>
    %77 = vector.shape_cast %76 : vector<1x8x32xf32> to vector<8x32xf32>
    %cst_43 = arith.constant dense<0.000000e+00> : vector<8x32xf32>
    %78 = tpu.matmul %75, %77, %cst_43 {dimension_numbers = #tpu.dot_dimension_numbers<[1], [0], [0], [1], [0, 0, 1, 1], [], []>} : vector<8x8xf32>, vector<8x32xf32>, vector<8x32xf32> -> vector<8x32xf32>
    %79 = arith.addf %60, %78 : vector<8x32xf32>
    %80 = vector.extract_strided_slice %37 {offsets = [0, 16], sizes = [8, 8], strides = [1, 1]} : vector<8x32xf32> to vector<8x8xf32>
    %81 = vector.extract_strided_slice %28 {offsets = [0, 16], sizes = [8, 8], strides = [1, 1]} : vector<8x32xf32> to vector<8x8xf32>
    %cst_44 = arith.constant dense<0.000000e+00> : vector<8x8xf32>
    %82 = tpu.matmul %80, %81, %cst_44 {dimension_numbers = #tpu.dot_dimension_numbers<[1], [1], [0], [0], [0, 0, 1, 0], [], []>} : vector<8x8xf32>, vector<8x8xf32>, vector<8x8xf32> -> vector<8x8xf32>
    %83 = arith.addf %82, %16 : vector<8x8xf32>
    %cst_45 = arith.constant dense<0xFF800000> : vector<8xf32>
    %84 = vector.multi_reduction <maximumf>, %83, %cst_45 [1] : vector<8x8xf32> to vector<8xf32>
    %85 = vector.shape_cast %84 : vector<8xf32> to vector<8x1xf32>
    %86 = vector.broadcast %85 : vector<8x1xf32> to vector<8x8xf32>
    %87 = arith.subf %83, %86 : vector<8x8xf32>
    %88 = math.exp %87 : vector<8x8xf32>
    %cst_46 = arith.constant dense<0.000000e+00> : vector<8xf32>
    %89 = vector.multi_reduction <add>, %88, %cst_46 [1] : vector<8x8xf32> to vector<8xf32>
    %90 = vector.shape_cast %89 : vector<8xf32> to vector<8x1xf32>
    %91 = vector.broadcast %90 : vector<8x1xf32> to vector<8x8xf32>
    %92 = arith.divf %88, %91 : vector<8x8xf32>
    %93 = vector.extract_strided_slice %29 {offsets = [0, 16], sizes = [8, 8], strides = [1, 1]} : vector<8x32xf32> to vector<8x8xf32>
    %cst_47 = arith.constant dense<0.000000e+00> : vector<8x8xf32>
    %94 = tpu.matmul %92, %93, %cst_47 {dimension_numbers = #tpu.dot_dimension_numbers<[1], [0], [0], [1], [0, 0, 1, 1], [], []>} : vector<8x8xf32>, vector<8x8xf32>, vector<8x8xf32> -> vector<8x8xf32>
    %c3_48 = arith.constant 3 : index
    %c16 = arith.constant 16 : index
    %c0_49 = arith.constant 0 : index
    %95 = vector.load %arg6[%c3_48, %c16, %c0_49] : memref<4x32x32xf32, #tpu.memory_space<vmem>>, vector<1x8x32xf32>
    %96 = vector.shape_cast %95 : vector<1x8x32xf32> to vector<8x32xf32>
    %cst_50 = arith.constant dense<0.000000e+00> : vector<8x32xf32>
    %97 = tpu.matmul %94, %96, %cst_50 {dimension_numbers = #tpu.dot_dimension_numbers<[1], [0], [0], [1], [0, 0, 1, 1], [], []>} : vector<8x8xf32>, vector<8x32xf32>, vector<8x32xf32> -> vector<8x32xf32>
    %98 = arith.addf %79, %97 : vector<8x32xf32>
    %99 = vector.extract_strided_slice %37 {offsets = [0, 24], sizes = [8, 8], strides = [1, 1]} : vector<8x32xf32> to vector<8x8xf32>
    %100 = vector.extract_strided_slice %28 {offsets = [0, 24], sizes = [8, 8], strides = [1, 1]} : vector<8x32xf32> to vector<8x8xf32>
    %cst_51 = arith.constant dense<0.000000e+00> : vector<8x8xf32>
    %101 = tpu.matmul %99, %100, %cst_51 {dimension_numbers = #tpu.dot_dimension_numbers<[1], [1], [0], [0], [0, 0, 1, 0], [], []>} : vector<8x8xf32>, vector<8x8xf32>, vector<8x8xf32> -> vector<8x8xf32>
    %102 = arith.addf %101, %16 : vector<8x8xf32>
    %cst_52 = arith.constant dense<0xFF800000> : vector<8xf32>
    %103 = vector.multi_reduction <maximumf>, %102, %cst_52 [1] : vector<8x8xf32> to vector<8xf32>
    %104 = vector.shape_cast %103 : vector<8xf32> to vector<8x1xf32>
    %105 = vector.broadcast %104 : vector<8x1xf32> to vector<8x8xf32>
    %106 = arith.subf %102, %105 : vector<8x8xf32>
    %107 = math.exp %106 : vector<8x8xf32>
    %cst_53 = arith.constant dense<0.000000e+00> : vector<8xf32>
    %108 = vector.multi_reduction <add>, %107, %cst_53 [1] : vector<8x8xf32> to vector<8xf32>
    %109 = vector.shape_cast %108 : vector<8xf32> to vector<8x1xf32>
    %110 = vector.broadcast %109 : vector<8x1xf32> to vector<8x8xf32>
    %111 = arith.divf %107, %110 : vector<8x8xf32>
    %112 = vector.extract_strided_slice %29 {offsets = [0, 24], sizes = [8, 8], strides = [1, 1]} : vector<8x32xf32> to vector<8x8xf32>
    %cst_54 = arith.constant dense<0.000000e+00> : vector<8x8xf32>
    %113 = tpu.matmul %111, %112, %cst_54 {dimension_numbers = #tpu.dot_dimension_numbers<[1], [0], [0], [1], [0, 0, 1, 1], [], []>} : vector<8x8xf32>, vector<8x8xf32>, vector<8x8xf32> -> vector<8x8xf32>
    %c3_55 = arith.constant 3 : index
    %c24 = arith.constant 24 : index
    %c0_56 = arith.constant 0 : index
    %114 = vector.load %arg6[%c3_55, %c24, %c0_56] : memref<4x32x32xf32, #tpu.memory_space<vmem>>, vector<1x8x32xf32>
    %115 = vector.shape_cast %114 : vector<1x8x32xf32> to vector<8x32xf32>
    %cst_57 = arith.constant dense<0.000000e+00> : vector<8x32xf32>
    %116 = tpu.matmul %113, %115, %cst_57 {dimension_numbers = #tpu.dot_dimension_numbers<[1], [0], [0], [1], [0, 0, 1, 1], [], []>} : vector<8x8xf32>, vector<8x32xf32>, vector<8x32xf32> -> vector<8x32xf32>
    %117 = arith.addf %98, %116 : vector<8x32xf32>
    %118 = arith.addf %7, %117 : vector<8x32xf32>
    %c1 = arith.constant 1 : index
    %c0_58 = arith.constant 0 : index
    %119 = vector.load %arg14[%c1, %c0_58] : memref<3x32xf32, #tpu.memory_space<vmem>>, vector<1x32xf32>
    %120 = vector.shape_cast %119 : vector<1x32xf32> to vector<32xf32>
    %c1_59 = arith.constant 1 : index
    %c0_60 = arith.constant 0 : index
    %121 = vector.load %arg15[%c1_59, %c0_60] : memref<3x32xf32, #tpu.memory_space<vmem>>, vector<1x32xf32>
    %122 = vector.shape_cast %121 : vector<1x32xf32> to vector<32xf32>
    %cst_61 = arith.constant dense<0.000000e+00> : vector<8xf32>
    %123 = vector.multi_reduction <add>, %118, %cst_61 [1] : vector<8x32xf32> to vector<8xf32>
    %124 = vector.shape_cast %123 : vector<8xf32> to vector<8x1xf32>
    %cst_62 = arith.constant 3.200000e+01 : f32
    %125 = vector.broadcast %cst_62 : f32 to vector<8x1xf32>
    %126 = arith.divf %124, %125 : vector<8x1xf32>
    %127 = vector.broadcast %126 : vector<8x1xf32> to vector<8x32xf32>
    %128 = arith.subf %118, %127 : vector<8x32xf32>
    %129 = arith.mulf %128, %128 : vector<8x32xf32>
    %cst_63 = arith.constant dense<0.000000e+00> : vector<8xf32>
    %130 = vector.multi_reduction <add>, %129, %cst_63 [1] : vector<8x32xf32> to vector<8xf32>
    %131 = vector.shape_cast %130 : vector<8xf32> to vector<8x1xf32>
    %cst_64 = arith.constant 0.0322580636 : f32
    %132 = vector.broadcast %cst_64 : f32 to vector<8x1xf32>
    %133 = arith.mulf %131, %132 : vector<8x1xf32>
    %134 = math.sqrt %133 : vector<8x1xf32>
    %cst_65 = arith.constant 9.99999997E-7 : f32
    %135 = vector.broadcast %cst_65 : f32 to vector<8x1xf32>
    %136 = arith.addf %134, %135 : vector<8x1xf32>
    %137 = vector.broadcast %136 : vector<8x1xf32> to vector<8x32xf32>
    %138 = arith.divf %128, %137 : vector<8x32xf32>
    %139 = vector.shape_cast %120 : vector<32xf32> to vector<1x32xf32>
    %140 = vector.broadcast %139 : vector<1x32xf32> to vector<8x32xf32>
    %141 = arith.mulf %140, %138 : vector<8x32xf32>
    %142 = vector.shape_cast %122 : vector<32xf32> to vector<1x32xf32>
    %143 = vector.broadcast %142 : vector<1x32xf32> to vector<8x32xf32>
    %144 = arith.addf %141, %143 : vector<8x32xf32>
    %c0_66 = arith.constant 0 : index
    %c0_67 = arith.constant 0 : index
    %145 = vector.load %arg20[%c0_66, %c0_67] : memref<8x32xf32, #tpu.memory_space<vmem>>, vector<8x32xf32>
    %c0_68 = arith.constant 0 : index
    %c0_69 = arith.constant 0 : index
    %146 = vector.load %arg21[%c0_68, %c0_69] : memref<8x32xf32, #tpu.memory_space<vmem>>, vector<8x32xf32>
    %c0_70 = arith.constant 0 : index
    %c0_71 = arith.constant 0 : index
    %c0_72 = arith.constant 0 : index
    %147 = vector.load %arg8[%c0_70, %c0_71, %c0_72] : memref<4x32x32xf32, #tpu.memory_space<vmem>>, vector<1x32x32xf32>
    %148 = vector.shape_cast %147 : vector<1x32x32xf32> to vector<32x32xf32>
    %cst_73 = arith.constant dense<0.000000e+00> : vector<8x32xf32>
    %149 = tpu.matmul %144, %148, %cst_73 {dimension_numbers = #tpu.dot_dimension_numbers<[1], [0], [0], [1], [0, 0, 1, 1], [], []>} : vector<8x32xf32>, vector<32x32xf32>, vector<8x32xf32> -> vector<8x32xf32>
    %c0_74 = arith.constant 0 : index
    %c0_75 = arith.constant 0 : index
    %150 = vector.load %arg9[%c0_74, %c0_75] : memref<4x32xf32, #tpu.memory_space<vmem>>, vector<1x32xf32>
    %151 = vector.shape_cast %150 : vector<1x32xf32> to vector<32xf32>
    %152 = vector.shape_cast %151 : vector<32xf32> to vector<1x32xf32>
    %153 = vector.broadcast %152 : vector<1x32xf32> to vector<8x32xf32>
    %154 = arith.addf %149, %153 : vector<8x32xf32>
    %c3_76 = arith.constant 3 : index
    %c0_77 = arith.constant 0 : index
    %155 = vector.load %arg9[%c3_76, %c0_77] : memref<4x32xf32, #tpu.memory_space<vmem>>, vector<1x32xf32>
    %156 = vector.shape_cast %155 : vector<1x32xf32> to vector<32xf32>
    %157 = vector.extract_strided_slice %154 {offsets = [0, 0], sizes = [8, 8], strides = [1, 1]} : vector<8x32xf32> to vector<8x8xf32>
    %158 = vector.extract_strided_slice %145 {offsets = [0, 0], sizes = [8, 8], strides = [1, 1]} : vector<8x32xf32> to vector<8x8xf32>
    %cst_78 = arith.constant dense<0.000000e+00> : vector<8x8xf32>
    %159 = tpu.matmul %157, %158, %cst_78 {dimension_numbers = #tpu.dot_dimension_numbers<[1], [1], [0], [0], [0, 0, 1, 0], [], []>} : vector<8x8xf32>, vector<8x8xf32>, vector<8x8xf32> -> vector<8x8xf32>
    %160 = arith.addf %159, %23 : vector<8x8xf32>
    %cst_79 = arith.constant dense<0xFF800000> : vector<8xf32>
    %161 = vector.multi_reduction <maximumf>, %160, %cst_79 [1] : vector<8x8xf32> to vector<8xf32>
    %162 = vector.shape_cast %161 : vector<8xf32> to vector<8x1xf32>
    %163 = vector.broadcast %162 : vector<8x1xf32> to vector<8x8xf32>
    %164 = arith.subf %160, %163 : vector<8x8xf32>
    %165 = math.exp %164 : vector<8x8xf32>
    %cst_80 = arith.constant dense<0.000000e+00> : vector<8xf32>
    %166 = vector.multi_reduction <add>, %165, %cst_80 [1] : vector<8x8xf32> to vector<8xf32>
    %167 = vector.shape_cast %166 : vector<8xf32> to vector<8x1xf32>
    %168 = vector.broadcast %167 : vector<8x1xf32> to vector<8x8xf32>
    %169 = arith.divf %165, %168 : vector<8x8xf32>
    %170 = vector.extract_strided_slice %146 {offsets = [0, 0], sizes = [8, 8], strides = [1, 1]} : vector<8x32xf32> to vector<8x8xf32>
    %cst_81 = arith.constant dense<0.000000e+00> : vector<8x8xf32>
    %171 = tpu.matmul %169, %170, %cst_81 {dimension_numbers = #tpu.dot_dimension_numbers<[1], [0], [0], [1], [0, 0, 1, 1], [], []>} : vector<8x8xf32>, vector<8x8xf32>, vector<8x8xf32> -> vector<8x8xf32>
    %c3_82 = arith.constant 3 : index
    %c0_83 = arith.constant 0 : index
    %c0_84 = arith.constant 0 : index
    %172 = vector.load %arg8[%c3_82, %c0_83, %c0_84] : memref<4x32x32xf32, #tpu.memory_space<vmem>>, vector<1x8x32xf32>
    %173 = vector.shape_cast %172 : vector<1x8x32xf32> to vector<8x32xf32>
    %cst_85 = arith.constant dense<0.000000e+00> : vector<8x32xf32>
    %174 = tpu.matmul %171, %173, %cst_85 {dimension_numbers = #tpu.dot_dimension_numbers<[1], [0], [0], [1], [0, 0, 1, 1], [], []>} : vector<8x8xf32>, vector<8x32xf32>, vector<8x32xf32> -> vector<8x32xf32>
    %175 = vector.shape_cast %156 : vector<32xf32> to vector<1x32xf32>
    %176 = vector.broadcast %175 : vector<1x32xf32> to vector<8x32xf32>
    %177 = arith.addf %176, %174 : vector<8x32xf32>
    %178 = vector.extract_strided_slice %154 {offsets = [0, 8], sizes = [8, 8], strides = [1, 1]} : vector<8x32xf32> to vector<8x8xf32>
    %179 = vector.extract_strided_slice %145 {offsets = [0, 8], sizes = [8, 8], strides = [1, 1]} : vector<8x32xf32> to vector<8x8xf32>
    %cst_86 = arith.constant dense<0.000000e+00> : vector<8x8xf32>
    %180 = tpu.matmul %178, %179, %cst_86 {dimension_numbers = #tpu.dot_dimension_numbers<[1], [1], [0], [0], [0, 0, 1, 0], [], []>} : vector<8x8xf32>, vector<8x8xf32>, vector<8x8xf32> -> vector<8x8xf32>
    %181 = arith.addf %180, %23 : vector<8x8xf32>
    %cst_87 = arith.constant dense<0xFF800000> : vector<8xf32>
    %182 = vector.multi_reduction <maximumf>, %181, %cst_87 [1] : vector<8x8xf32> to vector<8xf32>
    %183 = vector.shape_cast %182 : vector<8xf32> to vector<8x1xf32>
    %184 = vector.broadcast %183 : vector<8x1xf32> to vector<8x8xf32>
    %185 = arith.subf %181, %184 : vector<8x8xf32>
    %186 = math.exp %185 : vector<8x8xf32>
    %cst_88 = arith.constant dense<0.000000e+00> : vector<8xf32>
    %187 = vector.multi_reduction <add>, %186, %cst_88 [1] : vector<8x8xf32> to vector<8xf32>
    %188 = vector.shape_cast %187 : vector<8xf32> to vector<8x1xf32>
    %189 = vector.broadcast %188 : vector<8x1xf32> to vector<8x8xf32>
    %190 = arith.divf %186, %189 : vector<8x8xf32>
    %191 = vector.extract_strided_slice %146 {offsets = [0, 8], sizes = [8, 8], strides = [1, 1]} : vector<8x32xf32> to vector<8x8xf32>
    %cst_89 = arith.constant dense<0.000000e+00> : vector<8x8xf32>
    %192 = tpu.matmul %190, %191, %cst_89 {dimension_numbers = #tpu.dot_dimension_numbers<[1], [0], [0], [1], [0, 0, 1, 1], [], []>} : vector<8x8xf32>, vector<8x8xf32>, vector<8x8xf32> -> vector<8x8xf32>
    %c3_90 = arith.constant 3 : index
    %c8_91 = arith.constant 8 : index
    %c0_92 = arith.constant 0 : index
    %193 = vector.load %arg8[%c3_90, %c8_91, %c0_92] : memref<4x32x32xf32, #tpu.memory_space<vmem>>, vector<1x8x32xf32>
    %194 = vector.shape_cast %193 : vector<1x8x32xf32> to vector<8x32xf32>
    %cst_93 = arith.constant dense<0.000000e+00> : vector<8x32xf32>
    %195 = tpu.matmul %192, %194, %cst_93 {dimension_numbers = #tpu.dot_dimension_numbers<[1], [0], [0], [1], [0, 0, 1, 1], [], []>} : vector<8x8xf32>, vector<8x32xf32>, vector<8x32xf32> -> vector<8x32xf32>
    %196 = arith.addf %177, %195 : vector<8x32xf32>
    %197 = vector.extract_strided_slice %154 {offsets = [0, 16], sizes = [8, 8], strides = [1, 1]} : vector<8x32xf32> to vector<8x8xf32>
    %198 = vector.extract_strided_slice %145 {offsets = [0, 16], sizes = [8, 8], strides = [1, 1]} : vector<8x32xf32> to vector<8x8xf32>
    %cst_94 = arith.constant dense<0.000000e+00> : vector<8x8xf32>
    %199 = tpu.matmul %197, %198, %cst_94 {dimension_numbers = #tpu.dot_dimension_numbers<[1], [1], [0], [0], [0, 0, 1, 0], [], []>} : vector<8x8xf32>, vector<8x8xf32>, vector<8x8xf32> -> vector<8x8xf32>
    %200 = arith.addf %199, %23 : vector<8x8xf32>
    %cst_95 = arith.constant dense<0xFF800000> : vector<8xf32>
    %201 = vector.multi_reduction <maximumf>, %200, %cst_95 [1] : vector<8x8xf32> to vector<8xf32>
    %202 = vector.shape_cast %201 : vector<8xf32> to vector<8x1xf32>
    %203 = vector.broadcast %202 : vector<8x1xf32> to vector<8x8xf32>
    %204 = arith.subf %200, %203 : vector<8x8xf32>
    %205 = math.exp %204 : vector<8x8xf32>
    %cst_96 = arith.constant dense<0.000000e+00> : vector<8xf32>
    %206 = vector.multi_reduction <add>, %205, %cst_96 [1] : vector<8x8xf32> to vector<8xf32>
    %207 = vector.shape_cast %206 : vector<8xf32> to vector<8x1xf32>
    %208 = vector.broadcast %207 : vector<8x1xf32> to vector<8x8xf32>
    %209 = arith.divf %205, %208 : vector<8x8xf32>
    %210 = vector.extract_strided_slice %146 {offsets = [0, 16], sizes = [8, 8], strides = [1, 1]} : vector<8x32xf32> to vector<8x8xf32>
    %cst_97 = arith.constant dense<0.000000e+00> : vector<8x8xf32>
    %211 = tpu.matmul %209, %210, %cst_97 {dimension_numbers = #tpu.dot_dimension_numbers<[1], [0], [0], [1], [0, 0, 1, 1], [], []>} : vector<8x8xf32>, vector<8x8xf32>, vector<8x8xf32> -> vector<8x8xf32>
    %c3_98 = arith.constant 3 : index
    %c16_99 = arith.constant 16 : index
    %c0_100 = arith.constant 0 : index
    %212 = vector.load %arg8[%c3_98, %c16_99, %c0_100] : memref<4x32x32xf32, #tpu.memory_space<vmem>>, vector<1x8x32xf32>
    %213 = vector.shape_cast %212 : vector<1x8x32xf32> to vector<8x32xf32>
    %cst_101 = arith.constant dense<0.000000e+00> : vector<8x32xf32>
    %214 = tpu.matmul %211, %213, %cst_101 {dimension_numbers = #tpu.dot_dimension_numbers<[1], [0], [0], [1], [0, 0, 1, 1], [], []>} : vector<8x8xf32>, vector<8x32xf32>, vector<8x32xf32> -> vector<8x32xf32>
    %215 = arith.addf %196, %214 : vector<8x32xf32>
    %216 = vector.extract_strided_slice %154 {offsets = [0, 24], sizes = [8, 8], strides = [1, 1]} : vector<8x32xf32> to vector<8x8xf32>
    %217 = vector.extract_strided_slice %145 {offsets = [0, 24], sizes = [8, 8], strides = [1, 1]} : vector<8x32xf32> to vector<8x8xf32>
    %cst_102 = arith.constant dense<0.000000e+00> : vector<8x8xf32>
    %218 = tpu.matmul %216, %217, %cst_102 {dimension_numbers = #tpu.dot_dimension_numbers<[1], [1], [0], [0], [0, 0, 1, 0], [], []>} : vector<8x8xf32>, vector<8x8xf32>, vector<8x8xf32> -> vector<8x8xf32>
    %219 = arith.addf %218, %23 : vector<8x8xf32>
    %cst_103 = arith.constant dense<0xFF800000> : vector<8xf32>
    %220 = vector.multi_reduction <maximumf>, %219, %cst_103 [1] : vector<8x8xf32> to vector<8xf32>
    %221 = vector.shape_cast %220 : vector<8xf32> to vector<8x1xf32>
    %222 = vector.broadcast %221 : vector<8x1xf32> to vector<8x8xf32>
    %223 = arith.subf %219, %222 : vector<8x8xf32>
    %224 = math.exp %223 : vector<8x8xf32>
    %cst_104 = arith.constant dense<0.000000e+00> : vector<8xf32>
    %225 = vector.multi_reduction <add>, %224, %cst_104 [1] : vector<8x8xf32> to vector<8xf32>
    %226 = vector.shape_cast %225 : vector<8xf32> to vector<8x1xf32>
    %227 = vector.broadcast %226 : vector<8x1xf32> to vector<8x8xf32>
    %228 = arith.divf %224, %227 : vector<8x8xf32>
    %229 = vector.extract_strided_slice %146 {offsets = [0, 24], sizes = [8, 8], strides = [1, 1]} : vector<8x32xf32> to vector<8x8xf32>
    %cst_105 = arith.constant dense<0.000000e+00> : vector<8x8xf32>
    %230 = tpu.matmul %228, %229, %cst_105 {dimension_numbers = #tpu.dot_dimension_numbers<[1], [0], [0], [1], [0, 0, 1, 1], [], []>} : vector<8x8xf32>, vector<8x8xf32>, vector<8x8xf32> -> vector<8x8xf32>
    %c3_106 = arith.constant 3 : index
    %c24_107 = arith.constant 24 : index
    %c0_108 = arith.constant 0 : index
    %231 = vector.load %arg8[%c3_106, %c24_107, %c0_108] : memref<4x32x32xf32, #tpu.memory_space<vmem>>, vector<1x8x32xf32>
    %232 = vector.shape_cast %231 : vector<1x8x32xf32> to vector<8x32xf32>
    %cst_109 = arith.constant dense<0.000000e+00> : vector<8x32xf32>
    %233 = tpu.matmul %230, %232, %cst_109 {dimension_numbers = #tpu.dot_dimension_numbers<[1], [0], [0], [1], [0, 0, 1, 1], [], []>} : vector<8x8xf32>, vector<8x32xf32>, vector<8x32xf32> -> vector<8x32xf32>
    %234 = arith.addf %215, %233 : vector<8x32xf32>
    %235 = arith.addf %118, %234 : vector<8x32xf32>
    %c2 = arith.constant 2 : index
    %c0_110 = arith.constant 0 : index
    %236 = vector.load %arg14[%c2, %c0_110] : memref<3x32xf32, #tpu.memory_space<vmem>>, vector<1x32xf32>
    %237 = vector.shape_cast %236 : vector<1x32xf32> to vector<32xf32>
    %c2_111 = arith.constant 2 : index
    %c0_112 = arith.constant 0 : index
    %238 = vector.load %arg15[%c2_111, %c0_112] : memref<3x32xf32, #tpu.memory_space<vmem>>, vector<1x32xf32>
    %239 = vector.shape_cast %238 : vector<1x32xf32> to vector<32xf32>
    %cst_113 = arith.constant dense<0.000000e+00> : vector<8xf32>
    %240 = vector.multi_reduction <add>, %235, %cst_113 [1] : vector<8x32xf32> to vector<8xf32>
    %241 = vector.shape_cast %240 : vector<8xf32> to vector<8x1xf32>
    %cst_114 = arith.constant 3.200000e+01 : f32
    %242 = vector.broadcast %cst_114 : f32 to vector<8x1xf32>
    %243 = arith.divf %241, %242 : vector<8x1xf32>
    %244 = vector.broadcast %243 : vector<8x1xf32> to vector<8x32xf32>
    %245 = arith.subf %235, %244 : vector<8x32xf32>
    %246 = arith.mulf %245, %245 : vector<8x32xf32>
    %cst_115 = arith.constant dense<0.000000e+00> : vector<8xf32>
    %247 = vector.multi_reduction <add>, %246, %cst_115 [1] : vector<8x32xf32> to vector<8xf32>
    %248 = vector.shape_cast %247 : vector<8xf32> to vector<8x1xf32>
    %cst_116 = arith.constant 0.0322580636 : f32
    %249 = vector.broadcast %cst_116 : f32 to vector<8x1xf32>
    %250 = arith.mulf %248, %249 : vector<8x1xf32>
    %251 = math.sqrt %250 : vector<8x1xf32>
    %cst_117 = arith.constant 9.99999997E-7 : f32
    %252 = vector.broadcast %cst_117 : f32 to vector<8x1xf32>
    %253 = arith.addf %251, %252 : vector<8x1xf32>
    %254 = vector.broadcast %253 : vector<8x1xf32> to vector<8x32xf32>
    %255 = arith.divf %245, %254 : vector<8x32xf32>
    %256 = vector.shape_cast %237 : vector<32xf32> to vector<1x32xf32>
    %257 = vector.broadcast %256 : vector<1x32xf32> to vector<8x32xf32>
    %258 = arith.mulf %257, %255 : vector<8x32xf32>
    %259 = vector.shape_cast %239 : vector<32xf32> to vector<1x32xf32>
    %260 = vector.broadcast %259 : vector<1x32xf32> to vector<8x32xf32>
    %261 = arith.addf %258, %260 : vector<8x32xf32>
    %c0_118 = arith.constant 0 : index
    %c0_119 = arith.constant 0 : index
    %262 = vector.load %arg10[%c0_118, %c0_119] : memref<32x64xf32, #tpu.memory_space<vmem>>, vector<32x64xf32>
    %cst_120 = arith.constant dense<0.000000e+00> : vector<8x64xf32>
    %263 = tpu.matmul %261, %262, %cst_120 {dimension_numbers = #tpu.dot_dimension_numbers<[1], [0], [0], [1], [0, 0, 1, 1], [], []>} : vector<8x32xf32>, vector<32x64xf32>, vector<8x64xf32> -> vector<8x64xf32>
    %264 = vector.shape_cast %25 : vector<64xf32> to vector<1x64xf32>
    %265 = vector.broadcast %264 : vector<1x64xf32> to vector<8x64xf32>
    %266 = arith.addf %263, %265 : vector<8x64xf32>
    %cst_121 = arith.constant 0.000000e+00 : f32
    %267 = vector.broadcast %cst_121 : f32 to vector<8x64xf32>
    %268 = arith.maximumf %266, %267 : vector<8x64xf32>
    %c0_122 = arith.constant 0 : index
    %c0_123 = arith.constant 0 : index
    %269 = vector.load %arg12[%c0_122, %c0_123] : memref<64x32xf32, #tpu.memory_space<vmem>>, vector<64x32xf32>
    %cst_124 = arith.constant dense<0.000000e+00> : vector<8x32xf32>
    %270 = tpu.matmul %268, %269, %cst_124 {dimension_numbers = #tpu.dot_dimension_numbers<[1], [0], [0], [1], [0, 0, 1, 1], [], []>} : vector<8x64xf32>, vector<64x32xf32>, vector<8x32xf32> -> vector<8x32xf32>
    %271 = arith.addf %235, %270 : vector<8x32xf32>
    %272 = vector.shape_cast %27 : vector<32xf32> to vector<1x32xf32>
    %273 = vector.broadcast %272 : vector<1x32xf32> to vector<8x32xf32>
    %274 = arith.addf %271, %273 : vector<8x32xf32>
    %c0_125 = arith.constant 0 : index
    %c0_126 = arith.constant 0 : index
    %c0_127 = arith.constant 0 : index
    %275 = vector.load %arg16[%c0_125, %c0_126, %c0_127] : memref<1x8x32xf32, #tpu.memory_space<vmem>>, vector<1x8x32xf32>
    %276 = vector.shape_cast %275 : vector<1x8x32xf32> to vector<8x32xf32>
    %277 = vector.shape_cast %274 : vector<8x32xf32> to vector<1x8x32xf32>
    tpu.vector_store %arg16[%c0_125, %c0_126, %c0_127], %277 {strides = array<i32>} : memref<1x8x32xf32, #tpu.memory_space<vmem>>, vector<1x8x32xf32>,
    return
  }
  func.func @transform_0(%arg0: i32, %arg1: i32) -> (i32, i32, i32) {
    %c0_i32 = arith.constant 0 : i32
    %c0_i32_0 = arith.constant 0 : i32
    %c0_i32_1 = arith.constant 0 : i32
    return %arg0, %c0_i32, %c0_i32_0 : i32, i32, i32
  }
  func.func @transform_1(%arg0: i32, %arg1: i32) -> (i32, i32, i32) {
    %c0_i32 = arith.constant 0 : i32
    %c0_i32_0 = arith.constant 0 : i32
    %c0_i32_1 = arith.constant 0 : i32
    return %arg0, %c0_i32, %c0_i32_0 : i32, i32, i32
  }
  func.func @transform_2(%arg0: i32, %arg1: i32) -> (i32, i32, i32) {
    %c0_i32 = arith.constant 0 : i32
    %c0_i32_0 = arith.constant 0 : i32
    return %arg0, %arg1, %c0_i32 : i32, i32, i32
  }
  func.func @transform_3(%arg0: i32, %arg1: i32) -> (i32, i32, i32) {
    %c0_i32 = arith.constant 0 : i32
    %c0_i32_0 = arith.constant 0 : i32
    return %arg0, %arg1, %c0_i32 : i32, i32, i32
  }
  func.func @transform_4(%arg0: i32, %arg1: i32) -> (i32, i32, i32) {
    %c0_i32 = arith.constant 0 : i32
    %c0_i32_0 = arith.constant 0 : i32
    %c0_i32_1 = arith.constant 0 : i32
    %c0_i32_2 = arith.constant 0 : i32
    return %c0_i32, %c0_i32_0, %c0_i32_1 : i32, i32, i32
  }
  func.func @transform_5(%arg0: i32, %arg1: i32) -> (i32, i32) {
    %c0_i32 = arith.constant 0 : i32
    %c0_i32_0 = arith.constant 0 : i32
    %c0_i32_1 = arith.constant 0 : i32
    return %c0_i32, %c0_i32_0 : i32, i32
  }
  func.func @transform_6(%arg0: i32, %arg1: i32) -> (i32, i32, i32) {
    %c0_i32 = arith.constant 0 : i32
    %c0_i32_0 = arith.constant 0 : i32
    %c0_i32_1 = arith.constant 0 : i32
    %c0_i32_2 = arith.constant 0 : i32
    return %c0_i32, %c0_i32_0, %c0_i32_1 : i32, i32, i32
  }
  func.func @transform_7(%arg0: i32, %arg1: i32) -> (i32, i32) {
    %c0_i32 = arith.constant 0 : i32
    %c0_i32_0 = arith.constant 0 : i32
    %c0_i32_1 = arith.constant 0 : i32
    return %c0_i32, %c0_i32_0 : i32, i32
  }
  func.func @transform_8(%arg0: i32, %arg1: i32) -> (i32, i32) {
    %c0_i32 = arith.constant 0 : i32
    %c0_i32_0 = arith.constant 0 : i32
    %c0_i32_1 = arith.constant 0 : i32
    return %c0_i32, %c0_i32_0 : i32, i32
  }
  func.func @transform_9(%arg0: i32, %arg1: i32) -> (i32, i32) {
    %c0_i32 = arith.constant 0 : i32
    %c0_i32_0 = arith.constant 0 : i32
    %c0_i32_1 = arith.constant 0 : i32
    return %c0_i32, %c0_i32_0 : i32, i32
  }
  func.func @transform_10(%arg0: i32, %arg1: i32) -> (i32, i32) {
    %c0_i32 = arith.constant 0 : i32
    %c0_i32_0 = arith.constant 0 : i32
    %c0_i32_1 = arith.constant 0 : i32
    return %c0_i32, %c0_i32_0 : i32, i32
  }
  func.func @transform_11(%arg0: i32, %arg1: i32) -> (i32, i32) {
    %c0_i32 = arith.constant 0 : i32
    %c0_i32_0 = arith.constant 0 : i32
    %c0_i32_1 = arith.constant 0 : i32
    return %c0_i32, %c0_i32_0 : i32, i32
  }
  func.func @transform_12(%arg0: i32, %arg1: i32) -> (i32, i32) {
    %c0_i32 = arith.constant 0 : i32
    %c0_i32_0 = arith.constant 0 : i32
    %c0_i32_1 = arith.constant 0 : i32
    return %c0_i32, %c0_i32_0 : i32, i32
  }
  func.func @transform_13(%arg0: i32, %arg1: i32) -> (i32, i32) {
    %c0_i32 = arith.constant 0 : i32
    %c0_i32_0 = arith.constant 0 : i32
    %c0_i32_1 = arith.constant 0 : i32
    return %c0_i32, %c0_i32_0 : i32, i32
  }
  func.func @transform_14(%arg0: i32, %arg1: i32) -> (i32, i32, i32) {
    %c0_i32 = arith.constant 0 : i32
    %c0_i32_0 = arith.constant 0 : i32
    return %arg0, %arg1, %c0_i32 : i32, i32, i32
  }
}

</mosaic_0001>

<llo_original>
// kernel: tpu_custom_call.1
$region0: #{tpu_custom_call.1}
  #allocation0 [shape = 'u32[]', space=smem, size = 0x4, offset = 0x4, fixed_abs, tag = 'smem constant byte address 0x4 - core index']
  #allocation1 [shape = 'u32[144,128]{1,0:T(1,128)}', space=vmem, size = 0x12000, scoped, tag = 'internal scratch']
  #allocation2 [shape = 'f32[8,32]{1,0:T(8,128)}', space=vmem, size = 0x1000, scoped, tag = 'scratch operand']
  #allocation3 [shape = 'f32[8,32]{1,0:T(8,128)}', space=vmem, size = 0x1000, scoped, tag = 'scratch operand']
  #allocation4 [shape = 'f32[8,32]{1,0:T(8,128)}', space=vmem, size = 0x1000, scoped, tag = 'scratch operand']
  #allocation5 [shape = 'f32[8,32]{1,0:T(8,128)}', space=vmem, size = 0x1000, scoped, tag = 'scratch operand']
  #allocation6 [shape = 'f32[8,32]{1,0:T(8,128)}', space=vmem, size = 0x1000, scoped, tag = 'scratch operand']
  %s0 = inlined_call_operand.hbm [shape: f32[2,8,32], index: 0, kind: input, shape index: {}]
  %s1 = inlined_call_operand.hbm [shape: f32[2,8,32], index: 1, kind: input, shape index: {}]
  %s2 = inlined_call_operand.hbm [shape: f32[2,8,8], index: 2, kind: input, shape index: {}]
  %s3 = inlined_call_operand.hbm [shape: f32[2,8,8], index: 3, kind: input, shape index: {}]
  %s4 = inlined_call_operand.hbm [shape: f32[4,32,32], index: 4, kind: input, shape index: {}]
  %s5 = inlined_call_operand.hbm [shape: f32[4,32], index: 5, kind: input, shape index: {}]
  %s6 = inlined_call_operand.hbm [shape: f32[4,32,32], index: 6, kind: input, shape index: {}]
  %s7 = inlined_call_operand.hbm [shape: f32[4,32], index: 7, kind: input, shape index: {}]
  %s8 = inlined_call_operand.hbm [shape: f32[32,64], index: 8, kind: input, shape index: {}]
  %s9 = inlined_call_operand.hbm [shape: f32[1,64], index: 9, kind: input, shape index: {}]
  %s10 = inlined_call_operand.hbm [shape: f32[64,32], index: 10, kind: input, shape index: {}]
  %s11 = inlined_call_operand.hbm [shape: f32[1,32], index: 11, kind: input, shape index: {}]
  %s12 = inlined_call_operand.hbm [shape: f32[3,32], index: 12, kind: input, shape index: {}]
  %s13 = inlined_call_operand.hbm [shape: f32[3,32], index: 13, kind: input, shape index: {}]
  %s14 = inlined_call_operand.hbm [shape: f32[2,8,32], index: 14, kind: output, shape index: {}]
  %s15 = sld [smem:[#allocation0]]
  $region149: #{tpu_custom_call.1} parent=0
    _
  %s17 = ssub.s32 1, %s15
  %s18 = scalar_select 0, %s17, %s15
  $region1: #{tpu_custom_call.1} parent=0
    #allocation7 [shape = 'u8[8192]{0}', space=vmem, size = 0x2000, scoped, tag = 'input window, operand 0']
    #allocation8 [shape = 's32[2]{0}', space=sflag, size = 0x8, scoped, tag = 'scoped memory for tpu_custom_call.1']
    #allocation9 [shape = 's32[2]{0}', space=sflag, size = 0x8, scoped, tag = 'scoped memory for tpu_custom_call.1']
    #allocation10 [shape = 'u8[8192]{0}', space=vmem, size = 0x2000, scoped, tag = 'input window, operand 1']
    #allocation11 [shape = 's32[2]{0}', space=sflag, size = 0x8, scoped, tag = 'scoped memory for tpu_custom_call.1']
    #allocation12 [shape = 'u8[8192]{0}', space=vmem, size = 0x2000, scoped, tag = 'input window, operand 2']
    #allocation13 [shape = 'u8[8192]{0}', space=vmem, size = 0x2000, scoped, tag = 'input window, operand 3']
    #allocation14 [shape = 's32[2]{0}', space=sflag, size = 0x8, scoped, tag = 'scoped memory for tpu_custom_call.1']
    #allocation15 [shape = 'u8[65536]{0}', space=vmem, size = 0x10000, scoped, tag = 'input window, operand 4, single buffered']
    #allocation16 [shape = 'u8[2048]{0}', space=vmem, size = 0x800, scoped, tag = 'input window, operand 5, single buffered']
    #allocation17 [shape = 's32[1]{0}', space=sflag, size = 0x4, scoped, tag = 'scoped memory for tpu_custom_call.1']
    #allocation18 [shape = 'u8[65536]{0}', space=vmem, size = 0x10000, scoped, tag = 'input window, operand 6, single buffered']
    #allocation19 [shape = 'u8[2048]{0}', space=vmem, size = 0x800, scoped, tag = 'input window, operand 7, single buffered']
    #allocation20 [shape = 's32[1]{0}', space=sflag, size = 0x4, scoped, tag = 'scoped memory for tpu_custom_call.1']
    #allocation21 [shape = 'u8[16384]{0}', space=vmem, size = 0x4000, scoped, tag = 'input window, operand 8, single buffered']
    #allocation22 [shape = 'u8[512]{0}', space=vmem, size = 0x400, scoped, tag = 'input window, operand 9, single buffered']
    #allocation23 [shape = 's32[1]{0}', space=sflag, size = 0x4, scoped, tag = 'scoped memory for tpu_custom_call.1']
    #allocation24 [shape = 'u8[32768]{0}', space=vmem, size = 0x8000, scoped, tag = 'input window, operand 10, single buffered']
    #allocation25 [shape = 'u8[512]{0}', space=vmem, size = 0x400, scoped, tag = 'input window, operand 11, single buffered']
    #allocation26 [shape = 's32[1]{0}', space=sflag, size = 0x4, scoped, tag = 'scoped memory for tpu_custom_call.1']
    #allocation27 [shape = 'u8[2048]{0}', space=vmem, size = 0x800, scoped, tag = 'input window, operand 12, single buffered']
    #allocation28 [shape = 'u8[2048]{0}', space=vmem, size = 0x800, scoped, tag = 'input window, operand 13, single buffered']
    #allocation29 [shape = 's32[1]{0}', space=sflag, size = 0x4, scoped, tag = 'scoped memory for tpu_custom_call.1']
    #allocation30 [shape = 'u8[8192]{0}', space=vmem, size = 0x2000, scoped, tag = 'output window, operand 0']
    %19 = vsyncpa [#allocation8], 0
    %s20 = scalar_lea.sflag [#allocation8], 1
    %21 = vsyncpa %s20, 0
    %22 = vsyncpa [#allocation11], 0
    %s23 = scalar_lea.sflag [#allocation11], 1
    %24 = vsyncpa %s23, 0
    %25 = vsyncpa [#allocation14], 0
    %s26 = scalar_lea.sflag [#allocation14], 1
    %27 = vsyncpa %s26, 0
    %28 = vsyncpa [#allocation17], 0
    %29 = vsyncpa [#allocation20], 0
    %30 = vsyncpa [#allocation23], 0
    %31 = vsyncpa [#allocation26], 0
    %32 = vsyncpa [#allocation29], 0
    %33 = vsyncpa [#allocation9], 0
    %s34 = scalar_lea.sflag [#allocation9], 1
    %35 = vsyncpa %s34, 0
    loop: start=0, step=1, limit=4
    $region2: #{tpu_custom_call.1} parent=1 // loop_pre_header
      _
    $region3: #{tpu_custom_call.1} parent=1 // loop_header
      %s37 = sphi 0, %s41
      %p38 = scmp.ge.s32.totalorder %s37, 4
      %s44 = sphi 0, %s56
      %s45 = sphi 0, %s52
      %s46 = sphi 0, %s44
      %s47 = sphi 0, %s45
      %s48 = sphi 0, %s46
      %s49 = sphi 0, %s47
      %s59 = sphi 0, %s61
      %s62 = sphi 0, %s59
      %s63 = sphi 0, %s62
      %s79 = sphi 0, %s63
      %s85 = sphi 0, %s87
      %s88 = sphi 0, %s85
      %s89 = sphi 0, %s88
      %s105 = sphi 0, %s89
      %s113 = sphi 0, %s115
      %s116 = sphi 0, %s113
      %s117 = sphi 0, %s116
      %s133 = sphi 0, %s117
      %s141 = sphi 0, %s143
      %s144 = sphi 0, %s141
      %s145 = sphi 0, %s144
      %s161 = sphi 0, %s145
      %s165 = sphi 0, %s165
      %s167 = sphi 0, %s165
      %s168 = sphi 0, %s167
      %s182 = sphi 0, %s168
      %s186 = sphi 0, %s186
      %s188 = sphi 0, %s186
      %s189 = sphi 0, %s188
      %s203 = sphi 0, %s189
      %s207 = sphi 0, %s207
      %s209 = sphi 0, %s207
      %s210 = sphi 0, %s209
      %s224 = sphi 0, %s210
      %s228 = sphi 0, %s228
      %s230 = sphi 0, %s228
      %s231 = sphi 0, %s230
      %s245 = sphi 0, %s231
      %s249 = sphi 0, %s249
      %s251 = sphi 0, %s249
      %s252 = sphi 0, %s251
      %s266 = sphi 0, %s252
      %s270 = sphi 0, %s270
      %s272 = sphi 0, %s270
      %s273 = sphi 0, %s272
      %s287 = sphi 0, %s273
      %s291 = sphi 0, %s291
      %s293 = sphi 0, %s291
      %s294 = sphi 0, %s293
      %s308 = sphi 0, %s294
      %s312 = sphi 0, %s312
      %s314 = sphi 0, %s312
      %s315 = sphi 0, %s314
      %s329 = sphi 0, %s315
      %s333 = sphi 0, %s333
      %s335 = sphi 0, %s333
      %s336 = sphi 0, %s335
      %s350 = sphi 0, %s336
      %s354 = sphi 0, %s354
      %s356 = sphi 0, %s354
      %s357 = sphi 0, %s356
      %s371 = sphi 0, %s357
      %s379 = sphi 0, %s381
      %s382 = sphi 0, %s379
      %s383 = sphi 0, %s382
      %s399 = sphi 0, %s383
    $region4: #{tpu_custom_call.1} parent=1 // loop_header_branch
      %40 = sbr.rel (%p38) target = $region8
    $region5: #{tpu_custom_call.1} parent=1 // loop_body
      %s42 = ssub.s32 %s37, 1
      %s43 = ssub.s32 %s37, 2
      %s50 = sadd.s32 1, %s45
      %p51 = scmp.ge.s32.totalorder %s50, 1
      %s52 = scalar_select %p51, 0, %s50
      %s53 = sadd.s32 1, %s44
      %s54 = scalar_select %p51, %s53, %s44
      %p55 = scmp.ge.s32.totalorder %s54, 2
      %s56 = scalar_select %p55, 0, %s54
      %s57 = ssub.s32 %s44, %s56
      %p58 = scmp.eq.s32.totalorder %s57, 0
      %s60 = sadd.s32 %s59, 1
      %s61 = scalar_select %p58, %s59, %s60
      %p64 = pneg %p58
      %p65 = scmp.eq.s32.totalorder %s37, 1
      %p66 = por %p64, %p65
      %p67 = scmp.ne.s32.totalorder %s59, %s62
      %p68 = scmp.eq.s32.totalorder %s37, 0
      %p69 = por %p67, %p68
      %p70 = scmp.ne.s32.totalorder %s59, %s62
      %p71 = scmp.eq.s32.totalorder %s42, 1
      %p72 = por %p70, %p71
      %p73 = scmp.ne.s32.totalorder %s62, %s63
      %p74 = scmp.eq.s32.totalorder %s42, 0
      %p75 = por %p73, %p74
      %p76 = scmp.ne.s32.totalorder %s62, %s63
      %p77 = scmp.eq.s32.totalorder %s43, 1
      %p78 = por %p76, %p77
      %p80 = scmp.ne.s32.totalorder %s63, %s79
      %p81 = scmp.eq.s32.totalorder %s43, 0
      %p82 = por %p80, %p81
      %s83 = ssub.s32 %s44, %s56
      %p84 = scmp.eq.s32.totalorder %s83, 0
      %s86 = sadd.s32 %s85, 1
      %s87 = scalar_select %p84, %s85, %s86
      %p90 = pneg %p84
      %p91 = scmp.eq.s32.totalorder %s37, 1
      %p92 = por %p90, %p91
      %p93 = scmp.ne.s32.totalorder %s85, %s88
      %p94 = scmp.eq.s32.totalorder %s37, 0
      %p95 = por %p93, %p94
      %p96 = scmp.ne.s32.totalorder %s85, %s88
      %p97 = scmp.eq.s32.totalorder %s42, 1
      %p98 = por %p96, %p97
      %p99 = scmp.ne.s32.totalorder %s88, %s89
      %p100 = scmp.eq.s32.totalorder %s42, 0
      %p101 = por %p99, %p100
      %p102 = scmp.ne.s32.totalorder %s88, %s89
      %p103 = scmp.eq.s32.totalorder %s43, 1
      %p104 = por %p102, %p103
      %p106 = scmp.ne.s32.totalorder %s89, %s105
      %p107 = scmp.eq.s32.totalorder %s43, 0
      %p108 = por %p106, %p107
      %s109 = ssub.s32 %s44, %s56
      %s110 = ssub.s32 %s45, %s52
      %s111 = sor.u32 %s109, %s110
      %p112 = scmp.eq.s32.totalorder %s111, 0
      %s114 = sadd.s32 %s113, 1
      %s115 = scalar_select %p112, %s113, %s114
      %p118 = pneg %p112
      %p119 = scmp.eq.s32.totalorder %s37, 1
      %p120 = por %p118, %p119
      %p121 = scmp.ne.s32.totalorder %s113, %s116
      %p122 = scmp.eq.s32.totalorder %s37, 0
      %p123 = por %p121, %p122
      %p124 = scmp.ne.s32.totalorder %s113, %s116
      %p125 = scmp.eq.s32.totalorder %s42, 1
      %p126 = por %p124, %p125
      %p127 = scmp.ne.s32.totalorder %s116, %s117
      %p128 = scmp.eq.s32.totalorder %s42, 0
      %p129 = por %p127, %p128
      %p130 = scmp.ne.s32.totalorder %s116, %s117
      %p131 = scmp.eq.s32.totalorder %s43, 1
      %p132 = por %p130, %p131
      %p134 = scmp.ne.s32.totalorder %s117, %s133
      %p135 = scmp.eq.s32.totalorder %s43, 0
      %p136 = por %p134, %p135
      %s137 = ssub.s32 %s44, %s56
      %s138 = ssub.s32 %s45, %s52
      %s139 = sor.u32 %s137, %s138
      %p140 = scmp.eq.s32.totalorder %s139, 0
      %s142 = sadd.s32 %s141, 1
      %s143 = scalar_select %p140, %s141, %s142
      %p146 = pneg %p140
      %p147 = scmp.eq.s32.totalorder %s37, 1
      %p148 = por %p146, %p147
      %p149 = scmp.ne.s32.totalorder %s141, %s144
      %p150 = scmp.eq.s32.totalorder %s37, 0
      %p151 = por %p149, %p150
      %p152 = scmp.ne.s32.totalorder %s141, %s144
      %p153 = scmp.eq.s32.totalorder %s42, 1
      %p154 = por %p152, %p153
      %p155 = scmp.ne.s32.totalorder %s144, %s145
      %p156 = scmp.eq.s32.totalorder %s42, 0
      %p157 = por %p155, %p156
      %p158 = scmp.ne.s32.totalorder %s144, %s145
      %p159 = scmp.eq.s32.totalorder %s43, 1
      %p160 = por %p158, %p159
      %p162 = scmp.ne.s32.totalorder %s145, %s161
      %p163 = scmp.eq.s32.totalorder %s43, 0
      %p164 = por %p162, %p163
      %s166 = sadd.s32 %s165, 1
      %p169 = scmp.eq.s32.totalorder %s37, 1
      %p170 = scmp.ne.s32.totalorder %s165, %s167
      %p171 = scmp.eq.s32.totalorder %s37, 0
      %p172 = por %p170, %p171
      %p173 = scmp.ne.s32.totalorder %s165, %s167
      %p174 = scmp.eq.s32.totalorder %s42, 1
      %p175 = por %p173, %p174
      %p176 = scmp.ne.s32.totalorder %s167, %s168
      %p177 = scmp.eq.s32.totalorder %s42, 0
      %p178 = por %p176, %p177
      %p179 = scmp.ne.s32.totalorder %s167, %s168
      %p180 = scmp.eq.s32.totalorder %s43, 1
      %p181 = por %p179, %p180
      %p183 = scmp.ne.s32.totalorder %s168, %s182
      %p184 = scmp.eq.s32.totalorder %s43, 0
      %p185 = por %p183, %p184
      %s187 = sadd.s32 %s186, 1
      %p190 = scmp.eq.s32.totalorder %s37, 1
      %p191 = scmp.ne.s32.totalorder %s186, %s188
      %p192 = scmp.eq.s32.totalorder %s37, 0
      %p193 = por %p191, %p192
      %p194 = scmp.ne.s32.totalorder %s186, %s188
      %p195 = scmp.eq.s32.totalorder %s42, 1
      %p196 = por %p194, %p195
      %p197 = scmp.ne.s32.totalorder %s188, %s189
      %p198 = scmp.eq.s32.totalorder %s42, 0
      %p199 = por %p197, %p198
      %p200 = scmp.ne.s32.totalorder %s188, %s189
      %p201 = scmp.eq.s32.totalorder %s43, 1
      %p202 = por %p200, %p201
      %p204 = scmp.ne.s32.totalorder %s189, %s203
      %p205 = scmp.eq.s32.totalorder %s43, 0
      %p206 = por %p204, %p205
      %s208 = sadd.s32 %s207, 1
      %p211 = scmp.eq.s32.totalorder %s37, 1
      %p212 = scmp.ne.s32.totalorder %s207, %s209
      %p213 = scmp.eq.s32.totalorder %s37, 0
      %p214 = por %p212, %p213
      %p215 = scmp.ne.s32.totalorder %s207, %s209
      %p216 = scmp.eq.s32.totalorder %s42, 1
      %p217 = por %p215, %p216
      %p218 = scmp.ne.s32.totalorder %s209, %s210
      %p219 = scmp.eq.s32.totalorder %s42, 0
      %p220 = por %p218, %p219
      %p221 = scmp.ne.s32.totalorder %s209, %s210
      %p222 = scmp.eq.s32.totalorder %s43, 1
      %p223 = por %p221, %p222
      %p225 = scmp.ne.s32.totalorder %s210, %s224
      %p226 = scmp.eq.s32.totalorder %s43, 0
      %p227 = por %p225, %p226
      %s229 = sadd.s32 %s228, 1
      %p232 = scmp.eq.s32.totalorder %s37, 1
      %p233 = scmp.ne.s32.totalorder %s228, %s230
      %p234 = scmp.eq.s32.totalorder %s37, 0
      %p235 = por %p233, %p234
      %p236 = scmp.ne.s32.totalorder %s228, %s230
      %p237 = scmp.eq.s32.totalorder %s42, 1
      %p238 = por %p236, %p237
      %p239 = scmp.ne.s32.totalorder %s230, %s231
      %p240 = scmp.eq.s32.totalorder %s42, 0
      %p241 = por %p239, %p240
      %p242 = scmp.ne.s32.totalorder %s230, %s231
      %p243 = scmp.eq.s32.totalorder %s43, 1
      %p244 = por %p242, %p243
      %p246 = scmp.ne.s32.totalorder %s231, %s245
      %p247 = scmp.eq.s32.totalorder %s43, 0
      %p248 = por %p246, %p247
      %s250 = sadd.s32 %s249, 1
      %p253 = scmp.eq.s32.totalorder %s37, 1
      %p254 = scmp.ne.s32.totalorder %s249, %s251
      %p255 = scmp.eq.s32.totalorder %s37, 0
      %p256 = por %p254, %p255
      %p257 = scmp.ne.s32.totalorder %s249, %s251
      %p258 = scmp.eq.s32.totalorder %s42, 1
      %p259 = por %p257, %p258
      %p260 = scmp.ne.s32.totalorder %s251, %s252
      %p261 = scmp.eq.s32.totalorder %s42, 0
      %p262 = por %p260, %p261
      %p263 = scmp.ne.s32.totalorder %s251, %s252
      %p264 = scmp.eq.s32.totalorder %s43, 1
      %p265 = por %p263, %p264
      %p267 = scmp.ne.s32.totalorder %s252, %s266
      %p268 = scmp.eq.s32.totalorder %s43, 0
      %p269 = por %p267, %p268
      %s271 = sadd.s32 %s270, 1
      %p274 = scmp.eq.s32.totalorder %s37, 1
      %p275 = scmp.ne.s32.totalorder %s270, %s272
      %p276 = scmp.eq.s32.totalorder %s37, 0
      %p277 = por %p275, %p276
      %p278 = scmp.ne.s32.totalorder %s270, %s272
      %p279 = scmp.eq.s32.totalorder %s42, 1
      %p280 = por %p278, %p279
      %p281 = scmp.ne.s32.totalorder %s272, %s273
      %p282 = scmp.eq.s32.totalorder %s42, 0
      %p283 = por %p281, %p282
      %p284 = scmp.ne.s32.totalorder %s272, %s273
      %p285 = scmp.eq.s32.totalorder %s43, 1
      %p286 = por %p284, %p285
      %p288 = scmp.ne.s32.totalorder %s273, %s287
      %p289 = scmp.eq.s32.totalorder %s43, 0
      %p290 = por %p288, %p289
      %s292 = sadd.s32 %s291, 1
      %p295 = scmp.eq.s32.totalorder %s37, 1
      %p296 = scmp.ne.s32.totalorder %s291, %s293
      %p297 = scmp.eq.s32.totalorder %s37, 0
      %p298 = por %p296, %p297
      %p299 = scmp.ne.s32.totalorder %s291, %s293
      %p300 = scmp.eq.s32.totalorder %s42, 1
      %p301 = por %p299, %p300
      %p302 = scmp.ne.s32.totalorder %s293, %s294
      %p303 = scmp.eq.s32.totalorder %s42, 0
      %p304 = por %p302, %p303
      %p305 = scmp.ne.s32.totalorder %s293, %s294
      %p306 = scmp.eq.s32.totalorder %s43, 1
      %p307 = por %p305, %p306
      %p309 = scmp.ne.s32.totalorder %s294, %s308
      %p310 = scmp.eq.s32.totalorder %s43, 0
      %p311 = por %p309, %p310
      %s313 = sadd.s32 %s312, 1
      %p316 = scmp.eq.s32.totalorder %s37, 1
      %p317 = scmp.ne.s32.totalorder %s312, %s314
      %p318 = scmp.eq.s32.totalorder %s37, 0
      %p319 = por %p317, %p318
      %p320 = scmp.ne.s32.totalorder %s312, %s314
      %p321 = scmp.eq.s32.totalorder %s42, 1
      %p322 = por %p320, %p321
      %p323 = scmp.ne.s32.totalorder %s314, %s315
      %p324 = scmp.eq.s32.totalorder %s42, 0
      %p325 = por %p323, %p324
      %p326 = scmp.ne.s32.totalorder %s314, %s315
      %p327 = scmp.eq.s32.totalorder %s43, 1
      %p328 = por %p326, %p327
      %p330 = scmp.ne.s32.totalorder %s315, %s329
      %p331 = scmp.eq.s32.totalorder %s43, 0
      %p332 = por %p330, %p331
      %s334 = sadd.s32 %s333, 1
      %p337 = scmp.eq.s32.totalorder %s37, 1
      %p338 = scmp.ne.s32.totalorder %s333, %s335
      %p339 = scmp.eq.s32.totalorder %s37, 0
      %p340 = por %p338, %p339
      %p341 = scmp.ne.s32.totalorder %s333, %s335
      %p342 = scmp.eq.s32.totalorder %s42, 1
      %p343 = por %p341, %p342
      %p344 = scmp.ne.s32.totalorder %s335, %s336
      %p345 = scmp.eq.s32.totalorder %s42, 0
      %p346 = por %p344, %p345
      %p347 = scmp.ne.s32.totalorder %s335, %s336
      %p348 = scmp.eq.s32.totalorder %s43, 1
      %p349 = por %p347, %p348
      %p351 = scmp.ne.s32.totalorder %s336, %s350
      %p352 = scmp.eq.s32.totalorder %s43, 0
      %p353 = por %p351, %p352
      %s355 = sadd.s32 %s354, 1
      %p358 = scmp.eq.s32.totalorder %s37, 1
      %p359 = scmp.ne.s32.totalorder %s354, %s356
      %p360 = scmp.eq.s32.totalorder %s37, 0
      %p361 = por %p359, %p360
      %p362 = scmp.ne.s32.totalorder %s354, %s356
      %p363 = scmp.eq.s32.totalorder %s42, 1
      %p364 = por %p362, %p363
      %p365 = scmp.ne.s32.totalorder %s356, %s357
      %p366 = scmp.eq.s32.totalorder %s42, 0
      %p367 = por %p365, %p366
      %p368 = scmp.ne.s32.totalorder %s356, %s357
      %p369 = scmp.eq.s32.totalorder %s43, 1
      %p370 = por %p368, %p369
      %p372 = scmp.ne.s32.totalorder %s357, %s371
      %p373 = scmp.eq.s32.totalorder %s43, 0
      %p374 = por %p372, %p373
      %s375 = ssub.s32 %s44, %s56
      %s376 = ssub.s32 %s45, %s52
      %s377 = sor.u32 %s375, %s376
      %p378 = scmp.eq.s32.totalorder %s377, 0
      %s380 = sadd.s32 %s379, 1
      %s381 = scalar_select %p378, %s379, %s380
      %p384 = pneg %p378
      %p385 = scmp.eq.s32.totalorder %s37, 1
      %p386 = por %p384, %p385
      %p387 = scmp.ne.s32.totalorder %s379, %s382
      %p388 = scmp.eq.s32.totalorder %s37, 0
      %p389 = por %p387, %p388
      %p390 = scmp.ne.s32.totalorder %s379, %s382
      %p391 = scmp.eq.s32.totalorder %s42, 1
      %p392 = por %p390, %p391
      %p393 = scmp.ne.s32.totalorder %s382, %s383
      %p394 = scmp.eq.s32.totalorder %s42, 0
      %p395 = por %p393, %p394
      %p396 = scmp.ne.s32.totalorder %s382, %s383
      %p397 = scmp.eq.s32.totalorder %s43, 1
      %p398 = por %p396, %p397
      %p400 = scmp.ne.s32.totalorder %s383, %s399
      %p401 = scmp.eq.s32.totalorder %s43, 0
      %p402 = por %p400, %p401
      %p403 = scmp.le.s32.totalorder 1, %s37
      %p404 = scmp.lt.s32.totalorder %s37, 3
      %p405 = pnand %p403, %p404
      %p406 = pneg %p405
      // Predicated region
      $region9: #{tpu_custom_call.1} parent=5 // pred_check
        _
      $region10: #{tpu_custom_call.1} parent=5 // pred_check_branch
        %408 = sbr.rel (%p405) target = $region12
      $region11: #{tpu_custom_call.1} parent=5 // pred_region
        %s409 = ssub.s32 %s37, 1
        // Predicated region
        $region13: #{tpu_custom_call.1} parent=11 // pred_check
          %p410 = pneg %p178
        $region14: #{tpu_custom_call.1} parent=11 // pred_check_branch
          %412 = sbr.rel (%p410) target = $region16
        $region15: #{tpu_custom_call.1} parent=11 // pred_region
          %s414 = ssub.s32 2048, 2048
          %415 = vsyncadd [#allocation14], %s414
          %s416 = sshll.u32 [#allocation15], 4
          %s417 = int_to_ptr.vmem [resolvable:$true] %s416
          %422 = dma.hbm_to_vmem [thread:$0]  %s4, 2048, %s417, [#allocation14], 128, 128, 8
        $region16: #{tpu_custom_call.1} parent=11 // pred_fallthru
          _
        // Predicated region
        $region17: #{tpu_custom_call.1} parent=11 // pred_check
          %p423 = pneg %p199
        $region18: #{tpu_custom_call.1} parent=11 // pred_check_branch
          %425 = sbr.rel (%p423) target = $region20
        $region19: #{tpu_custom_call.1} parent=11 // pred_region
          %s427 = ssub.s32 64, 64
          %428 = vsyncadd [#allocation17], %s427
          %s430 = sshll.u32 [#allocation16], 4
          %s431 = int_to_ptr.vmem [resolvable:$true] %s430
          %433 = dma.hbm_to_vmem [thread:$0]  %s5, 64, %s431, [#allocation17]
        $region20: #{tpu_custom_call.1} parent=11 // pred_fallthru
          _
        // Predicated region
        $region21: #{tpu_custom_call.1} parent=11 // pred_check
          %p434 = pneg %p220
        $region22: #{tpu_custom_call.1} parent=11 // pred_check_branch
          %436 = sbr.rel (%p434) target = $region24
        $region23: #{tpu_custom_call.1} parent=11 // pred_region
          %s438 = ssub.s32 2048, 2048
          %439 = vsyncadd [#allocation17], %s438
          %s440 = sshll.u32 [#allocation18], 4
          %s441 = int_to_ptr.vmem [resolvable:$true] %s440
          %446 = dma.hbm_to_vmem [thread:$0]  %s6, 2048, %s441, [#allocation17], 128, 128, 8
        $region24: #{tpu_custom_call.1} parent=11 // pred_fallthru
          _
        // Predicated region
        $region25: #{tpu_custom_call.1} parent=11 // pred_check
          %p447 = pneg %p241
        $region26: #{tpu_custom_call.1} parent=11 // pred_check_branch
          %449 = sbr.rel (%p447) target = $region28
        $region27: #{tpu_custom_call.1} parent=11 // pred_region
          %s451 = ssub.s32 64, 64
          %452 = vsyncadd [#allocation20], %s451
          %s454 = sshll.u32 [#allocation19], 4
          %s455 = int_to_ptr.vmem [resolvable:$true] %s454
          %457 = dma.hbm_to_vmem [thread:$0]  %s7, 64, %s455, [#allocation20]
        $region28: #{tpu_custom_call.1} parent=11 // pred_fallthru
          _
        // Predicated region
        $region29: #{tpu_custom_call.1} parent=11 // pred_check
          %p458 = pneg %p262
        $region30: #{tpu_custom_call.1} parent=11 // pred_check_branch
          %460 = sbr.rel (%p458) target = $region32
        $region31: #{tpu_custom_call.1} parent=11 // pred_region
          %s462 = ssub.s32 512, 512
          %463 = vsyncadd [#allocation20], %s462
          %s464 = sshll.u32 [#allocation21], 4
          %s465 = int_to_ptr.vmem [resolvable:$true] %s464
          %470 = dma.hbm_to_vmem [thread:$0]  %s8, 512, %s465, [#allocation20], 128, 128, 8
        $region32: #{tpu_custom_call.1} parent=11 // pred_fallthru
          _
        // Predicated region
        $region33: #{tpu_custom_call.1} parent=11 // pred_check
          %p471 = pneg %p283
        $region34: #{tpu_custom_call.1} parent=11 // pred_check_branch
          %473 = sbr.rel (%p471) target = $region36
        $region35: #{tpu_custom_call.1} parent=11 // pred_region
          %s475 = ssub.s32 16, 16
          %476 = vsyncadd [#allocation23], %s475
          %s478 = sshll.u32 [#allocation22], 4
          %s479 = int_to_ptr.vmem [resolvable:$true] %s478
          %481 = dma.hbm_to_vmem [thread:$0]  %s9, 16, %s479, [#allocation23]
        $region36: #{tpu_custom_call.1} parent=11 // pred_fallthru
          _
        // Predicated region
        $region37: #{tpu_custom_call.1} parent=11 // pred_check
          %p482 = pneg %p304
        $region38: #{tpu_custom_call.1} parent=11 // pred_check_branch
          %484 = sbr.rel (%p482) target = $region40
        $region39: #{tpu_custom_call.1} parent=11 // pred_region
          %s486 = ssub.s32 1024, 1024
          %487 = vsyncadd [#allocation23], %s486
          %s488 = sshll.u32 [#allocation24], 4
          %s489 = int_to_ptr.vmem [resolvable:$true] %s488
          %494 = dma.hbm_to_vmem [thread:$0]  %s10, 1024, %s489, [#allocation23], 128, 128, 8
        $region40: #{tpu_custom_call.1} parent=11 // pred_fallthru
          _
        // Predicated region
        $region41: #{tpu_custom_call.1} parent=11 // pred_check
          %p495 = pneg %p325
        $region42: #{tpu_custom_call.1} parent=11 // pred_check_branch
          %497 = sbr.rel (%p495) target = $region44
        $region43: #{tpu_custom_call.1} parent=11 // pred_region
          %s499 = ssub.s32 16, 16
          %500 = vsyncadd [#allocation26], %s499
          %s502 = sshll.u32 [#allocation25], 4
          %s503 = int_to_ptr.vmem [resolvable:$true] %s502
          %505 = dma.hbm_to_vmem [thread:$0]  %s11, 16, %s503, [#allocation26]
        $region44: #{tpu_custom_call.1} parent=11 // pred_fallthru
          _
        // Predicated region
        $region45: #{tpu_custom_call.1} parent=11 // pred_check
          %p506 = pneg %p346
        $region46: #{tpu_custom_call.1} parent=11 // pred_check_branch
          %508 = sbr.rel (%p506) target = $region48
        $region47: #{tpu_custom_call.1} parent=11 // pred_region
          %s510 = ssub.s32 64, 64
          %511 = vsyncadd [#allocation26], %s510
          %s513 = sshll.u32 [#allocation27], 4
          %s514 = int_to_ptr.vmem [resolvable:$true] %s513
          %516 = dma.hbm_to_vmem [thread:$0]  %s12, 64, %s514, [#allocation26]
        $region48: #{tpu_custom_call.1} parent=11 // pred_fallthru
          _
        // Predicated region
        $region49: #{tpu_custom_call.1} parent=11 // pred_check
          %p517 = pneg %p367
        $region50: #{tpu_custom_call.1} parent=11 // pred_check_branch
          %519 = sbr.rel (%p517) target = $region52
        $region51: #{tpu_custom_call.1} parent=11 // pred_region
          %s521 = ssub.s32 64, 64
          %522 = vsyncadd [#allocation29], %s521
          %s524 = sshll.u32 [#allocation28], 4
          %s525 = int_to_ptr.vmem [resolvable:$true] %s524
          %527 = dma.hbm_to_vmem [thread:$0]  %s13, 64, %s525, [#allocation29]
        $region52: #{tpu_custom_call.1} parent=11 // pred_fallthru
          _
      $region12: #{tpu_custom_call.1} parent=5 // pred_fallthru
        _
      %p528 = scmp.lt.s32.totalorder %s37, 2
      // Predicated region
      $region53: #{tpu_custom_call.1} parent=5 // pred_check
        %p529 = pneg %p528
      $region54: #{tpu_custom_call.1} parent=5 // pred_check_branch
        %531 = sbr.rel (%p529) target = $region56
      $region55: #{tpu_custom_call.1} parent=5 // pred_region
        // Predicated region
        $region57: #{tpu_custom_call.1} parent=55 // pred_check
          %p532 = pneg %p69
        $region58: #{tpu_custom_call.1} parent=55 // pred_check_branch
          %534 = sbr.rel (%p532) target = $region60
        $region59: #{tpu_custom_call.1} parent=55 // pred_region
          %s535 = sand.u32 %s59, 1
          %s536 = scalar_lea.sflag [#allocation8], %s535
          %s537 = sand.u32 %s59, 1
          %s538 = smul.addr %s537, 8
          %s539 = scalar_lea.vmem [#allocation7], %s538
          %s541 = ssub.s32 128, 128
          %542 = vsyncadd %s536, %s541
          %s543 = smul.addr %s44, 128
          %s544 = scalar_lea.hbm %s0, %s543
          %s546 = sshll.u32 %s539, 4
          %s547 = int_to_ptr.vmem [resolvable:$true] %s546
          %549 = dma.hbm_to_vmem [thread:$0]  %s544, 128, %s547, %s536
        $region60: #{tpu_custom_call.1} parent=55 // pred_fallthru
          _
        // Predicated region
        $region61: #{tpu_custom_call.1} parent=55 // pred_check
          %p550 = pneg %p95
        $region62: #{tpu_custom_call.1} parent=55 // pred_check_branch
          %552 = sbr.rel (%p550) target = $region64
        $region63: #{tpu_custom_call.1} parent=55 // pred_region
          %s553 = sand.u32 %s37, 1
          %s554 = scalar_lea.sflag [#allocation11], %s553
          %s555 = sand.u32 %s85, 1
          %s556 = smul.addr %s555, 8
          %s557 = scalar_lea.vmem [#allocation10], %s556
          %s559 = ssub.s32 128, 128
          %560 = vsyncadd %s554, %s559
          %s561 = smul.addr %s44, 128
          %s562 = scalar_lea.hbm %s1, %s561
          %s564 = sshll.u32 %s557, 4
          %s565 = int_to_ptr.vmem [resolvable:$true] %s564
          %567 = dma.hbm_to_vmem [thread:$0]  %s562, 128, %s565, %s554
        $region64: #{tpu_custom_call.1} parent=55 // pred_fallthru
          _
        // Predicated region
        $region65: #{tpu_custom_call.1} parent=55 // pred_check
          %p568 = pneg %p123
        $region66: #{tpu_custom_call.1} parent=55 // pred_check_branch
          %570 = sbr.rel (%p568) target = $region68
        $region67: #{tpu_custom_call.1} parent=55 // pred_region
          %s571 = sand.u32 %s37, 1
          %s572 = scalar_lea.sflag [#allocation11], %s571
          %s573 = sand.u32 %s113, 1
          %s574 = smul.addr %s573, 8
          %s575 = scalar_lea.vmem [#allocation12], %s574
          %s577 = ssub.s32 128, 128
          %578 = vsyncadd %s572, %s577
          %s579 = sadd.s32 %s45, %s44
          %s580 = smul.addr %s579, 128
          %s581 = scalar_lea.hbm %s2, %s580
          %s583 = sshll.u32 %s575, 4
          %s584 = int_to_ptr.vmem [resolvable:$true] %s583
          %586 = dma.hbm_to_vmem [thread:$0]  %s581, 128, %s584, %s572
        $region68: #{tpu_custom_call.1} parent=55 // pred_fallthru
          _
        // Predicated region
        $region69: #{tpu_custom_call.1} parent=55 // pred_check
          %p587 = pneg %p151
        $region70: #{tpu_custom_call.1} parent=55 // pred_check_branch
          %589 = sbr.rel (%p587) target = $region72
        $region71: #{tpu_custom_call.1} parent=55 // pred_region
          %s590 = sand.u32 %s37, 1
          %s591 = scalar_lea.sflag [#allocation14], %s590
          %s592 = sand.u32 %s141, 1
          %s593 = smul.addr %s592, 8
          %s594 = scalar_lea.vmem [#allocation13], %s593
          %s596 = ssub.s32 128, 128
          %597 = vsyncadd %s591, %s596
          %s598 = sadd.s32 %s45, %s44
          %s599 = smul.addr %s598, 128
          %s600 = scalar_lea.hbm %s3, %s599
          %s602 = sshll.u32 %s594, 4
          %s603 = int_to_ptr.vmem [resolvable:$true] %s602
          %605 = dma.hbm_to_vmem [thread:$0]  %s600, 128, %s603, %s591
        $region72: #{tpu_custom_call.1} parent=55 // pred_fallthru
          _
      $region56: #{tpu_custom_call.1} parent=5 // pred_fallthru
        _
      %p606 = scmp.le.s32.totalorder 1, %s37
      %p607 = scmp.lt.s32.totalorder %s37, 3
      %p608 = pnand %p606, %p607
      %p609 = pneg %p608
      // Predicated region
      $region73: #{tpu_custom_call.1} parent=5 // pred_check
        _
      $region74: #{tpu_custom_call.1} parent=5 // pred_check_branch
        %611 = sbr.rel (%p608) target = $region76
      $region75: #{tpu_custom_call.1} parent=5 // pred_region
        %s612 = ssub.s32 %s37, 1
        %s613 = sand.u32 %s62, 1
        %s614 = scalar_lea.sflag [#allocation8], %s613
        %s615 = sand.u32 %s62, 1
        %s616 = smul.addr %s615, 8
        %s617 = scalar_lea.vmem [#allocation7], %s616
        // Predicated region
        $region77: #{tpu_custom_call.1} parent=75 // pred_check
          %p618 = pneg %p75
        $region78: #{tpu_custom_call.1} parent=75 // pred_check_branch
          %620 = sbr.rel (%p618) target = $region80
        $region79: #{tpu_custom_call.1} parent=75 // pred_region
          %621 = dma.done %s614, 128
        $region80: #{tpu_custom_call.1} parent=75 // pred_fallthru
          _
        %s622 = sand.u32 %s42, 1
        %s623 = scalar_lea.sflag [#allocation11], %s622
        %s624 = sand.u32 %s88, 1
        %s625 = smul.addr %s624, 8
        %s626 = scalar_lea.vmem [#allocation10], %s625
        // Predicated region
        $region81: #{tpu_custom_call.1} parent=75 // pred_check
          %p627 = pneg %p101
        $region82: #{tpu_custom_call.1} parent=75 // pred_check_branch
          %629 = sbr.rel (%p627) target = $region84
        $region83: #{tpu_custom_call.1} parent=75 // pred_region
          %630 = dma.done %s623, 128
        $region84: #{tpu_custom_call.1} parent=75 // pred_fallthru
          _
        %s631 = sand.u32 %s42, 1
        %s632 = scalar_lea.sflag [#allocation11], %s631
        %s633 = sand.u32 %s116, 1
        %s634 = smul.addr %s633, 8
        %s635 = scalar_lea.vmem [#allocation12], %s634
        // Predicated region
        $region85: #{tpu_custom_call.1} parent=75 // pred_check
          %p636 = pneg %p129
        $region86: #{tpu_custom_call.1} parent=75 // pred_check_branch
          %638 = sbr.rel (%p636) target = $region88
        $region87: #{tpu_custom_call.1} parent=75 // pred_region
          %639 = dma.done %s632, 128
        $region88: #{tpu_custom_call.1} parent=75 // pred_fallthru
          _
        %s640 = sand.u32 %s42, 1
        %s641 = scalar_lea.sflag [#allocation14], %s640
        %s642 = sand.u32 %s144, 1
        %s643 = smul.addr %s642, 8
        %s644 = scalar_lea.vmem [#allocation13], %s643
        // Predicated region
        $region89: #{tpu_custom_call.1} parent=75 // pred_check
          %p645 = pneg %p157
        $region90: #{tpu_custom_call.1} parent=75 // pred_check_branch
          %647 = sbr.rel (%p645) target = $region92
        $region91: #{tpu_custom_call.1} parent=75 // pred_region
          %648 = dma.done %s641, 128
        $region92: #{tpu_custom_call.1} parent=75 // pred_fallthru
          _
        // Predicated region
        $region93: #{tpu_custom_call.1} parent=75 // pred_check
          %p649 = pneg %p178
        $region94: #{tpu_custom_call.1} parent=75 // pred_check_branch
          %651 = sbr.rel (%p649) target = $region96
        $region95: #{tpu_custom_call.1} parent=75 // pred_region
          %652 = dma.done [#allocation14], 2048
        $region96: #{tpu_custom_call.1} parent=75 // pred_fallthru
          _
        // Predicated region
        $region97: #{tpu_custom_call.1} parent=75 // pred_check
          %p653 = pneg %p199
        $region98: #{tpu_custom_call.1} parent=75 // pred_check_branch
          %655 = sbr.rel (%p653) target = $region100
        $region99: #{tpu_custom_call.1} parent=75 // pred_region
          %656 = dma.done [#allocation17], 64
        $region100: #{tpu_custom_call.1} parent=75 // pred_fallthru
          _
        // Predicated region
        $region101: #{tpu_custom_call.1} parent=75 // pred_check
          %p657 = pneg %p220
        $region102: #{tpu_custom_call.1} parent=75 // pred_check_branch
          %659 = sbr.rel (%p657) target = $region104
        $region103: #{tpu_custom_call.1} parent=75 // pred_region
          %660 = dma.done [#allocation17], 2048
        $region104: #{tpu_custom_call.1} parent=75 // pred_fallthru
          _
        // Predicated region
        $region105: #{tpu_custom_call.1} parent=75 // pred_check
          %p661 = pneg %p241
        $region106: #{tpu_custom_call.1} parent=75 // pred_check_branch
          %663 = sbr.rel (%p661) target = $region108
        $region107: #{tpu_custom_call.1} parent=75 // pred_region
          %664 = dma.done [#allocation20], 64
        $region108: #{tpu_custom_call.1} parent=75 // pred_fallthru
          _
        // Predicated region
        $region109: #{tpu_custom_call.1} parent=75 // pred_check
          %p665 = pneg %p262
        $region110: #{tpu_custom_call.1} parent=75 // pred_check_branch
          %667 = sbr.rel (%p665) target = $region112
        $region111: #{tpu_custom_call.1} parent=75 // pred_region
          %668 = dma.done [#allocation20], 512
        $region112: #{tpu_custom_call.1} parent=75 // pred_fallthru
          _
        // Predicated region
        $region113: #{tpu_custom_call.1} parent=75 // pred_check
          %p669 = pneg %p283
        $region114: #{tpu_custom_call.1} parent=75 // pred_check_branch
          %671 = sbr.rel (%p669) target = $region116
        $region115: #{tpu_custom_call.1} parent=75 // pred_region
          %672 = dma.done [#allocation23], 16
        $region116: #{tpu_custom_call.1} parent=75 // pred_fallthru
          _
        // Predicated region
        $region117: #{tpu_custom_call.1} parent=75 // pred_check
          %p673 = pneg %p304
        $region118: #{tpu_custom_call.1} parent=75 // pred_check_branch
          %675 = sbr.rel (%p673) target = $region120
        $region119: #{tpu_custom_call.1} parent=75 // pred_region
          %676 = dma.done [#allocation23], 1024
        $region120: #{tpu_custom_call.1} parent=75 // pred_fallthru
          _
        // Predicated region
        $region121: #{tpu_custom_call.1} parent=75 // pred_check
          %p677 = pneg %p325
        $region122: #{tpu_custom_call.1} parent=75 // pred_check_branch
          %679 = sbr.rel (%p677) target = $region124
        $region123: #{tpu_custom_call.1} parent=75 // pred_region
          %680 = dma.done [#allocation26], 16
        $region124: #{tpu_custom_call.1} parent=75 // pred_fallthru
          _
        // Predicated region
        $region125: #{tpu_custom_call.1} parent=75 // pred_check
          %p681 = pneg %p346
        $region126: #{tpu_custom_call.1} parent=75 // pred_check_branch
          %683 = sbr.rel (%p681) target = $region128
        $region127: #{tpu_custom_call.1} parent=75 // pred_region
          %684 = dma.done [#allocation26], 64
        $region128: #{tpu_custom_call.1} parent=75 // pred_fallthru
          _
        // Predicated region
        $region129: #{tpu_custom_call.1} parent=75 // pred_check
          %p685 = pneg %p367
        $region130: #{tpu_custom_call.1} parent=75 // pred_check_branch
          %687 = sbr.rel (%p685) target = $region132
        $region131: #{tpu_custom_call.1} parent=75 // pred_region
          %688 = dma.done [#allocation29], 64
        $region132: #{tpu_custom_call.1} parent=75 // pred_fallthru
          _
        %s689 = sand.u32 %s62, 1
        %s690 = scalar_lea.sflag [#allocation8], %s689
        %s691 = sand.u32 %s62, 1
        %s692 = smul.addr %s691, 8
        %s693 = scalar_lea.vmem [#allocation7], %s692
        %p694 = pneg %p75
        %p695 = pneg %p72
        %s696 = sand.u32 %s42, 1
        %s697 = scalar_lea.sflag [#allocation11], %s696
        %s698 = sand.u32 %s88, 1
        %s699 = smul.addr %s698, 8
        %s700 = scalar_lea.vmem [#allocation10], %s699
        %p701 = pneg %p101
        %p702 = pneg %p98
        %s703 = sand.u32 %s42, 1
        %s704 = scalar_lea.sflag [#allocation11], %s703
        %s705 = sand.u32 %s116, 1
        %s706 = smul.addr %s705, 8
        %s707 = scalar_lea.vmem [#allocation12], %s706
        %p708 = pneg %p129
        %p709 = pneg %p126
        %s710 = sand.u32 %s42, 1
        %s711 = scalar_lea.sflag [#allocation14], %s710
        %s712 = sand.u32 %s144, 1
        %s713 = smul.addr %s712, 8
        %s714 = scalar_lea.vmem [#allocation13], %s713
        %p715 = pneg %p157
        %p716 = pneg %p154
        %p717 = pneg %p178
        %p718 = pneg %p175
        %p719 = pneg %p199
        %p720 = pneg %p196
        %p721 = pneg %p220
        %p722 = pneg %p217
        %p723 = pneg %p241
        %p724 = pneg %p238
        %p725 = pneg %p262
        %p726 = pneg %p259
        %p727 = pneg %p283
        %p728 = pneg %p280
        %p729 = pneg %p304
        %p730 = pneg %p301
        %p731 = pneg %p325
        %p732 = pneg %p322
        %p733 = pneg %p346
        %p734 = pneg %p343
        %p735 = pneg %p367
        %p736 = pneg %p364
        %p737 = pneg %p395
        %p738 = pneg %p392
        %s739 = sand.u32 %s382, 1
        %s740 = scalar_lea.sflag [#allocation9], %s739
        %s741 = sand.u32 %s382, 1
        %s742 = smul.addr %s741, 8
        %s743 = scalar_lea.vmem [#allocation30], %s742
        %p744 = scmp.eq.s32.totalorder %s47, 0
        // Predicated region
        $region133: #{tpu_custom_call.1} parent=75 // pred_check
          %p745 = pneg %p744
        $region134: #{tpu_custom_call.1} parent=75 // pred_check_branch
          %747 = sbr.rel (%p745) target = $region136
        $region135: #{tpu_custom_call.1} parent=75 // pred_region
          %v748 = vld [vmem:[%s617] sm:$0xff]
          %v749 = vld [vmem:[#allocation27] sm:$0x1]
          %v750 = vld [vmem:[#allocation28] sm:$0x1]
          %vm751 = vcmask 261120
          %v752 = vsel %vm751, %v748, 0.0
          %753 = vadd.xlane.f32.xlu0 %v752
          %v754 = vpop.xlane.xlu0 %753
          %v755 = vrcp.pop 32.0
          %v756 = vmul.f32 %v754, %v755
          %v757 = vsub.f32 %v748, %v756
          %v758 = vmul.f32 %v757, %v757
          %v759 = vsel %vm751, %v758, 0.0
          %760 = vadd.xlane.f32.xlu0 %v759
          %v761 = vpop.xlane.xlu0 %760
          %v762 = vmul.f32 %v761, 0.032258064
          %v763 = vrsqrt.pop %v762
          %v764 = vmul.f32 %v762, %v763
          %vm765 = vcmp.eq.f32.partialorder %v762, inf
          %v766 = vsel %vm765, %v762, %v764
          %vm767 = vcmp.eq.f32.partialorder %v762, 0.0
          %v768 = vand.u32 %v762, 2147483648
          %v769 = vsel %vm767, %v768, %v766
          %v770 = vadd.f32 %v769, 1e-06
          %v771 = vrcp.pop %v770
          %v772 = vmul.f32 %v757, %v771
          %v773 = vlaneseq
          %v774 = vshrl.u32 %v773, 7
          %v775 = vsub.s32 0, %v774
          %v776 = vrot.slane %v749, %v775
          %v777 = vmul.f32 %v776, %v772
          %v778 = vlaneseq
          %v779 = vshrl.u32 %v778, 7
          %v780 = vsub.s32 0, %v779
          %v781 = vrot.slane %v750, %v780
          %v782 = vadd.f32 %v777, %v781
          %783 = vst.msk [vmem:[#allocation2] sm:$0xff] %vm751, %v782
          %s784 = scalar_lea.vmem [#allocation15], 32
          %v785 = vld [vmem:[%s784] sm:$0xff]
          %v786 = vld [vmem:[%s784 + $0x8] sm:$0xff]
          %v787 = vld [vmem:[%s784 + $0x10] sm:$0xff]
          %v788 = vld [vmem:[%s784 + $0x18] sm:$0xff]
          %v789 = vld [vmem:[#allocation16 + $0x1] sm:$0x1]
          %v790 = vlaneseq
          %v791 = vshrl.u32 %v790, 7
          %v792 = vsub.s32 0, %v791
          %v793 = vrot.slane %v789, %v792
          %v795 = vsel %vm751, %v782, 0
          %797 = vmatprep.subr.mxu0 0.0
          %798 = vmatpush1.msra.mxu0 %v785
          %799 = vmatprep.subr.mxu0 0.0
          %800 = vmatpush1.msra.mxu0 %v786
          %801 = vmatprep.subr.mxu0 0.0
          %802 = vmatpush1.msra.mxu0 %v787
          %803 = vmatprep.subr.mxu0 0.0
          %804 = vmatpush1.msra.mxu0 %v788
          %805 = vmatprep.subr.mxu0 0.0
          %806 = vmatpush1.msra.mxu0 0.0
          %807 = vmatprep.subr.mxu0 0.0
          %808 = vmatpush1.msra.mxu0 0.0
          %809 = vmatprep.subr.mxu0 0.0
          %810 = vmatpush1.msra.mxu0 0.0
          %811 = vmatprep.subr.mxu0 0.0
          %812 = vmatpush1.msra.mxu0 0.0
          %813 = vmatprep.subr.mxu0 0.0
          %814 = vmatpush1.msra.mxu0 0.0
          %815 = vmatprep.subr.mxu0 0.0
          %816 = vmatpush1.msra.mxu0 0.0
          %817 = vmatprep.subr.mxu0 0.0
          %818 = vmatpush1.msra.mxu0 0.0
          %819 = vmatprep.subr.mxu0 0.0
          %820 = vmatpush1.msra.mxu0 0.0
          %821 = vmatprep.subr.mxu0 0.0
          %822 = vmatpush1.msra.mxu0 0.0
          %823 = vmatprep.subr.mxu0 0.0
          %824 = vmatpush1.msra.mxu0 0.0
          %825 = vmatprep.subr.mxu0 0.0
          %826 = vmatpush1.msra.mxu0 0.0
          %827 = vmatprep.subr.mxu0 0.0
          %828 = vmatpush1.msra.mxu0 0.0
          %829 = vmatprep.subr.mxu0 0.0
          %830 = vmatpush1.msra.mxu0 0.0
          %831 = vmatprep.subr.mxu0 0.0
          %832 = vmatpush1.msra.mxu0 0.0
          %833 = vmatprep.subr.mxu0 0.0
          %834 = vmatpush1.msra.mxu0 0.0
          %835 = vmatprep.subr.mxu0 0.0
          %836 = vmatpush1.msra.mxu0 0.0
          %837 = vmatprep.subr.mxu0 0.0
          %838 = vmatpush1.msra.mxu0 0.0
          %839 = vmatprep.subr.mxu0 0.0
          %840 = vmatpush1.msra.mxu0 0.0
          %841 = vmatprep.subr.mxu0 0.0
          %842 = vmatpush1.msra.mxu0 0.0
          %843 = vmatprep.subr.mxu0 0.0
          %844 = vmatpush1.msra.mxu0 0.0
          %845 = vmatprep.subr.mxu0 0.0
          %846 = vmatpush1.msra.mxu0 0.0
          %847 = vmatprep.subr.mxu0 0.0
          %848 = vmatpush1.msra.mxu0 0.0
          %849 = vmatprep.subr.mxu0 0.0
          %850 = vmatpush1.msra.mxu0 0.0
          %851 = vmatprep.subr.mxu0 0.0
          %852 = vmatpush1.msra.mxu0 0.0
          %853 = vmatprep.subr.mxu0 0.0
          %854 = vmatpush1.msra.mxu0 0.0
          %855 = vmatprep.subr.mxu0 0.0
          %856 = vmatpush1.msra.mxu0 0.0
          %857 = vmatprep.subr.mxu0 0.0
          %858 = vmatpush1.msra.mxu0 0.0
          %859 = vmatprep.subr.mxu0 0.0
          %860 = vmatpush1.msra.mxu0 0.0
          %861 = vmatprep.mubr.f32.mxu0 0.0
          %862 = vmatmul.mubr.f32.gmra.mrb[0].mxu0 %v795
          %v863 = vpop.f32.mrb[0].mxu0
          %v864 = vadd.f32 %v793, %v863
          %v865 = vpop.f32.mrb[0].mxu0
          %866 = vdwg.mxu0
          %s867 = scalar_lea.vmem [#allocation15], 64
          %v868 = vld [vmem:[%s867] sm:$0xff]
          %v869 = vld [vmem:[%s867 + $0x8] sm:$0xff]
          %v870 = vld [vmem:[%s867 + $0x10] sm:$0xff]
          %v871 = vld [vmem:[%s867 + $0x18] sm:$0xff]
          %v872 = vld [vmem:[#allocation16 + $0x2] sm:$0x1]
          %v873 = vlaneseq
          %v874 = vshrl.u32 %v873, 7
          %v875 = vsub.s32 0, %v874
          %v876 = vrot.slane %v872, %v875
          %877 = vmatprep.subr.mxu0 0.0
          %878 = vmatpush1.msra.mxu0 %v868
          %879 = vmatprep.subr.mxu0 0.0
          %880 = vmatpush1.msra.mxu0 %v869
          %881 = vmatprep.subr.mxu0 0.0
          %882 = vmatpush1.msra.mxu0 %v870
          %883 = vmatprep.subr.mxu0 0.0
          %884 = vmatpush1.msra.mxu0 %v871
          %885 = vmatprep.subr.mxu0 0.0
          %886 = vmatpush1.msra.mxu0 0.0
          %887 = vmatprep.subr.mxu0 0.0
          %888 = vmatpush1.msra.mxu0 0.0
          %889 = vmatprep.subr.mxu0 0.0
          %890 = vmatpush1.msra.mxu0 0.0
          %891 = vmatprep.subr.mxu0 0.0
          %892 = vmatpush1.msra.mxu0 0.0
          %893 = vmatprep.subr.mxu0 0.0
          %894 = vmatpush1.msra.mxu0 0.0
          %895 = vmatprep.subr.mxu0 0.0
          %896 = vmatpush1.msra.mxu0 0.0
          %897 = vmatprep.subr.mxu0 0.0
          %898 = vmatpush1.msra.mxu0 0.0
          %899 = vmatprep.subr.mxu0 0.0
          %900 = vmatpush1.msra.mxu0 0.0
          %901 = vmatprep.subr.mxu0 0.0
          %902 = vmatpush1.msra.mxu0 0.0
          %903 = vmatprep.subr.mxu0 0.0
          %904 = vmatpush1.msra.mxu0 0.0
          %905 = vmatprep.subr.mxu0 0.0
          %906 = vmatpush1.msra.mxu0 0.0
          %907 = vmatprep.subr.mxu0 0.0
          %908 = vmatpush1.msra.mxu0 0.0
          %909 = vmatprep.subr.mxu0 0.0
          %910 = vmatpush1.msra.mxu0 0.0
          %911 = vmatprep.subr.mxu0 0.0
          %912 = vmatpush1.msra.mxu0 0.0
          %913 = vmatprep.subr.mxu0 0.0
          %914 = vmatpush1.msra.mxu0 0.0
          %915 = vmatprep.subr.mxu0 0.0
          %916 = vmatpush1.msra.mxu0 0.0
          %917 = vmatprep.subr.mxu0 0.0
          %918 = vmatpush1.msra.mxu0 0.0
          %919 = vmatprep.subr.mxu0 0.0
          %920 = vmatpush1.msra.mxu0 0.0
          %921 = vmatprep.subr.mxu0 0.0
          %922 = vmatpush1.msra.mxu0 0.0
          %923 = vmatprep.subr.mxu0 0.0
          %924 = vmatpush1.msra.mxu0 0.0
          %925 = vmatprep.subr.mxu0 0.0
          %926 = vmatpush1.msra.mxu0 0.0
          %927 = vmatprep.subr.mxu0 0.0
          %928 = vmatpush1.msra.mxu0 0.0
          %929 = vmatprep.subr.mxu0 0.0
          %930 = vmatpush1.msra.mxu0 0.0
          %931 = vmatprep.subr.mxu0 0.0
          %932 = vmatpush1.msra.mxu0 0.0
          %933 = vmatprep.subr.mxu0 0.0
          %934 = vmatpush1.msra.mxu0 0.0
          %935 = vmatprep.subr.mxu0 0.0
          %936 = vmatpush1.msra.mxu0 0.0
          %937 = vmatprep.subr.mxu0 0.0
          %938 = vmatpush1.msra.mxu0 0.0
          %939 = vmatprep.subr.mxu0 0.0
          %940 = vmatpush1.msra.mxu0 0.0
          %941 = vmatprep.mubr.f32.mxu0 0.0
          %942 = vmatmul.mubr.f32.gmra.mrb[0].mxu0 %v795
          %v943 = vpop.f32.mrb[0].mxu0
          %v944 = vadd.f32 %v876, %v943
          %v945 = vpop.f32.mrb[0].mxu0
          %946 = vdwg.mxu0
          %947 = vst.msk [vmem:[#allocation3] sm:$0xff] %vm751, %v864
          %948 = vst.msk [vmem:[#allocation4] sm:$0xff] %vm751, %v944
          %v949 = vld [vmem:[%s626] sm:$0xff]
          %s950 = scalar_lea.vmem [#allocation18], 32
          %v951 = vld [vmem:[%s950] sm:$0xff]
          %v952 = vld [vmem:[%s950 + $0x8] sm:$0xff]
          %v953 = vld [vmem:[%s950 + $0x10] sm:$0xff]
          %v954 = vld [vmem:[%s950 + $0x18] sm:$0xff]
          %v955 = vld [vmem:[#allocation19 + $0x1] sm:$0x1]
          %v956 = vlaneseq
          %v957 = vshrl.u32 %v956, 7
          %v958 = vsub.s32 0, %v957
          %v959 = vrot.slane %v955, %v958
          %v961 = vsel %vm751, %v949, 0
          %963 = vmatprep.subr.mxu0 0.0
          %964 = vmatpush1.msra.mxu0 %v951
          %965 = vmatprep.subr.mxu0 0.0
          %966 = vmatpush1.msra.mxu0 %v952
          %967 = vmatprep.subr.mxu0 0.0
          %968 = vmatpush1.msra.mxu0 %v953
          %969 = vmatprep.subr.mxu0 0.0
          %970 = vmatpush1.msra.mxu0 %v954
          %971 = vmatprep.subr.mxu0 0.0
          %972 = vmatpush1.msra.mxu0 0.0
          %973 = vmatprep.subr.mxu0 0.0
          %974 = vmatpush1.msra.mxu0 0.0
          %975 = vmatprep.subr.mxu0 0.0
          %976 = vmatpush1.msra.mxu0 0.0
          %977 = vmatprep.subr.mxu0 0.0
          %978 = vmatpush1.msra.mxu0 0.0
          %979 = vmatprep.subr.mxu0 0.0
          %980 = vmatpush1.msra.mxu0 0.0
          %981 = vmatprep.subr.mxu0 0.0
          %982 = vmatpush1.msra.mxu0 0.0
          %983 = vmatprep.subr.mxu0 0.0
          %984 = vmatpush1.msra.mxu0 0.0
          %985 = vmatprep.subr.mxu0 0.0
          %986 = vmatpush1.msra.mxu0 0.0
          %987 = vmatprep.subr.mxu0 0.0
          %988 = vmatpush1.msra.mxu0 0.0
          %989 = vmatprep.subr.mxu0 0.0
          %990 = vmatpush1.msra.mxu0 0.0
          %991 = vmatprep.subr.mxu0 0.0
          %992 = vmatpush1.msra.mxu0 0.0
          %993 = vmatprep.subr.mxu0 0.0
          %994 = vmatpush1.msra.mxu0 0.0
          %995 = vmatprep.subr.mxu0 0.0
          %996 = vmatpush1.msra.mxu0 0.0
          %997 = vmatprep.subr.mxu0 0.0
          %998 = vmatpush1.msra.mxu0 0.0
          %999 = vmatprep.subr.mxu0 0.0
          %1000 = vmatpush1.msra.mxu0 0.0
          %1001 = vmatprep.subr.mxu0 0.0
          %1002 = vmatpush1.msra.mxu0 0.0
          %1003 = vmatprep.subr.mxu0 0.0
          %1004 = vmatpush1.msra.mxu0 0.0
          %1005 = vmatprep.subr.mxu0 0.0
          %1006 = vmatpush1.msra.mxu0 0.0
          %1007 = vmatprep.subr.mxu0 0.0
          %1008 = vmatpush1.msra.mxu0 0.0
          %1009 = vmatprep.subr.mxu0 0.0
          %1010 = vmatpush1.msra.mxu0 0.0
          %1011 = vmatprep.subr.mxu0 0.0
          %1012 = vmatpush1.msra.mxu0 0.0
          %1013 = vmatprep.subr.mxu0 0.0
          %1014 = vmatpush1.msra.mxu0 0.0
          %1015 = vmatprep.subr.mxu0 0.0
          %1016 = vmatpush1.msra.mxu0 0.0
          %1017 = vmatprep.subr.mxu0 0.0
          %1018 = vmatpush1.msra.mxu0 0.0
          %1019 = vmatprep.subr.mxu0 0.0
          %1020 = vmatpush1.msra.mxu0 0.0
          %1021 = vmatprep.subr.mxu0 0.0
          %1022 = vmatpush1.msra.mxu0 0.0
          %1023 = vmatprep.subr.mxu0 0.0
          %1024 = vmatpush1.msra.mxu0 0.0
          %1025 = vmatprep.subr.mxu0 0.0
          %1026 = vmatpush1.msra.mxu0 0.0
          %1027 = vmatprep.mubr.f32.mxu0 0.0
          %1028 = vmatmul.mubr.f32.gmra.mrb[0].mxu0 %v961
          %v1029 = vpop.f32.mrb[0].mxu0
          %v1030 = vadd.f32 %v959, %v1029
          %v1031 = vpop.f32.mrb[0].mxu0
          %1032 = vdwg.mxu0
          %s1033 = scalar_lea.vmem [#allocation18], 64
          %v1034 = vld [vmem:[%s1033] sm:$0xff]
          %v1035 = vld [vmem:[%s1033 + $0x8] sm:$0xff]
          %v1036 = vld [vmem:[%s1033 + $0x10] sm:$0xff]
          %v1037 = vld [vmem:[%s1033 + $0x18] sm:$0xff]
          %v1038 = vld [vmem:[#allocation19 + $0x2] sm:$0x1]
          %v1039 = vlaneseq
          %v1040 = vshrl.u32 %v1039, 7
          %v1041 = vsub.s32 0, %v1040
          %v1042 = vrot.slane %v1038, %v1041
          %1043 = vmatprep.subr.mxu0 0.0
          %1044 = vmatpush1.msra.mxu0 %v1034
          %1045 = vmatprep.subr.mxu0 0.0
          %1046 = vmatpush1.msra.mxu0 %v1035
          %1047 = vmatprep.subr.mxu0 0.0
          %1048 = vmatpush1.msra.mxu0 %v1036
          %1049 = vmatprep.subr.mxu0 0.0
          %1050 = vmatpush1.msra.mxu0 %v1037
          %1051 = vmatprep.subr.mxu0 0.0
          %1052 = vmatpush1.msra.mxu0 0.0
          %1053 = vmatprep.subr.mxu0 0.0
          %1054 = vmatpush1.msra.mxu0 0.0
          %1055 = vmatprep.subr.mxu0 0.0
          %1056 = vmatpush1.msra.mxu0 0.0
          %1057 = vmatprep.subr.mxu0 0.0
          %1058 = vmatpush1.msra.mxu0 0.0
          %1059 = vmatprep.subr.mxu0 0.0
          %1060 = vmatpush1.msra.mxu0 0.0
          %1061 = vmatprep.subr.mxu0 0.0
          %1062 = vmatpush1.msra.mxu0 0.0
          %1063 = vmatprep.subr.mxu0 0.0
          %1064 = vmatpush1.msra.mxu0 0.0
          %1065 = vmatprep.subr.mxu0 0.0
          %1066 = vmatpush1.msra.mxu0 0.0
          %1067 = vmatprep.subr.mxu0 0.0
          %1068 = vmatpush1.msra.mxu0 0.0
          %1069 = vmatprep.subr.mxu0 0.0
          %1070 = vmatpush1.msra.mxu0 0.0
          %1071 = vmatprep.subr.mxu0 0.0
          %1072 = vmatpush1.msra.mxu0 0.0
          %1073 = vmatprep.subr.mxu0 0.0
          %1074 = vmatpush1.msra.mxu0 0.0
          %1075 = vmatprep.subr.mxu0 0.0
          %1076 = vmatpush1.msra.mxu0 0.0
          %1077 = vmatprep.subr.mxu0 0.0
          %1078 = vmatpush1.msra.mxu0 0.0
          %1079 = vmatprep.subr.mxu0 0.0
          %1080 = vmatpush1.msra.mxu0 0.0
          %1081 = vmatprep.subr.mxu0 0.0
          %1082 = vmatpush1.msra.mxu0 0.0
          %1083 = vmatprep.subr.mxu0 0.0
          %1084 = vmatpush1.msra.mxu0 0.0
          %1085 = vmatprep.subr.mxu0 0.0
          %1086 = vmatpush1.msra.mxu0 0.0
          %1087 = vmatprep.subr.mxu0 0.0
          %1088 = vmatpush1.msra.mxu0 0.0
          %1089 = vmatprep.subr.mxu0 0.0
          %1090 = vmatpush1.msra.mxu0 0.0
          %1091 = vmatprep.subr.mxu0 0.0
          %1092 = vmatpush1.msra.mxu0 0.0
          %1093 = vmatprep.subr.mxu0 0.0
          %1094 = vmatpush1.msra.mxu0 0.0
          %1095 = vmatprep.subr.mxu0 0.0
          %1096 = vmatpush1.msra.mxu0 0.0
          %1097 = vmatprep.subr.mxu0 0.0
          %1098 = vmatpush1.msra.mxu0 0.0
          %1099 = vmatprep.subr.mxu0 0.0
          %1100 = vmatpush1.msra.mxu0 0.0
          %1101 = vmatprep.subr.mxu0 0.0
          %1102 = vmatpush1.msra.mxu0 0.0
          %1103 = vmatprep.subr.mxu0 0.0
          %1104 = vmatpush1.msra.mxu0 0.0
          %1105 = vmatprep.subr.mxu0 0.0
          %1106 = vmatpush1.msra.mxu0 0.0
          %1107 = vmatprep.mubr.f32.mxu0 0.0
          %1108 = vmatmul.mubr.f32.gmra.mrb[0].mxu0 %v961
          %v1109 = vpop.f32.mrb[0].mxu0
          %v1110 = vadd.f32 %v1042, %v1109
          %v1111 = vpop.f32.mrb[0].mxu0
          %1112 = vdwg.mxu0
          %1113 = vst.msk [vmem:[#allocation5] sm:$0xff] %vm751, %v1030
          %1114 = vst.msk [vmem:[#allocation6] sm:$0xff] %vm751, %v1110
        $region136: #{tpu_custom_call.1} parent=75 // pred_fallthru
          _
        %s1115 = smul.u32 %s47, 8
        %s1116 = scalar_lea.vmem %s617, %s1115 [#allocation7]
        %v1117 = vld [vmem:[%s1116] sm:$0xff]
        %s1118 = scalar_lea.vmem [#allocation2], %s1115
        %v1119 = vld [vmem:[%s1118] sm:$0xff]
        %v1120 = vld [vmem:[%s644] sm:$0xff]
        %vm1121 = vcmp.eq.f32.partialorder %v1120, 0.0
        %v1122 = vsel %vm1121, -1e+09, 0.0
        %v1123 = vld [vmem:[%s635] sm:$0xff]
        %vm1124 = vcmp.eq.f32.partialorder %v1123, 0.0
        %v1125 = vsel %vm1124, -1e+09, 0.0
        %v1126 = vld [vmem:[#allocation22] sm:$0x1]
        %v1127 = vld [vmem:[#allocation25] sm:$0x1]
        %v1128 = vld [vmem:[#allocation3] sm:$0xff]
        %v1129 = vld [vmem:[#allocation4] sm:$0xff]
        %v1130 = vld [vmem:[#allocation15] sm:$0xff]
        %v1131 = vld [vmem:[#allocation15 + $0x8] sm:$0xff]
        %v1132 = vld [vmem:[#allocation15 + $0x10] sm:$0xff]
        %v1133 = vld [vmem:[#allocation15 + $0x18] sm:$0xff]
        %v1134 = vld [vmem:[#allocation16] sm:$0x1]
        %v1135 = vlaneseq
        %v1136 = vshrl.u32 %v1135, 7
        %v1137 = vsub.s32 0, %v1136
        %v1138 = vrot.slane %v1134, %v1137
        %vm1139 = vcmask 261120
        %v1141 = vsel %vm1139, %v1119, 0
        %1143 = vmatprep.subr.mxu0 0.0
        %1144 = vmatpush1.msra.mxu0 %v1130
        %1145 = vmatprep.subr.mxu0 0.0
        %1146 = vmatpush1.msra.mxu0 %v1131
        %1147 = vmatprep.subr.mxu0 0.0
        %1148 = vmatpush1.msra.mxu0 %v1132
        %1149 = vmatprep.subr.mxu0 0.0
        %1150 = vmatpush1.msra.mxu0 %v1133
        %1151 = vmatprep.subr.mxu0 0.0
        %1152 = vmatpush1.msra.mxu0 0.0
        %1153 = vmatprep.subr.mxu0 0.0
        %1154 = vmatpush1.msra.mxu0 0.0
        %1155 = vmatprep.subr.mxu0 0.0
        %1156 = vmatpush1.msra.mxu0 0.0
        %1157 = vmatprep.subr.mxu0 0.0
        %1158 = vmatpush1.msra.mxu0 0.0
        %1159 = vmatprep.subr.mxu0 0.0
        %1160 = vmatpush1.msra.mxu0 0.0
        %1161 = vmatprep.subr.mxu0 0.0
        %1162 = vmatpush1.msra.mxu0 0.0
        %1163 = vmatprep.subr.mxu0 0.0
        %1164 = vmatpush1.msra.mxu0 0.0
        %1165 = vmatprep.subr.mxu0 0.0
        %1166 = vmatpush1.msra.mxu0 0.0
        %1167 = vmatprep.subr.mxu0 0.0
        %1168 = vmatpush1.msra.mxu0 0.0
        %1169 = vmatprep.subr.mxu0 0.0
        %1170 = vmatpush1.msra.mxu0 0.0
        %1171 = vmatprep.subr.mxu0 0.0
        %1172 = vmatpush1.msra.mxu0 0.0
        %1173 = vmatprep.subr.mxu0 0.0
        %1174 = vmatpush1.msra.mxu0 0.0
        %1175 = vmatprep.subr.mxu0 0.0
        %1176 = vmatpush1.msra.mxu0 0.0
        %1177 = vmatprep.subr.mxu0 0.0
        %1178 = vmatpush1.msra.mxu0 0.0
        %1179 = vmatprep.subr.mxu0 0.0
        %1180 = vmatpush1.msra.mxu0 0.0
        %1181 = vmatprep.subr.mxu0 0.0
        %1182 = vmatpush1.msra.mxu0 0.0
        %1183 = vmatprep.subr.mxu0 0.0
        %1184 = vmatpush1.msra.mxu0 0.0
        %1185 = vmatprep.subr.mxu0 0.0
        %1186 = vmatpush1.msra.mxu0 0.0
        %1187 = vmatprep.subr.mxu0 0.0
        %1188 = vmatpush1.msra.mxu0 0.0
        %1189 = vmatprep.subr.mxu0 0.0
        %1190 = vmatpush1.msra.mxu0 0.0
        %1191 = vmatprep.subr.mxu0 0.0
        %1192 = vmatpush1.msra.mxu0 0.0
        %1193 = vmatprep.subr.mxu0 0.0
        %1194 = vmatpush1.msra.mxu0 0.0
        %1195 = vmatprep.subr.mxu0 0.0
        %1196 = vmatpush1.msra.mxu0 0.0
        %1197 = vmatprep.subr.mxu0 0.0
        %1198 = vmatpush1.msra.mxu0 0.0
        %1199 = vmatprep.subr.mxu0 0.0
        %1200 = vmatpush1.msra.mxu0 0.0
        %1201 = vmatprep.subr.mxu0 0.0
        %1202 = vmatpush1.msra.mxu0 0.0
        %1203 = vmatprep.subr.mxu0 0.0
        %1204 = vmatpush1.msra.mxu0 0.0
        %1205 = vmatprep.subr.mxu0 0.0
        %1206 = vmatpush1.msra.mxu0 0.0
        %1207 = vmatprep.mubr.f32.mxu0 0.0
        %1208 = vmatmul.mubr.f32.gmra.mrb[0].mxu0 %v1141
        %v1209 = vpop.f32.mrb[0].mxu0
        %v1210 = vadd.f32 %v1138, %v1209
        %v1211 = vpop.f32.mrb[0].mxu0
        %1212 = vdwg.mxu0
        %v1213 = vld [vmem:[#allocation16 + $0x3] sm:$0x1]
        %vm1214 = vcmask 64512
        %v1216 = vsel %vm1214, %v1210, 0
        %v1219 = vsel %vm1214, %v1128, 0
        %1221 = vmatprep.subr.mxu0 0.0
        %1222 = vmatpush1.xpose.msra.mxu0 %v1219
        %1223 = vmatprep.subr.mxu0 0.0
        %1224 = vmatpush1.xpose.msra.mxu0 0.0
        %1225 = vmatprep.subr.mxu0 0.0
        %1226 = vmatpush1.xpose.msra.mxu0 0.0
        %1227 = vmatprep.subr.mxu0 0.0
        %1228 = vmatpush1.xpose.msra.mxu0 0.0
        %1229 = vmatprep.subr.mxu0 0.0
        %1230 = vmatpush1.xpose.msra.mxu0 0.0
        %1231 = vmatprep.subr.mxu0 0.0
        %1232 = vmatpush1.xpose.msra.mxu0 0.0
        %1233 = vmatprep.subr.mxu0 0.0
        %1234 = vmatpush1.xpose.msra.mxu0 0.0
        %1235 = vmatprep.subr.mxu0 0.0
        %1236 = vmatpush1.xpose.msra.mxu0 0.0
        %1237 = vmatprep.subr.mxu0 0.0
        %1238 = vmatpush1.xpose.msra.mxu0 0.0
        %1239 = vmatprep.subr.mxu0 0.0
        %1240 = vmatpush1.xpose.msra.mxu0 0.0
        %1241 = vmatprep.subr.mxu0 0.0
        %1242 = vmatpush1.xpose.msra.mxu0 0.0
        %1243 = vmatprep.subr.mxu0 0.0
        %1244 = vmatpush1.xpose.msra.mxu0 0.0
        %1245 = vmatprep.subr.mxu0 0.0
        %1246 = vmatpush1.xpose.msra.mxu0 0.0
        %1247 = vmatprep.subr.mxu0 0.0
        %1248 = vmatpush1.xpose.msra.mxu0 0.0
        %1249 = vmatprep.subr.mxu0 0.0
        %1250 = vmatpush1.xpose.msra.mxu0 0.0
        %1251 = vmatprep.subr.mxu0 0.0
        %1252 = vmatpush1.xpose.msra.mxu0 0.0
        %1253 = vmatprep.subr.mxu0 0.0
        %1254 = vmatpush1.xpose.msra.mxu0 0.0
        %1255 = vmatprep.subr.mxu0 0.0
        %1256 = vmatpush1.xpose.msra.mxu0 0.0
        %1257 = vmatprep.subr.mxu0 0.0
        %1258 = vmatpush1.xpose.msra.mxu0 0.0
        %1259 = vmatprep.subr.mxu0 0.0
        %1260 = vmatpush1.xpose.msra.mxu0 0.0
        %1261 = vmatprep.subr.mxu0 0.0
        %1262 = vmatpush1.xpose.msra.mxu0 0.0
        %1263 = vmatprep.subr.mxu0 0.0
        %1264 = vmatpush1.xpose.msra.mxu0 0.0
        %1265 = vmatprep.subr.mxu0 0.0
        %1266 = vmatpush1.xpose.msra.mxu0 0.0
        %1267 = vmatprep.subr.mxu0 0.0
        %1268 = vmatpush1.xpose.msra.mxu0 0.0
        %1269 = vmatprep.subr.mxu0 0.0
        %1270 = vmatpush1.xpose.msra.mxu0 0.0
        %1271 = vmatprep.subr.mxu0 0.0
        %1272 = vmatpush1.xpose.msra.mxu0 0.0
        %1273 = vmatprep.subr.mxu0 0.0
        %1274 = vmatpush1.xpose.msra.mxu0 0.0
        %1275 = vmatprep.subr.mxu0 0.0
        %1276 = vmatpush1.xpose.msra.mxu0 0.0
        %1277 = vmatprep.subr.mxu0 0.0
        %1278 = vmatpush1.xpose.msra.mxu0 0.0
        %1279 = vmatprep.subr.mxu0 0.0
        %1280 = vmatpush1.xpose.msra.mxu0 0.0
        %1281 = vmatprep.subr.mxu0 0.0
        %1282 = vmatpush1.xpose.msra.mxu0 0.0
        %1283 = vmatprep.subr.mxu0 0.0
        %1284 = vmatpush1.xpose.msra.mxu0 0.0
        %1285 = vmatprep.mubr.f32.mxu0 0.0
        %1286 = vmatmul.mubr.f32.gmra.mrb[0].mxu0 %v1216
        %v1287 = vpop.f32.mrb[0].mxu0
        %v1288 = vadd.f32 %v1122, %v1287
        %v1289 = vpop.f32.mrb[0].mxu0
        %1290 = vdwg.mxu0
        %v1291 = vsel %vm1214, %v1288, -inf
        %1292 = vmax.xlane.f32.xlu0 %v1291
        %v1293 = vpop.xlane.xlu0 %1292
        %v1294 = vsub.f32 %v1288, %v1293
        %v1295 = vmul.f32 %v1294, 1.442695
        %v1296 = vpow.pop %v1295
        %v1297 = vsel %vm1214, %v1296, 0.0
        %1298 = vadd.xlane.f32.xlu0 %v1297
        %v1299 = vpop.xlane.xlu0 %1298
        %v1300 = vrcp.pop %v1299
        %v1301 = vmul.f32 %v1296, %v1300
        %v1303 = vsel %vm1214, %v1301, 0
        %1305 = vmatprep.subr.mxu0 0.0
        %1306 = vmatpush1.msra.mxu0 %v1129
        %1307 = vmatprep.subr.mxu0 0.0
        %1308 = vmatpush1.msra.mxu0 0.0
        %1309 = vmatprep.subr.mxu0 0.0
        %1310 = vmatpush1.msra.mxu0 0.0
        %1311 = vmatprep.subr.mxu0 0.0
        %1312 = vmatpush1.msra.mxu0 0.0
        %1313 = vmatprep.subr.mxu0 0.0
        %1314 = vmatpush1.msra.mxu0 0.0
        %1315 = vmatprep.subr.mxu0 0.0
        %1316 = vmatpush1.msra.mxu0 0.0
        %1317 = vmatprep.subr.mxu0 0.0
        %1318 = vmatpush1.msra.mxu0 0.0
        %1319 = vmatprep.subr.mxu0 0.0
        %1320 = vmatpush1.msra.mxu0 0.0
        %1321 = vmatprep.subr.mxu0 0.0
        %1322 = vmatpush1.msra.mxu0 0.0
        %1323 = vmatprep.subr.mxu0 0.0
        %1324 = vmatpush1.msra.mxu0 0.0
        %1325 = vmatprep.subr.mxu0 0.0
        %1326 = vmatpush1.msra.mxu0 0.0
        %1327 = vmatprep.subr.mxu0 0.0
        %1328 = vmatpush1.msra.mxu0 0.0
        %1329 = vmatprep.subr.mxu0 0.0
        %1330 = vmatpush1.msra.mxu0 0.0
        %1331 = vmatprep.subr.mxu0 0.0
        %1332 = vmatpush1.msra.mxu0 0.0
        %1333 = vmatprep.subr.mxu0 0.0
        %1334 = vmatpush1.msra.mxu0 0.0
        %1335 = vmatprep.subr.mxu0 0.0
        %1336 = vmatpush1.msra.mxu0 0.0
        %1337 = vmatprep.subr.mxu0 0.0
        %1338 = vmatpush1.msra.mxu0 0.0
        %1339 = vmatprep.subr.mxu0 0.0
        %1340 = vmatpush1.msra.mxu0 0.0
        %1341 = vmatprep.subr.mxu0 0.0
        %1342 = vmatpush1.msra.mxu0 0.0
        %1343 = vmatprep.subr.mxu0 0.0
        %1344 = vmatpush1.msra.mxu0 0.0
        %1345 = vmatprep.subr.mxu0 0.0
        %1346 = vmatpush1.msra.mxu0 0.0
        %1347 = vmatprep.subr.mxu0 0.0
        %1348 = vmatpush1.msra.mxu0 0.0
        %1349 = vmatprep.subr.mxu0 0.0
        %1350 = vmatpush1.msra.mxu0 0.0
        %1351 = vmatprep.subr.mxu0 0.0
        %1352 = vmatpush1.msra.mxu0 0.0
        %1353 = vmatprep.subr.mxu0 0.0
        %1354 = vmatpush1.msra.mxu0 0.0
        %1355 = vmatprep.subr.mxu0 0.0
        %1356 = vmatpush1.msra.mxu0 0.0
        %1357 = vmatprep.subr.mxu0 0.0
        %1358 = vmatpush1.msra.mxu0 0.0
        %1359 = vmatprep.subr.mxu0 0.0
        %1360 = vmatpush1.msra.mxu0 0.0
        %1361 = vmatprep.subr.mxu0 0.0
        %1362 = vmatpush1.msra.mxu0 0.0
        %1363 = vmatprep.subr.mxu0 0.0
        %1364 = vmatpush1.msra.mxu0 0.0
        %1365 = vmatprep.subr.mxu0 0.0
        %1366 = vmatpush1.msra.mxu0 0.0
        %1367 = vmatprep.subr.mxu0 0.0
        %1368 = vmatpush1.msra.mxu0 0.0
        %1369 = vmatprep.mubr.f32.mxu0 0.0
        %1370 = vmatmul.mubr.f32.gmra.mrb[0].mxu0 %v1303
        %v1371 = vpop.f32.mrb[0].mxu0
        %v1372 = vadd.f32 0.0, %v1371
        %v1373 = vpop.f32.mrb[0].mxu0
        %1374 = vdwg.mxu0
        %s1375 = scalar_lea.vmem [#allocation15], 96
        %v1376 = vld [vmem:[%s1375] sm:$0xff]
        %v1378 = vsel %vm1214, %v1372, 0
        %1380 = vmatprep.subr.mxu0 0.0
        %1381 = vmatpush1.msra.mxu0 %v1376
        %1382 = vmatprep.subr.mxu0 0.0
        %1383 = vmatpush1.msra.mxu0 0.0
        %1384 = vmatprep.subr.mxu0 0.0
        %1385 = vmatpush1.msra.mxu0 0.0
        %1386 = vmatprep.subr.mxu0 0.0
        %1387 = vmatpush1.msra.mxu0 0.0
        %1388 = vmatprep.subr.mxu0 0.0
        %1389 = vmatpush1.msra.mxu0 0.0
        %1390 = vmatprep.subr.mxu0 0.0
        %1391 = vmatpush1.msra.mxu0 0.0
        %1392 = vmatprep.subr.mxu0 0.0
        %1393 = vmatpush1.msra.mxu0 0.0
        %1394 = vmatprep.subr.mxu0 0.0
        %1395 = vmatpush1.msra.mxu0 0.0
        %1396 = vmatprep.subr.mxu0 0.0
        %1397 = vmatpush1.msra.mxu0 0.0
        %1398 = vmatprep.subr.mxu0 0.0
        %1399 = vmatpush1.msra.mxu0 0.0
        %1400 = vmatprep.subr.mxu0 0.0
        %1401 = vmatpush1.msra.mxu0 0.0
        %1402 = vmatprep.subr.mxu0 0.0
        %1403 = vmatpush1.msra.mxu0 0.0
        %1404 = vmatprep.subr.mxu0 0.0
        %1405 = vmatpush1.msra.mxu0 0.0
        %1406 = vmatprep.subr.mxu0 0.0
        %1407 = vmatpush1.msra.mxu0 0.0
        %1408 = vmatprep.subr.mxu0 0.0
        %1409 = vmatpush1.msra.mxu0 0.0
        %1410 = vmatprep.subr.mxu0 0.0
        %1411 = vmatpush1.msra.mxu0 0.0
        %1412 = vmatprep.subr.mxu0 0.0
        %1413 = vmatpush1.msra.mxu0 0.0
        %1414 = vmatprep.subr.mxu0 0.0
        %1415 = vmatpush1.msra.mxu0 0.0
        %1416 = vmatprep.subr.mxu0 0.0
        %1417 = vmatpush1.msra.mxu0 0.0
        %1418 = vmatprep.subr.mxu0 0.0
        %1419 = vmatpush1.msra.mxu0 0.0
        %1420 = vmatprep.subr.mxu0 0.0
        %1421 = vmatpush1.msra.mxu0 0.0
        %1422 = vmatprep.subr.mxu0 0.0
        %1423 = vmatpush1.msra.mxu0 0.0
        %1424 = vmatprep.subr.mxu0 0.0
        %1425 = vmatpush1.msra.mxu0 0.0
        %1426 = vmatprep.subr.mxu0 0.0
        %1427 = vmatpush1.msra.mxu0 0.0
        %1428 = vmatprep.subr.mxu0 0.0
        %1429 = vmatpush1.msra.mxu0 0.0
        %1430 = vmatprep.subr.mxu0 0.0
        %1431 = vmatpush1.msra.mxu0 0.0
        %1432 = vmatprep.subr.mxu0 0.0
        %1433 = vmatpush1.msra.mxu0 0.0
        %1434 = vmatprep.subr.mxu0 0.0
        %1435 = vmatpush1.msra.mxu0 0.0
        %1436 = vmatprep.subr.mxu0 0.0
        %1437 = vmatpush1.msra.mxu0 0.0
        %1438 = vmatprep.subr.mxu0 0.0
        %1439 = vmatpush1.msra.mxu0 0.0
        %1440 = vmatprep.subr.mxu0 0.0
        %1441 = vmatpush1.msra.mxu0 0.0
        %1442 = vmatprep.subr.mxu0 0.0
        %1443 = vmatpush1.msra.mxu0 0.0
        %1444 = vmatprep.mubr.f32.mxu0 0.0
        %1445 = vmatmul.mubr.f32.gmra.mrb[0].mxu0 %v1378
        %v1446 = vpop.f32.mrb[0].mxu0
        %v1447 = vadd.f32 0.0, %v1446
        %v1448 = vpop.f32.mrb[0].mxu0
        %1449 = vdwg.mxu0
        %v1450 = vlaneseq
        %v1451 = vshrl.u32 %v1450, 7
        %v1452 = vsub.s32 0, %v1451
        %v1453 = vrot.slane %v1213, %v1452
        %v1454 = vadd.f32 %v1453, %v1447
        %1455 = vrot.lane.b32.xlu0 %v1210, 120
        %v1456 = vpop.permute.xlu0 %1455
        %1457 = vrot.lane.b32.xlu0 %v1128, 120
        %v1458 = vpop.permute.xlu0 %1457
        %v1459 = vsel %vm1214, %v1456, 0
        %v1461 = vsel %vm1214, %v1458, 0
        %1463 = vmatprep.subr.mxu0 0.0
        %1464 = vmatpush1.xpose.msra.mxu0 %v1461
        %1465 = vmatprep.subr.mxu0 0.0
        %1466 = vmatpush1.xpose.msra.mxu0 0.0
        %1467 = vmatprep.subr.mxu0 0.0
        %1468 = vmatpush1.xpose.msra.mxu0 0.0
        %1469 = vmatprep.subr.mxu0 0.0
        %1470 = vmatpush1.xpose.msra.mxu0 0.0
        %1471 = vmatprep.subr.mxu0 0.0
        %1472 = vmatpush1.xpose.msra.mxu0 0.0
        %1473 = vmatprep.subr.mxu0 0.0
        %1474 = vmatpush1.xpose.msra.mxu0 0.0
        %1475 = vmatprep.subr.mxu0 0.0
        %1476 = vmatpush1.xpose.msra.mxu0 0.0
        %1477 = vmatprep.subr.mxu0 0.0
        %1478 = vmatpush1.xpose.msra.mxu0 0.0
        %1479 = vmatprep.subr.mxu0 0.0
        %1480 = vmatpush1.xpose.msra.mxu0 0.0
        %1481 = vmatprep.subr.mxu0 0.0
        %1482 = vmatpush1.xpose.msra.mxu0 0.0
        %1483 = vmatprep.subr.mxu0 0.0
        %1484 = vmatpush1.xpose.msra.mxu0 0.0
        %1485 = vmatprep.subr.mxu0 0.0
        %1486 = vmatpush1.xpose.msra.mxu0 0.0
        %1487 = vmatprep.subr.mxu0 0.0
        %1488 = vmatpush1.xpose.msra.mxu0 0.0
        %1489 = vmatprep.subr.mxu0 0.0
        %1490 = vmatpush1.xpose.msra.mxu0 0.0
        %1491 = vmatprep.subr.mxu0 0.0
        %1492 = vmatpush1.xpose.msra.mxu0 0.0
        %1493 = vmatprep.subr.mxu0 0.0
        %1494 = vmatpush1.xpose.msra.mxu0 0.0
        %1495 = vmatprep.subr.mxu0 0.0
        %1496 = vmatpush1.xpose.msra.mxu0 0.0
        %1497 = vmatprep.subr.mxu0 0.0
        %1498 = vmatpush1.xpose.msra.mxu0 0.0
        %1499 = vmatprep.subr.mxu0 0.0
        %1500 = vmatpush1.xpose.msra.mxu0 0.0
        %1501 = vmatprep.subr.mxu0 0.0
        %1502 = vmatpush1.xpose.msra.mxu0 0.0
        %1503 = vmatprep.subr.mxu0 0.0
        %1504 = vmatpush1.xpose.msra.mxu0 0.0
        %1505 = vmatprep.subr.mxu0 0.0
        %1506 = vmatpush1.xpose.msra.mxu0 0.0
        %1507 = vmatprep.subr.mxu0 0.0
        %1508 = vmatpush1.xpose.msra.mxu0 0.0
        %1509 = vmatprep.subr.mxu0 0.0
        %1510 = vmatpush1.xpose.msra.mxu0 0.0
        %1511 = vmatprep.subr.mxu0 0.0
        %1512 = vmatpush1.xpose.msra.mxu0 0.0
        %1513 = vmatprep.subr.mxu0 0.0
        %1514 = vmatpush1.xpose.msra.mxu0 0.0
        %1515 = vmatprep.subr.mxu0 0.0
        %1516 = vmatpush1.xpose.msra.mxu0 0.0
        %1517 = vmatprep.subr.mxu0 0.0
        %1518 = vmatpush1.xpose.msra.mxu0 0.0
        %1519 = vmatprep.subr.mxu0 0.0
        %1520 = vmatpush1.xpose.msra.mxu0 0.0
        %1521 = vmatprep.subr.mxu0 0.0
        %1522 = vmatpush1.xpose.msra.mxu0 0.0
        %1523 = vmatprep.subr.mxu0 0.0
        %1524 = vmatpush1.xpose.msra.mxu0 0.0
        %1525 = vmatprep.subr.mxu0 0.0
        %1526 = vmatpush1.xpose.msra.mxu0 0.0
        %1527 = vmatprep.mubr.f32.mxu0 0.0
        %1528 = vmatmul.mubr.f32.gmra.mrb[0].mxu0 %v1459
        %v1529 = vpop.f32.mrb[0].mxu0
        %v1530 = vadd.f32 %v1122, %v1529
        %v1531 = vpop.f32.mrb[0].mxu0
        %1532 = vdwg.mxu0
        %v1533 = vsel %vm1214, %v1530, -inf
        %1534 = vmax.xlane.f32.xlu0 %v1533
        %v1535 = vpop.xlane.xlu0 %1534
        %v1536 = vsub.f32 %v1530, %v1535
        %v1537 = vmul.f32 %v1536, 1.442695
        %v1538 = vpow.pop %v1537
        %v1539 = vsel %vm1214, %v1538, 0.0
        %1540 = vadd.xlane.f32.xlu0 %v1539
        %v1541 = vpop.xlane.xlu0 %1540
        %v1542 = vrcp.pop %v1541
        %v1543 = vmul.f32 %v1538, %v1542
        %1545 = vrot.lane.b32.xlu0 %v1129, 120
        %v1546 = vpop.permute.xlu0 %1545
        %v1549 = vsel %vm1214, %v1543, 0
        %1551 = vmatprep.subr.mxu0 0.0
        %1552 = vmatpush1.msra.mxu0 %v1546
        %1553 = vmatprep.subr.mxu0 0.0
        %1554 = vmatpush1.msra.mxu0 0.0
        %1555 = vmatprep.subr.mxu0 0.0
        %1556 = vmatpush1.msra.mxu0 0.0
        %1557 = vmatprep.subr.mxu0 0.0
        %1558 = vmatpush1.msra.mxu0 0.0
        %1559 = vmatprep.subr.mxu0 0.0
        %1560 = vmatpush1.msra.mxu0 0.0
        %1561 = vmatprep.subr.mxu0 0.0
        %1562 = vmatpush1.msra.mxu0 0.0
        %1563 = vmatprep.subr.mxu0 0.0
        %1564 = vmatpush1.msra.mxu0 0.0
        %1565 = vmatprep.subr.mxu0 0.0
        %1566 = vmatpush1.msra.mxu0 0.0
        %1567 = vmatprep.subr.mxu0 0.0
        %1568 = vmatpush1.msra.mxu0 0.0
        %1569 = vmatprep.subr.mxu0 0.0
        %1570 = vmatpush1.msra.mxu0 0.0
        %1571 = vmatprep.subr.mxu0 0.0
        %1572 = vmatpush1.msra.mxu0 0.0
        %1573 = vmatprep.subr.mxu0 0.0
        %1574 = vmatpush1.msra.mxu0 0.0
        %1575 = vmatprep.subr.mxu0 0.0
        %1576 = vmatpush1.msra.mxu0 0.0
        %1577 = vmatprep.subr.mxu0 0.0
        %1578 = vmatpush1.msra.mxu0 0.0
        %1579 = vmatprep.subr.mxu0 0.0
        %1580 = vmatpush1.msra.mxu0 0.0
        %1581 = vmatprep.subr.mxu0 0.0
        %1582 = vmatpush1.msra.mxu0 0.0
        %1583 = vmatprep.subr.mxu0 0.0
        %1584 = vmatpush1.msra.mxu0 0.0
        %1585 = vmatprep.subr.mxu0 0.0
        %1586 = vmatpush1.msra.mxu0 0.0
        %1587 = vmatprep.subr.mxu0 0.0
        %1588 = vmatpush1.msra.mxu0 0.0
        %1589 = vmatprep.subr.mxu0 0.0
        %1590 = vmatpush1.msra.mxu0 0.0
        %1591 = vmatprep.subr.mxu0 0.0
        %1592 = vmatpush1.msra.mxu0 0.0
        %1593 = vmatprep.subr.mxu0 0.0
        %1594 = vmatpush1.msra.mxu0 0.0
        %1595 = vmatprep.subr.mxu0 0.0
        %1596 = vmatpush1.msra.mxu0 0.0
        %1597 = vmatprep.subr.mxu0 0.0
        %1598 = vmatpush1.msra.mxu0 0.0
        %1599 = vmatprep.subr.mxu0 0.0
        %1600 = vmatpush1.msra.mxu0 0.0
        %1601 = vmatprep.subr.mxu0 0.0
        %1602 = vmatpush1.msra.mxu0 0.0
        %1603 = vmatprep.subr.mxu0 0.0
        %1604 = vmatpush1.msra.mxu0 0.0
        %1605 = vmatprep.subr.mxu0 0.0
        %1606 = vmatpush1.msra.mxu0 0.0
        %1607 = vmatprep.subr.mxu0 0.0
        %1608 = vmatpush1.msra.mxu0 0.0
        %1609 = vmatprep.subr.mxu0 0.0
        %1610 = vmatpush1.msra.mxu0 0.0
        %1611 = vmatprep.subr.mxu0 0.0
        %1612 = vmatpush1.msra.mxu0 0.0
        %1613 = vmatprep.subr.mxu0 0.0
        %1614 = vmatpush1.msra.mxu0 0.0
        %1615 = vmatprep.mubr.f32.mxu0 0.0
        %1616 = vmatmul.mubr.f32.gmra.mrb[0].mxu0 %v1549
        %v1617 = vpop.f32.mrb[0].mxu0
        %v1618 = vadd.f32 0.0, %v1617
        %v1619 = vpop.f32.mrb[0].mxu0
        %1620 = vdwg.mxu0
        %v1621 = vld [vmem:[%s1375 + $0x8] sm:$0xff]
        %v1623 = vsel %vm1214, %v1618, 0
        %1625 = vmatprep.subr.mxu0 0.0
        %1626 = vmatpush1.msra.mxu0 %v1621
        %1627 = vmatprep.subr.mxu0 0.0
        %1628 = vmatpush1.msra.mxu0 0.0
        %1629 = vmatprep.subr.mxu0 0.0
        %1630 = vmatpush1.msra.mxu0 0.0
        %1631 = vmatprep.subr.mxu0 0.0
        %1632 = vmatpush1.msra.mxu0 0.0
        %1633 = vmatprep.subr.mxu0 0.0
        %1634 = vmatpush1.msra.mxu0 0.0
        %1635 = vmatprep.subr.mxu0 0.0
        %1636 = vmatpush1.msra.mxu0 0.0
        %1637 = vmatprep.subr.mxu0 0.0
        %1638 = vmatpush1.msra.mxu0 0.0
        %1639 = vmatprep.subr.mxu0 0.0
        %1640 = vmatpush1.msra.mxu0 0.0
        %1641 = vmatprep.subr.mxu0 0.0
        %1642 = vmatpush1.msra.mxu0 0.0
        %1643 = vmatprep.subr.mxu0 0.0
        %1644 = vmatpush1.msra.mxu0 0.0
        %1645 = vmatprep.subr.mxu0 0.0
        %1646 = vmatpush1.msra.mxu0 0.0
        %1647 = vmatprep.subr.mxu0 0.0
        %1648 = vmatpush1.msra.mxu0 0.0
        %1649 = vmatprep.subr.mxu0 0.0
        %1650 = vmatpush1.msra.mxu0 0.0
        %1651 = vmatprep.subr.mxu0 0.0
        %1652 = vmatpush1.msra.mxu0 0.0
        %1653 = vmatprep.subr.mxu0 0.0
        %1654 = vmatpush1.msra.mxu0 0.0
        %1655 = vmatprep.subr.mxu0 0.0
        %1656 = vmatpush1.msra.mxu0 0.0
        %1657 = vmatprep.subr.mxu0 0.0
        %1658 = vmatpush1.msra.mxu0 0.0
        %1659 = vmatprep.subr.mxu0 0.0
        %1660 = vmatpush1.msra.mxu0 0.0
        %1661 = vmatprep.subr.mxu0 0.0
        %1662 = vmatpush1.msra.mxu0 0.0
        %1663 = vmatprep.subr.mxu0 0.0
        %1664 = vmatpush1.msra.mxu0 0.0
        %1665 = vmatprep.subr.mxu0 0.0
        %1666 = vmatpush1.msra.mxu0 0.0
        %1667 = vmatprep.subr.mxu0 0.0
        %1668 = vmatpush1.msra.mxu0 0.0
        %1669 = vmatprep.subr.mxu0 0.0
        %1670 = vmatpush1.msra.mxu0 0.0
        %1671 = vmatprep.subr.mxu0 0.0
        %1672 = vmatpush1.msra.mxu0 0.0
        %1673 = vmatprep.subr.mxu0 0.0
        %1674 = vmatpush1.msra.mxu0 0.0
        %1675 = vmatprep.subr.mxu0 0.0
        %1676 = vmatpush1.msra.mxu0 0.0
        %1677 = vmatprep.subr.mxu0 0.0
        %1678 = vmatpush1.msra.mxu0 0.0
        %1679 = vmatprep.subr.mxu0 0.0
        %1680 = vmatpush1.msra.mxu0 0.0
        %1681 = vmatprep.subr.mxu0 0.0
        %1682 = vmatpush1.msra.mxu0 0.0
        %1683 = vmatprep.subr.mxu0 0.0
        %1684 = vmatpush1.msra.mxu0 0.0
        %1685 = vmatprep.subr.mxu0 0.0
        %1686 = vmatpush1.msra.mxu0 0.0
        %1687 = vmatprep.subr.mxu0 0.0
        %1688 = vmatpush1.msra.mxu0 0.0
        %1689 = vmatprep.mubr.f32.mxu0 0.0
        %1690 = vmatmul.mubr.f32.gmra.mrb[0].mxu0 %v1623
        %v1691 = vpop.f32.mrb[0].mxu0
        %v1692 = vadd.f32 0.0, %v1691
        %v1693 = vpop.f32.mrb[0].mxu0
        %1694 = vdwg.mxu0
        %v1695 = vadd.f32 %v1454, %v1692
        %1696 = vrot.lane.b32.xlu0 %v1210, 112
        %v1697 = vpop.permute.xlu0 %1696
        %1698 = vrot.lane.b32.xlu0 %v1128, 112
        %v1699 = vpop.permute.xlu0 %1698
        %v1700 = vsel %vm1214, %v1697, 0
        %v1702 = vsel %vm1214, %v1699, 0
        %1704 = vmatprep.subr.mxu0 0.0
        %1705 = vmatpush1.xpose.msra.mxu0 %v1702
        %1706 = vmatprep.subr.mxu0 0.0
        %1707 = vmatpush1.xpose.msra.mxu0 0.0
        %1708 = vmatprep.subr.mxu0 0.0
        %1709 = vmatpush1.xpose.msra.mxu0 0.0
        %1710 = vmatprep.subr.mxu0 0.0
        %1711 = vmatpush1.xpose.msra.mxu0 0.0
        %1712 = vmatprep.subr.mxu0 0.0
        %1713 = vmatpush1.xpose.msra.mxu0 0.0
        %1714 = vmatprep.subr.mxu0 0.0
        %1715 = vmatpush1.xpose.msra.mxu0 0.0
        %1716 = vmatprep.subr.mxu0 0.0
        %1717 = vmatpush1.xpose.msra.mxu0 0.0
        %1718 = vmatprep.subr.mxu0 0.0
        %1719 = vmatpush1.xpose.msra.mxu0 0.0
        %1720 = vmatprep.subr.mxu0 0.0
        %1721 = vmatpush1.xpose.msra.mxu0 0.0
        %1722 = vmatprep.subr.mxu0 0.0
        %1723 = vmatpush1.xpose.msra.mxu0 0.0
        %1724 = vmatprep.subr.mxu0 0.0
        %1725 = vmatpush1.xpose.msra.mxu0 0.0
        %1726 = vmatprep.subr.mxu0 0.0
        %1727 = vmatpush1.xpose.msra.mxu0 0.0
        %1728 = vmatprep.subr.mxu0 0.0
        %1729 = vmatpush1.xpose.msra.mxu0 0.0
        %1730 = vmatprep.subr.mxu0 0.0
        %1731 = vmatpush1.xpose.msra.mxu0 0.0
        %1732 = vmatprep.subr.mxu0 0.0
        %1733 = vmatpush1.xpose.msra.mxu0 0.0
        %1734 = vmatprep.subr.mxu0 0.0
        %1735 = vmatpush1.xpose.msra.mxu0 0.0
        %1736 = vmatprep.subr.mxu0 0.0
        %1737 = vmatpush1.xpose.msra.mxu0 0.0
        %1738 = vmatprep.subr.mxu0 0.0
        %1739 = vmatpush1.xpose.msra.mxu0 0.0
        %1740 = vmatprep.subr.mxu0 0.0
        %1741 = vmatpush1.xpose.msra.mxu0 0.0
        %1742 = vmatprep.subr.mxu0 0.0
        %1743 = vmatpush1.xpose.msra.mxu0 0.0
        %1744 = vmatprep.subr.mxu0 0.0
        %1745 = vmatpush1.xpose.msra.mxu0 0.0
        %1746 = vmatprep.subr.mxu0 0.0
        %1747 = vmatpush1.xpose.msra.mxu0 0.0
        %1748 = vmatprep.subr.mxu0 0.0
        %1749 = vmatpush1.xpose.msra.mxu0 0.0
        %1750 = vmatprep.subr.mxu0 0.0
        %1751 = vmatpush1.xpose.msra.mxu0 0.0
        %1752 = vmatprep.subr.mxu0 0.0
        %1753 = vmatpush1.xpose.msra.mxu0 0.0
        %1754 = vmatprep.subr.mxu0 0.0
        %1755 = vmatpush1.xpose.msra.mxu0 0.0
        %1756 = vmatprep.subr.mxu0 0.0
        %1757 = vmatpush1.xpose.msra.mxu0 0.0
        %1758 = vmatprep.subr.mxu0 0.0
        %1759 = vmatpush1.xpose.msra.mxu0 0.0
        %1760 = vmatprep.subr.mxu0 0.0
        %1761 = vmatpush1.xpose.msra.mxu0 0.0
        %1762 = vmatprep.subr.mxu0 0.0
        %1763 = vmatpush1.xpose.msra.mxu0 0.0
        %1764 = vmatprep.subr.mxu0 0.0
        %1765 = vmatpush1.xpose.msra.mxu0 0.0
        %1766 = vmatprep.subr.mxu0 0.0
        %1767 = vmatpush1.xpose.msra.mxu0 0.0
        %1768 = vmatprep.mubr.f32.mxu0 0.0
        %1769 = vmatmul.mubr.f32.gmra.mrb[0].mxu0 %v1700
        %v1770 = vpop.f32.mrb[0].mxu0
        %v1771 = vadd.f32 %v1122, %v1770
        %v1772 = vpop.f32.mrb[0].mxu0
        %1773 = vdwg.mxu0
        %v1774 = vsel %vm1214, %v1771, -inf
        %1775 = vmax.xlane.f32.xlu0 %v1774
        %v1776 = vpop.xlane.xlu0 %1775
        %v1777 = vsub.f32 %v1771, %v1776
        %v1778 = vmul.f32 %v1777, 1.442695
        %v1779 = vpow.pop %v1778
        %v1780 = vsel %vm1214, %v1779, 0.0
        %1781 = vadd.xlane.f32.xlu0 %v1780
        %v1782 = vpop.xlane.xlu0 %1781
        %v1783 = vrcp.pop %v1782
        %v1784 = vmul.f32 %v1779, %v1783
        %1785 = vrot.lane.b32.xlu0 %v1129, 112
        %v1786 = vpop.permute.xlu0 %1785
        %v1789 = vsel %vm1214, %v1784, 0
        %1791 = vmatprep.subr.mxu0 0.0
        %1792 = vmatpush1.msra.mxu0 %v1786
        %1793 = vmatprep.subr.mxu0 0.0
        %1794 = vmatpush1.msra.mxu0 0.0
        %1795 = vmatprep.subr.mxu0 0.0
        %1796 = vmatpush1.msra.mxu0 0.0
        %1797 = vmatprep.subr.mxu0 0.0
        %1798 = vmatpush1.msra.mxu0 0.0
        %1799 = vmatprep.subr.mxu0 0.0
        %1800 = vmatpush1.msra.mxu0 0.0
        %1801 = vmatprep.subr.mxu0 0.0
        %1802 = vmatpush1.msra.mxu0 0.0
        %1803 = vmatprep.subr.mxu0 0.0
        %1804 = vmatpush1.msra.mxu0 0.0
        %1805 = vmatprep.subr.mxu0 0.0
        %1806 = vmatpush1.msra.mxu0 0.0
        %1807 = vmatprep.subr.mxu0 0.0
        %1808 = vmatpush1.msra.mxu0 0.0
        %1809 = vmatprep.subr.mxu0 0.0
        %1810 = vmatpush1.msra.mxu0 0.0
        %1811 = vmatprep.subr.mxu0 0.0
        %1812 = vmatpush1.msra.mxu0 0.0
        %1813 = vmatprep.subr.mxu0 0.0
        %1814 = vmatpush1.msra.mxu0 0.0
        %1815 = vmatprep.subr.mxu0 0.0
        %1816 = vmatpush1.msra.mxu0 0.0
        %1817 = vmatprep.subr.mxu0 0.0
        %1818 = vmatpush1.msra.mxu0 0.0
        %1819 = vmatprep.subr.mxu0 0.0
        %1820 = vmatpush1.msra.mxu0 0.0
        %1821 = vmatprep.subr.mxu0 0.0
        %1822 = vmatpush1.msra.mxu0 0.0
        %1823 = vmatprep.subr.mxu0 0.0
        %1824 = vmatpush1.msra.mxu0 0.0
        %1825 = vmatprep.subr.mxu0 0.0
        %1826 = vmatpush1.msra.mxu0 0.0
        %1827 = vmatprep.subr.mxu0 0.0
        %1828 = vmatpush1.msra.mxu0 0.0
        %1829 = vmatprep.subr.mxu0 0.0
        %1830 = vmatpush1.msra.mxu0 0.0
        %1831 = vmatprep.subr.mxu0 0.0
        %1832 = vmatpush1.msra.mxu0 0.0
        %1833 = vmatprep.subr.mxu0 0.0
        %1834 = vmatpush1.msra.mxu0 0.0
        %1835 = vmatprep.subr.mxu0 0.0
        %1836 = vmatpush1.msra.mxu0 0.0
        %1837 = vmatprep.subr.mxu0 0.0
        %1838 = vmatpush1.msra.mxu0 0.0
        %1839 = vmatprep.subr.mxu0 0.0
        %1840 = vmatpush1.msra.mxu0 0.0
        %1841 = vmatprep.subr.mxu0 0.0
        %1842 = vmatpush1.msra.mxu0 0.0
        %1843 = vmatprep.subr.mxu0 0.0
        %1844 = vmatpush1.msra.mxu0 0.0
        %1845 = vmatprep.subr.mxu0 0.0
        %1846 = vmatpush1.msra.mxu0 0.0
        %1847 = vmatprep.subr.mxu0 0.0
        %1848 = vmatpush1.msra.mxu0 0.0
        %1849 = vmatprep.subr.mxu0 0.0
        %1850 = vmatpush1.msra.mxu0 0.0
        %1851 = vmatprep.subr.mxu0 0.0
        %1852 = vmatpush1.msra.mxu0 0.0
        %1853 = vmatprep.subr.mxu0 0.0
        %1854 = vmatpush1.msra.mxu0 0.0
        %1855 = vmatprep.mubr.f32.mxu0 0.0
        %1856 = vmatmul.mubr.f32.gmra.mrb[0].mxu0 %v1789
        %v1857 = vpop.f32.mrb[0].mxu0
        %v1858 = vadd.f32 0.0, %v1857
        %v1859 = vpop.f32.mrb[0].mxu0
        %1860 = vdwg.mxu0
        %v1861 = vld [vmem:[%s1375 + $0x10] sm:$0xff]
        %v1863 = vsel %vm1214, %v1858, 0
        %1865 = vmatprep.subr.mxu0 0.0
        %1866 = vmatpush1.msra.mxu0 %v1861
        %1867 = vmatprep.subr.mxu0 0.0
        %1868 = vmatpush1.msra.mxu0 0.0
        %1869 = vmatprep.subr.mxu0 0.0
        %1870 = vmatpush1.msra.mxu0 0.0
        %1871 = vmatprep.subr.mxu0 0.0
        %1872 = vmatpush1.msra.mxu0 0.0
        %1873 = vmatprep.subr.mxu0 0.0
        %1874 = vmatpush1.msra.mxu0 0.0
        %1875 = vmatprep.subr.mxu0 0.0
        %1876 = vmatpush1.msra.mxu0 0.0
        %1877 = vmatprep.subr.mxu0 0.0
        %1878 = vmatpush1.msra.mxu0 0.0
        %1879 = vmatprep.subr.mxu0 0.0
        %1880 = vmatpush1.msra.mxu0 0.0
        %1881 = vmatprep.subr.mxu0 0.0
        %1882 = vmatpush1.msra.mxu0 0.0
        %1883 = vmatprep.subr.mxu0 0.0
        %1884 = vmatpush1.msra.mxu0 0.0
        %1885 = vmatprep.subr.mxu0 0.0
        %1886 = vmatpush1.msra.mxu0 0.0
        %1887 = vmatprep.subr.mxu0 0.0
        %1888 = vmatpush1.msra.mxu0 0.0
        %1889 = vmatprep.subr.mxu0 0.0
        %1890 = vmatpush1.msra.mxu0 0.0
        %1891 = vmatprep.subr.mxu0 0.0
        %1892 = vmatpush1.msra.mxu0 0.0
        %1893 = vmatprep.subr.mxu0 0.0
        %1894 = vmatpush1.msra.mxu0 0.0
        %1895 = vmatprep.subr.mxu0 0.0
        %1896 = vmatpush1.msra.mxu0 0.0
        %1897 = vmatprep.subr.mxu0 0.0
        %1898 = vmatpush1.msra.mxu0 0.0
        %1899 = vmatprep.subr.mxu0 0.0
        %1900 = vmatpush1.msra.mxu0 0.0
        %1901 = vmatprep.subr.mxu0 0.0
        %1902 = vmatpush1.msra.mxu0 0.0
        %1903 = vmatprep.subr.mxu0 0.0
        %1904 = vmatpush1.msra.mxu0 0.0
        %1905 = vmatprep.subr.mxu0 0.0
        %1906 = vmatpush1.msra.mxu0 0.0
        %1907 = vmatprep.subr.mxu0 0.0
        %1908 = vmatpush1.msra.mxu0 0.0
        %1909 = vmatprep.subr.mxu0 0.0
        %1910 = vmatpush1.msra.mxu0 0.0
        %1911 = vmatprep.subr.mxu0 0.0
        %1912 = vmatpush1.msra.mxu0 0.0
        %1913 = vmatprep.subr.mxu0 0.0
        %1914 = vmatpush1.msra.mxu0 0.0
        %1915 = vmatprep.subr.mxu0 0.0
        %1916 = vmatpush1.msra.mxu0 0.0
        %1917 = vmatprep.subr.mxu0 0.0
        %1918 = vmatpush1.msra.mxu0 0.0
        %1919 = vmatprep.subr.mxu0 0.0
        %1920 = vmatpush1.msra.mxu0 0.0
        %1921 = vmatprep.subr.mxu0 0.0
        %1922 = vmatpush1.msra.mxu0 0.0
        %1923 = vmatprep.subr.mxu0 0.0
        %1924 = vmatpush1.msra.mxu0 0.0
        %1925 = vmatprep.subr.mxu0 0.0
        %1926 = vmatpush1.msra.mxu0 0.0
        %1927 = vmatprep.subr.mxu0 0.0
        %1928 = vmatpush1.msra.mxu0 0.0
        %1929 = vmatprep.mubr.f32.mxu0 0.0
        %1930 = vmatmul.mubr.f32.gmra.mrb[0].mxu0 %v1863
        %v1931 = vpop.f32.mrb[0].mxu0
        %v1932 = vadd.f32 0.0, %v1931
        %v1933 = vpop.f32.mrb[0].mxu0
        %1934 = vdwg.mxu0
        %v1935 = vadd.f32 %v1695, %v1932
        %1936 = vrot.lane.b32.xlu0 %v1210, 104
        %v1937 = vpop.permute.xlu0 %1936
        %1938 = vrot.lane.b32.xlu0 %v1128, 104
        %v1939 = vpop.permute.xlu0 %1938
        %v1940 = vsel %vm1214, %v1937, 0
        %v1942 = vsel %vm1214, %v1939, 0
        %1944 = vmatprep.subr.mxu0 0.0
        %1945 = vmatpush1.xpose.msra.mxu0 %v1942
        %1946 = vmatprep.subr.mxu0 0.0
        %1947 = vmatpush1.xpose.msra.mxu0 0.0
        %1948 = vmatprep.subr.mxu0 0.0
        %1949 = vmatpush1.xpose.msra.mxu0 0.0
        %1950 = vmatprep.subr.mxu0 0.0
        %1951 = vmatpush1.xpose.msra.mxu0 0.0
        %1952 = vmatprep.subr.mxu0 0.0
        %1953 = vmatpush1.xpose.msra.mxu0 0.0
        %1954 = vmatprep.subr.mxu0 0.0
        %1955 = vmatpush1.xpose.msra.mxu0 0.0
        %1956 = vmatprep.subr.mxu0 0.0
        %1957 = vmatpush1.xpose.msra.mxu0 0.0
        %1958 = vmatprep.subr.mxu0 0.0
        %1959 = vmatpush1.xpose.msra.mxu0 0.0
        %1960 = vmatprep.subr.mxu0 0.0
        %1961 = vmatpush1.xpose.msra.mxu0 0.0
        %1962 = vmatprep.subr.mxu0 0.0
        %1963 = vmatpush1.xpose.msra.mxu0 0.0
        %1964 = vmatprep.subr.mxu0 0.0
        %1965 = vmatpush1.xpose.msra.mxu0 0.0
        %1966 = vmatprep.subr.mxu0 0.0
        %1967 = vmatpush1.xpose.msra.mxu0 0.0
        %1968 = vmatprep.subr.mxu0 0.0
        %1969 = vmatpush1.xpose.msra.mxu0 0.0
        %1970 = vmatprep.subr.mxu0 0.0
        %1971 = vmatpush1.xpose.msra.mxu0 0.0
        %1972 = vmatprep.subr.mxu0 0.0
        %1973 = vmatpush1.xpose.msra.mxu0 0.0
        %1974 = vmatprep.subr.mxu0 0.0
        %1975 = vmatpush1.xpose.msra.mxu0 0.0
        %1976 = vmatprep.subr.mxu0 0.0
        %1977 = vmatpush1.xpose.msra.mxu0 0.0
        %1978 = vmatprep.subr.mxu0 0.0
        %1979 = vmatpush1.xpose.msra.mxu0 0.0
        %1980 = vmatprep.subr.mxu0 0.0
        %1981 = vmatpush1.xpose.msra.mxu0 0.0
        %1982 = vmatprep.subr.mxu0 0.0
        %1983 = vmatpush1.xpose.msra.mxu0 0.0
        %1984 = vmatprep.subr.mxu0 0.0
        %1985 = vmatpush1.xpose.msra.mxu0 0.0
        %1986 = vmatprep.subr.mxu0 0.0
        %1987 = vmatpush1.xpose.msra.mxu0 0.0
        %1988 = vmatprep.subr.mxu0 0.0
        %1989 = vmatpush1.xpose.msra.mxu0 0.0
        %1990 = vmatprep.subr.mxu0 0.0
        %1991 = vmatpush1.xpose.msra.mxu0 0.0
        %1992 = vmatprep.subr.mxu0 0.0
        %1993 = vmatpush1.xpose.msra.mxu0 0.0
        %1994 = vmatprep.subr.mxu0 0.0
        %1995 = vmatpush1.xpose.msra.mxu0 0.0
        %1996 = vmatprep.subr.mxu0 0.0
        %1997 = vmatpush1.xpose.msra.mxu0 0.0
        %1998 = vmatprep.subr.mxu0 0.0
        %1999 = vmatpush1.xpose.msra.mxu0 0.0
        %2000 = vmatprep.subr.mxu0 0.0
        %2001 = vmatpush1.xpose.msra.mxu0 0.0
        %2002 = vmatprep.subr.mxu0 0.0
        %2003 = vmatpush1.xpose.msra.mxu0 0.0
        %2004 = vmatprep.subr.mxu0 0.0
        %2005 = vmatpush1.xpose.msra.mxu0 0.0
        %2006 = vmatprep.subr.mxu0 0.0
        %2007 = vmatpush1.xpose.msra.mxu0 0.0
        %2008 = vmatprep.mubr.f32.mxu0 0.0
        %2009 = vmatmul.mubr.f32.gmra.mrb[0].mxu0 %v1940
        %v2010 = vpop.f32.mrb[0].mxu0
        %v2011 = vadd.f32 %v1122, %v2010
        %v2012 = vpop.f32.mrb[0].mxu0
        %2013 = vdwg.mxu0
        %v2014 = vsel %vm1214, %v2011, -inf
        %2015 = vmax.xlane.f32.xlu0 %v2014
        %v2016 = vpop.xlane.xlu0 %2015
        %v2017 = vsub.f32 %v2011, %v2016
        %v2018 = vmul.f32 %v2017, 1.442695
        %v2019 = vpow.pop %v2018
        %v2020 = vsel %vm1214, %v2019, 0.0
        %2021 = vadd.xlane.f32.xlu0 %v2020
        %v2022 = vpop.xlane.xlu0 %2021
        %v2023 = vrcp.pop %v2022
        %v2024 = vmul.f32 %v2019, %v2023
        %2025 = vrot.lane.b32.xlu0 %v1129, 104
        %v2026 = vpop.permute.xlu0 %2025
        %v2029 = vsel %vm1214, %v2024, 0
        %2031 = vmatprep.subr.mxu0 0.0
        %2032 = vmatpush1.msra.mxu0 %v2026
        %2033 = vmatprep.subr.mxu0 0.0
        %2034 = vmatpush1.msra.mxu0 0.0
        %2035 = vmatprep.subr.mxu0 0.0
        %2036 = vmatpush1.msra.mxu0 0.0
        %2037 = vmatprep.subr.mxu0 0.0
        %2038 = vmatpush1.msra.mxu0 0.0
        %2039 = vmatprep.subr.mxu0 0.0
        %2040 = vmatpush1.msra.mxu0 0.0
        %2041 = vmatprep.subr.mxu0 0.0
        %2042 = vmatpush1.msra.mxu0 0.0
        %2043 = vmatprep.subr.mxu0 0.0
        %2044 = vmatpush1.msra.mxu0 0.0
        %2045 = vmatprep.subr.mxu0 0.0
        %2046 = vmatpush1.msra.mxu0 0.0
        %2047 = vmatprep.subr.mxu0 0.0
        %2048 = vmatpush1.msra.mxu0 0.0
        %2049 = vmatprep.subr.mxu0 0.0
        %2050 = vmatpush1.msra.mxu0 0.0
        %2051 = vmatprep.subr.mxu0 0.0
        %2052 = vmatpush1.msra.mxu0 0.0
        %2053 = vmatprep.subr.mxu0 0.0
        %2054 = vmatpush1.msra.mxu0 0.0
        %2055 = vmatprep.subr.mxu0 0.0
        %2056 = vmatpush1.msra.mxu0 0.0
        %2057 = vmatprep.subr.mxu0 0.0
        %2058 = vmatpush1.msra.mxu0 0.0
        %2059 = vmatprep.subr.mxu0 0.0
        %2060 = vmatpush1.msra.mxu0 0.0
        %2061 = vmatprep.subr.mxu0 0.0
        %2062 = vmatpush1.msra.mxu0 0.0
        %2063 = vmatprep.subr.mxu0 0.0
        %2064 = vmatpush1.msra.mxu0 0.0
        %2065 = vmatprep.subr.mxu0 0.0
        %2066 = vmatpush1.msra.mxu0 0.0
        %2067 = vmatprep.subr.mxu0 0.0
        %2068 = vmatpush1.msra.mxu0 0.0
        %2069 = vmatprep.subr.mxu0 0.0
        %2070 = vmatpush1.msra.mxu0 0.0
        %2071 = vmatprep.subr.mxu0 0.0
        %2072 = vmatpush1.msra.mxu0 0.0
        %2073 = vmatprep.subr.mxu0 0.0
        %2074 = vmatpush1.msra.mxu0 0.0
        %2075 = vmatprep.subr.mxu0 0.0
        %2076 = vmatpush1.msra.mxu0 0.0
        %2077 = vmatprep.subr.mxu0 0.0
        %2078 = vmatpush1.msra.mxu0 0.0
        %2079 = vmatprep.subr.mxu0 0.0
        %2080 = vmatpush1.msra.mxu0 0.0
        %2081 = vmatprep.subr.mxu0 0.0
        %2082 = vmatpush1.msra.mxu0 0.0
        %2083 = vmatprep.subr.mxu0 0.0
        %2084 = vmatpush1.msra.mxu0 0.0
        %2085 = vmatprep.subr.mxu0 0.0
        %2086 = vmatpush1.msra.mxu0 0.0
        %2087 = vmatprep.subr.mxu0 0.0
        %2088 = vmatpush1.msra.mxu0 0.0
        %2089 = vmatprep.subr.mxu0 0.0
        %2090 = vmatpush1.msra.mxu0 0.0
        %2091 = vmatprep.subr.mxu0 0.0
        %2092 = vmatpush1.msra.mxu0 0.0
        %2093 = vmatprep.subr.mxu0 0.0
        %2094 = vmatpush1.msra.mxu0 0.0
        %2095 = vmatprep.mubr.f32.mxu0 0.0
        %2096 = vmatmul.mubr.f32.gmra.mrb[0].mxu0 %v2029
        %v2097 = vpop.f32.mrb[0].mxu0
        %v2098 = vadd.f32 0.0, %v2097
        %v2099 = vpop.f32.mrb[0].mxu0
        %2100 = vdwg.mxu0
        %v2101 = vld [vmem:[%s1375 + $0x18] sm:$0xff]
        %v2103 = vsel %vm1214, %v2098, 0
        %2105 = vmatprep.subr.mxu0 0.0
        %2106 = vmatpush1.msra.mxu0 %v2101
        %2107 = vmatprep.subr.mxu0 0.0
        %2108 = vmatpush1.msra.mxu0 0.0
        %2109 = vmatprep.subr.mxu0 0.0
        %2110 = vmatpush1.msra.mxu0 0.0
        %2111 = vmatprep.subr.mxu0 0.0
        %2112 = vmatpush1.msra.mxu0 0.0
        %2113 = vmatprep.subr.mxu0 0.0
        %2114 = vmatpush1.msra.mxu0 0.0
        %2115 = vmatprep.subr.mxu0 0.0
        %2116 = vmatpush1.msra.mxu0 0.0
        %2117 = vmatprep.subr.mxu0 0.0
        %2118 = vmatpush1.msra.mxu0 0.0
        %2119 = vmatprep.subr.mxu0 0.0
        %2120 = vmatpush1.msra.mxu0 0.0
        %2121 = vmatprep.subr.mxu0 0.0
        %2122 = vmatpush1.msra.mxu0 0.0
        %2123 = vmatprep.subr.mxu0 0.0
        %2124 = vmatpush1.msra.mxu0 0.0
        %2125 = vmatprep.subr.mxu0 0.0
        %2126 = vmatpush1.msra.mxu0 0.0
        %2127 = vmatprep.subr.mxu0 0.0
        %2128 = vmatpush1.msra.mxu0 0.0
        %2129 = vmatprep.subr.mxu0 0.0
        %2130 = vmatpush1.msra.mxu0 0.0
        %2131 = vmatprep.subr.mxu0 0.0
        %2132 = vmatpush1.msra.mxu0 0.0
        %2133 = vmatprep.subr.mxu0 0.0
        %2134 = vmatpush1.msra.mxu0 0.0
        %2135 = vmatprep.subr.mxu0 0.0
        %2136 = vmatpush1.msra.mxu0 0.0
        %2137 = vmatprep.subr.mxu0 0.0
        %2138 = vmatpush1.msra.mxu0 0.0
        %2139 = vmatprep.subr.mxu0 0.0
        %2140 = vmatpush1.msra.mxu0 0.0
        %2141 = vmatprep.subr.mxu0 0.0
        %2142 = vmatpush1.msra.mxu0 0.0
        %2143 = vmatprep.subr.mxu0 0.0
        %2144 = vmatpush1.msra.mxu0 0.0
        %2145 = vmatprep.subr.mxu0 0.0
        %2146 = vmatpush1.msra.mxu0 0.0
        %2147 = vmatprep.subr.mxu0 0.0
        %2148 = vmatpush1.msra.mxu0 0.0
        %2149 = vmatprep.subr.mxu0 0.0
        %2150 = vmatpush1.msra.mxu0 0.0
        %2151 = vmatprep.subr.mxu0 0.0
        %2152 = vmatpush1.msra.mxu0 0.0
        %2153 = vmatprep.subr.mxu0 0.0
        %2154 = vmatpush1.msra.mxu0 0.0
        %2155 = vmatprep.subr.mxu0 0.0
        %2156 = vmatpush1.msra.mxu0 0.0
        %2157 = vmatprep.subr.mxu0 0.0
        %2158 = vmatpush1.msra.mxu0 0.0
        %2159 = vmatprep.subr.mxu0 0.0
        %2160 = vmatpush1.msra.mxu0 0.0
        %2161 = vmatprep.subr.mxu0 0.0
        %2162 = vmatpush1.msra.mxu0 0.0
        %2163 = vmatprep.subr.mxu0 0.0
        %2164 = vmatpush1.msra.mxu0 0.0
        %2165 = vmatprep.subr.mxu0 0.0
        %2166 = vmatpush1.msra.mxu0 0.0
        %2167 = vmatprep.subr.mxu0 0.0
        %2168 = vmatpush1.msra.mxu0 0.0
        %2169 = vmatprep.mubr.f32.mxu0 0.0
        %2170 = vmatmul.mubr.f32.gmra.mrb[0].mxu0 %v2103
        %v2171 = vpop.f32.mrb[0].mxu0
        %v2172 = vadd.f32 0.0, %v2171
        %v2173 = vpop.f32.mrb[0].mxu0
        %2174 = vdwg.mxu0
        %v2175 = vadd.f32 %v1935, %v2172
        %v2176 = vadd.f32 %v1117, %v2175
        %v2177 = vld [vmem:[#allocation27 + $0x1] sm:$0x1]
        %v2178 = vld [vmem:[#allocation28 + $0x1] sm:$0x1]
        %v2179 = vsel %vm1139, %v2176, 0.0
        %2180 = vadd.xlane.f32.xlu0 %v2179
        %v2181 = vpop.xlane.xlu0 %2180
        %v2182 = vrcp.pop 32.0
        %v2183 = vmul.f32 %v2181, %v2182
        %v2184 = vsub.f32 %v2176, %v2183
        %v2185 = vmul.f32 %v2184, %v2184
        %v2186 = vsel %vm1139, %v2185, 0.0
        %2187 = vadd.xlane.f32.xlu0 %v2186
        %v2188 = vpop.xlane.xlu0 %2187
        %v2189 = vmul.f32 %v2188, 0.032258064
        %v2190 = vrsqrt.pop %v2189
        %v2191 = vmul.f32 %v2189, %v2190
        %vm2192 = vcmp.eq.f32.partialorder %v2189, inf
        %v2193 = vsel %vm2192, %v2189, %v2191
        %vm2194 = vcmp.eq.f32.partialorder %v2189, 0.0
        %v2195 = vand.u32 %v2189, 2147483648
        %v2196 = vsel %vm2194, %v2195, %v2193
        %v2197 = vadd.f32 %v2196, 1e-06
        %v2198 = vrcp.pop %v2197
        %v2199 = vmul.f32 %v2184, %v2198
        %v2200 = vlaneseq
        %v2201 = vshrl.u32 %v2200, 7
        %v2202 = vsub.s32 0, %v2201
        %v2203 = vrot.slane %v2177, %v2202
        %v2204 = vmul.f32 %v2203, %v2199
        %v2205 = vlaneseq
        %v2206 = vshrl.u32 %v2205, 7
        %v2207 = vsub.s32 0, %v2206
        %v2208 = vrot.slane %v2178, %v2207
        %v2209 = vadd.f32 %v2204, %v2208
        %v2210 = vld [vmem:[#allocation5] sm:$0xff]
        %v2211 = vld [vmem:[#allocation6] sm:$0xff]
        %v2212 = vld [vmem:[#allocation18] sm:$0xff]
        %v2213 = vld [vmem:[#allocation18 + $0x8] sm:$0xff]
        %v2214 = vld [vmem:[#allocation18 + $0x10] sm:$0xff]
        %v2215 = vld [vmem:[#allocation18 + $0x18] sm:$0xff]
        %v2216 = vld [vmem:[#allocation19] sm:$0x1]
        %v2217 = vlaneseq
        %v2218 = vshrl.u32 %v2217, 7
        %v2219 = vsub.s32 0, %v2218
        %v2220 = vrot.slane %v2216, %v2219
        %v2222 = vsel %vm1139, %v2209, 0
        %2224 = vmatprep.subr.mxu0 0.0
        %2225 = vmatpush1.msra.mxu0 %v2212
        %2226 = vmatprep.subr.mxu0 0.0
        %2227 = vmatpush1.msra.mxu0 %v2213
        %2228 = vmatprep.subr.mxu0 0.0
        %2229 = vmatpush1.msra.mxu0 %v2214
        %2230 = vmatprep.subr.mxu0 0.0
        %2231 = vmatpush1.msra.mxu0 %v2215
        %2232 = vmatprep.subr.mxu0 0.0
        %2233 = vmatpush1.msra.mxu0 0.0
        %2234 = vmatprep.subr.mxu0 0.0
        %2235 = vmatpush1.msra.mxu0 0.0
        %2236 = vmatprep.subr.mxu0 0.0
        %2237 = vmatpush1.msra.mxu0 0.0
        %2238 = vmatprep.subr.mxu0 0.0
        %2239 = vmatpush1.msra.mxu0 0.0
        %2240 = vmatprep.subr.mxu0 0.0
        %2241 = vmatpush1.msra.mxu0 0.0
        %2242 = vmatprep.subr.mxu0 0.0
        %2243 = vmatpush1.msra.mxu0 0.0
        %2244 = vmatprep.subr.mxu0 0.0
        %2245 = vmatpush1.msra.mxu0 0.0
        %2246 = vmatprep.subr.mxu0 0.0
        %2247 = vmatpush1.msra.mxu0 0.0
        %2248 = vmatprep.subr.mxu0 0.0
        %2249 = vmatpush1.msra.mxu0 0.0
        %2250 = vmatprep.subr.mxu0 0.0
        %2251 = vmatpush1.msra.mxu0 0.0
        %2252 = vmatprep.subr.mxu0 0.0
        %2253 = vmatpush1.msra.mxu0 0.0
        %2254 = vmatprep.subr.mxu0 0.0
        %2255 = vmatpush1.msra.mxu0 0.0
        %2256 = vmatprep.subr.mxu0 0.0
        %2257 = vmatpush1.msra.mxu0 0.0
        %2258 = vmatprep.subr.mxu0 0.0
        %2259 = vmatpush1.msra.mxu0 0.0
        %2260 = vmatprep.subr.mxu0 0.0
        %2261 = vmatpush1.msra.mxu0 0.0
        %2262 = vmatprep.subr.mxu0 0.0
        %2263 = vmatpush1.msra.mxu0 0.0
        %2264 = vmatprep.subr.mxu0 0.0
        %2265 = vmatpush1.msra.mxu0 0.0
        %2266 = vmatprep.subr.mxu0 0.0
        %2267 = vmatpush1.msra.mxu0 0.0
        %2268 = vmatprep.subr.mxu0 0.0
        %2269 = vmatpush1.msra.mxu0 0.0
        %2270 = vmatprep.subr.mxu0 0.0
        %2271 = vmatpush1.msra.mxu0 0.0
        %2272 = vmatprep.subr.mxu0 0.0
        %2273 = vmatpush1.msra.mxu0 0.0
        %2274 = vmatprep.subr.mxu0 0.0
        %2275 = vmatpush1.msra.mxu0 0.0
        %2276 = vmatprep.subr.mxu0 0.0
        %2277 = vmatpush1.msra.mxu0 0.0
        %2278 = vmatprep.subr.mxu0 0.0
        %2279 = vmatpush1.msra.mxu0 0.0
        %2280 = vmatprep.subr.mxu0 0.0
        %2281 = vmatpush1.msra.mxu0 0.0
        %2282 = vmatprep.subr.mxu0 0.0
        %2283 = vmatpush1.msra.mxu0 0.0
        %2284 = vmatprep.subr.mxu0 0.0
        %2285 = vmatpush1.msra.mxu0 0.0
        %2286 = vmatprep.subr.mxu0 0.0
        %2287 = vmatpush1.msra.mxu0 0.0
        %2288 = vmatprep.mubr.f32.mxu0 0.0
        %2289 = vmatmul.mubr.f32.gmra.mrb[0].mxu0 %v2222
        %v2290 = vpop.f32.mrb[0].mxu0
        %v2291 = vadd.f32 %v2220, %v2290
        %v2292 = vpop.f32.mrb[0].mxu0
        %2293 = vdwg.mxu0
        %v2294 = vld [vmem:[#allocation19 + $0x3] sm:$0x1]
        %v2296 = vsel %vm1214, %v2291, 0
        %v2299 = vsel %vm1214, %v2210, 0
        %2301 = vmatprep.subr.mxu0 0.0
        %2302 = vmatpush1.xpose.msra.mxu0 %v2299
        %2303 = vmatprep.subr.mxu0 0.0
        %2304 = vmatpush1.xpose.msra.mxu0 0.0
        %2305 = vmatprep.subr.mxu0 0.0
        %2306 = vmatpush1.xpose.msra.mxu0 0.0
        %2307 = vmatprep.subr.mxu0 0.0
        %2308 = vmatpush1.xpose.msra.mxu0 0.0
        %2309 = vmatprep.subr.mxu0 0.0
        %2310 = vmatpush1.xpose.msra.mxu0 0.0
        %2311 = vmatprep.subr.mxu0 0.0
        %2312 = vmatpush1.xpose.msra.mxu0 0.0
        %2313 = vmatprep.subr.mxu0 0.0
        %2314 = vmatpush1.xpose.msra.mxu0 0.0
        %2315 = vmatprep.subr.mxu0 0.0
        %2316 = vmatpush1.xpose.msra.mxu0 0.0
        %2317 = vmatprep.subr.mxu0 0.0
        %2318 = vmatpush1.xpose.msra.mxu0 0.0
        %2319 = vmatprep.subr.mxu0 0.0
        %2320 = vmatpush1.xpose.msra.mxu0 0.0
        %2321 = vmatprep.subr.mxu0 0.0
        %2322 = vmatpush1.xpose.msra.mxu0 0.0
        %2323 = vmatprep.subr.mxu0 0.0
        %2324 = vmatpush1.xpose.msra.mxu0 0.0
        %2325 = vmatprep.subr.mxu0 0.0
        %2326 = vmatpush1.xpose.msra.mxu0 0.0
        %2327 = vmatprep.subr.mxu0 0.0
        %2328 = vmatpush1.xpose.msra.mxu0 0.0
        %2329 = vmatprep.subr.mxu0 0.0
        %2330 = vmatpush1.xpose.msra.mxu0 0.0
        %2331 = vmatprep.subr.mxu0 0.0
        %2332 = vmatpush1.xpose.msra.mxu0 0.0
        %2333 = vmatprep.subr.mxu0 0.0
        %2334 = vmatpush1.xpose.msra.mxu0 0.0
        %2335 = vmatprep.subr.mxu0 0.0
        %2336 = vmatpush1.xpose.msra.mxu0 0.0
        %2337 = vmatprep.subr.mxu0 0.0
        %2338 = vmatpush1.xpose.msra.mxu0 0.0
        %2339 = vmatprep.subr.mxu0 0.0
        %2340 = vmatpush1.xpose.msra.mxu0 0.0
        %2341 = vmatprep.subr.mxu0 0.0
        %2342 = vmatpush1.xpose.msra.mxu0 0.0
        %2343 = vmatprep.subr.mxu0 0.0
        %2344 = vmatpush1.xpose.msra.mxu0 0.0
        %2345 = vmatprep.subr.mxu0 0.0
        %2346 = vmatpush1.xpose.msra.mxu0 0.0
        %2347 = vmatprep.subr.mxu0 0.0
        %2348 = vmatpush1.xpose.msra.mxu0 0.0
        %2349 = vmatprep.subr.mxu0 0.0
        %2350 = vmatpush1.xpose.msra.mxu0 0.0
        %2351 = vmatprep.subr.mxu0 0.0
        %2352 = vmatpush1.xpose.msra.mxu0 0.0
        %2353 = vmatprep.subr.mxu0 0.0
        %2354 = vmatpush1.xpose.msra.mxu0 0.0
        %2355 = vmatprep.subr.mxu0 0.0
        %2356 = vmatpush1.xpose.msra.mxu0 0.0
        %2357 = vmatprep.subr.mxu0 0.0
        %2358 = vmatpush1.xpose.msra.mxu0 0.0
        %2359 = vmatprep.subr.mxu0 0.0
        %2360 = vmatpush1.xpose.msra.mxu0 0.0
        %2361 = vmatprep.subr.mxu0 0.0
        %2362 = vmatpush1.xpose.msra.mxu0 0.0
        %2363 = vmatprep.subr.mxu0 0.0
        %2364 = vmatpush1.xpose.msra.mxu0 0.0
        %2365 = vmatprep.mubr.f32.mxu0 0.0
        %2366 = vmatmul.mubr.f32.gmra.mrb[0].mxu0 %v2296
        %v2367 = vpop.f32.mrb[0].mxu0
        %v2368 = vadd.f32 %v1125, %v2367
        %v2369 = vpop.f32.mrb[0].mxu0
        %2370 = vdwg.mxu0
        %v2371 = vsel %vm1214, %v2368, -inf
        %2372 = vmax.xlane.f32.xlu0 %v2371
        %v2373 = vpop.xlane.xlu0 %2372
        %v2374 = vsub.f32 %v2368, %v2373
        %v2375 = vmul.f32 %v2374, 1.442695
        %v2376 = vpow.pop %v2375
        %v2377 = vsel %vm1214, %v2376, 0.0
        %2378 = vadd.xlane.f32.xlu0 %v2377
        %v2379 = vpop.xlane.xlu0 %2378
        %v2380 = vrcp.pop %v2379
        %v2381 = vmul.f32 %v2376, %v2380
        %v2383 = vsel %vm1214, %v2381, 0
        %2385 = vmatprep.subr.mxu0 0.0
        %2386 = vmatpush1.msra.mxu0 %v2211
        %2387 = vmatprep.subr.mxu0 0.0
        %2388 = vmatpush1.msra.mxu0 0.0
        %2389 = vmatprep.subr.mxu0 0.0
        %2390 = vmatpush1.msra.mxu0 0.0
        %2391 = vmatprep.subr.mxu0 0.0
        %2392 = vmatpush1.msra.mxu0 0.0
        %2393 = vmatprep.subr.mxu0 0.0
        %2394 = vmatpush1.msra.mxu0 0.0
        %2395 = vmatprep.subr.mxu0 0.0
        %2396 = vmatpush1.msra.mxu0 0.0
        %2397 = vmatprep.subr.mxu0 0.0
        %2398 = vmatpush1.msra.mxu0 0.0
        %2399 = vmatprep.subr.mxu0 0.0
        %2400 = vmatpush1.msra.mxu0 0.0
        %2401 = vmatprep.subr.mxu0 0.0
        %2402 = vmatpush1.msra.mxu0 0.0
        %2403 = vmatprep.subr.mxu0 0.0
        %2404 = vmatpush1.msra.mxu0 0.0
        %2405 = vmatprep.subr.mxu0 0.0
        %2406 = vmatpush1.msra.mxu0 0.0
        %2407 = vmatprep.subr.mxu0 0.0
        %2408 = vmatpush1.msra.mxu0 0.0
        %2409 = vmatprep.subr.mxu0 0.0
        %2410 = vmatpush1.msra.mxu0 0.0
        %2411 = vmatprep.subr.mxu0 0.0
        %2412 = vmatpush1.msra.mxu0 0.0
        %2413 = vmatprep.subr.mxu0 0.0
        %2414 = vmatpush1.msra.mxu0 0.0
        %2415 = vmatprep.subr.mxu0 0.0
        %2416 = vmatpush1.msra.mxu0 0.0
        %2417 = vmatprep.subr.mxu0 0.0
        %2418 = vmatpush1.msra.mxu0 0.0
        %2419 = vmatprep.subr.mxu0 0.0
        %2420 = vmatpush1.msra.mxu0 0.0
        %2421 = vmatprep.subr.mxu0 0.0
        %2422 = vmatpush1.msra.mxu0 0.0
        %2423 = vmatprep.subr.mxu0 0.0
        %2424 = vmatpush1.msra.mxu0 0.0
        %2425 = vmatprep.subr.mxu0 0.0
        %2426 = vmatpush1.msra.mxu0 0.0
        %2427 = vmatprep.subr.mxu0 0.0
        %2428 = vmatpush1.msra.mxu0 0.0
        %2429 = vmatprep.subr.mxu0 0.0
        %2430 = vmatpush1.msra.mxu0 0.0
        %2431 = vmatprep.subr.mxu0 0.0
        %2432 = vmatpush1.msra.mxu0 0.0
        %2433 = vmatprep.subr.mxu0 0.0
        %2434 = vmatpush1.msra.mxu0 0.0
        %2435 = vmatprep.subr.mxu0 0.0
        %2436 = vmatpush1.msra.mxu0 0.0
        %2437 = vmatprep.subr.mxu0 0.0
        %2438 = vmatpush1.msra.mxu0 0.0
        %2439 = vmatprep.subr.mxu0 0.0
        %2440 = vmatpush1.msra.mxu0 0.0
        %2441 = vmatprep.subr.mxu0 0.0
        %2442 = vmatpush1.msra.mxu0 0.0
        %2443 = vmatprep.subr.mxu0 0.0
        %2444 = vmatpush1.msra.mxu0 0.0
        %2445 = vmatprep.subr.mxu0 0.0
        %2446 = vmatpush1.msra.mxu0 0.0
        %2447 = vmatprep.subr.mxu0 0.0
        %2448 = vmatpush1.msra.mxu0 0.0
        %2449 = vmatprep.mubr.f32.mxu0 0.0
        %2450 = vmatmul.mubr.f32.gmra.mrb[0].mxu0 %v2383
        %v2451 = vpop.f32.mrb[0].mxu0
        %v2452 = vadd.f32 0.0, %v2451
        %v2453 = vpop.f32.mrb[0].mxu0
        %2454 = vdwg.mxu0
        %s2455 = scalar_lea.vmem [#allocation18], 96
        %v2456 = vld [vmem:[%s2455] sm:$0xff]
        %v2458 = vsel %vm1214, %v2452, 0
        %2460 = vmatprep.subr.mxu0 0.0
        %2461 = vmatpush1.msra.mxu0 %v2456
        %2462 = vmatprep.subr.mxu0 0.0
        %2463 = vmatpush1.msra.mxu0 0.0
        %2464 = vmatprep.subr.mxu0 0.0
        %2465 = vmatpush1.msra.mxu0 0.0
        %2466 = vmatprep.subr.mxu0 0.0
        %2467 = vmatpush1.msra.mxu0 0.0
        %2468 = vmatprep.subr.mxu0 0.0
        %2469 = vmatpush1.msra.mxu0 0.0
        %2470 = vmatprep.subr.mxu0 0.0
        %2471 = vmatpush1.msra.mxu0 0.0
        %2472 = vmatprep.subr.mxu0 0.0
        %2473 = vmatpush1.msra.mxu0 0.0
        %2474 = vmatprep.subr.mxu0 0.0
        %2475 = vmatpush1.msra.mxu0 0.0
        %2476 = vmatprep.subr.mxu0 0.0
        %2477 = vmatpush1.msra.mxu0 0.0
        %2478 = vmatprep.subr.mxu0 0.0
        %2479 = vmatpush1.msra.mxu0 0.0
        %2480 = vmatprep.subr.mxu0 0.0
        %2481 = vmatpush1.msra.mxu0 0.0
        %2482 = vmatprep.subr.mxu0 0.0
        %2483 = vmatpush1.msra.mxu0 0.0
        %2484 = vmatprep.subr.mxu0 0.0
        %2485 = vmatpush1.msra.mxu0 0.0
        %2486 = vmatprep.subr.mxu0 0.0
        %2487 = vmatpush1.msra.mxu0 0.0
        %2488 = vmatprep.subr.mxu0 0.0
        %2489 = vmatpush1.msra.mxu0 0.0
        %2490 = vmatprep.subr.mxu0 0.0
        %2491 = vmatpush1.msra.mxu0 0.0
        %2492 = vmatprep.subr.mxu0 0.0
        %2493 = vmatpush1.msra.mxu0 0.0
        %2494 = vmatprep.subr.mxu0 0.0
        %2495 = vmatpush1.msra.mxu0 0.0
        %2496 = vmatprep.subr.mxu0 0.0
        %2497 = vmatpush1.msra.mxu0 0.0
        %2498 = vmatprep.subr.mxu0 0.0
        %2499 = vmatpush1.msra.mxu0 0.0
        %2500 = vmatprep.subr.mxu0 0.0
        %2501 = vmatpush1.msra.mxu0 0.0
        %2502 = vmatprep.subr.mxu0 0.0
        %2503 = vmatpush1.msra.mxu0 0.0
        %2504 = vmatprep.subr.mxu0 0.0
        %2505 = vmatpush1.msra.mxu0 0.0
        %2506 = vmatprep.subr.mxu0 0.0
        %2507 = vmatpush1.msra.mxu0 0.0
        %2508 = vmatprep.subr.mxu0 0.0
        %2509 = vmatpush1.msra.mxu0 0.0
        %2510 = vmatprep.subr.mxu0 0.0
        %2511 = vmatpush1.msra.mxu0 0.0
        %2512 = vmatprep.subr.mxu0 0.0
        %2513 = vmatpush1.msra.mxu0 0.0
        %2514 = vmatprep.subr.mxu0 0.0
        %2515 = vmatpush1.msra.mxu0 0.0
        %2516 = vmatprep.subr.mxu0 0.0
        %2517 = vmatpush1.msra.mxu0 0.0
        %2518 = vmatprep.subr.mxu0 0.0
        %2519 = vmatpush1.msra.mxu0 0.0
        %2520 = vmatprep.subr.mxu0 0.0
        %2521 = vmatpush1.msra.mxu0 0.0
        %2522 = vmatprep.subr.mxu0 0.0
        %2523 = vmatpush1.msra.mxu0 0.0
        %2524 = vmatprep.mubr.f32.mxu0 0.0
        %2525 = vmatmul.mubr.f32.gmra.mrb[0].mxu0 %v2458
        %v2526 = vpop.f32.mrb[0].mxu0
        %v2527 = vadd.f32 0.0, %v2526
        %v2528 = vpop.f32.mrb[0].mxu0
        %2529 = vdwg.mxu0
        %v2530 = vlaneseq
        %v2531 = vshrl.u32 %v2530, 7
        %v2532 = vsub.s32 0, %v2531
        %v2533 = vrot.slane %v2294, %v2532
        %v2534 = vadd.f32 %v2533, %v2527
        %2535 = vrot.lane.b32.xlu0 %v2291, 120
        %v2536 = vpop.permute.xlu0 %2535
        %2537 = vrot.lane.b32.xlu0 %v2210, 120
        %v2538 = vpop.permute.xlu0 %2537
        %v2539 = vsel %vm1214, %v2536, 0
        %v2541 = vsel %vm1214, %v2538, 0
        %2543 = vmatprep.subr.mxu0 0.0
        %2544 = vmatpush1.xpose.msra.mxu0 %v2541
        %2545 = vmatprep.subr.mxu0 0.0
        %2546 = vmatpush1.xpose.msra.mxu0 0.0
        %2547 = vmatprep.subr.mxu0 0.0
        %2548 = vmatpush1.xpose.msra.mxu0 0.0
        %2549 = vmatprep.subr.mxu0 0.0
        %2550 = vmatpush1.xpose.msra.mxu0 0.0
        %2551 = vmatprep.subr.mxu0 0.0
        %2552 = vmatpush1.xpose.msra.mxu0 0.0
        %2553 = vmatprep.subr.mxu0 0.0
        %2554 = vmatpush1.xpose.msra.mxu0 0.0
        %2555 = vmatprep.subr.mxu0 0.0
        %2556 = vmatpush1.xpose.msra.mxu0 0.0
        %2557 = vmatprep.subr.mxu0 0.0
        %2558 = vmatpush1.xpose.msra.mxu0 0.0
        %2559 = vmatprep.subr.mxu0 0.0
        %2560 = vmatpush1.xpose.msra.mxu0 0.0
        %2561 = vmatprep.subr.mxu0 0.0
        %2562 = vmatpush1.xpose.msra.mxu0 0.0
        %2563 = vmatprep.subr.mxu0 0.0
        %2564 = vmatpush1.xpose.msra.mxu0 0.0
        %2565 = vmatprep.subr.mxu0 0.0
        %2566 = vmatpush1.xpose.msra.mxu0 0.0
        %2567 = vmatprep.subr.mxu0 0.0
        %2568 = vmatpush1.xpose.msra.mxu0 0.0
        %2569 = vmatprep.subr.mxu0 0.0
        %2570 = vmatpush1.xpose.msra.mxu0 0.0
        %2571 = vmatprep.subr.mxu0 0.0
        %2572 = vmatpush1.xpose.msra.mxu0 0.0
        %2573 = vmatprep.subr.mxu0 0.0
        %2574 = vmatpush1.xpose.msra.mxu0 0.0
        %2575 = vmatprep.subr.mxu0 0.0
        %2576 = vmatpush1.xpose.msra.mxu0 0.0
        %2577 = vmatprep.subr.mxu0 0.0
        %2578 = vmatpush1.xpose.msra.mxu0 0.0
        %2579 = vmatprep.subr.mxu0 0.0
        %2580 = vmatpush1.xpose.msra.mxu0 0.0
        %2581 = vmatprep.subr.mxu0 0.0
        %2582 = vmatpush1.xpose.msra.mxu0 0.0
        %2583 = vmatprep.subr.mxu0 0.0
        %2584 = vmatpush1.xpose.msra.mxu0 0.0
        %2585 = vmatprep.subr.mxu0 0.0
        %2586 = vmatpush1.xpose.msra.mxu0 0.0
        %2587 = vmatprep.subr.mxu0 0.0
        %2588 = vmatpush1.xpose.msra.mxu0 0.0
        %2589 = vmatprep.subr.mxu0 0.0
        %2590 = vmatpush1.xpose.msra.mxu0 0.0
        %2591 = vmatprep.subr.mxu0 0.0
        %2592 = vmatpush1.xpose.msra.mxu0 0.0
        %2593 = vmatprep.subr.mxu0 0.0
        %2594 = vmatpush1.xpose.msra.mxu0 0.0
        %2595 = vmatprep.subr.mxu0 0.0
        %2596 = vmatpush1.xpose.msra.mxu0 0.0
        %2597 = vmatprep.subr.mxu0 0.0
        %2598 = vmatpush1.xpose.msra.mxu0 0.0
        %2599 = vmatprep.subr.mxu0 0.0
        %2600 = vmatpush1.xpose.msra.mxu0 0.0
        %2601 = vmatprep.subr.mxu0 0.0
        %2602 = vmatpush1.xpose.msra.mxu0 0.0
        %2603 = vmatprep.subr.mxu0 0.0
        %2604 = vmatpush1.xpose.msra.mxu0 0.0
        %2605 = vmatprep.subr.mxu0 0.0
        %2606 = vmatpush1.xpose.msra.mxu0 0.0
        %2607 = vmatprep.mubr.f32.mxu0 0.0
        %2608 = vmatmul.mubr.f32.gmra.mrb[0].mxu0 %v2539
        %v2609 = vpop.f32.mrb[0].mxu0
        %v2610 = vadd.f32 %v1125, %v2609
        %v2611 = vpop.f32.mrb[0].mxu0
        %2612 = vdwg.mxu0
        %v2613 = vsel %vm1214, %v2610, -inf
        %2614 = vmax.xlane.f32.xlu0 %v2613
        %v2615 = vpop.xlane.xlu0 %2614
        %v2616 = vsub.f32 %v2610, %v2615
        %v2617 = vmul.f32 %v2616, 1.442695
        %v2618 = vpow.pop %v2617
        %v2619 = vsel %vm1214, %v2618, 0.0
        %2620 = vadd.xlane.f32.xlu0 %v2619
        %v2621 = vpop.xlane.xlu0 %2620
        %v2622 = vrcp.pop %v2621
        %v2623 = vmul.f32 %v2618, %v2622
        %2625 = vrot.lane.b32.xlu0 %v2211, 120
        %v2626 = vpop.permute.xlu0 %2625
        %v2629 = vsel %vm1214, %v2623, 0
        %2631 = vmatprep.subr.mxu0 0.0
        %2632 = vmatpush1.msra.mxu0 %v2626
        %2633 = vmatprep.subr.mxu0 0.0
        %2634 = vmatpush1.msra.mxu0 0.0
        %2635 = vmatprep.subr.mxu0 0.0
        %2636 = vmatpush1.msra.mxu0 0.0
        %2637 = vmatprep.subr.mxu0 0.0
        %2638 = vmatpush1.msra.mxu0 0.0
        %2639 = vmatprep.subr.mxu0 0.0
        %2640 = vmatpush1.msra.mxu0 0.0
        %2641 = vmatprep.subr.mxu0 0.0
        %2642 = vmatpush1.msra.mxu0 0.0
        %2643 = vmatprep.subr.mxu0 0.0
        %2644 = vmatpush1.msra.mxu0 0.0
        %2645 = vmatprep.subr.mxu0 0.0
        %2646 = vmatpush1.msra.mxu0 0.0
        %2647 = vmatprep.subr.mxu0 0.0
        %2648 = vmatpush1.msra.mxu0 0.0
        %2649 = vmatprep.subr.mxu0 0.0
        %2650 = vmatpush1.msra.mxu0 0.0
        %2651 = vmatprep.subr.mxu0 0.0
        %2652 = vmatpush1.msra.mxu0 0.0
        %2653 = vmatprep.subr.mxu0 0.0
        %2654 = vmatpush1.msra.mxu0 0.0
        %2655 = vmatprep.subr.mxu0 0.0
        %2656 = vmatpush1.msra.mxu0 0.0
        %2657 = vmatprep.subr.mxu0 0.0
        %2658 = vmatpush1.msra.mxu0 0.0
        %2659 = vmatprep.subr.mxu0 0.0
        %2660 = vmatpush1.msra.mxu0 0.0
        %2661 = vmatprep.subr.mxu0 0.0
        %2662 = vmatpush1.msra.mxu0 0.0
        %2663 = vmatprep.subr.mxu0 0.0
        %2664 = vmatpush1.msra.mxu0 0.0
        %2665 = vmatprep.subr.mxu0 0.0
        %2666 = vmatpush1.msra.mxu0 0.0
        %2667 = vmatprep.subr.mxu0 0.0
        %2668 = vmatpush1.msra.mxu0 0.0
        %2669 = vmatprep.subr.mxu0 0.0
        %2670 = vmatpush1.msra.mxu0 0.0
        %2671 = vmatprep.subr.mxu0 0.0
        %2672 = vmatpush1.msra.mxu0 0.0
        %2673 = vmatprep.subr.mxu0 0.0
        %2674 = vmatpush1.msra.mxu0 0.0
        %2675 = vmatprep.subr.mxu0 0.0
        %2676 = vmatpush1.msra.mxu0 0.0
        %2677 = vmatprep.subr.mxu0 0.0
        %2678 = vmatpush1.msra.mxu0 0.0
        %2679 = vmatprep.subr.mxu0 0.0
        %2680 = vmatpush1.msra.mxu0 0.0
        %2681 = vmatprep.subr.mxu0 0.0
        %2682 = vmatpush1.msra.mxu0 0.0
        %2683 = vmatprep.subr.mxu0 0.0
        %2684 = vmatpush1.msra.mxu0 0.0
        %2685 = vmatprep.subr.mxu0 0.0
        %2686 = vmatpush1.msra.mxu0 0.0
        %2687 = vmatprep.subr.mxu0 0.0
        %2688 = vmatpush1.msra.mxu0 0.0
        %2689 = vmatprep.subr.mxu0 0.0
        %2690 = vmatpush1.msra.mxu0 0.0
        %2691 = vmatprep.subr.mxu0 0.0
        %2692 = vmatpush1.msra.mxu0 0.0
        %2693 = vmatprep.subr.mxu0 0.0
        %2694 = vmatpush1.msra.mxu0 0.0
        %2695 = vmatprep.mubr.f32.mxu0 0.0
        %2696 = vmatmul.mubr.f32.gmra.mrb[0].mxu0 %v2629
        %v2697 = vpop.f32.mrb[0].mxu0
        %v2698 = vadd.f32 0.0, %v2697
        %v2699 = vpop.f32.mrb[0].mxu0
        %2700 = vdwg.mxu0
        %v2701 = vld [vmem:[%s2455 + $0x8] sm:$0xff]
        %v2703 = vsel %vm1214, %v2698, 0
        %2705 = vmatprep.subr.mxu0 0.0
        %2706 = vmatpush1.msra.mxu0 %v2701
        %2707 = vmatprep.subr.mxu0 0.0
        %2708 = vmatpush1.msra.mxu0 0.0
        %2709 = vmatprep.subr.mxu0 0.0
        %2710 = vmatpush1.msra.mxu0 0.0
        %2711 = vmatprep.subr.mxu0 0.0
        %2712 = vmatpush1.msra.mxu0 0.0
        %2713 = vmatprep.subr.mxu0 0.0
        %2714 = vmatpush1.msra.mxu0 0.0
        %2715 = vmatprep.subr.mxu0 0.0
        %2716 = vmatpush1.msra.mxu0 0.0
        %2717 = vmatprep.subr.mxu0 0.0
        %2718 = vmatpush1.msra.mxu0 0.0
        %2719 = vmatprep.subr.mxu0 0.0
        %2720 = vmatpush1.msra.mxu0 0.0
        %2721 = vmatprep.subr.mxu0 0.0
        %2722 = vmatpush1.msra.mxu0 0.0
        %2723 = vmatprep.subr.mxu0 0.0
        %2724 = vmatpush1.msra.mxu0 0.0
        %2725 = vmatprep.subr.mxu0 0.0
        %2726 = vmatpush1.msra.mxu0 0.0
        %2727 = vmatprep.subr.mxu0 0.0
        %2728 = vmatpush1.msra.mxu0 0.0
        %2729 = vmatprep.subr.mxu0 0.0
        %2730 = vmatpush1.msra.mxu0 0.0
        %2731 = vmatprep.subr.mxu0 0.0
        %2732 = vmatpush1.msra.mxu0 0.0
        %2733 = vmatprep.subr.mxu0 0.0
        %2734 = vmatpush1.msra.mxu0 0.0
        %2735 = vmatprep.subr.mxu0 0.0
        %2736 = vmatpush1.msra.mxu0 0.0
        %2737 = vmatprep.subr.mxu0 0.0
        %2738 = vmatpush1.msra.mxu0 0.0
        %2739 = vmatprep.subr.mxu0 0.0
        %2740 = vmatpush1.msra.mxu0 0.0
        %2741 = vmatprep.subr.mxu0 0.0
        %2742 = vmatpush1.msra.mxu0 0.0
        %2743 = vmatprep.subr.mxu0 0.0
        %2744 = vmatpush1.msra.mxu0 0.0
        %2745 = vmatprep.subr.mxu0 0.0
        %2746 = vmatpush1.msra.mxu0 0.0
        %2747 = vmatprep.subr.mxu0 0.0
        %2748 = vmatpush1.msra.mxu0 0.0
        %2749 = vmatprep.subr.mxu0 0.0
        %2750 = vmatpush1.msra.mxu0 0.0
        %2751 = vmatprep.subr.mxu0 0.0
        %2752 = vmatpush1.msra.mxu0 0.0
        %2753 = vmatprep.subr.mxu0 0.0
        %2754 = vmatpush1.msra.mxu0 0.0
        %2755 = vmatprep.subr.mxu0 0.0
        %2756 = vmatpush1.msra.mxu0 0.0
        %2757 = vmatprep.subr.mxu0 0.0
        %2758 = vmatpush1.msra.mxu0 0.0
        %2759 = vmatprep.subr.mxu0 0.0
        %2760 = vmatpush1.msra.mxu0 0.0
        %2761 = vmatprep.subr.mxu0 0.0
        %2762 = vmatpush1.msra.mxu0 0.0
        %2763 = vmatprep.subr.mxu0 0.0
        %2764 = vmatpush1.msra.mxu0 0.0
        %2765 = vmatprep.subr.mxu0 0.0
        %2766 = vmatpush1.msra.mxu0 0.0
        %2767 = vmatprep.subr.mxu0 0.0
        %2768 = vmatpush1.msra.mxu0 0.0
        %2769 = vmatprep.mubr.f32.mxu0 0.0
        %2770 = vmatmul.mubr.f32.gmra.mrb[0].mxu0 %v2703
        %v2771 = vpop.f32.mrb[0].mxu0
        %v2772 = vadd.f32 0.0, %v2771
        %v2773 = vpop.f32.mrb[0].mxu0
        %2774 = vdwg.mxu0
        %v2775 = vadd.f32 %v2534, %v2772
        %2776 = vrot.lane.b32.xlu0 %v2291, 112
        %v2777 = vpop.permute.xlu0 %2776
        %2778 = vrot.lane.b32.xlu0 %v2210, 112
        %v2779 = vpop.permute.xlu0 %2778
        %v2780 = vsel %vm1214, %v2777, 0
        %v2782 = vsel %vm1214, %v2779, 0
        %2784 = vmatprep.subr.mxu0 0.0
        %2785 = vmatpush1.xpose.msra.mxu0 %v2782
        %2786 = vmatprep.subr.mxu0 0.0
        %2787 = vmatpush1.xpose.msra.mxu0 0.0
        %2788 = vmatprep.subr.mxu0 0.0
        %2789 = vmatpush1.xpose.msra.mxu0 0.0
        %2790 = vmatprep.subr.mxu0 0.0
        %2791 = vmatpush1.xpose.msra.mxu0 0.0
        %2792 = vmatprep.subr.mxu0 0.0
        %2793 = vmatpush1.xpose.msra.mxu0 0.0
        %2794 = vmatprep.subr.mxu0 0.0
        %2795 = vmatpush1.xpose.msra.mxu0 0.0
        %2796 = vmatprep.subr.mxu0 0.0
        %2797 = vmatpush1.xpose.msra.mxu0 0.0
        %2798 = vmatprep.subr.mxu0 0.0
        %2799 = vmatpush1.xpose.msra.mxu0 0.0
        %2800 = vmatprep.subr.mxu0 0.0
        %2801 = vmatpush1.xpose.msra.mxu0 0.0
        %2802 = vmatprep.subr.mxu0 0.0
        %2803 = vmatpush1.xpose.msra.mxu0 0.0
        %2804 = vmatprep.subr.mxu0 0.0
        %2805 = vmatpush1.xpose.msra.mxu0 0.0
        %2806 = vmatprep.subr.mxu0 0.0
        %2807 = vmatpush1.xpose.msra.mxu0 0.0
        %2808 = vmatprep.subr.mxu0 0.0
        %2809 = vmatpush1.xpose.msra.mxu0 0.0
        %2810 = vmatprep.subr.mxu0 0.0
        %2811 = vmatpush1.xpose.msra.mxu0 0.0
        %2812 = vmatprep.subr.mxu0 0.0
        %2813 = vmatpush1.xpose.msra.mxu0 0.0
        %2814 = vmatprep.subr.mxu0 0.0
        %2815 = vmatpush1.xpose.msra.mxu0 0.0
        %2816 = vmatprep.subr.mxu0 0.0
        %2817 = vmatpush1.xpose.msra.mxu0 0.0
        %2818 = vmatprep.subr.mxu0 0.0
        %2819 = vmatpush1.xpose.msra.mxu0 0.0
        %2820 = vmatprep.subr.mxu0 0.0
        %2821 = vmatpush1.xpose.msra.mxu0 0.0
        %2822 = vmatprep.subr.mxu0 0.0
        %2823 = vmatpush1.xpose.msra.mxu0 0.0
        %2824 = vmatprep.subr.mxu0 0.0
        %2825 = vmatpush1.xpose.msra.mxu0 0.0
        %2826 = vmatprep.subr.mxu0 0.0
        %2827 = vmatpush1.xpose.msra.mxu0 0.0
        %2828 = vmatprep.subr.mxu0 0.0
        %2829 = vmatpush1.xpose.msra.mxu0 0.0
        %2830 = vmatprep.subr.mxu0 0.0
        %2831 = vmatpush1.xpose.msra.mxu0 0.0
        %2832 = vmatprep.subr.mxu0 0.0
        %2833 = vmatpush1.xpose.msra.mxu0 0.0
        %2834 = vmatprep.subr.mxu0 0.0
        %2835 = vmatpush1.xpose.msra.mxu0 0.0
        %2836 = vmatprep.subr.mxu0 0.0
        %2837 = vmatpush1.xpose.msra.mxu0 0.0
        %2838 = vmatprep.subr.mxu0 0.0
        %2839 = vmatpush1.xpose.msra.mxu0 0.0
        %2840 = vmatprep.subr.mxu0 0.0
        %2841 = vmatpush1.xpose.msra.mxu0 0.0
        %2842 = vmatprep.subr.mxu0 0.0
        %2843 = vmatpush1.xpose.msra.mxu0 0.0
        %2844 = vmatprep.subr.mxu0 0.0
        %2845 = vmatpush1.xpose.msra.mxu0 0.0
        %2846 = vmatprep.subr.mxu0 0.0
        %2847 = vmatpush1.xpose.msra.mxu0 0.0
        %2848 = vmatprep.mubr.f32.mxu0 0.0
        %2849 = vmatmul.mubr.f32.gmra.mrb[0].mxu0 %v2780
        %v2850 = vpop.f32.mrb[0].mxu0
        %v2851 = vadd.f32 %v1125, %v2850
        %v2852 = vpop.f32.mrb[0].mxu0
        %2853 = vdwg.mxu0
        %v2854 = vsel %vm1214, %v2851, -inf
        %2855 = vmax.xlane.f32.xlu0 %v2854
        %v2856 = vpop.xlane.xlu0 %2855
        %v2857 = vsub.f32 %v2851, %v2856
        %v2858 = vmul.f32 %v2857, 1.442695
        %v2859 = vpow.pop %v2858
        %v2860 = vsel %vm1214, %v2859, 0.0
        %2861 = vadd.xlane.f32.xlu0 %v2860
        %v2862 = vpop.xlane.xlu0 %2861
        %v2863 = vrcp.pop %v2862
        %v2864 = vmul.f32 %v2859, %v2863
        %2865 = vrot.lane.b32.xlu0 %v2211, 112
        %v2866 = vpop.permute.xlu0 %2865
        %v2869 = vsel %vm1214, %v2864, 0
        %2871 = vmatprep.subr.mxu0 0.0
        %2872 = vmatpush1.msra.mxu0 %v2866
        %2873 = vmatprep.subr.mxu0 0.0
        %2874 = vmatpush1.msra.mxu0 0.0
        %2875 = vmatprep.subr.mxu0 0.0
        %2876 = vmatpush1.msra.mxu0 0.0
        %2877 = vmatprep.subr.mxu0 0.0
        %2878 = vmatpush1.msra.mxu0 0.0
        %2879 = vmatprep.subr.mxu0 0.0
        %2880 = vmatpush1.msra.mxu0 0.0
        %2881 = vmatprep.subr.mxu0 0.0
        %2882 = vmatpush1.msra.mxu0 0.0
        %2883 = vmatprep.subr.mxu0 0.0
        %2884 = vmatpush1.msra.mxu0 0.0
        %2885 = vmatprep.subr.mxu0 0.0
        %2886 = vmatpush1.msra.mxu0 0.0
        %2887 = vmatprep.subr.mxu0 0.0
        %2888 = vmatpush1.msra.mxu0 0.0
        %2889 = vmatprep.subr.mxu0 0.0
        %2890 = vmatpush1.msra.mxu0 0.0
        %2891 = vmatprep.subr.mxu0 0.0
        %2892 = vmatpush1.msra.mxu0 0.0
        %2893 = vmatprep.subr.mxu0 0.0
        %2894 = vmatpush1.msra.mxu0 0.0
        %2895 = vmatprep.subr.mxu0 0.0
        %2896 = vmatpush1.msra.mxu0 0.0
        %2897 = vmatprep.subr.mxu0 0.0
        %2898 = vmatpush1.msra.mxu0 0.0
        %2899 = vmatprep.subr.mxu0 0.0
        %2900 = vmatpush1.msra.mxu0 0.0
        %2901 = vmatprep.subr.mxu0 0.0
        %2902 = vmatpush1.msra.mxu0 0.0
        %2903 = vmatprep.subr.mxu0 0.0
        %2904 = vmatpush1.msra.mxu0 0.0
        %2905 = vmatprep.subr.mxu0 0.0
        %2906 = vmatpush1.msra.mxu0 0.0
        %2907 = vmatprep.subr.mxu0 0.0
        %2908 = vmatpush1.msra.mxu0 0.0
        %2909 = vmatprep.subr.mxu0 0.0
        %2910 = vmatpush1.msra.mxu0 0.0
        %2911 = vmatprep.subr.mxu0 0.0
        %2912 = vmatpush1.msra.mxu0 0.0
        %2913 = vmatprep.subr.mxu0 0.0
        %2914 = vmatpush1.msra.mxu0 0.0
        %2915 = vmatprep.subr.mxu0 0.0
        %2916 = vmatpush1.msra.mxu0 0.0
        %2917 = vmatprep.subr.mxu0 0.0
        %2918 = vmatpush1.msra.mxu0 0.0
        %2919 = vmatprep.subr.mxu0 0.0
        %2920 = vmatpush1.msra.mxu0 0.0
        %2921 = vmatprep.subr.mxu0 0.0
        %2922 = vmatpush1.msra.mxu0 0.0
        %2923 = vmatprep.subr.mxu0 0.0
        %2924 = vmatpush1.msra.mxu0 0.0
        %2925 = vmatprep.subr.mxu0 0.0
        %2926 = vmatpush1.msra.mxu0 0.0
        %2927 = vmatprep.subr.mxu0 0.0
        %2928 = vmatpush1.msra.mxu0 0.0
        %2929 = vmatprep.subr.mxu0 0.0
        %2930 = vmatpush1.msra.mxu0 0.0
        %2931 = vmatprep.subr.mxu0 0.0
        %2932 = vmatpush1.msra.mxu0 0.0
        %2933 = vmatprep.subr.mxu0 0.0
        %2934 = vmatpush1.msra.mxu0 0.0
        %2935 = vmatprep.mubr.f32.mxu0 0.0
        %2936 = vmatmul.mubr.f32.gmra.mrb[0].mxu0 %v2869
        %v2937 = vpop.f32.mrb[0].mxu0
        %v2938 = vadd.f32 0.0, %v2937
        %v2939 = vpop.f32.mrb[0].mxu0
        %2940 = vdwg.mxu0
        %v2941 = vld [vmem:[%s2455 + $0x10] sm:$0xff]
        %v2943 = vsel %vm1214, %v2938, 0
        %2945 = vmatprep.subr.mxu0 0.0
        %2946 = vmatpush1.msra.mxu0 %v2941
        %2947 = vmatprep.subr.mxu0 0.0
        %2948 = vmatpush1.msra.mxu0 0.0
        %2949 = vmatprep.subr.mxu0 0.0
        %2950 = vmatpush1.msra.mxu0 0.0
        %2951 = vmatprep.subr.mxu0 0.0
        %2952 = vmatpush1.msra.mxu0 0.0
        %2953 = vmatprep.subr.mxu0 0.0
        %2954 = vmatpush1.msra.mxu0 0.0
        %2955 = vmatprep.subr.mxu0 0.0
        %2956 = vmatpush1.msra.mxu0 0.0
        %2957 = vmatprep.subr.mxu0 0.0
        %2958 = vmatpush1.msra.mxu0 0.0
        %2959 = vmatprep.subr.mxu0 0.0
        %2960 = vmatpush1.msra.mxu0 0.0
        %2961 = vmatprep.subr.mxu0 0.0
        %2962 = vmatpush1.msra.mxu0 0.0
        %2963 = vmatprep.subr.mxu0 0.0
        %2964 = vmatpush1.msra.mxu0 0.0
        %2965 = vmatprep.subr.mxu0 0.0
        %2966 = vmatpush1.msra.mxu0 0.0
        %2967 = vmatprep.subr.mxu0 0.0
        %2968 = vmatpush1.msra.mxu0 0.0
        %2969 = vmatprep.subr.mxu0 0.0
        %2970 = vmatpush1.msra.mxu0 0.0
        %2971 = vmatprep.subr.mxu0 0.0
        %2972 = vmatpush1.msra.mxu0 0.0
        %2973 = vmatprep.subr.mxu0 0.0
        %2974 = vmatpush1.msra.mxu0 0.0
        %2975 = vmatprep.subr.mxu0 0.0
        %2976 = vmatpush1.msra.mxu0 0.0
        %2977 = vmatprep.subr.mxu0 0.0
        %2978 = vmatpush1.msra.mxu0 0.0
        %2979 = vmatprep.subr.mxu0 0.0
        %2980 = vmatpush1.msra.mxu0 0.0
        %2981 = vmatprep.subr.mxu0 0.0
        %2982 = vmatpush1.msra.mxu0 0.0
        %2983 = vmatprep.subr.mxu0 0.0
        %2984 = vmatpush1.msra.mxu0 0.0
        %2985 = vmatprep.subr.mxu0 0.0
        %2986 = vmatpush1.msra.mxu0 0.0
        %2987 = vmatprep.subr.mxu0 0.0
        %2988 = vmatpush1.msra.mxu0 0.0
        %2989 = vmatprep.subr.mxu0 0.0
        %2990 = vmatpush1.msra.mxu0 0.0
        %2991 = vmatprep.subr.mxu0 0.0
        %2992 = vmatpush1.msra.mxu0 0.0
        %2993 = vmatprep.subr.mxu0 0.0
        %2994 = vmatpush1.msra.mxu0 0.0
        %2995 = vmatprep.subr.mxu0 0.0
        %2996 = vmatpush1.msra.mxu0 0.0
        %2997 = vmatprep.subr.mxu0 0.0
        %2998 = vmatpush1.msra.mxu0 0.0
        %2999 = vmatprep.subr.mxu0 0.0
        %3000 = vmatpush1.msra.mxu0 0.0
        %3001 = vmatprep.subr.mxu0 0.0
        %3002 = vmatpush1.msra.mxu0 0.0
        %3003 = vmatprep.subr.mxu0 0.0
        %3004 = vmatpush1.msra.mxu0 0.0
        %3005 = vmatprep.subr.mxu0 0.0
        %3006 = vmatpush1.msra.mxu0 0.0
        %3007 = vmatprep.subr.mxu0 0.0
        %3008 = vmatpush1.msra.mxu0 0.0
        %3009 = vmatprep.mubr.f32.mxu0 0.0
        %3010 = vmatmul.mubr.f32.gmra.mrb[0].mxu0 %v2943
        %v3011 = vpop.f32.mrb[0].mxu0
        %v3012 = vadd.f32 0.0, %v3011
        %v3013 = vpop.f32.mrb[0].mxu0
        %3014 = vdwg.mxu0
        %v3015 = vadd.f32 %v2775, %v3012
        %3016 = vrot.lane.b32.xlu0 %v2291, 104
        %v3017 = vpop.permute.xlu0 %3016
        %3018 = vrot.lane.b32.xlu0 %v2210, 104
        %v3019 = vpop.permute.xlu0 %3018
        %v3020 = vsel %vm1214, %v3017, 0
        %v3022 = vsel %vm1214, %v3019, 0
        %3024 = vmatprep.subr.mxu0 0.0
        %3025 = vmatpush1.xpose.msra.mxu0 %v3022
        %3026 = vmatprep.subr.mxu0 0.0
        %3027 = vmatpush1.xpose.msra.mxu0 0.0
        %3028 = vmatprep.subr.mxu0 0.0
        %3029 = vmatpush1.xpose.msra.mxu0 0.0
        %3030 = vmatprep.subr.mxu0 0.0
        %3031 = vmatpush1.xpose.msra.mxu0 0.0
        %3032 = vmatprep.subr.mxu0 0.0
        %3033 = vmatpush1.xpose.msra.mxu0 0.0
        %3034 = vmatprep.subr.mxu0 0.0
        %3035 = vmatpush1.xpose.msra.mxu0 0.0
        %3036 = vmatprep.subr.mxu0 0.0
        %3037 = vmatpush1.xpose.msra.mxu0 0.0
        %3038 = vmatprep.subr.mxu0 0.0
        %3039 = vmatpush1.xpose.msra.mxu0 0.0
        %3040 = vmatprep.subr.mxu0 0.0
        %3041 = vmatpush1.xpose.msra.mxu0 0.0
        %3042 = vmatprep.subr.mxu0 0.0
        %3043 = vmatpush1.xpose.msra.mxu0 0.0
        %3044 = vmatprep.subr.mxu0 0.0
        %3045 = vmatpush1.xpose.msra.mxu0 0.0
        %3046 = vmatprep.subr.mxu0 0.0
        %3047 = vmatpush1.xpose.msra.mxu0 0.0
        %3048 = vmatprep.subr.mxu0 0.0
        %3049 = vmatpush1.xpose.msra.mxu0 0.0
        %3050 = vmatprep.subr.mxu0 0.0
        %3051 = vmatpush1.xpose.msra.mxu0 0.0
        %3052 = vmatprep.subr.mxu0 0.0
        %3053 = vmatpush1.xpose.msra.mxu0 0.0
        %3054 = vmatprep.subr.mxu0 0.0
        %3055 = vmatpush1.xpose.msra.mxu0 0.0
        %3056 = vmatprep.subr.mxu0 0.0
        %3057 = vmatpush1.xpose.msra.mxu0 0.0
        %3058 = vmatprep.subr.mxu0 0.0
        %3059 = vmatpush1.xpose.msra.mxu0 0.0
        %3060 = vmatprep.subr.mxu0 0.0
        %3061 = vmatpush1.xpose.msra.mxu0 0.0
        %3062 = vmatprep.subr.mxu0 0.0
        %3063 = vmatpush1.xpose.msra.mxu0 0.0
        %3064 = vmatprep.subr.mxu0 0.0
        %3065 = vmatpush1.xpose.msra.mxu0 0.0
        %3066 = vmatprep.subr.mxu0 0.0
        %3067 = vmatpush1.xpose.msra.mxu0 0.0
        %3068 = vmatprep.subr.mxu0 0.0
        %3069 = vmatpush1.xpose.msra.mxu0 0.0
        %3070 = vmatprep.subr.mxu0 0.0
        %3071 = vmatpush1.xpose.msra.mxu0 0.0
        %3072 = vmatprep.subr.mxu0 0.0
        %3073 = vmatpush1.xpose.msra.mxu0 0.0
        %3074 = vmatprep.subr.mxu0 0.0
        %3075 = vmatpush1.xpose.msra.mxu0 0.0
        %3076 = vmatprep.subr.mxu0 0.0
        %3077 = vmatpush1.xpose.msra.mxu0 0.0
        %3078 = vmatprep.subr.mxu0 0.0
        %3079 = vmatpush1.xpose.msra.mxu0 0.0
        %3080 = vmatprep.subr.mxu0 0.0
        %3081 = vmatpush1.xpose.msra.mxu0 0.0
        %3082 = vmatprep.subr.mxu0 0.0
        %3083 = vmatpush1.xpose.msra.mxu0 0.0
        %3084 = vmatprep.subr.mxu0 0.0
        %3085 = vmatpush1.xpose.msra.mxu0 0.0
        %3086 = vmatprep.subr.mxu0 0.0
        %3087 = vmatpush1.xpose.msra.mxu0 0.0
        %3088 = vmatprep.mubr.f32.mxu0 0.0
        %3089 = vmatmul.mubr.f32.gmra.mrb[0].mxu0 %v3020
        %v3090 = vpop.f32.mrb[0].mxu0
        %v3091 = vadd.f32 %v1125, %v3090
        %v3092 = vpop.f32.mrb[0].mxu0
        %3093 = vdwg.mxu0
        %v3094 = vsel %vm1214, %v3091, -inf
        %3095 = vmax.xlane.f32.xlu0 %v3094
        %v3096 = vpop.xlane.xlu0 %3095
        %v3097 = vsub.f32 %v3091, %v3096
        %v3098 = vmul.f32 %v3097, 1.442695
        %v3099 = vpow.pop %v3098
        %v3100 = vsel %vm1214, %v3099, 0.0
        %3101 = vadd.xlane.f32.xlu0 %v3100
        %v3102 = vpop.xlane.xlu0 %3101
        %v3103 = vrcp.pop %v3102
        %v3104 = vmul.f32 %v3099, %v3103
        %3105 = vrot.lane.b32.xlu0 %v2211, 104
        %v3106 = vpop.permute.xlu0 %3105
        %v3109 = vsel %vm1214, %v3104, 0
        %3111 = vmatprep.subr.mxu0 0.0
        %3112 = vmatpush1.msra.mxu0 %v3106
        %3113 = vmatprep.subr.mxu0 0.0
        %3114 = vmatpush1.msra.mxu0 0.0
        %3115 = vmatprep.subr.mxu0 0.0
        %3116 = vmatpush1.msra.mxu0 0.0
        %3117 = vmatprep.subr.mxu0 0.0
        %3118 = vmatpush1.msra.mxu0 0.0
        %3119 = vmatprep.subr.mxu0 0.0
        %3120 = vmatpush1.msra.mxu0 0.0
        %3121 = vmatprep.subr.mxu0 0.0
        %3122 = vmatpush1.msra.mxu0 0.0
        %3123 = vmatprep.subr.mxu0 0.0
        %3124 = vmatpush1.msra.mxu0 0.0
        %3125 = vmatprep.subr.mxu0 0.0
        %3126 = vmatpush1.msra.mxu0 0.0
        %3127 = vmatprep.subr.mxu0 0.0
        %3128 = vmatpush1.msra.mxu0 0.0
        %3129 = vmatprep.subr.mxu0 0.0
        %3130 = vmatpush1.msra.mxu0 0.0
        %3131 = vmatprep.subr.mxu0 0.0
        %3132 = vmatpush1.msra.mxu0 0.0
        %3133 = vmatprep.subr.mxu0 0.0
        %3134 = vmatpush1.msra.mxu0 0.0
        %3135 = vmatprep.subr.mxu0 0.0
        %3136 = vmatpush1.msra.mxu0 0.0
        %3137 = vmatprep.subr.mxu0 0.0
        %3138 = vmatpush1.msra.mxu0 0.0
        %3139 = vmatprep.subr.mxu0 0.0
        %3140 = vmatpush1.msra.mxu0 0.0
        %3141 = vmatprep.subr.mxu0 0.0
        %3142 = vmatpush1.msra.mxu0 0.0
        %3143 = vmatprep.subr.mxu0 0.0
        %3144 = vmatpush1.msra.mxu0 0.0
        %3145 = vmatprep.subr.mxu0 0.0
        %3146 = vmatpush1.msra.mxu0 0.0
        %3147 = vmatprep.subr.mxu0 0.0
        %3148 = vmatpush1.msra.mxu0 0.0
        %3149 = vmatprep.subr.mxu0 0.0
        %3150 = vmatpush1.msra.mxu0 0.0
        %3151 = vmatprep.subr.mxu0 0.0
        %3152 = vmatpush1.msra.mxu0 0.0
        %3153 = vmatprep.subr.mxu0 0.0
        %3154 = vmatpush1.msra.mxu0 0.0
        %3155 = vmatprep.subr.mxu0 0.0
        %3156 = vmatpush1.msra.mxu0 0.0
        %3157 = vmatprep.subr.mxu0 0.0
        %3158 = vmatpush1.msra.mxu0 0.0
        %3159 = vmatprep.subr.mxu0 0.0
        %3160 = vmatpush1.msra.mxu0 0.0
        %3161 = vmatprep.subr.mxu0 0.0
        %3162 = vmatpush1.msra.mxu0 0.0
        %3163 = vmatprep.subr.mxu0 0.0
        %3164 = vmatpush1.msra.mxu0 0.0
        %3165 = vmatprep.subr.mxu0 0.0
        %3166 = vmatpush1.msra.mxu0 0.0
        %3167 = vmatprep.subr.mxu0 0.0
        %3168 = vmatpush1.msra.mxu0 0.0
        %3169 = vmatprep.subr.mxu0 0.0
        %3170 = vmatpush1.msra.mxu0 0.0
        %3171 = vmatprep.subr.mxu0 0.0
        %3172 = vmatpush1.msra.mxu0 0.0
        %3173 = vmatprep.subr.mxu0 0.0
        %3174 = vmatpush1.msra.mxu0 0.0
        %3175 = vmatprep.mubr.f32.mxu0 0.0
        %3176 = vmatmul.mubr.f32.gmra.mrb[0].mxu0 %v3109
        %v3177 = vpop.f32.mrb[0].mxu0
        %v3178 = vadd.f32 0.0, %v3177
        %v3179 = vpop.f32.mrb[0].mxu0
        %3180 = vdwg.mxu0
        %v3181 = vld [vmem:[%s2455 + $0x18] sm:$0xff]
        %v3183 = vsel %vm1214, %v3178, 0
        %3185 = vmatprep.subr.mxu0 0.0
        %3186 = vmatpush1.msra.mxu0 %v3181
        %3187 = vmatprep.subr.mxu0 0.0
        %3188 = vmatpush1.msra.mxu0 0.0
        %3189 = vmatprep.subr.mxu0 0.0
        %3190 = vmatpush1.msra.mxu0 0.0
        %3191 = vmatprep.subr.mxu0 0.0
        %3192 = vmatpush1.msra.mxu0 0.0
        %3193 = vmatprep.subr.mxu0 0.0
        %3194 = vmatpush1.msra.mxu0 0.0
        %3195 = vmatprep.subr.mxu0 0.0
        %3196 = vmatpush1.msra.mxu0 0.0
        %3197 = vmatprep.subr.mxu0 0.0
        %3198 = vmatpush1.msra.mxu0 0.0
        %3199 = vmatprep.subr.mxu0 0.0
        %3200 = vmatpush1.msra.mxu0 0.0
        %3201 = vmatprep.subr.mxu0 0.0
        %3202 = vmatpush1.msra.mxu0 0.0
        %3203 = vmatprep.subr.mxu0 0.0
        %3204 = vmatpush1.msra.mxu0 0.0
        %3205 = vmatprep.subr.mxu0 0.0
        %3206 = vmatpush1.msra.mxu0 0.0
        %3207 = vmatprep.subr.mxu0 0.0
        %3208 = vmatpush1.msra.mxu0 0.0
        %3209 = vmatprep.subr.mxu0 0.0
        %3210 = vmatpush1.msra.mxu0 0.0
        %3211 = vmatprep.subr.mxu0 0.0
        %3212 = vmatpush1.msra.mxu0 0.0
        %3213 = vmatprep.subr.mxu0 0.0
        %3214 = vmatpush1.msra.mxu0 0.0
        %3215 = vmatprep.subr.mxu0 0.0
        %3216 = vmatpush1.msra.mxu0 0.0
        %3217 = vmatprep.subr.mxu0 0.0
        %3218 = vmatpush1.msra.mxu0 0.0
        %3219 = vmatprep.subr.mxu0 0.0
        %3220 = vmatpush1.msra.mxu0 0.0
        %3221 = vmatprep.subr.mxu0 0.0
        %3222 = vmatpush1.msra.mxu0 0.0
        %3223 = vmatprep.subr.mxu0 0.0
        %3224 = vmatpush1.msra.mxu0 0.0
        %3225 = vmatprep.subr.mxu0 0.0
        %3226 = vmatpush1.msra.mxu0 0.0
        %3227 = vmatprep.subr.mxu0 0.0
        %3228 = vmatpush1.msra.mxu0 0.0
        %3229 = vmatprep.subr.mxu0 0.0
        %3230 = vmatpush1.msra.mxu0 0.0
        %3231 = vmatprep.subr.mxu0 0.0
        %3232 = vmatpush1.msra.mxu0 0.0
        %3233 = vmatprep.subr.mxu0 0.0
        %3234 = vmatpush1.msra.mxu0 0.0
        %3235 = vmatprep.subr.mxu0 0.0
        %3236 = vmatpush1.msra.mxu0 0.0
        %3237 = vmatprep.subr.mxu0 0.0
        %3238 = vmatpush1.msra.mxu0 0.0
        %3239 = vmatprep.subr.mxu0 0.0
        %3240 = vmatpush1.msra.mxu0 0.0
        %3241 = vmatprep.subr.mxu0 0.0
        %3242 = vmatpush1.msra.mxu0 0.0
        %3243 = vmatprep.subr.mxu0 0.0
        %3244 = vmatpush1.msra.mxu0 0.0
        %3245 = vmatprep.subr.mxu0 0.0
        %3246 = vmatpush1.msra.mxu0 0.0
        %3247 = vmatprep.subr.mxu0 0.0
        %3248 = vmatpush1.msra.mxu0 0.0
        %3249 = vmatprep.mubr.f32.mxu0 0.0
        %3250 = vmatmul.mubr.f32.gmra.mrb[0].mxu0 %v3183
        %v3251 = vpop.f32.mrb[0].mxu0
        %v3252 = vadd.f32 0.0, %v3251
        %v3253 = vpop.f32.mrb[0].mxu0
        %3254 = vdwg.mxu0
        %v3255 = vadd.f32 %v3015, %v3252
        %v3256 = vadd.f32 %v2176, %v3255
        %v3257 = vld [vmem:[#allocation27 + $0x2] sm:$0x1]
        %v3258 = vld [vmem:[#allocation28 + $0x2] sm:$0x1]
        %v3259 = vsel %vm1139, %v3256, 0.0
        %3260 = vadd.xlane.f32.xlu0 %v3259
        %v3261 = vpop.xlane.xlu0 %3260
        %v3262 = vmul.f32 %v3261, %v2182
        %v3263 = vsub.f32 %v3256, %v3262
        %v3264 = vmul.f32 %v3263, %v3263
        %v3265 = vsel %vm1139, %v3264, 0.0
        %3266 = vadd.xlane.f32.xlu0 %v3265
        %v3267 = vpop.xlane.xlu0 %3266
        %v3268 = vmul.f32 %v3267, 0.032258064
        %v3269 = vrsqrt.pop %v3268
        %v3270 = vmul.f32 %v3268, %v3269
        %vm3271 = vcmp.eq.f32.partialorder %v3268, inf
        %v3272 = vsel %vm3271, %v3268, %v3270
        %vm3273 = vcmp.eq.f32.partialorder %v3268, 0.0
        %v3274 = vand.u32 %v3268, 2147483648
        %v3275 = vsel %vm3273, %v3274, %v3272
        %v3276 = vadd.f32 %v3275, 1e-06
        %v3277 = vrcp.pop %v3276
        %v3278 = vmul.f32 %v3263, %v3277
        %v3279 = vlaneseq
        %v3280 = vshrl.u32 %v3279, 7
        %v3281 = vsub.s32 0, %v3280
        %v3282 = vrot.slane %v3257, %v3281
        %v3283 = vmul.f32 %v3282, %v3278
        %v3284 = vlaneseq
        %v3285 = vshrl.u32 %v3284, 7
        %v3286 = vsub.s32 0, %v3285
        %v3287 = vrot.slane %v3258, %v3286
        %v3288 = vadd.f32 %v3283, %v3287
        %v3289 = vld [vmem:[#allocation21] sm:$0xff]
        %v3290 = vld [vmem:[#allocation21 + $0x8] sm:$0xff]
        %v3291 = vld [vmem:[#allocation21 + $0x10] sm:$0xff]
        %v3292 = vld [vmem:[#allocation21 + $0x18] sm:$0xff]
        %v3294 = vlaneseq
        %v3295 = vshrl.u32 %v3294, 7
        %v3296 = vsub.s32 0, %v3295
        %v3297 = vrot.slane %v1126, %v3296
        %v3300 = vsel %vm1139, %v3288, 0
        %3302 = vmatprep.subr.mxu0 0.0
        %3303 = vmatpush1.msra.mxu0 %v3289
        %3304 = vmatprep.subr.mxu0 0.0
        %3305 = vmatpush1.msra.mxu0 %v3290
        %3306 = vmatprep.subr.mxu0 0.0
        %3307 = vmatpush1.msra.mxu0 %v3291
        %3308 = vmatprep.subr.mxu0 0.0
        %3309 = vmatpush1.msra.mxu0 %v3292
        %3310 = vmatprep.subr.mxu0 0.0
        %3311 = vmatpush1.msra.mxu0 0.0
        %3312 = vmatprep.subr.mxu0 0.0
        %3313 = vmatpush1.msra.mxu0 0.0
        %3314 = vmatprep.subr.mxu0 0.0
        %3315 = vmatpush1.msra.mxu0 0.0
        %3316 = vmatprep.subr.mxu0 0.0
        %3317 = vmatpush1.msra.mxu0 0.0
        %3318 = vmatprep.subr.mxu0 0.0
        %3319 = vmatpush1.msra.mxu0 0.0
        %3320 = vmatprep.subr.mxu0 0.0
        %3321 = vmatpush1.msra.mxu0 0.0
        %3322 = vmatprep.subr.mxu0 0.0
        %3323 = vmatpush1.msra.mxu0 0.0
        %3324 = vmatprep.subr.mxu0 0.0
        %3325 = vmatpush1.msra.mxu0 0.0
        %3326 = vmatprep.subr.mxu0 0.0
        %3327 = vmatpush1.msra.mxu0 0.0
        %3328 = vmatprep.subr.mxu0 0.0
        %3329 = vmatpush1.msra.mxu0 0.0
        %3330 = vmatprep.subr.mxu0 0.0
        %3331 = vmatpush1.msra.mxu0 0.0
        %3332 = vmatprep.subr.mxu0 0.0
        %3333 = vmatpush1.msra.mxu0 0.0
        %3334 = vmatprep.subr.mxu0 0.0
        %3335 = vmatpush1.msra.mxu0 0.0
        %3336 = vmatprep.subr.mxu0 0.0
        %3337 = vmatpush1.msra.mxu0 0.0
        %3338 = vmatprep.subr.mxu0 0.0
        %3339 = vmatpush1.msra.mxu0 0.0
        %3340 = vmatprep.subr.mxu0 0.0
        %3341 = vmatpush1.msra.mxu0 0.0
        %3342 = vmatprep.subr.mxu0 0.0
        %3343 = vmatpush1.msra.mxu0 0.0
        %3344 = vmatprep.subr.mxu0 0.0
        %3345 = vmatpush1.msra.mxu0 0.0
        %3346 = vmatprep.subr.mxu0 0.0
        %3347 = vmatpush1.msra.mxu0 0.0
        %3348 = vmatprep.subr.mxu0 0.0
        %3349 = vmatpush1.msra.mxu0 0.0
        %3350 = vmatprep.subr.mxu0 0.0
        %3351 = vmatpush1.msra.mxu0 0.0
        %3352 = vmatprep.subr.mxu0 0.0
        %3353 = vmatpush1.msra.mxu0 0.0
        %3354 = vmatprep.subr.mxu0 0.0
        %3355 = vmatpush1.msra.mxu0 0.0
        %3356 = vmatprep.subr.mxu0 0.0
        %3357 = vmatpush1.msra.mxu0 0.0
        %3358 = vmatprep.subr.mxu0 0.0
        %3359 = vmatpush1.msra.mxu0 0.0
        %3360 = vmatprep.subr.mxu0 0.0
        %3361 = vmatpush1.msra.mxu0 0.0
        %3362 = vmatprep.subr.mxu0 0.0
        %3363 = vmatpush1.msra.mxu0 0.0
        %3364 = vmatprep.subr.mxu0 0.0
        %3365 = vmatpush1.msra.mxu0 0.0
        %3366 = vmatprep.mubr.f32.mxu0 0.0
        %3367 = vmatmul.mubr.f32.gmra.mrb[0].mxu0 %v3300
        %v3368 = vpop.f32.mrb[0].mxu0
        %v3369 = vadd.f32 %v3297, %v3368
        %v3370 = vpop.f32.mrb[0].mxu0
        %3371 = vdwg.mxu0
        %v3372 = vmax.f32 %v3369, 0.0
        %v3373 = vld [vmem:[#allocation24] sm:$0xff]
        %v3374 = vld [vmem:[#allocation24 + $0x8] sm:$0xff]
        %v3375 = vld [vmem:[#allocation24 + $0x10] sm:$0xff]
        %v3376 = vld [vmem:[#allocation24 + $0x18] sm:$0xff]
        %v3377 = vld [vmem:[#allocation24 + $0x20] sm:$0xff]
        %v3378 = vld [vmem:[#allocation24 + $0x28] sm:$0xff]
        %v3379 = vld [vmem:[#allocation24 + $0x30] sm:$0xff]
        %v3380 = vld [vmem:[#allocation24 + $0x38] sm:$0xff]
        %vm3381 = vcmask 523264
        %v3383 = vsel %vm3381, %v3372, 0
        %3385 = vmatprep.subr.mxu0 0.0
        %3386 = vmatpush1.msra.mxu0 %v3373
        %3387 = vmatprep.subr.mxu0 0.0
        %3388 = vmatpush1.msra.mxu0 %v3374
        %3389 = vmatprep.subr.mxu0 0.0
        %3390 = vmatpush1.msra.mxu0 %v3375
        %3391 = vmatprep.subr.mxu0 0.0
        %3392 = vmatpush1.msra.mxu0 %v3376
        %3393 = vmatprep.subr.mxu0 0.0
        %3394 = vmatpush1.msra.mxu0 %v3377
        %3395 = vmatprep.subr.mxu0 0.0
        %3396 = vmatpush1.msra.mxu0 %v3378
        %3397 = vmatprep.subr.mxu0 0.0
        %3398 = vmatpush1.msra.mxu0 %v3379
        %3399 = vmatprep.subr.mxu0 0.0
        %3400 = vmatpush1.msra.mxu0 %v3380
        %3401 = vmatprep.subr.mxu0 0.0
        %3402 = vmatpush1.msra.mxu0 0.0
        %3403 = vmatprep.subr.mxu0 0.0
        %3404 = vmatpush1.msra.mxu0 0.0
        %3405 = vmatprep.subr.mxu0 0.0
        %3406 = vmatpush1.msra.mxu0 0.0
        %3407 = vmatprep.subr.mxu0 0.0
        %3408 = vmatpush1.msra.mxu0 0.0
        %3409 = vmatprep.subr.mxu0 0.0
        %3410 = vmatpush1.msra.mxu0 0.0
        %3411 = vmatprep.subr.mxu0 0.0
        %3412 = vmatpush1.msra.mxu0 0.0
        %3413 = vmatprep.subr.mxu0 0.0
        %3414 = vmatpush1.msra.mxu0 0.0
        %3415 = vmatprep.subr.mxu0 0.0
        %3416 = vmatpush1.msra.mxu0 0.0
        %3417 = vmatprep.subr.mxu0 0.0
        %3418 = vmatpush1.msra.mxu0 0.0
        %3419 = vmatprep.subr.mxu0 0.0
        %3420 = vmatpush1.msra.mxu0 0.0
        %3421 = vmatprep.subr.mxu0 0.0
        %3422 = vmatpush1.msra.mxu0 0.0
        %3423 = vmatprep.subr.mxu0 0.0
        %3424 = vmatpush1.msra.mxu0 0.0
        %3425 = vmatprep.subr.mxu0 0.0
        %3426 = vmatpush1.msra.mxu0 0.0
        %3427 = vmatprep.subr.mxu0 0.0
        %3428 = vmatpush1.msra.mxu0 0.0
        %3429 = vmatprep.subr.mxu0 0.0
        %3430 = vmatpush1.msra.mxu0 0.0
        %3431 = vmatprep.subr.mxu0 0.0
        %3432 = vmatpush1.msra.mxu0 0.0
        %3433 = vmatprep.subr.mxu0 0.0
        %3434 = vmatpush1.msra.mxu0 0.0
        %3435 = vmatprep.subr.mxu0 0.0
        %3436 = vmatpush1.msra.mxu0 0.0
        %3437 = vmatprep.subr.mxu0 0.0
        %3438 = vmatpush1.msra.mxu0 0.0
        %3439 = vmatprep.subr.mxu0 0.0
        %3440 = vmatpush1.msra.mxu0 0.0
        %3441 = vmatprep.subr.mxu0 0.0
        %3442 = vmatpush1.msra.mxu0 0.0
        %3443 = vmatprep.subr.mxu0 0.0
        %3444 = vmatpush1.msra.mxu0 0.0
        %3445 = vmatprep.subr.mxu0 0.0
        %3446 = vmatpush1.msra.mxu0 0.0
        %3447 = vmatprep.subr.mxu0 0.0
        %3448 = vmatpush1.msra.mxu0 0.0
        %3449 = vmatprep.mubr.f32.mxu0 0.0
        %3450 = vmatmul.mubr.f32.gmra.mrb[0].mxu0 %v3383
        %v3451 = vpop.f32.mrb[0].mxu0
        %v3452 = vadd.f32 0.0, %v3451
        %v3453 = vpop.f32.mrb[0].mxu0
        %3454 = vdwg.mxu0
        %v3455 = vadd.f32 %v3256, %v3452
        %v3457 = vlaneseq
        %v3458 = vshrl.u32 %v3457, 7
        %v3459 = vsub.s32 0, %v3458
        %v3460 = vrot.slane %v1127, %v3459
        %v3462 = vadd.f32 %v3455, %v3460
        %3463 = vst.msk [vmem:[%s743] sm:$0xff] %vm1139, %v3462
        %s3464 = sand.u32 %s382, 1
        %s3465 = scalar_lea.sflag [#allocation9], %s3464
        %s3466 = sand.u32 %s382, 1
        %s3467 = smul.addr %s3466, 8
        %s3468 = scalar_lea.vmem [#allocation30], %s3467
        // Predicated region
        $region137: #{tpu_custom_call.1} parent=75 // pred_check
          %p3469 = pneg %p392
        $region138: #{tpu_custom_call.1} parent=75 // pred_check_branch
          %3471 = sbr.rel (%p3469) target = $region140
        $region139: #{tpu_custom_call.1} parent=75 // pred_region
          %s3473 = ssub.s32 128, 128
          %3474 = vsyncadd %s3465, %s3473
          %s3475 = sadd.s32 %s47, %s46
          %s3476 = smul.addr %s3475, 128
          %s3477 = scalar_lea.hbm %s14, %s3476
          %s3479 = sshll.u32 %s3468, 4
          %s3480 = int_to_ptr.vmem [resolvable:$true] %s3479
          %3482 = dma.vmem_to_hbm [thread:$0]  %s3480, 128, %s3477, %s3465
        $region140: #{tpu_custom_call.1} parent=75 // pred_fallthru
          _
      $region76: #{tpu_custom_call.1} parent=5 // pred_fallthru
        _
      %p3483 = scmp.le.s32.totalorder 2, %s37
      // Predicated region
      $region141: #{tpu_custom_call.1} parent=5 // pred_check
        %p3484 = pneg %p3483
      $region142: #{tpu_custom_call.1} parent=5 // pred_check_branch
        %3486 = sbr.rel (%p3484) target = $region144
      $region143: #{tpu_custom_call.1} parent=5 // pred_region
        %s3487 = ssub.s32 %s37, 2
        // Predicated region
        $region145: #{tpu_custom_call.1} parent=143 // pred_check
          %p3488 = pneg %p398
        $region146: #{tpu_custom_call.1} parent=143 // pred_check_branch
          %3490 = sbr.rel (%p3488) target = $region148
        $region147: #{tpu_custom_call.1} parent=143 // pred_region
          %s3491 = sand.u32 %s383, 1
          %s3492 = scalar_lea.sflag [#allocation9], %s3491
          %s3493 = sand.u32 %s383, 1
          %s3494 = smul.addr %s3493, 8
          %s3495 = scalar_lea.vmem [#allocation30], %s3494
          %3496 = dma.done %s3492, 128
        $region148: #{tpu_custom_call.1} parent=143 // pred_fallthru
          _
      $region144: #{tpu_custom_call.1} parent=5 // pred_fallthru
        _
    $region6: #{tpu_custom_call.1} parent=1 // loop_footer
      %s41 = sadd.s32 1, %s37
    $region7: #{tpu_custom_call.1} parent=1 // loop_footer_branch
      %36 = sbr.rel target = $region3
    $region8: #{tpu_custom_call.1} parent=1 // loop_exit
      _
    %3497 = vsyncpa [#allocation8], 1
    %s3498 = scalar_lea.sflag [#allocation8], 1
    %3499 = vsyncpa %s3498, 1
    %3500 = vsyncpa [#allocation11], 1
    %s3501 = scalar_lea.sflag [#allocation11], 1
    %3502 = vsyncpa %s3501, 1
    %3503 = vsyncpa [#allocation14], 1
    %s3504 = scalar_lea.sflag [#allocation14], 1
    %3505 = vsyncpa %s3504, 1
    %3506 = vsyncpa [#allocation17], 1
    %3507 = vsyncpa [#allocation20], 1
    %3508 = vsyncpa [#allocation23], 1
    %3509 = vsyncpa [#allocation26], 1
    %3510 = vsyncpa [#allocation29], 1
    %3511 = vsyncpa [#allocation9], 1
    %s3512 = scalar_lea.sflag [#allocation9], 1
    %3513 = vsyncpa %s3512, 1

// kernel: tpu_custom_call.1
$region0: #{tpu_custom_call.1}
  #allocation0 [shape = 'u32[]', space=smem, size = 0x4, offset = 0x4, fixed_abs, tag = 'smem constant byte address 0x4 - core index']
  #allocation1 [shape = 'u32[144,128]{1,0:T(1,128)}', space=vmem, size = 0x12000, scoped, tag = 'internal scratch']
  #allocation2 [shape = 'f32[8,32]{1,0:T(8,128)}', space=vmem, size = 0x1000, scoped, tag = 'scratch operand']
  #allocation3 [shape = 'f32[8,32]{1,0:T(8,128)}', space=vmem, size = 0x1000, scoped, tag = 'scratch operand']
  #allocation4 [shape = 'f32[8,32]{1,0:T(8,128)}', space=vmem, size = 0x1000, scoped, tag = 'scratch operand']
  #allocation5 [shape = 'f32[8,32]{1,0:T(8,128)}', space=vmem, size = 0x1000, scoped, tag = 'scratch operand']
  #allocation6 [shape = 'f32[8,32]{1,0:T(8,128)}', space=vmem, size = 0x1000, scoped, tag = 'scratch operand']
  %s0 = inlined_call_operand.hbm [shape: f32[2,8,32], index: 0, kind: input, shape index: {}]
  %s1 = inlined_call_operand.hbm [shape: f32[2,8,32], index: 1, kind: input, shape index: {}]
  %s2 = inlined_call_operand.hbm [shape: f32[2,8,8], index: 2, kind: input, shape index: {}]
  %s3 = inlined_call_operand.hbm [shape: f32[2,8,8], index: 3, kind: input, shape index: {}]
  %s4 = inlined_call_operand.hbm [shape: f32[4,32,32], index: 4, kind: input, shape index: {}]
  %s5 = inlined_call_operand.hbm [shape: f32[4,32], index: 5, kind: input, shape index: {}]
  %s6 = inlined_call_operand.hbm [shape: f32[4,32,32], index: 6, kind: input, shape index: {}]
  %s7 = inlined_call_operand.hbm [shape: f32[4,32], index: 7, kind: input, shape index: {}]
  %s8 = inlined_call_operand.hbm [shape: f32[32,64], index: 8, kind: input, shape index: {}]
  %s9 = inlined_call_operand.hbm [shape: f32[1,64], index: 9, kind: input, shape index: {}]
  %s10 = inlined_call_operand.hbm [shape: f32[64,32], index: 10, kind: input, shape index: {}]
  %s11 = inlined_call_operand.hbm [shape: f32[1,32], index: 11, kind: input, shape index: {}]
  %s12 = inlined_call_operand.hbm [shape: f32[3,32], index: 12, kind: input, shape index: {}]
  %s13 = inlined_call_operand.hbm [shape: f32[3,32], index: 13, kind: input, shape index: {}]
  %s14 = inlined_call_operand.hbm [shape: f32[2,8,32], index: 14, kind: output, shape index: {}]
  %s15 = sld [smem:[#allocation0]]
  $region149: #{tpu_custom_call.1} parent=0
    _
  %s17 = ssub.s32 1, %s15
  %s18 = scalar_select 0, %s17, %s15
  $region1: #{tpu_custom_call.1} parent=0
    #allocation7 [shape = 'u8[8192]{0}', space=vmem, size = 0x2000, scoped, tag = 'input window, operand 0']
    #allocation8 [shape = 's32[2]{0}', space=sflag, size = 0x8, scoped, tag = 'scoped memory for tpu_custom_call.1']
    #allocation9 [shape = 's32[2]{0}', space=sflag, size = 0x8, scoped, tag = 'scoped memory for tpu_custom_call.1']
    #allocation10 [shape = 'u8[8192]{0}', space=vmem, size = 0x2000, scoped, tag = 'input window, operand 1']
    #allocation11 [shape = 's32[2]{0}', space=sflag, size = 0x8, scoped, tag = 'scoped memory for tpu_custom_call.1']
    #allocation12 [shape = 'u8[8192]{0}', space=vmem, size = 0x2000, scoped, tag = 'input window, operand 2']
    #allocation13 [shape = 'u8[8192]{0}', space=vmem, size = 0x2000, scoped, tag = 'input window, operand 3']
    #allocation14 [shape = 's32[2]{0}', space=sflag, size = 0x8, scoped, tag = 'scoped memory for tpu_custom_call.1']
    #allocation15 [shape = 'u8[65536]{0}', space=vmem, size = 0x10000, scoped, tag = 'input window, operand 4, single buffered']
    #allocation16 [shape = 'u8[2048]{0}', space=vmem, size = 0x800, scoped, tag = 'input window, operand 5, single buffered']
    #allocation17 [shape = 's32[1]{0}', space=sflag, size = 0x4, scoped, tag = 'scoped memory for tpu_custom_call.1']
    #allocation18 [shape = 'u8[65536]{0}', space=vmem, size = 0x10000, scoped, tag = 'input window, operand 6, single buffered']
    #allocation19 [shape = 'u8[2048]{0}', space=vmem, size = 0x800, scoped, tag = 'input window, operand 7, single buffered']
    #allocation20 [shape = 's32[1]{0}', space=sflag, size = 0x4, scoped, tag = 'scoped memory for tpu_custom_call.1']
    #allocation21 [shape = 'u8[16384]{0}', space=vmem, size = 0x4000, scoped, tag = 'input window, operand 8, single buffered']
    #allocation22 [shape = 'u8[512]{0}', space=vmem, size = 0x400, scoped, tag = 'input window, operand 9, single buffered']
    #allocation23 [shape = 's32[1]{0}', space=sflag, size = 0x4, scoped, tag = 'scoped memory for tpu_custom_call.1']
    #allocation24 [shape = 'u8[32768]{0}', space=vmem, size = 0x8000, scoped, tag = 'input window, operand 10, single buffered']
    #allocation25 [shape = 'u8[512]{0}', space=vmem, size = 0x400, scoped, tag = 'input window, operand 11, single buffered']
    #allocation26 [shape = 's32[1]{0}', space=sflag, size = 0x4, scoped, tag = 'scoped memory for tpu_custom_call.1']
    #allocation27 [shape = 'u8[2048]{0}', space=vmem, size = 0x800, scoped, tag = 'input window, operand 12, single buffered']
    #allocation28 [shape = 'u8[2048]{0}', space=vmem, size = 0x800, scoped, tag = 'input window, operand 13, single buffered']
    #allocation29 [shape = 's32[1]{0}', space=sflag, size = 0x4, scoped, tag = 'scoped memory for tpu_custom_call.1']
    #allocation30 [shape = 'u8[8192]{0}', space=vmem, size = 0x2000, scoped, tag = 'output window, operand 0']
    %19 = vsyncpa [#allocation8], 0
    %s20 = scalar_lea.sflag [#allocation8], 1
    %21 = vsyncpa %s20, 0
    %22 = vsyncpa [#allocation11], 0
    %s23 = scalar_lea.sflag [#allocation11], 1
    %24 = vsyncpa %s23, 0
    %25 = vsyncpa [#allocation14], 0
    %s26 = scalar_lea.sflag [#allocation14], 1
    %27 = vsyncpa %s26, 0
    %28 = vsyncpa [#allocation17], 0
    %29 = vsyncpa [#allocation20], 0
    %30 = vsyncpa [#allocation23], 0
    %31 = vsyncpa [#allocation26], 0
    %32 = vsyncpa [#allocation29], 0
    %33 = vsyncpa [#allocation9], 0
    %s34 = scalar_lea.sflag [#allocation9], 1
    %35 = vsyncpa %s34, 0
    loop: start=0, step=1, limit=4
    $region2: #{tpu_custom_call.1} parent=1 // loop_pre_header
      _
    $region3: #{tpu_custom_call.1} parent=1 // loop_header
      %s37 = sphi 0, %s41
      %p38 = scmp.ge.s32.totalorder %s37, 4
      %s44 = sphi 0, %s56
      %s45 = sphi 0, %s52
      %s46 = sphi 0, %s44
      %s47 = sphi 0, %s45
      %s48 = sphi 0, %s46
      %s49 = sphi 0, %s47
      %s59 = sphi 0, %s61
      %s62 = sphi 0, %s59
      %s63 = sphi 0, %s62
      %s79 = sphi 0, %s63
      %s85 = sphi 0, %s87
      %s88 = sphi 0, %s85
      %s89 = sphi 0, %s88
      %s105 = sphi 0, %s89
      %s113 = sphi 0, %s115
      %s116 = sphi 0, %s113
      %s117 = sphi 0, %s116
      %s133 = sphi 0, %s117
      %s141 = sphi 0, %s143
      %s144 = sphi 0, %s141
      %s145 = sphi 0, %s144
      %s161 = sphi 0, %s145
      %s165 = sphi 0, %s165
      %s167 = sphi 0, %s165
      %s168 = sphi 0, %s167
      %s182 = sphi 0, %s168
      %s186 = sphi 0, %s186
      %s188 = sphi 0, %s186
      %s189 = sphi 0, %s188
      %s203 = sphi 0, %s189
      %s207 = sphi 0, %s207
      %s209 = sphi 0, %s207
      %s210 = sphi 0, %s209
      %s224 = sphi 0, %s210
      %s228 = sphi 0, %s228
      %s230 = sphi 0, %s228
      %s231 = sphi 0, %s230
      %s245 = sphi 0, %s231
      %s249 = sphi 0, %s249
      %s251 = sphi 0, %s249
      %s252 = sphi 0, %s251
      %s266 = sphi 0, %s252
      %s270 = sphi 0, %s270
      %s272 = sphi 0, %s270
      %s273 = sphi 0, %s272
      %s287 = sphi 0, %s273
      %s291 = sphi 0, %s291
      %s293 = sphi 0, %s291
      %s294 = sphi 0, %s293
      %s308 = sphi 0, %s294
      %s312 = sphi 0, %s312
      %s314 = sphi 0, %s312
      %s315 = sphi 0, %s314
      %s329 = sphi 0, %s315
      %s333 = sphi 0, %s333
      %s335 = sphi 0, %s333
      %s336 = sphi 0, %s335
      %s350 = sphi 0, %s336
      %s354 = sphi 0, %s354
      %s356 = sphi 0, %s354
      %s357 = sphi 0, %s356
      %s371 = sphi 0, %s357
      %s379 = sphi 0, %s381
      %s382 = sphi 0, %s379
      %s383 = sphi 0, %s382
      %s399 = sphi 0, %s383
    $region4: #{tpu_custom_call.1} parent=1 // loop_header_branch
      %40 = sbr.rel (%p38) target = $region8
    $region5: #{tpu_custom_call.1} parent=1 // loop_body
      %s42 = ssub.s32 %s37, 1
      %s43 = ssub.s32 %s37, 2
      %s50 = sadd.s32 1, %s45
      %p51 = scmp.ge.s32.totalorder %s50, 1
      %s52 = scalar_select %p51, 0, %s50
      %s53 = sadd.s32 1, %s44
      %s54 = scalar_select %p51, %s53, %s44
      %p55 = scmp.ge.s32.totalorder %s54, 2
      %s56 = scalar_select %p55, 0, %s54
      %s57 = ssub.s32 %s44, %s56
      %p58 = scmp.eq.s32.totalorder %s57, 0
      %s60 = sadd.s32 %s59, 1
      %s61 = scalar_select %p58, %s59, %s60
      %p64 = pneg %p58
      %p65 = scmp.eq.s32.totalorder %s37, 1
      %p66 = por %p64, %p65
      %p67 = scmp.ne.s32.totalorder %s59, %s62
      %p68 = scmp.eq.s32.totalorder %s37, 0
      %p69 = por %p67, %p68
      %p70 = scmp.ne.s32.totalorder %s59, %s62
      %p71 = scmp.eq.s32.totalorder %s42, 1
      %p72 = por %p70, %p71
      %p73 = scmp.ne.s32.totalorder %s62, %s63
      %p74 = scmp.eq.s32.totalorder %s42, 0
      %p75 = por %p73, %p74
      %p76 = scmp.ne.s32.totalorder %s62, %s63
      %p77 = scmp.eq.s32.totalorder %s43, 1
      %p78 = por %p76, %p77
      %p80 = scmp.ne.s32.totalorder %s63, %s79
      %p81 = scmp.eq.s32.totalorder %s43, 0
      %p82 = por %p80, %p81
      %s83 = ssub.s32 %s44, %s56
      %p84 = scmp.eq.s32.totalorder %s83, 0
      %s86 = sadd.s32 %s85, 1
      %s87 = scalar_select %p84, %s85, %s86
      %p90 = pneg %p84
      %p91 = scmp.eq.s32.totalorder %s37, 1
      %p92 = por %p90, %p91
      %p93 = scmp.ne.s32.totalorder %s85, %s88
      %p94 = scmp.eq.s32.totalorder %s37, 0
      %p95 = por %p93, %p94
      %p96 = scmp.ne.s32.totalorder %s85, %s88
      %p97 = scmp.eq.s32.totalorder %s42, 1
      %p98 = por %p96, %p97
      %p99 = scmp.ne.s32.totalorder %s88, %s89
      %p100 = scmp.eq.s32.totalorder %s42, 0
      %p101 = por %p99, %p100
      %p102 = scmp.ne.s32.totalorder %s88, %s89
      %p103 = scmp.eq.s32.totalorder %s43, 1
      %p104 = por %p102, %p103
      %p106 = scmp.ne.s32.totalorder %s89, %s105
      %p107 = scmp.eq.s32.totalorder %s43, 0
      %p108 = por %p106, %p107
      %s109 = ssub.s32 %s44, %s56
      %s110 = ssub.s32 %s45, %s52
      %s111 = sor.u32 %s109, %s110
      %p112 = scmp.eq.s32.totalorder %s111, 0
      %s114 = sadd.s32 %s113, 1
      %s115 = scalar_select %p112, %s113, %s114
      %p118 = pneg %p112
      %p119 = scmp.eq.s32.totalorder %s37, 1
      %p120 = por %p118, %p119
      %p121 = scmp.ne.s32.totalorder %s113, %s116
      %p122 = scmp.eq.s32.totalorder %s37, 0
      %p123 = por %p121, %p122
      %p124 = scmp.ne.s32.totalorder %s113, %s116
      %p125 = scmp.eq.s32.totalorder %s42, 1
      %p126 = por %p124, %p125
      %p127 = scmp.ne.s32.totalorder %s116, %s117
      %p128 = scmp.eq.s32.totalorder %s42, 0
      %p129 = por %p127, %p128
      %p130 = scmp.ne.s32.totalorder %s116, %s117
      %p131 = scmp.eq.s32.totalorder %s43, 1
      %p132 = por %p130, %p131
      %p134 = scmp.ne.s32.totalorder %s117, %s133
      %p135 = scmp.eq.s32.totalorder %s43, 0
      %p136 = por %p134, %p135
      %s137 = ssub.s32 %s44, %s56
      %s138 = ssub.s32 %s45, %s52
      %s139 = sor.u32 %s137, %s138
      %p140 = scmp.eq.s32.totalorder %s139, 0
      %s142 = sadd.s32 %s141, 1
      %s143 = scalar_select %p140, %s141, %s142
      %p146 = pneg %p140
      %p147 = scmp.eq.s32.totalorder %s37, 1
      %p148 = por %p146, %p147
      %p149 = scmp.ne.s32.totalorder %s141, %s144
      %p150 = scmp.eq.s32.totalorder %s37, 0
      %p151 = por %p149, %p150
      %p152 = scmp.ne.s32.totalorder %s141, %s144
      %p153 = scmp.eq.s32.totalorder %s42, 1
      %p154 = por %p152, %p153
      %p155 = scmp.ne.s32.totalorder %s144, %s145
      %p156 = scmp.eq.s32.totalorder %s42, 0
      %p157 = por %p155, %p156
      %p158 = scmp.ne.s32.totalorder %s144, %s145
      %p159 = scmp.eq.s32.totalorder %s43, 1
      %p160 = por %p158, %p159
      %p162 = scmp.ne.s32.totalorder %s145, %s161
      %p163 = scmp.eq.s32.totalorder %s43, 0
      %p164 = por %p162, %p163
      %s166 = sadd.s32 %s165, 1
      %p169 = scmp.eq.s32.totalorder %s37, 1
      %p170 = scmp.ne.s32.totalorder %s165, %s167
      %p171 = scmp.eq.s32.totalorder %s37, 0
      %p172 = por %p170, %p171
      %p173 = scmp.ne.s32.totalorder %s165, %s167
      %p174 = scmp.eq.s32.totalorder %s42, 1
      %p175 = por %p173, %p174
      %p176 = scmp.ne.s32.totalorder %s167, %s168
      %p177 = scmp.eq.s32.totalorder %s42, 0
      %p178 = por %p176, %p177
      %p179 = scmp.ne.s32.totalorder %s167, %s168
      %p180 = scmp.eq.s32.totalorder %s43, 1
      %p181 = por %p179, %p180
      %p183 = scmp.ne.s32.totalorder %s168, %s182
      %p184 = scmp.eq.s32.totalorder %s43, 0
      %p185 = por %p183, %p184
      %s187 = sadd.s32 %s186, 1
      %p190 = scmp.eq.s32.totalorder %s37, 1
      %p191 = scmp.ne.s32.totalorder %s186, %s188
      %p192 = scmp.eq.s32.totalorder %s37, 0
      %p193 = por %p191, %p192
      %p194 = scmp.ne.s32.totalorder %s186, %s188
      %p195 = scmp.eq.s32.totalorder %s42, 1
      %p196 = por %p194, %p195
      %p197 = scmp.ne.s32.totalorder %s188, %s189
      %p198 = scmp.eq.s32.totalorder %s42, 0
      %p199 = por %p197, %p198
      %p200 = scmp.ne.s32.totalorder %s188, %s189
      %p201 = scmp.eq.s32.totalorder %s43, 1
      %p202 = por %p200, %p201
      %p204 = scmp.ne.s32.totalorder %s189, %s203
      %p205 = scmp.eq.s32.totalorder %s43, 0
      %p206 = por %p204, %p205
      %s208 = sadd.s32 %s207, 1
      %p211 = scmp.eq.s32.totalorder %s37, 1
      %p212 = scmp.ne.s32.totalorder %s207, %s209
      %p213 = scmp.eq.s32.totalorder %s37, 0
      %p214 = por %p212, %p213
      %p215 = scmp.ne.s32.totalorder %s207, %s209
      %p216 = scmp.eq.s32.totalorder %s42, 1
      %p217 = por %p215, %p216
      %p218 = scmp.ne.s32.totalorder %s209, %s210
      %p219 = scmp.eq.s32.totalorder %s42, 0
      %p220 = por %p218, %p219
      %p221 = scmp.ne.s32.totalorder %s209, %s210
      %p222 = scmp.eq.s32.totalorder %s43, 1
      %p223 = por %p221, %p222
      %p225 = scmp.ne.s32.totalorder %s210, %s224
      %p226 = scmp.eq.s32.totalorder %s43, 0
      %p227 = por %p225, %p226
      %s229 = sadd.s32 %s228, 1
      %p232 = scmp.eq.s32.totalorder %s37, 1
      %p233 = scmp.ne.s32.totalorder %s228, %s230
      %p234 = scmp.eq.s32.totalorder %s37, 0
      %p235 = por %p233, %p234
      %p236 = scmp.ne.s32.totalorder %s228, %s230
      %p237 = scmp.eq.s32.totalorder %s42, 1
      %p238 = por %p236, %p237
      %p239 = scmp.ne.s32.totalorder %s230, %s231
      %p240 = scmp.eq.s32.totalorder %s42, 0
      %p241 = por %p239, %p240
      %p242 = scmp.ne.s32.totalorder %s230, %s231
      %p243 = scmp.eq.s32.totalorder %s43, 1
      %p244 = por %p242, %p243
      %p246 = scmp.ne.s32.totalorder %s231, %s245
      %p247 = scmp.eq.s32.totalorder %s43, 0
      %p248 = por %p246, %p247
      %s250 = sadd.s32 %s249, 1
      %p253 = scmp.eq.s32.totalorder %s37, 1
      %p254 = scmp.ne.s32.totalorder %s249, %s251
      %p255 = scmp.eq.s32.totalorder %s37, 0
      %p256 = por %p254, %p255
      %p257 = scmp.ne.s32.totalorder %s249, %s251
      %p258 = scmp.eq.s32.totalorder %s42, 1
      %p259 = por %p257, %p258
      %p260 = scmp.ne.s32.totalorder %s251, %s252
      %p261 = scmp.eq.s32.totalorder %s42, 0
      %p262 = por %p260, %p261
      %p263 = scmp.ne.s32.totalorder %s251, %s252
      %p264 = scmp.eq.s32.totalorder %s43, 1
      %p265 = por %p263, %p264
      %p267 = scmp.ne.s32.totalorder %s252, %s266
      %p268 = scmp.eq.s32.totalorder %s43, 0
      %p269 = por %p267, %p268
      %s271 = sadd.s32 %s270, 1
      %p274 = scmp.eq.s32.totalorder %s37, 1
      %p275 = scmp.ne.s32.totalorder %s270, %s272
      %p276 = scmp.eq.s32.totalorder %s37, 0
      %p277 = por %p275, %p276
      %p278 = scmp.ne.s32.totalorder %s270, %s272
      %p279 = scmp.eq.s32.totalorder %s42, 1
      %p280 = por %p278, %p279
      %p281 = scmp.ne.s32.totalorder %s272, %s273
      %p282 = scmp.eq.s32.totalorder %s42, 0
      %p283 = por %p281, %p282
      %p284 = scmp.ne.s32.totalorder %s272, %s273
      %p285 = scmp.eq.s32.totalorder %s43, 1
      %p286 = por %p284, %p285
      %p288 = scmp.ne.s32.totalorder %s273, %s287
      %p289 = scmp.eq.s32.totalorder %s43, 0
      %p290 = por %p288, %p289
      %s292 = sadd.s32 %s291, 1
      %p295 = scmp.eq.s32.totalorder %s37, 1
      %p296 = scmp.ne.s32.totalorder %s291, %s293
      %p297 = scmp.eq.s32.totalorder %s37, 0
      %p298 = por %p296, %p297
      %p299 = scmp.ne.s32.totalorder %s291, %s293
      %p300 = scmp.eq.s32.totalorder %s42, 1
      %p301 = por %p299, %p300
      %p302 = scmp.ne.s32.totalorder %s293, %s294
      %p303 = scmp.eq.s32.totalorder %s42, 0
      %p304 = por %p302, %p303
      %p305 = scmp.ne.s32.totalorder %s293, %s294
      %p306 = scmp.eq.s32.totalorder %s43, 1
      %p307 = por %p305, %p306
      %p309 = scmp.ne.s32.totalorder %s294, %s308
      %p310 = scmp.eq.s32.totalorder %s43, 0
      %p311 = por %p309, %p310
      %s313 = sadd.s32 %s312, 1
      %p316 = scmp.eq.s32.totalorder %s37, 1
      %p317 = scmp.ne.s32.totalorder %s312, %s314
      %p318 = scmp.eq.s32.totalorder %s37, 0
      %p319 = por %p317, %p318
      %p320 = scmp.ne.s32.totalorder %s312, %s314
      %p321 = scmp.eq.s32.totalorder %s42, 1
      %p322 = por %p320, %p321
      %p323 = scmp.ne.s32.totalorder %s314, %s315
      %p324 = scmp.eq.s32.totalorder %s42, 0
      %p325 = por %p323, %p324
      %p326 = scmp.ne.s32.totalorder %s314, %s315
      %p327 = scmp.eq.s32.totalorder %s43, 1
      %p328 = por %p326, %p327
      %p330 = scmp.ne.s32.totalorder %s315, %s329
      %p331 = scmp.eq.s32.totalorder %s43, 0
      %p332 = por %p330, %p331
      %s334 = sadd.s32 %s333, 1
      %p337 = scmp.eq.s32.totalorder %s37, 1
      %p338 = scmp.ne.s32.totalorder %s333, %s335
      %p339 = scmp.eq.s32.totalorder %s37, 0
      %p340 = por %p338, %p339
      %p341 = scmp.ne.s32.totalorder %s333, %s335
      %p342 = scmp.eq.s32.totalorder %s42, 1
      %p343 = por %p341, %p342
      %p344 = scmp.ne.s32.totalorder %s335, %s336
      %p345 = scmp.eq.s32.totalorder %s42, 0
      %p346 = por %p344, %p345
      %p347 = scmp.ne.s32.totalorder %s335, %s336
      %p348 = scmp.eq.s32.totalorder %s43, 1
      %p349 = por %p347, %p348
      %p351 = scmp.ne.s32.totalorder %s336, %s350
      %p352 = scmp.eq.s32.totalorder %s43, 0
      %p353 = por %p351, %p352
      %s355 = sadd.s32 %s354, 1
      %p358 = scmp.eq.s32.totalorder %s37, 1
      %p359 = scmp.ne.s32.totalorder %s354, %s356
      %p360 = scmp.eq.s32.totalorder %s37, 0
      %p361 = por %p359, %p360
      %p362 = scmp.ne.s32.totalorder %s354, %s356
      %p363 = scmp.eq.s32.totalorder %s42, 1
      %p364 = por %p362, %p363
      %p365 = scmp.ne.s32.totalorder %s356, %s357
      %p366 = scmp.eq.s32.totalorder %s42, 0
      %p367 = por %p365, %p366
      %p368 = scmp.ne.s32.totalorder %s356, %s357
      %p369 = scmp.eq.s32.totalorder %s43, 1
      %p370 = por %p368, %p369
      %p372 = scmp.ne.s32.totalorder %s357, %s371
      %p373 = scmp.eq.s32.totalorder %s43, 0
      %p374 = por %p372, %p373
      %s375 = ssub.s32 %s44, %s56
      %s376 = ssub.s32 %s45, %s52
      %s377 = sor.u32 %s375, %s376
      %p378 = scmp.eq.s32.totalorder %s377, 0
      %s380 = sadd.s32 %s379, 1
      %s381 = scalar_select %p378, %s379, %s380
      %p384 = pneg %p378
      %p385 = scmp.eq.s32.totalorder %s37, 1
      %p386 = por %p384, %p385
      %p387 = scmp.ne.s32.totalorder %s379, %s382
      %p388 = scmp.eq.s32.totalorder %s37, 0
      %p389 = por %p387, %p388
      %p390 = scmp.ne.s32.totalorder %s379, %s382
      %p391 = scmp.eq.s32.totalorder %s42, 1
      %p392 = por %p390, %p391
      %p393 = scmp.ne.s32.totalorder %s382, %s383
      %p394 = scmp.eq.s32.totalorder %s42, 0
      %p395 = por %p393, %p394
      %p396 = scmp.ne.s32.totalorder %s382, %s383
      %p397 = scmp.eq.s32.totalorder %s43, 1
      %p398 = por %p396, %p397
      %p400 = scmp.ne.s32.totalorder %s383, %s399
      %p401 = scmp.eq.s32.totalorder %s43, 0
      %p402 = por %p400, %p401
      %p403 = scmp.le.s32.totalorder 1, %s37
      %p404 = scmp.lt.s32.totalorder %s37, 3
      %p405 = pnand %p403, %p404
      %p406 = pneg %p405
      // Predicated region
      $region9: #{tpu_custom_call.1} parent=5 // pred_check
        _
      $region10: #{tpu_custom_call.1} parent=5 // pred_check_branch
        %408 = sbr.rel (%p405) target = $region12
      $region11: #{tpu_custom_call.1} parent=5 // pred_region
        %s409 = ssub.s32 %s37, 1
        // Predicated region
        $region13: #{tpu_custom_call.1} parent=11 // pred_check
          %p410 = pneg %p178
        $region14: #{tpu_custom_call.1} parent=11 // pred_check_branch
          %412 = sbr.rel (%p410) target = $region16
        $region15: #{tpu_custom_call.1} parent=11 // pred_region
          %s414 = ssub.s32 2048, 2048
          %415 = vsyncadd [#allocation14], %s414
          %s416 = sshll.u32 [#allocation15], 4
          %s417 = int_to_ptr.vmem [resolvable:$true] %s416
          %422 = dma.hbm_to_vmem [thread:$0]  %s4, 2048, %s417, [#allocation14], 128, 128, 8
        $region16: #{tpu_custom_call.1} parent=11 // pred_fallthru
          _
        // Predicated region
        $region17: #{tpu_custom_call.1} parent=11 // pred_check
          %p423 = pneg %p199
        $region18: #{tpu_custom_call.1} parent=11 // pred_check_branch
          %425 = sbr.rel (%p423) target = $region20
        $region19: #{tpu_custom_call.1} parent=11 // pred_region
          %s427 = ssub.s32 64, 64
          %428 = vsyncadd [#allocation17], %s427
          %s430 = sshll.u32 [#allocation16], 4
          %s431 = int_to_ptr.vmem [resolvable:$true] %s430
          %433 = dma.hbm_to_vmem [thread:$0]  %s5, 64, %s431, [#allocation17]
        $region20: #{tpu_custom_call.1} parent=11 // pred_fallthru
          _
        // Predicated region
        $region21: #{tpu_custom_call.1} parent=11 // pred_check
          %p434 = pneg %p220
        $region22: #{tpu_custom_call.1} parent=11 // pred_check_branch
          %436 = sbr.rel (%p434) target = $region24
        $region23: #{tpu_custom_call.1} parent=11 // pred_region
          %s438 = ssub.s32 2048, 2048
          %439 = vsyncadd [#allocation17], %s438
          %s440 = sshll.u32 [#allocation18], 4
          %s441 = int_to_ptr.vmem [resolvable:$true] %s440
          %446 = dma.hbm_to_vmem [thread:$0]  %s6, 2048, %s441, [#allocation17], 128, 128, 8
        $region24: #{tpu_custom_call.1} parent=11 // pred_fallthru
          _
        // Predicated region
        $region25: #{tpu_custom_call.1} parent=11 // pred_check
          %p447 = pneg %p241
        $region26: #{tpu_custom_call.1} parent=11 // pred_check_branch
          %449 = sbr.rel (%p447) target = $region28
        $region27: #{tpu_custom_call.1} parent=11 // pred_region
          %s451 = ssub.s32 64, 64
          %452 = vsyncadd [#allocation20], %s451
          %s454 = sshll.u32 [#allocation19], 4
          %s455 = int_to_ptr.vmem [resolvable:$true] %s454
          %457 = dma.hbm_to_vmem [thread:$0]  %s7, 64, %s455, [#allocation20]
        $region28: #{tpu_custom_call.1} parent=11 // pred_fallthru
          _
        // Predicated region
        $region29: #{tpu_custom_call.1} parent=11 // pred_check
          %p458 = pneg %p262
        $region30: #{tpu_custom_call.1} parent=11 // pred_check_branch
          %460 = sbr.rel (%p458) target = $region32
        $region31: #{tpu_custom_call.1} parent=11 // pred_region
          %s462 = ssub.s32 512, 512
          %463 = vsyncadd [#allocation20], %s462
          %s464 = sshll.u32 [#allocation21], 4
          %s465 = int_to_ptr.vmem [resolvable:$true] %s464
          %470 = dma.hbm_to_vmem [thread:$0]  %s8, 512, %s465, [#allocation20], 128, 128, 8
        $region32: #{tpu_custom_call.1} parent=11 // pred_fallthru
          _
        // Predicated region
        $region33: #{tpu_custom_call.1} parent=11 // pred_check
          %p471 = pneg %p283
        $region34: #{tpu_custom_call.1} parent=11 // pred_check_branch
          %473 = sbr.rel (%p471) target = $region36
        $region35: #{tpu_custom_call.1} parent=11 // pred_region
          %s475 = ssub.s32 16, 16
          %476 = vsyncadd [#allocation23], %s475
          %s478 = sshll.u32 [#allocation22], 4
          %s479 = int_to_ptr.vmem [resolvable:$true] %s478
          %481 = dma.hbm_to_vmem [thread:$0]  %s9, 16, %s479, [#allocation23]
        $region36: #{tpu_custom_call.1} parent=11 // pred_fallthru
          _
        // Predicated region
        $region37: #{tpu_custom_call.1} parent=11 // pred_check
          %p482 = pneg %p304
        $region38: #{tpu_custom_call.1} parent=11 // pred_check_branch
          %484 = sbr.rel (%p482) target = $region40
        $region39: #{tpu_custom_call.1} parent=11 // pred_region
          %s486 = ssub.s32 1024, 1024
          %487 = vsyncadd [#allocation23], %s486
          %s488 = sshll.u32 [#allocation24], 4
          %s489 = int_to_ptr.vmem [resolvable:$true] %s488
          %494 = dma.hbm_to_vmem [thread:$0]  %s10, 1024, %s489, [#allocation23], 128, 128, 8
        $region40: #{tpu_custom_call.1} parent=11 // pred_fallthru
          _
        // Predicated region
        $region41: #{tpu_custom_call.1} parent=11 // pred_check
          %p495 = pneg %p325
        $region42: #{tpu_custom_call.1} parent=11 // pred_check_branch
          %497 = sbr.rel (%p495) target = $region44
        $region43: #{tpu_custom_call.1} parent=11 // pred_region
          %s499 = ssub.s32 16, 16
          %500 = vsyncadd [#allocation26], %s499
          %s502 = sshll.u32 [#allocation25], 4
          %s503 = int_to_ptr.vmem [resolvable:$true] %s502
          %505 = dma.hbm_to_vmem [thread:$0]  %s11, 16, %s503, [#allocation26]
        $region44: #{tpu_custom_call.1} parent=11 // pred_fallthru
          _
        // Predicated region
        $region45: #{tpu_custom_call.1} parent=11 // pred_check
          %p506 = pneg %p346
        $region46: #{tpu_custom_call.1} parent=11 // pred_check_branch
          %508 = sbr.rel (%p506) target = $region48
        $region47: #{tpu_custom_call.1} parent=11 // pred_region
          %s510 = ssub.s32 64, 64
          %511 = vsyncadd [#allocation26], %s510
          %s513 = sshll.u32 [#allocation27], 4
          %s514 = int_to_ptr.vmem [resolvable:$true] %s513
          %516 = dma.hbm_to_vmem [thread:$0]  %s12, 64, %s514, [#allocation26]
        $region48: #{tpu_custom_call.1} parent=11 // pred_fallthru
          _
        // Predicated region
        $region49: #{tpu_custom_call.1} parent=11 // pred_check
          %p517 = pneg %p367
        $region50: #{tpu_custom_call.1} parent=11 // pred_check_branch
          %519 = sbr.rel (%p517) target = $region52
        $region51: #{tpu_custom_call.1} parent=11 // pred_region
          %s521 = ssub.s32 64, 64
          %522 = vsyncadd [#allocation29], %s521
          %s524 = sshll.u32 [#allocation28], 4
          %s525 = int_to_ptr.vmem [resolvable:$true] %s524
          %527 = dma.hbm_to_vmem [thread:$0]  %s13, 64, %s525, [#allocation29]
        $region52: #{tpu_custom_call.1} parent=11 // pred_fallthru
          _
      $region12: #{tpu_custom_call.1} parent=5 // pred_fallthru
        _
      %p528 = scmp.lt.s32.totalorder %s37, 2
      // Predicated region
      $region53: #{tpu_custom_call.1} parent=5 // pred_check
        %p529 = pneg %p528
      $region54: #{tpu_custom_call.1} parent=5 // pred_check_branch
        %531 = sbr.rel (%p529) target = $region56
      $region55: #{tpu_custom_call.1} parent=5 // pred_region
        // Predicated region
        $region57: #{tpu_custom_call.1} parent=55 // pred_check
          %p532 = pneg %p69
        $region58: #{tpu_custom_call.1} parent=55 // pred_check_branch
          %534 = sbr.rel (%p532) target = $region60
        $region59: #{tpu_custom_call.1} parent=55 // pred_region
          %s535 = sand.u32 %s59, 1
          %s536 = scalar_lea.sflag [#allocation8], %s535
          %s537 = sand.u32 %s59, 1
          %s538 = smul.addr %s537, 8
          %s539 = scalar_lea.vmem [#allocation7], %s538
          %s541 = ssub.s32 128, 128
          %542 = vsyncadd %s536, %s541
          %s543 = smul.addr %s44, 128
          %s544 = scalar_lea.hbm %s0, %s543
          %s546 = sshll.u32 %s539, 4
          %s547 = int_to_ptr.vmem [resolvable:$true] %s546
          %549 = dma.hbm_to_vmem [thread:$0]  %s544, 128, %s547, %s536
        $region60: #{tpu_custom_call.1} parent=55 // pred_fallthru
          _
        // Predicated region
        $region61: #{tpu_custom_call.1} parent=55 // pred_check
          %p550 = pneg %p95
        $region62: #{tpu_custom_call.1} parent=55 // pred_check_branch
          %552 = sbr.rel (%p550) target = $region64
        $region63: #{tpu_custom_call.1} parent=55 // pred_region
          %s553 = sand.u32 %s37, 1
          %s554 = scalar_lea.sflag [#allocation11], %s553
          %s555 = sand.u32 %s85, 1
          %s556 = smul.addr %s555, 8
          %s557 = scalar_lea.vmem [#allocation10], %s556
          %s559 = ssub.s32 128, 128
          %560 = vsyncadd %s554, %s559
          %s561 = smul.addr %s44, 128
          %s562 = scalar_lea.hbm %s1, %s561
          %s564 = sshll.u32 %s557, 4
          %s565 = int_to_ptr.vmem [resolvable:$true] %s564
          %567 = dma.hbm_to_vmem [thread:$0]  %s562, 128, %s565, %s554
        $region64: #{tpu_custom_call.1} parent=55 // pred_fallthru
          _
        // Predicated region
        $region65: #{tpu_custom_call.1} parent=55 // pred_check
          %p568 = pneg %p123
        $region66: #{tpu_custom_call.1} parent=55 // pred_check_branch
          %570 = sbr.rel (%p568) target = $region68
        $region67: #{tpu_custom_call.1} parent=55 // pred_region
          %s571 = sand.u32 %s37, 1
          %s572 = scalar_lea.sflag [#allocation11], %s571
          %s573 = sand.u32 %s113, 1
          %s574 = smul.addr %s573, 8
          %s575 = scalar_lea.vmem [#allocation12], %s574
          %s577 = ssub.s32 128, 128
          %578 = vsyncadd %s572, %s577
          %s579 = sadd.s32 %s45, %s44
          %s580 = smul.addr %s579, 128
          %s581 = scalar_lea.hbm %s2, %s580
          %s583 = sshll.u32 %s575, 4
          %s584 = int_to_ptr.vmem [resolvable:$true] %s583
          %586 = dma.hbm_to_vmem [thread:$0]  %s581, 128, %s584, %s572
        $region68: #{tpu_custom_call.1} parent=55 // pred_fallthru
          _
        // Predicated region
        $region69: #{tpu_custom_call.1} parent=55 // pred_check
          %p587 = pneg %p151
        $region70: #{tpu_custom_call.1} parent=55 // pred_check_branch
          %589 = sbr.rel (%p587) target = $region72
        $region71: #{tpu_custom_call.1} parent=55 // pred_region
          %s590 = sand.u32 %s37, 1
          %s591 = scalar_lea.sflag [#allocation14], %s590
          %s592 = sand.u32 %s141, 1
          %s593 = smul.addr %s592, 8
          %s594 = scalar_lea.vmem [#allocation13], %s593
          %s596 = ssub.s32 128, 128
          %597 = vsyncadd %s591, %s596
          %s598 = sadd.s32 %s45, %s44
          %s599 = smul.addr %s598, 128
          %s600 = scalar_lea.hbm %s3, %s599
          %s602 = sshll.u32 %s594, 4
          %s603 = int_to_ptr.vmem [resolvable:$true] %s602
          %605 = dma.hbm_to_vmem [thread:$0]  %s600, 128, %s603, %s591
        $region72: #{tpu_custom_call.1} parent=55 // pred_fallthru
          _
      $region56: #{tpu_custom_call.1} parent=5 // pred_fallthru
        _
      %p606 = scmp.le.s32.totalorder 1, %s37
      %p607 = scmp.lt.s32.totalorder %s37, 3
      %p608 = pnand %p606, %p607
      %p609 = pneg %p608
      // Predicated region
      $region73: #{tpu_custom_call.1} parent=5 // pred_check
        _
      $region74: #{tpu_custom_call.1} parent=5 // pred_check_branch
        %611 = sbr.rel (%p608) target = $region76
      $region75: #{tpu_custom_call.1} parent=5 // pred_region
        %s612 = ssub.s32 %s37, 1
        %s613 = sand.u32 %s62, 1
        %s614 = scalar_lea.sflag [#allocation8], %s613
        %s615 = sand.u32 %s62, 1
        %s616 = smul.addr %s615, 8
        %s617 = scalar_lea.vmem [#allocation7], %s616
        // Predicated region
        $region77: #{tpu_custom_call.1} parent=75 // pred_check
          %p618 = pneg %p75
        $region78: #{tpu_custom_call.1} parent=75 // pred_check_branch
          %620 = sbr.rel (%p618) target = $region80
        $region79: #{tpu_custom_call.1} parent=75 // pred_region
          %621 = dma.done %s614, 128
        $region80: #{tpu_custom_call.1} parent=75 // pred_fallthru
          _
        %s622 = sand.u32 %s42, 1
        %s623 = scalar_lea.sflag [#allocation11], %s622
        %s624 = sand.u32 %s88, 1
        %s625 = smul.addr %s624, 8
        %s626 = scalar_lea.vmem [#allocation10], %s625
        // Predicated region
        $region81: #{tpu_custom_call.1} parent=75 // pred_check
          %p627 = pneg %p101
        $region82: #{tpu_custom_call.1} parent=75 // pred_check_branch
          %629 = sbr.rel (%p627) target = $region84
        $region83: #{tpu_custom_call.1} parent=75 // pred_region
          %630 = dma.done %s623, 128
        $region84: #{tpu_custom_call.1} parent=75 // pred_fallthru
          _
        %s631 = sand.u32 %s42, 1
        %s632 = scalar_lea.sflag [#allocation11], %s631
        %s633 = sand.u32 %s116, 1
        %s634 = smul.addr %s633, 8
        %s635 = scalar_lea.vmem [#allocation12], %s634
        // Predicated region
        $region85: #{tpu_custom_call.1} parent=75 // pred_check
          %p636 = pneg %p129
        $region86: #{tpu_custom_call.1} parent=75 // pred_check_branch
          %638 = sbr.rel (%p636) target = $region88
        $region87: #{tpu_custom_call.1} parent=75 // pred_region
          %639 = dma.done %s632, 128
        $region88: #{tpu_custom_call.1} parent=75 // pred_fallthru
          _
        %s640 = sand.u32 %s42, 1
        %s641 = scalar_lea.sflag [#allocation14], %s640
        %s642 = sand.u32 %s144, 1
        %s643 = smul.addr %s642, 8
        %s644 = scalar_lea.vmem [#allocation13], %s643
        // Predicated region
        $region89: #{tpu_custom_call.1} parent=75 // pred_check
          %p645 = pneg %p157
        $region90: #{tpu_custom_call.1} parent=75 // pred_check_branch
          %647 = sbr.rel (%p645) target = $region92
        $region91: #{tpu_custom_call.1} parent=75 // pred_region
          %648 = dma.done %s641, 128
        $region92: #{tpu_custom_call.1} parent=75 // pred_fallthru
          _
        // Predicated region
        $region93: #{tpu_custom_call.1} parent=75 // pred_check
          %p649 = pneg %p178
        $region94: #{tpu_custom_call.1} parent=75 // pred_check_branch
          %651 = sbr.rel (%p649) target = $region96
        $region95: #{tpu_custom_call.1} parent=75 // pred_region
          %652 = dma.done [#allocation14], 2048
        $region96: #{tpu_custom_call.1} parent=75 // pred_fallthru
          _
        // Predicated region
        $region97: #{tpu_custom_call.1} parent=75 // pred_check
          %p653 = pneg %p199
        $region98: #{tpu_custom_call.1} parent=75 // pred_check_branch
          %655 = sbr.rel (%p653) target = $region100
        $region99: #{tpu_custom_call.1} parent=75 // pred_region
          %656 = dma.done [#allocation17], 64
        $region100: #{tpu_custom_call.1} parent=75 // pred_fallthru
          _
        // Predicated region
        $region101: #{tpu_custom_call.1} parent=75 // pred_check
          %p657 = pneg %p220
        $region102: #{tpu_custom_call.1} parent=75 // pred_check_branch
          %659 = sbr.rel (%p657) target = $region104
        $region103: #{tpu_custom_call.1} parent=75 // pred_region
          %660 = dma.done [#allocation17], 2048
        $region104: #{tpu_custom_call.1} parent=75 // pred_fallthru
          _
        // Predicated region
        $region105: #{tpu_custom_call.1} parent=75 // pred_check
          %p661 = pneg %p241
        $region106: #{tpu_custom_call.1} parent=75 // pred_check_branch
          %663 = sbr.rel (%p661) target = $region108
        $region107: #{tpu_custom_call.1} parent=75 // pred_region
          %664 = dma.done [#allocation20], 64
        $region108: #{tpu_custom_call.1} parent=75 // pred_fallthru
          _
        // Predicated region
        $region109: #{tpu_custom_call.1} parent=75 // pred_check
          %p665 = pneg %p262
        $region110: #{tpu_custom_call.1} parent=75 // pred_check_branch
          %667 = sbr.rel (%p665) target = $region112
        $region111: #{tpu_custom_call.1} parent=75 // pred_region
          %668 = dma.done [#allocation20], 512
        $region112: #{tpu_custom_call.1} parent=75 // pred_fallthru
          _
        // Predicated region
        $region113: #{tpu_custom_call.1} parent=75 // pred_check
          %p669 = pneg %p283
        $region114: #{tpu_custom_call.1} parent=75 // pred_check_branch
          %671 = sbr.rel (%p669) target = $region116
        $region115: #{tpu_custom_call.1} parent=75 // pred_region
          %672 = dma.done [#allocation23], 16
        $region116: #{tpu_custom_call.1} parent=75 // pred_fallthru
          _
        // Predicated region
        $region117: #{tpu_custom_call.1} parent=75 // pred_check
          %p673 = pneg %p304
        $region118: #{tpu_custom_call.1} parent=75 // pred_check_branch
          %675 = sbr.rel (%p673) target = $region120
        $region119: #{tpu_custom_call.1} parent=75 // pred_region
          %676 = dma.done [#allocation23], 1024
        $region120: #{tpu_custom_call.1} parent=75 // pred_fallthru
          _
        // Predicated region
        $region121: #{tpu_custom_call.1} parent=75 // pred_check
          %p677 = pneg %p325
        $region122: #{tpu_custom_call.1} parent=75 // pred_check_branch
          %679 = sbr.rel (%p677) target = $region124
        $region123: #{tpu_custom_call.1} parent=75 // pred_region
          %680 = dma.done [#allocation26], 16
        $region124: #{tpu_custom_call.1} parent=75 // pred_fallthru
          _
        // Predicated region
        $region125: #{tpu_custom_call.1} parent=75 // pred_check
          %p681 = pneg %p346
        $region126: #{tpu_custom_call.1} parent=75 // pred_check_branch
          %683 = sbr.rel (%p681) target = $region128
        $region127: #{tpu_custom_call.1} parent=75 // pred_region
          %684 = dma.done [#allocation26], 64
        $region128: #{tpu_custom_call.1} parent=75 // pred_fallthru
          _
        // Predicated region
        $region129: #{tpu_custom_call.1} parent=75 // pred_check
          %p685 = pneg %p367
        $region130: #{tpu_custom_call.1} parent=75 // pred_check_branch
          %687 = sbr.rel (%p685) target = $region132
        $region131: #{tpu_custom_call.1} parent=75 // pred_region
          %688 = dma.done [#allocation29], 64
        $region132: #{tpu_custom_call.1} parent=75 // pred_fallthru
          _
        %s689 = sand.u32 %s62, 1
        %s690 = scalar_lea.sflag [#allocation8], %s689
        %s691 = sand.u32 %s62, 1
        %s692 = smul.addr %s691, 8
        %s693 = scalar_lea.vmem [#allocation7], %s692
        %p694 = pneg %p75
        %p695 = pneg %p72
        %s696 = sand.u32 %s42, 1
        %s697 = scalar_lea.sflag [#allocation11], %s696
        %s698 = sand.u32 %s88, 1
        %s699 = smul.addr %s698, 8
        %s700 = scalar_lea.vmem [#allocation10], %s699
        %p701 = pneg %p101
        %p702 = pneg %p98
        %s703 = sand.u32 %s42, 1
        %s704 = scalar_lea.sflag [#allocation11], %s703
        %s705 = sand.u32 %s116, 1
        %s706 = smul.addr %s705, 8
        %s707 = scalar_lea.vmem [#allocation12], %s706
        %p708 = pneg %p129
        %p709 = pneg %p126
        %s710 = sand.u32 %s42, 1
        %s711 = scalar_lea.sflag [#allocation14], %s710
        %s712 = sand.u32 %s144, 1
        %s713 = smul.addr %s712, 8
        %s714 = scalar_lea.vmem [#allocation13], %s713
        %p715 = pneg %p157
        %p716 = pneg %p154
        %p717 = pneg %p178
        %p718 = pneg %p175
        %p719 = pneg %p199
        %p720 = pneg %p196
        %p721 = pneg %p220
        %p722 = pneg %p217
        %p723 = pneg %p241
        %p724 = pneg %p238
        %p725 = pneg %p262
        %p726 = pneg %p259
        %p727 = pneg %p283
        %p728 = pneg %p280
        %p729 = pneg %p304
        %p730 = pneg %p301
        %p731 = pneg %p325
        %p732 = pneg %p322
        %p733 = pneg %p346
        %p734 = pneg %p343
        %p735 = pneg %p367
        %p736 = pneg %p364
        %p737 = pneg %p395
        %p738 = pneg %p392
        %s739 = sand.u32 %s382, 1
        %s740 = scalar_lea.sflag [#allocation9], %s739
        %s741 = sand.u32 %s382, 1
        %s742 = smul.addr %s741, 8
        %s743 = scalar_lea.vmem [#allocation30], %s742
        %p744 = scmp.eq.s32.totalorder %s47, 0
        // Predicated region
        $region133: #{tpu_custom_call.1} parent=75 // pred_check
          %p745 = pneg %p744
        $region134: #{tpu_custom_call.1} parent=75 // pred_check_branch
          %747 = sbr.rel (%p745) target = $region136
        $region135: #{tpu_custom_call.1} parent=75 // pred_region
          %v748 = vld [vmem:[%s617] sm:$0xff]
          %v749 = vld [vmem:[#allocation27] sm:$0x1]
          %v750 = vld [vmem:[#allocation28] sm:$0x1]
          %vm751 = vcmask 261120
          %v752 = vsel %vm751, %v748, 0.0
          %753 = vadd.xlane.f32.xlu0 %v752
          %v754 = vpop.xlane.xlu0 %753
          %v755 = vrcp.pop 32.0
          %v756 = vmul.f32 %v754, %v755
          %v757 = vsub.f32 %v748, %v756
          %v758 = vmul.f32 %v757, %v757
          %v759 = vsel %vm751, %v758, 0.0
          %760 = vadd.xlane.f32.xlu0 %v759
          %v761 = vpop.xlane.xlu0 %760
          %v762 = vmul.f32 %v761, 0.032258064
          %v763 = vrsqrt.pop %v762
          %v764 = vmul.f32 %v762, %v763
          %vm765 = vcmp.eq.f32.partialorder %v762, inf
          %v766 = vsel %vm765, %v762, %v764
          %vm767 = vcmp.eq.f32.partialorder %v762, 0.0
          %v768 = vand.u32 %v762, 2147483648
          %v769 = vsel %vm767, %v768, %v766
          %v770 = vadd.f32 %v769, 1e-06
          %v771 = vrcp.pop %v770
          %v772 = vmul.f32 %v757, %v771
          %v773 = vlaneseq
          %v774 = vshrl.u32 %v773, 7
          %v775 = vsub.s32 0, %v774
          %v776 = vrot.slane %v749, %v775
          %v777 = vmul.f32 %v776, %v772
          %v778 = vlaneseq
          %v779 = vshrl.u32 %v778, 7
          %v780 = vsub.s32 0, %v779
          %v781 = vrot.slane %v750, %v780
          %v782 = vadd.f32 %v777, %v781
          %783 = vst.msk [vmem:[#allocation2] sm:$0xff] %vm751, %v782
          %s784 = scalar_lea.vmem [#allocation15], 32
          %v785 = vld [vmem:[%s784] sm:$0xff]
          %v786 = vld [vmem:[%s784 + $0x8] sm:$0xff]
          %v787 = vld [vmem:[%s784 + $0x10] sm:$0xff]
          %v788 = vld [vmem:[%s784 + $0x18] sm:$0xff]
          %v789 = vld [vmem:[#allocation16 + $0x1] sm:$0x1]
          %v790 = vlaneseq
          %v791 = vshrl.u32 %v790, 7
          %v792 = vsub.s32 0, %v791
          %v793 = vrot.slane %v789, %v792
          %v795 = vsel %vm751, %v782, 0
          %797 = vmatprep.subr.mxu0 0.0
          %798 = vmatpush1.msra.mxu0 %v785
          %799 = vmatprep.subr.mxu0 0.0
          %800 = vmatpush1.msra.mxu0 %v786
          %801 = vmatprep.subr.mxu0 0.0
          %802 = vmatpush1.msra.mxu0 %v787
          %803 = vmatprep.subr.mxu0 0.0
          %804 = vmatpush1.msra.mxu0 %v788
          %805 = vmatprep.subr.mxu0 0.0
          %806 = vmatpush1.msra.mxu0 0.0
          %807 = vmatprep.subr.mxu0 0.0
          %808 = vmatpush1.msra.mxu0 0.0
          %809 = vmatprep.subr.mxu0 0.0
          %810 = vmatpush1.msra.mxu0 0.0
          %811 = vmatprep.subr.mxu0 0.0
          %812 = vmatpush1.msra.mxu0 0.0
          %813 = vmatprep.subr.mxu0 0.0
          %814 = vmatpush1.msra.mxu0 0.0
          %815 = vmatprep.subr.mxu0 0.0
          %816 = vmatpush1.msra.mxu0 0.0
          %817 = vmatprep.subr.mxu0 0.0
          %818 = vmatpush1.msra.mxu0 0.0
          %819 = vmatprep.subr.mxu0 0.0
          %820 = vmatpush1.msra.mxu0 0.0
          %821 = vmatprep.subr.mxu0 0.0
          %822 = vmatpush1.msra.mxu0 0.0
          %823 = vmatprep.subr.mxu0 0.0
          %824 = vmatpush1.msra.mxu0 0.0
          %825 = vmatprep.subr.mxu0 0.0
          %826 = vmatpush1.msra.mxu0 0.0
          %827 = vmatprep.subr.mxu0 0.0
          %828 = vmatpush1.msra.mxu0 0.0
          %829 = vmatprep.subr.mxu0 0.0
          %830 = vmatpush1.msra.mxu0 0.0
          %831 = vmatprep.subr.mxu0 0.0
          %832 = vmatpush1.msra.mxu0 0.0
          %833 = vmatprep.subr.mxu0 0.0
          %834 = vmatpush1.msra.mxu0 0.0
          %835 = vmatprep.subr.mxu0 0.0
          %836 = vmatpush1.msra.mxu0 0.0
          %837 = vmatprep.subr.mxu0 0.0
          %838 = vmatpush1.msra.mxu0 0.0
          %839 = vmatprep.subr.mxu0 0.0
          %840 = vmatpush1.msra.mxu0 0.0
          %841 = vmatprep.subr.mxu0 0.0
          %842 = vmatpush1.msra.mxu0 0.0
          %843 = vmatprep.subr.mxu0 0.0
          %844 = vmatpush1.msra.mxu0 0.0
          %845 = vmatprep.subr.mxu0 0.0
          %846 = vmatpush1.msra.mxu0 0.0
          %847 = vmatprep.subr.mxu0 0.0
          %848 = vmatpush1.msra.mxu0 0.0
          %849 = vmatprep.subr.mxu0 0.0
          %850 = vmatpush1.msra.mxu0 0.0
          %851 = vmatprep.subr.mxu0 0.0
          %852 = vmatpush1.msra.mxu0 0.0
          %853 = vmatprep.subr.mxu0 0.0
          %854 = vmatpush1.msra.mxu0 0.0
          %855 = vmatprep.subr.mxu0 0.0
          %856 = vmatpush1.msra.mxu0 0.0
          %857 = vmatprep.subr.mxu0 0.0
          %858 = vmatpush1.msra.mxu0 0.0
          %859 = vmatprep.subr.mxu0 0.0
          %860 = vmatpush1.msra.mxu0 0.0
          %861 = vmatprep.mubr.f32.mxu0 0.0
          %862 = vmatmul.mubr.f32.gmra.mrb[0].mxu0 %v795
          %v863 = vpop.f32.mrb[0].mxu0
          %v864 = vadd.f32 %v793, %v863
          %v865 = vpop.f32.mrb[0].mxu0
          %866 = vdwg.mxu0
          %s867 = scalar_lea.vmem [#allocation15], 64
          %v868 = vld [vmem:[%s867] sm:$0xff]
          %v869 = vld [vmem:[%s867 + $0x8] sm:$0xff]
          %v870 = vld [vmem:[%s867 + $0x10] sm:$0xff]
          %v871 = vld [vmem:[%s867 + $0x18] sm:$0xff]
          %v872 = vld [vmem:[#allocation16 + $0x2] sm:$0x1]
          %v873 = vlaneseq
          %v874 = vshrl.u32 %v873, 7
          %v875 = vsub.s32 0, %v874
          %v876 = vrot.slane %v872, %v875
          %877 = vmatprep.subr.mxu0 0.0
          %878 = vmatpush1.msra.mxu0 %v868
          %879 = vmatprep.subr.mxu0 0.0
          %880 = vmatpush1.msra.mxu0 %v869
          %881 = vmatprep.subr.mxu0 0.0
          %882 = vmatpush1.msra.mxu0 %v870
          %883 = vmatprep.subr.mxu0 0.0
          %884 = vmatpush1.msra.mxu0 %v871
          %885 = vmatprep.subr.mxu0 0.0
          %886 = vmatpush1.msra.mxu0 0.0
          %887 = vmatprep.subr.mxu0 0.0
          %888 = vmatpush1.msra.mxu0 0.0
          %889 = vmatprep.subr.mxu0 0.0
          %890 = vmatpush1.msra.mxu0 0.0
          %891 = vmatprep.subr.mxu0 0.0
          %892 = vmatpush1.msra.mxu0 0.0
          %893 = vmatprep.subr.mxu0 0.0
          %894 = vmatpush1.msra.mxu0 0.0
          %895 = vmatprep.subr.mxu0 0.0
          %896 = vmatpush1.msra.mxu0 0.0
          %897 = vmatprep.subr.mxu0 0.0
          %898 = vmatpush1.msra.mxu0 0.0
          %899 = vmatprep.subr.mxu0 0.0
          %900 = vmatpush1.msra.mxu0 0.0
          %901 = vmatprep.subr.mxu0 0.0
          %902 = vmatpush1.msra.mxu0 0.0
          %903 = vmatprep.subr.mxu0 0.0
          %904 = vmatpush1.msra.mxu0 0.0
          %905 = vmatprep.subr.mxu0 0.0
          %906 = vmatpush1.msra.mxu0 0.0
          %907 = vmatprep.subr.mxu0 0.0
          %908 = vmatpush1.msra.mxu0 0.0
          %909 = vmatprep.subr.mxu0 0.0
          %910 = vmatpush1.msra.mxu0 0.0
          %911 = vmatprep.subr.mxu0 0.0
          %912 = vmatpush1.msra.mxu0 0.0
          %913 = vmatprep.subr.mxu0 0.0
          %914 = vmatpush1.msra.mxu0 0.0
          %915 = vmatprep.subr.mxu0 0.0
          %916 = vmatpush1.msra.mxu0 0.0
          %917 = vmatprep.subr.mxu0 0.0
          %918 = vmatpush1.msra.mxu0 0.0
          %919 = vmatprep.subr.mxu0 0.0
          %920 = vmatpush1.msra.mxu0 0.0
          %921 = vmatprep.subr.mxu0 0.0
          %922 = vmatpush1.msra.mxu0 0.0
          %923 = vmatprep.subr.mxu0 0.0
          %924 = vmatpush1.msra.mxu0 0.0
          %925 = vmatprep.subr.mxu0 0.0
          %926 = vmatpush1.msra.mxu0 0.0
          %927 = vmatprep.subr.mxu0 0.0
          %928 = vmatpush1.msra.mxu0 0.0
          %929 = vmatprep.subr.mxu0 0.0
          %930 = vmatpush1.msra.mxu0 0.0
          %931 = vmatprep.subr.mxu0 0.0
          %932 = vmatpush1.msra.mxu0 0.0
          %933 = vmatprep.subr.mxu0 0.0
          %934 = vmatpush1.msra.mxu0 0.0
          %935 = vmatprep.subr.mxu0 0.0
          %936 = vmatpush1.msra.mxu0 0.0
          %937 = vmatprep.subr.mxu0 0.0
          %938 = vmatpush1.msra.mxu0 0.0
          %939 = vmatprep.subr.mxu0 0.0
          %940 = vmatpush1.msra.mxu0 0.0
          %941 = vmatprep.mubr.f32.mxu0 0.0
          %942 = vmatmul.mubr.f32.gmra.mrb[0].mxu0 %v795
          %v943 = vpop.f32.mrb[0].mxu0
          %v944 = vadd.f32 %v876, %v943
          %v945 = vpop.f32.mrb[0].mxu0
          %946 = vdwg.mxu0
          %947 = vst.msk [vmem:[#allocation3] sm:$0xff] %vm751, %v864
          %948 = vst.msk [vmem:[#allocation4] sm:$0xff] %vm751, %v944
          %v949 = vld [vmem:[%s626] sm:$0xff]
          %s950 = scalar_lea.vmem [#allocation18], 32
          %v951 = vld [vmem:[%s950] sm:$0xff]
          %v952 = vld [vmem:[%s950 + $0x8] sm:$0xff]
          %v953 = vld [vmem:[%s950 + $0x10] sm:$0xff]
          %v954 = vld [vmem:[%s950 + $0x18] sm:$0xff]
          %v955 = vld [vmem:[#allocation19 + $0x1] sm:$0x1]
          %v956 = vlaneseq
          %v957 = vshrl.u32 %v956, 7
          %v958 = vsub.s32 0, %v957
          %v959 = vrot.slane %v955, %v958
          %v961 = vsel %vm751, %v949, 0
          %963 = vmatprep.subr.mxu0 0.0
          %964 = vmatpush1.msra.mxu0 %v951
          %965 = vmatprep.subr.mxu0 0.0
          %966 = vmatpush1.msra.mxu0 %v952
          %967 = vmatprep.subr.mxu0 0.0
          %968 = vmatpush1.msra.mxu0 %v953
          %969 = vmatprep.subr.mxu0 0.0
          %970 = vmatpush1.msra.mxu0 %v954
          %971 = vmatprep.subr.mxu0 0.0
          %972 = vmatpush1.msra.mxu0 0.0
          %973 = vmatprep.subr.mxu0 0.0
          %974 = vmatpush1.msra.mxu0 0.0
          %975 = vmatprep.subr.mxu0 0.0
          %976 = vmatpush1.msra.mxu0 0.0
          %977 = vmatprep.subr.mxu0 0.0
          %978 = vmatpush1.msra.mxu0 0.0
          %979 = vmatprep.subr.mxu0 0.0
          %980 = vmatpush1.msra.mxu0 0.0
          %981 = vmatprep.subr.mxu0 0.0
          %982 = vmatpush1.msra.mxu0 0.0
          %983 = vmatprep.subr.mxu0 0.0
          %984 = vmatpush1.msra.mxu0 0.0
          %985 = vmatprep.subr.mxu0 0.0
          %986 = vmatpush1.msra.mxu0 0.0
          %987 = vmatprep.subr.mxu0 0.0
          %988 = vmatpush1.msra.mxu0 0.0
          %989 = vmatprep.subr.mxu0 0.0
          %990 = vmatpush1.msra.mxu0 0.0
          %991 = vmatprep.subr.mxu0 0.0
          %992 = vmatpush1.msra.mxu0 0.0
          %993 = vmatprep.subr.mxu0 0.0
          %994 = vmatpush1.msra.mxu0 0.0
          %995 = vmatprep.subr.mxu0 0.0
          %996 = vmatpush1.msra.mxu0 0.0
          %997 = vmatprep.subr.mxu0 0.0
          %998 = vmatpush1.msra.mxu0 0.0
          %999 = vmatprep.subr.mxu0 0.0
          %1000 = vmatpush1.msra.mxu0 0.0
          %1001 = vmatprep.subr.mxu0 0.0
          %1002 = vmatpush1.msra.mxu0 0.0
          %1003 = vmatprep.subr.mxu0 0.0
          %1004 = vmatpush1.msra.mxu0 0.0
          %1005 = vmatprep.subr.mxu0 0.0
          %1006 = vmatpush1.msra.mxu0 0.0
          %1007 = vmatprep.subr.mxu0 0.0
          %1008 = vmatpush1.msra.mxu0 0.0
          %1009 = vmatprep.subr.mxu0 0.0
          %1010 = vmatpush1.msra.mxu0 0.0
          %1011 = vmatprep.subr.mxu0 0.0
          %1012 = vmatpush1.msra.mxu0 0.0
          %1013 = vmatprep.subr.mxu0 0.0
          %1014 = vmatpush1.msra.mxu0 0.0
          %1015 = vmatprep.subr.mxu0 0.0
          %1016 = vmatpush1.msra.mxu0 0.0
          %1017 = vmatprep.subr.mxu0 0.0
          %1018 = vmatpush1.msra.mxu0 0.0
          %1019 = vmatprep.subr.mxu0 0.0
          %1020 = vmatpush1.msra.mxu0 0.0
          %1021 = vmatprep.subr.mxu0 0.0
          %1022 = vmatpush1.msra.mxu0 0.0
          %1023 = vmatprep.subr.mxu0 0.0
          %1024 = vmatpush1.msra.mxu0 0.0
          %1025 = vmatprep.subr.mxu0 0.0
          %1026 = vmatpush1.msra.mxu0 0.0
          %1027 = vmatprep.mubr.f32.mxu0 0.0
          %1028 = vmatmul.mubr.f32.gmra.mrb[0].mxu0 %v961
          %v1029 = vpop.f32.mrb[0].mxu0
          %v1030 = vadd.f32 %v959, %v1029
          %v1031 = vpop.f32.mrb[0].mxu0
          %1032 = vdwg.mxu0
          %s1033 = scalar_lea.vmem [#allocation18], 64
          %v1034 = vld [vmem:[%s1033] sm:$0xff]
          %v1035 = vld [vmem:[%s1033 + $0x8] sm:$0xff]
          %v1036 = vld [vmem:[%s1033 + $0x10] sm:$0xff]
          %v1037 = vld [vmem:[%s1033 + $0x18] sm:$0xff]
          %v1038 = vld [vmem:[#allocation19 + $0x2] sm:$0x1]
          %v1039 = vlaneseq
          %v1040 = vshrl.u32 %v1039, 7
          %v1041 = vsub.s32 0, %v1040
          %v1042 = vrot.slane %v1038, %v1041
          %1043 = vmatprep.subr.mxu0 0.0
          %1044 = vmatpush1.msra.mxu0 %v1034
          %1045 = vmatprep.subr.mxu0 0.0
          %1046 = vmatpush1.msra.mxu0 %v1035
          %1047 = vmatprep.subr.mxu0 0.0
          %1048 = vmatpush1.msra.mxu0 %v1036
          %1049 = vmatprep.subr.mxu0 0.0
          %1050 = vmatpush1.msra.mxu0 %v1037
          %1051 = vmatprep.subr.mxu0 0.0
          %1052 = vmatpush1.msra.mxu0 0.0
          %1053 = vmatprep.subr.mxu0 0.0
          %1054 = vmatpush1.msra.mxu0 0.0
          %1055 = vmatprep.subr.mxu0 0.0
          %1056 = vmatpush1.msra.mxu0 0.0
          %1057 = vmatprep.subr.mxu0 0.0
          %1058 = vmatpush1.msra.mxu0 0.0
          %1059 = vmatprep.subr.mxu0 0.0
          %1060 = vmatpush1.msra.mxu0 0.0
          %1061 = vmatprep.subr.mxu0 0.0
          %1062 = vmatpush1.msra.mxu0 0.0
          %1063 = vmatprep.subr.mxu0 0.0
          %1064 = vmatpush1.msra.mxu0 0.0
          %1065 = vmatprep.subr.mxu0 0.0
          %1066 = vmatpush1.msra.mxu0 0.0
          %1067 = vmatprep.subr.mxu0 0.0
          %1068 = vmatpush1.msra.mxu0 0.0
          %1069 = vmatprep.subr.mxu0 0.0
          %1070 = vmatpush1.msra.mxu0 0.0
          %1071 = vmatprep.subr.mxu0 0.0
          %1072 = vmatpush1.msra.mxu0 0.0
          %1073 = vmatprep.subr.mxu0 0.0
          %1074 = vmatpush1.msra.mxu0 0.0
          %1075 = vmatprep.subr.mxu0 0.0
          %1076 = vmatpush1.msra.mxu0 0.0
          %1077 = vmatprep.subr.mxu0 0.0
          %1078 = vmatpush1.msra.mxu0 0.0
          %1079 = vmatprep.subr.mxu0 0.0
          %1080 = vmatpush1.msra.mxu0 0.0
          %1081 = vmatprep.subr.mxu0 0.0
          %1082 = vmatpush1.msra.mxu0 0.0
          %1083 = vmatprep.subr.mxu0 0.0
          %1084 = vmatpush1.msra.mxu0 0.0
          %1085 = vmatprep.subr.mxu0 0.0
          %1086 = vmatpush1.msra.mxu0 0.0
          %1087 = vmatprep.subr.mxu0 0.0
          %1088 = vmatpush1.msra.mxu0 0.0
          %1089 = vmatprep.subr.mxu0 0.0
          %1090 = vmatpush1.msra.mxu0 0.0
          %1091 = vmatprep.subr.mxu0 0.0
          %1092 = vmatpush1.msra.mxu0 0.0
          %1093 = vmatprep.subr.mxu0 0.0
          %1094 = vmatpush1.msra.mxu0 0.0
          %1095 = vmatprep.subr.mxu0 0.0
          %1096 = vmatpush1.msra.mxu0 0.0
          %1097 = vmatprep.subr.mxu0 0.0
          %1098 = vmatpush1.msra.mxu0 0.0
          %1099 = vmatprep.subr.mxu0 0.0
          %1100 = vmatpush1.msra.mxu0 0.0
          %1101 = vmatprep.subr.mxu0 0.0
          %1102 = vmatpush1.msra.mxu0 0.0
          %1103 = vmatprep.subr.mxu0 0.0
          %1104 = vmatpush1.msra.mxu0 0.0
          %1105 = vmatprep.subr.mxu0 0.0
          %1106 = vmatpush1.msra.mxu0 0.0
          %1107 = vmatprep.mubr.f32.mxu0 0.0
          %1108 = vmatmul.mubr.f32.gmra.mrb[0].mxu0 %v961
          %v1109 = vpop.f32.mrb[0].mxu0
          %v1110 = vadd.f32 %v1042, %v1109
          %v1111 = vpop.f32.mrb[0].mxu0
          %1112 = vdwg.mxu0
          %1113 = vst.msk [vmem:[#allocation5] sm:$0xff] %vm751, %v1030
          %1114 = vst.msk [vmem:[#allocation6] sm:$0xff] %vm751, %v1110
        $region136: #{tpu_custom_call.1} parent=75 // pred_fallthru
          _
        %s1115 = smul.u32 %s47, 8
        %s1116 = scalar_lea.vmem %s617, %s1115 [#allocation7]
        %v1117 = vld [vmem:[%s1116] sm:$0xff]
        %s1118 = scalar_lea.vmem [#allocation2], %s1115
        %v1119 = vld [vmem:[%s1118] sm:$0xff]
        %v1120 = vld [vmem:[%s644] sm:$0xff]
        %vm1121 = vcmp.eq.f32.partialorder %v1120, 0.0
        %v1122 = vsel %vm1121, -1e+09, 0.0
        %v1123 = vld [vmem:[%s635] sm:$0xff]
        %vm1124 = vcmp.eq.f32.partialorder %v1123, 0.0
        %v1125 = vsel %vm1124, -1e+09, 0.0
        %v1126 = vld [vmem:[#allocation22] sm:$0x1]
        %v1127 = vld [vmem:[#allocation25] sm:$0x1]
        %v1128 = vld [vmem:[#allocation3] sm:$0xff]
        %v1129 = vld [vmem:[#allocation4] sm:$0xff]
        %v1130 = vld [vmem:[#allocation15] sm:$0xff]
        %v1131 = vld [vmem:[#allocation15 + $0x8] sm:$0xff]
        %v1132 = vld [vmem:[#allocation15 + $0x10] sm:$0xff]
        %v1133 = vld [vmem:[#allocation15 + $0x18] sm:$0xff]
        %v1134 = vld [vmem:[#allocation16] sm:$0x1]
        %v1135 = vlaneseq
        %v1136 = vshrl.u32 %v1135, 7
        %v1137 = vsub.s32 0, %v1136
        %v1138 = vrot.slane %v1134, %v1137
        %vm1139 = vcmask 261120
        %v1141 = vsel %vm1139, %v1119, 0
        %1143 = vmatprep.subr.mxu0 0.0
        %1144 = vmatpush1.msra.mxu0 %v1130
        %1145 = vmatprep.subr.mxu0 0.0
        %1146 = vmatpush1.msra.mxu0 %v1131
        %1147 = vmatprep.subr.mxu0 0.0
        %1148 = vmatpush1.msra.mxu0 %v1132
        %1149 = vmatprep.subr.mxu0 0.0
        %1150 = vmatpush1.msra.mxu0 %v1133
        %1151 = vmatprep.subr.mxu0 0.0
        %1152 = vmatpush1.msra.mxu0 0.0
        %1153 = vmatprep.subr.mxu0 0.0
        %1154 = vmatpush1.msra.mxu0 0.0
        %1155 = vmatprep.subr.mxu0 0.0
        %1156 = vmatpush1.msra.mxu0 0.0
        %1157 = vmatprep.subr.mxu0 0.0
        %1158 = vmatpush1.msra.mxu0 0.0
        %1159 = vmatprep.subr.mxu0 0.0
        %1160 = vmatpush1.msra.mxu0 0.0
        %1161 = vmatprep.subr.mxu0 0.0
        %1162 = vmatpush1.msra.mxu0 0.0
        %1163 = vmatprep.subr.mxu0 0.0
        %1164 = vmatpush1.msra.mxu0 0.0
        %1165 = vmatprep.subr.mxu0 0.0
        %1166 = vmatpush1.msra.mxu0 0.0
        %1167 = vmatprep.subr.mxu0 0.0
        %1168 = vmatpush1.msra.mxu0 0.0
        %1169 = vmatprep.subr.mxu0 0.0
        %1170 = vmatpush1.msra.mxu0 0.0
        %1171 = vmatprep.subr.mxu0 0.0
        %1172 = vmatpush1.msra.mxu0 0.0
        %1173 = vmatprep.subr.mxu0 0.0
        %1174 = vmatpush1.msra.mxu0 0.0
        %1175 = vmatprep.subr.mxu0 0.0
        %1176 = vmatpush1.msra.mxu0 0.0
        %1177 = vmatprep.subr.mxu0 0.0
        %1178 = vmatpush1.msra.mxu0 0.0
        %1179 = vmatprep.subr.mxu0 0.0
        %1180 = vmatpush1.msra.mxu0 0.0
        %1181 = vmatprep.subr.mxu0 0.0
        %1182 = vmatpush1.msra.mxu0 0.0
        %1183 = vmatprep.subr.mxu0 0.0
        %1184 = vmatpush1.msra.mxu0 0.0
        %1185 = vmatprep.subr.mxu0 0.0
        %1186 = vmatpush1.msra.mxu0 0.0
        %1187 = vmatprep.subr.mxu0 0.0
        %1188 = vmatpush1.msra.mxu0 0.0
        %1189 = vmatprep.subr.mxu0 0.0
        %1190 = vmatpush1.msra.mxu0 0.0
        %1191 = vmatprep.subr.mxu0 0.0
        %1192 = vmatpush1.msra.mxu0 0.0
        %1193 = vmatprep.subr.mxu0 0.0
        %1194 = vmatpush1.msra.mxu0 0.0
        %1195 = vmatprep.subr.mxu0 0.0
        %1196 = vmatpush1.msra.mxu0 0.0
        %1197 = vmatprep.subr.mxu0 0.0
        %1198 = vmatpush1.msra.mxu0 0.0
        %1199 = vmatprep.subr.mxu0 0.0
        %1200 = vmatpush1.msra.mxu0 0.0
        %1201 = vmatprep.subr.mxu0 0.0
        %1202 = vmatpush1.msra.mxu0 0.0
        %1203 = vmatprep.subr.mxu0 0.0
        %1204 = vmatpush1.msra.mxu0 0.0
        %1205 = vmatprep.subr.mxu0 0.0
        %1206 = vmatpush1.msra.mxu0 0.0
        %1207 = vmatprep.mubr.f32.mxu0 0.0
        %1208 = vmatmul.mubr.f32.gmra.mrb[0].mxu0 %v1141
        %v1209 = vpop.f32.mrb[0].mxu0
        %v1210 = vadd.f32 %v1138, %v1209
        %v1211 = vpop.f32.mrb[0].mxu0
        %1212 = vdwg.mxu0
        %v1213 = vld [vmem:[#allocation16 + $0x3] sm:$0x1]
        %vm1214 = vcmask 64512
        %v1216 = vsel %vm1214, %v1210, 0
        %v1219 = vsel %vm1214, %v1128, 0
        %1221 = vmatprep.subr.mxu0 0.0
        %1222 = vmatpush1.xpose.msra.mxu0 %v1219
        %1223 = vmatprep.subr.mxu0 0.0
        %1224 = vmatpush1.xpose.msra.mxu0 0.0
        %1225 = vmatprep.subr.mxu0 0.0
        %1226 = vmatpush1.xpose.msra.mxu0 0.0
        %1227 = vmatprep.subr.mxu0 0.0
        %1228 = vmatpush1.xpose.msra.mxu0 0.0
        %1229 = vmatprep.subr.mxu0 0.0
        %1230 = vmatpush1.xpose.msra.mxu0 0.0
        %1231 = vmatprep.subr.mxu0 0.0
        %1232 = vmatpush1.xpose.msra.mxu0 0.0
        %1233 = vmatprep.subr.mxu0 0.0
        %1234 = vmatpush1.xpose.msra.mxu0 0.0
        %1235 = vmatprep.subr.mxu0 0.0
        %1236 = vmatpush1.xpose.msra.mxu0 0.0
        %1237 = vmatprep.subr.mxu0 0.0
        %1238 = vmatpush1.xpose.msra.mxu0 0.0
        %1239 = vmatprep.subr.mxu0 0.0
        %1240 = vmatpush1.xpose.msra.mxu0 0.0
        %1241 = vmatprep.subr.mxu0 0.0
        %1242 = vmatpush1.xpose.msra.mxu0 0.0
        %1243 = vmatprep.subr.mxu0 0.0
        %1244 = vmatpush1.xpose.msra.mxu0 0.0
        %1245 = vmatprep.subr.mxu0 0.0
        %1246 = vmatpush1.xpose.msra.mxu0 0.0
        %1247 = vmatprep.subr.mxu0 0.0
        %1248 = vmatpush1.xpose.msra.mxu0 0.0
        %1249 = vmatprep.subr.mxu0 0.0
        %1250 = vmatpush1.xpose.msra.mxu0 0.0
        %1251 = vmatprep.subr.mxu0 0.0
        %1252 = vmatpush1.xpose.msra.mxu0 0.0
        %1253 = vmatprep.subr.mxu0 0.0
        %1254 = vmatpush1.xpose.msra.mxu0 0.0
        %1255 = vmatprep.subr.mxu0 0.0
        %1256 = vmatpush1.xpose.msra.mxu0 0.0
        %1257 = vmatprep.subr.mxu0 0.0
        %1258 = vmatpush1.xpose.msra.mxu0 0.0
        %1259 = vmatprep.subr.mxu0 0.0
        %1260 = vmatpush1.xpose.msra.mxu0 0.0
        %1261 = vmatprep.subr.mxu0 0.0
        %1262 = vmatpush1.xpose.msra.mxu0 0.0
        %1263 = vmatprep.subr.mxu0 0.0
        %1264 = vmatpush1.xpose.msra.mxu0 0.0
        %1265 = vmatprep.subr.mxu0 0.0
        %1266 = vmatpush1.xpose.msra.mxu0 0.0
        %1267 = vmatprep.subr.mxu0 0.0
        %1268 = vmatpush1.xpose.msra.mxu0 0.0
        %1269 = vmatprep.subr.mxu0 0.0
        %1270 = vmatpush1.xpose.msra.mxu0 0.0
        %1271 = vmatprep.subr.mxu0 0.0
        %1272 = vmatpush1.xpose.msra.mxu0 0.0
        %1273 = vmatprep.subr.mxu0 0.0
        %1274 = vmatpush1.xpose.msra.mxu0 0.0
        %1275 = vmatprep.subr.mxu0 0.0
        %1276 = vmatpush1.xpose.msra.mxu0 0.0
        %1277 = vmatprep.subr.mxu0 0.0
        %1278 = vmatpush1.xpose.msra.mxu0 0.0
        %1279 = vmatprep.subr.mxu0 0.0
        %1280 = vmatpush1.xpose.msra.mxu0 0.0
        %1281 = vmatprep.subr.mxu0 0.0
        %1282 = vmatpush1.xpose.msra.mxu0 0.0
        %1283 = vmatprep.subr.mxu0 0.0
        %1284 = vmatpush1.xpose.msra.mxu0 0.0
        %1285 = vmatprep.mubr.f32.mxu0 0.0
        %1286 = vmatmul.mubr.f32.gmra.mrb[0].mxu0 %v1216
        %v1287 = vpop.f32.mrb[0].mxu0
        %v1288 = vadd.f32 %v1122, %v1287
        %v1289 = vpop.f32.mrb[0].mxu0
        %1290 = vdwg.mxu0
        %v1291 = vsel %vm1214, %v1288, -inf
        %1292 = vmax.xlane.f32.xlu0 %v1291
        %v1293 = vpop.xlane.xlu0 %1292
        %v1294 = vsub.f32 %v1288, %v1293
        %v1295 = vmul.f32 %v1294, 1.442695
        %v1296 = vpow.pop %v1295
        %v1297 = vsel %vm1214, %v1296, 0.0
        %1298 = vadd.xlane.f32.xlu0 %v1297
        %v1299 = vpop.xlane.xlu0 %1298
        %v1300 = vrcp.pop %v1299
        %v1301 = vmul.f32 %v1296, %v1300
        %v1303 = vsel %vm1214, %v1301, 0
        %1305 = vmatprep.subr.mxu0 0.0
        %1306 = vmatpush1.msra.mxu0 %v1129
        %1307 = vmatprep.subr.mxu0 0.0
        %1308 = vmatpush1.msra.mxu0 0.0
        %1309 = vmatprep.subr.mxu0 0.0
        %1310 = vmatpush1.msra.mxu0 0.0
        %1311 = vmatprep.subr.mxu0 0.0
        %1312 = vmatpush1.msra.mxu0 0.0
        %1313 = vmatprep.subr.mxu0 0.0
        %1314 = vmatpush1.msra.mxu0 0.0
        %1315 = vmatprep.subr.mxu0 0.0
        %1316 = vmatpush1.msra.mxu0 0.0
        %1317 = vmatprep.subr.mxu0 0.0
        %1318 = vmatpush1.msra.mxu0 0.0
        %1319 = vmatprep.subr.mxu0 0.0
        %1320 = vmatpush1.msra.mxu0 0.0
        %1321 = vmatprep.subr.mxu0 0.0
        %1322 = vmatpush1.msra.mxu0 0.0
        %1323 = vmatprep.subr.mxu0 0.0
        %1324 = vmatpush1.msra.mxu0 0.0
        %1325 = vmatprep.subr.mxu0 0.0
        %1326 = vmatpush1.msra.mxu0 0.0
        %1327 = vmatprep.subr.mxu0 0.0
        %1328 = vmatpush1.msra.mxu0 0.0
        %1329 = vmatprep.subr.mxu0 0.0
        %1330 = vmatpush1.msra.mxu0 0.0
        %1331 = vmatprep.subr.mxu0 0.0
        %1332 = vmatpush1.msra.mxu0 0.0
        %1333 = vmatprep.subr.mxu0 0.0
        %1334 = vmatpush1.msra.mxu0 0.0
        %1335 = vmatprep.subr.mxu0 0.0
        %1336 = vmatpush1.msra.mxu0 0.0
        %1337 = vmatprep.subr.mxu0 0.0
        %1338 = vmatpush1.msra.mxu0 0.0
        %1339 = vmatprep.subr.mxu0 0.0
        %1340 = vmatpush1.msra.mxu0 0.0
        %1341 = vmatprep.subr.mxu0 0.0
        %1342 = vmatpush1.msra.mxu0 0.0
        %1343 = vmatprep.subr.mxu0 0.0
        %1344 = vmatpush1.msra.mxu0 0.0
        %1345 = vmatprep.subr.mxu0 0.0
        %1346 = vmatpush1.msra.mxu0 0.0
        %1347 = vmatprep.subr.mxu0 0.0
        %1348 = vmatpush1.msra.mxu0 0.0
        %1349 = vmatprep.subr.mxu0 0.0
        %1350 = vmatpush1.msra.mxu0 0.0
        %1351 = vmatprep.subr.mxu0 0.0
        %1352 = vmatpush1.msra.mxu0 0.0
        %1353 = vmatprep.subr.mxu0 0.0
        %1354 = vmatpush1.msra.mxu0 0.0
        %1355 = vmatprep.subr.mxu0 0.0
        %1356 = vmatpush1.msra.mxu0 0.0
        %1357 = vmatprep.subr.mxu0 0.0
        %1358 = vmatpush1.msra.mxu0 0.0
        %1359 = vmatprep.subr.mxu0 0.0
        %1360 = vmatpush1.msra.mxu0 0.0
        %1361 = vmatprep.subr.mxu0 0.0
        %1362 = vmatpush1.msra.mxu0 0.0
        %1363 = vmatprep.subr.mxu0 0.0
        %1364 = vmatpush1.msra.mxu0 0.0
        %1365 = vmatprep.subr.mxu0 0.0
        %1366 = vmatpush1.msra.mxu0 0.0
        %1367 = vmatprep.subr.mxu0 0.0
        %1368 = vmatpush1.msra.mxu0 0.0
        %1369 = vmatprep.mubr.f32.mxu0 0.0
        %1370 = vmatmul.mubr.f32.gmra.mrb[0].mxu0 %v1303
        %v1371 = vpop.f32.mrb[0].mxu0
        %v1372 = vadd.f32 0.0, %v1371
        %v1373 = vpop.f32.mrb[0].mxu0
        %1374 = vdwg.mxu0
        %s1375 = scalar_lea.vmem [#allocation15], 96
        %v1376 = vld [vmem:[%s1375] sm:$0xff]
        %v1378 = vsel %vm1214, %v1372, 0
        %1380 = vmatprep.subr.mxu0 0.0
        %1381 = vmatpush1.msra.mxu0 %v1376
        %1382 = vmatprep.subr.mxu0 0.0
        %1383 = vmatpush1.msra.mxu0 0.0
        %1384 = vmatprep.subr.mxu0 0.0
        %1385 = vmatpush1.msra.mxu0 0.0
        %1386 = vmatprep.subr.mxu0 0.0
        %1387 = vmatpush1.msra.mxu0 0.0
        %1388 = vmatprep.subr.mxu0 0.0
        %1389 = vmatpush1.msra.mxu0 0.0
        %1390 = vmatprep.subr.mxu0 0.0
        %1391 = vmatpush1.msra.mxu0 0.0
        %1392 = vmatprep.subr.mxu0 0.0
        %1393 = vmatpush1.msra.mxu0 0.0
        %1394 = vmatprep.subr.mxu0 0.0
        %1395 = vmatpush1.msra.mxu0 0.0
        %1396 = vmatprep.subr.mxu0 0.0
        %1397 = vmatpush1.msra.mxu0 0.0
        %1398 = vmatprep.subr.mxu0 0.0
        %1399 = vmatpush1.msra.mxu0 0.0
        %1400 = vmatprep.subr.mxu0 0.0
        %1401 = vmatpush1.msra.mxu0 0.0
        %1402 = vmatprep.subr.mxu0 0.0
        %1403 = vmatpush1.msra.mxu0 0.0
        %1404 = vmatprep.subr.mxu0 0.0
        %1405 = vmatpush1.msra.mxu0 0.0
        %1406 = vmatprep.subr.mxu0 0.0
        %1407 = vmatpush1.msra.mxu0 0.0
        %1408 = vmatprep.subr.mxu0 0.0
        %1409 = vmatpush1.msra.mxu0 0.0
        %1410 = vmatprep.subr.mxu0 0.0
        %1411 = vmatpush1.msra.mxu0 0.0
        %1412 = vmatprep.subr.mxu0 0.0
        %1413 = vmatpush1.msra.mxu0 0.0
        %1414 = vmatprep.subr.mxu0 0.0
        %1415 = vmatpush1.msra.mxu0 0.0
        %1416 = vmatprep.subr.mxu0 0.0
        %1417 = vmatpush1.msra.mxu0 0.0
        %1418 = vmatprep.subr.mxu0 0.0
        %1419 = vmatpush1.msra.mxu0 0.0
        %1420 = vmatprep.subr.mxu0 0.0
        %1421 = vmatpush1.msra.mxu0 0.0
        %1422 = vmatprep.subr.mxu0 0.0
        %1423 = vmatpush1.msra.mxu0 0.0
        %1424 = vmatprep.subr.mxu0 0.0
        %1425 = vmatpush1.msra.mxu0 0.0
        %1426 = vmatprep.subr.mxu0 0.0
        %1427 = vmatpush1.msra.mxu0 0.0
        %1428 = vmatprep.subr.mxu0 0.0
        %1429 = vmatpush1.msra.mxu0 0.0
        %1430 = vmatprep.subr.mxu0 0.0
        %1431 = vmatpush1.msra.mxu0 0.0
        %1432 = vmatprep.subr.mxu0 0.0
        %1433 = vmatpush1.msra.mxu0 0.0
        %1434 = vmatprep.subr.mxu0 0.0
        %1435 = vmatpush1.msra.mxu0 0.0
        %1436 = vmatprep.subr.mxu0 0.0
        %1437 = vmatpush1.msra.mxu0 0.0
        %1438 = vmatprep.subr.mxu0 0.0
        %1439 = vmatpush1.msra.mxu0 0.0
        %1440 = vmatprep.subr.mxu0 0.0
        %1441 = vmatpush1.msra.mxu0 0.0
        %1442 = vmatprep.subr.mxu0 0.0
        %1443 = vmatpush1.msra.mxu0 0.0
        %1444 = vmatprep.mubr.f32.mxu0 0.0
        %1445 = vmatmul.mubr.f32.gmra.mrb[0].mxu0 %v1378
        %v1446 = vpop.f32.mrb[0].mxu0
        %v1447 = vadd.f32 0.0, %v1446
        %v1448 = vpop.f32.mrb[0].mxu0
        %1449 = vdwg.mxu0
        %v1450 = vlaneseq
        %v1451 = vshrl.u32 %v1450, 7
        %v1452 = vsub.s32 0, %v1451
        %v1453 = vrot.slane %v1213, %v1452
        %v1454 = vadd.f32 %v1453, %v1447
        %1455 = vrot.lane.b32.xlu0 %v1210, 120
        %v1456 = vpop.permute.xlu0 %1455
        %1457 = vrot.lane.b32.xlu0 %v1128, 120
        %v1458 = vpop.permute.xlu0 %1457
        %v1459 = vsel %vm1214, %v1456, 0
        %v1461 = vsel %vm1214, %v1458, 0
        %1463 = vmatprep.subr.mxu0 0.0
        %1464 = vmatpush1.xpose.msra.mxu0 %v1461
        %1465 = vmatprep.subr.mxu0 0.0
        %1466 = vmatpush1.xpose.msra.mxu0 0.0
        %1467 = vmatprep.subr.mxu0 0.0
        %1468 = vmatpush1.xpose.msra.mxu0 0.0
        %1469 = vmatprep.subr.mxu0 0.0
        %1470 = vmatpush1.xpose.msra.mxu0 0.0
        %1471 = vmatprep.subr.mxu0 0.0
        %1472 = vmatpush1.xpose.msra.mxu0 0.0
        %1473 = vmatprep.subr.mxu0 0.0
        %1474 = vmatpush1.xpose.msra.mxu0 0.0
        %1475 = vmatprep.subr.mxu0 0.0
        %1476 = vmatpush1.xpose.msra.mxu0 0.0
        %1477 = vmatprep.subr.mxu0 0.0
        %1478 = vmatpush1.xpose.msra.mxu0 0.0
        %1479 = vmatprep.subr.mxu0 0.0
        %1480 = vmatpush1.xpose.msra.mxu0 0.0
        %1481 = vmatprep.subr.mxu0 0.0
        %1482 = vmatpush1.xpose.msra.mxu0 0.0
        %1483 = vmatprep.subr.mxu0 0.0
        %1484 = vmatpush1.xpose.msra.mxu0 0.0
        %1485 = vmatprep.subr.mxu0 0.0
        %1486 = vmatpush1.xpose.msra.mxu0 0.0
        %1487 = vmatprep.subr.mxu0 0.0
        %1488 = vmatpush1.xpose.msra.mxu0 0.0
        %1489 = vmatprep.subr.mxu0 0.0
        %1490 = vmatpush1.xpose.msra.mxu0 0.0
        %1491 = vmatprep.subr.mxu0 0.0
        %1492 = vmatpush1.xpose.msra.mxu0 0.0
        %1493 = vmatprep.subr.mxu0 0.0
        %1494 = vmatpush1.xpose.msra.mxu0 0.0
        %1495 = vmatprep.subr.mxu0 0.0
        %1496 = vmatpush1.xpose.msra.mxu0 0.0
        %1497 = vmatprep.subr.mxu0 0.0
        %1498 = vmatpush1.xpose.msra.mxu0 0.0
        %1499 = vmatprep.subr.mxu0 0.0
        %1500 = vmatpush1.xpose.msra.mxu0 0.0
        %1501 = vmatprep.subr.mxu0 0.0
        %1502 = vmatpush1.xpose.msra.mxu0 0.0
        %1503 = vmatprep.subr.mxu0 0.0
        %1504 = vmatpush1.xpose.msra.mxu0 0.0
        %1505 = vmatprep.subr.mxu0 0.0
        %1506 = vmatpush1.xpose.msra.mxu0 0.0
        %1507 = vmatprep.subr.mxu0 0.0
        %1508 = vmatpush1.xpose.msra.mxu0 0.0
        %1509 = vmatprep.subr.mxu0 0.0
        %1510 = vmatpush1.xpose.msra.mxu0 0.0
        %1511 = vmatprep.subr.mxu0 0.0
        %1512 = vmatpush1.xpose.msra.mxu0 0.0
        %1513 = vmatprep.subr.mxu0 0.0
        %1514 = vmatpush1.xpose.msra.mxu0 0.0
        %1515 = vmatprep.subr.mxu0 0.0
        %1516 = vmatpush1.xpose.msra.mxu0 0.0
        %1517 = vmatprep.subr.mxu0 0.0
        %1518 = vmatpush1.xpose.msra.mxu0 0.0
        %1519 = vmatprep.subr.mxu0 0.0
        %1520 = vmatpush1.xpose.msra.mxu0 0.0
        %1521 = vmatprep.subr.mxu0 0.0
        %1522 = vmatpush1.xpose.msra.mxu0 0.0
        %1523 = vmatprep.subr.mxu0 0.0
        %1524 = vmatpush1.xpose.msra.mxu0 0.0
        %1525 = vmatprep.subr.mxu0 0.0
        %1526 = vmatpush1.xpose.msra.mxu0 0.0
        %1527 = vmatprep.mubr.f32.mxu0 0.0
        %1528 = vmatmul.mubr.f32.gmra.mrb[0].mxu0 %v1459
        %v1529 = vpop.f32.mrb[0].mxu0
        %v1530 = vadd.f32 %v1122, %v1529
        %v1531 = vpop.f32.mrb[0].mxu0
        %1532 = vdwg.mxu0
        %v1533 = vsel %vm1214, %v1530, -inf
        %1534 = vmax.xlane.f32.xlu0 %v1533
        %v1535 = vpop.xlane.xlu0 %1534
        %v1536 = vsub.f32 %v1530, %v1535
        %v1537 = vmul.f32 %v1536, 1.442695
        %v1538 = vpow.pop %v1537
        %v1539 = vsel %vm1214, %v1538, 0.0
        %1540 = vadd.xlane.f32.xlu0 %v1539
        %v1541 = vpop.xlane.xlu0 %1540
        %v1542 = vrcp.pop %v1541
        %v1543 = vmul.f32 %v1538, %v1542
        %1545 = vrot.lane.b32.xlu0 %v1129, 120
        %v1546 = vpop.permute.xlu0 %1545
        %v1549 = vsel %vm1214, %v1543, 0
        %1551 = vmatprep.subr.mxu0 0.0
        %1552 = vmatpush1.msra.mxu0 %v1546
        %1553 = vmatprep.subr.mxu0 0.0
        %1554 = vmatpush1.msra.mxu0 0.0
        %1555 = vmatprep.subr.mxu0 0.0
        %1556 = vmatpush1.msra.mxu0 0.0
        %1557 = vmatprep.subr.mxu0 0.0
        %1558 = vmatpush1.msra.mxu0 0.0
        %1559 = vmatprep.subr.mxu0 0.0
        %1560 = vmatpush1.msra.mxu0 0.0
        %1561 = vmatprep.subr.mxu0 0.0
        %1562 = vmatpush1.msra.mxu0 0.0
        %1563 = vmatprep.subr.mxu0 0.0
        %1564 = vmatpush1.msra.mxu0 0.0
        %1565 = vmatprep.subr.mxu0 0.0
        %1566 = vmatpush1.msra.mxu0 0.0
        %1567 = vmatprep.subr.mxu0 0.0
        %1568 = vmatpush1.msra.mxu0 0.0
        %1569 = vmatprep.subr.mxu0 0.0
        %1570 = vmatpush1.msra.mxu0 0.0
        %1571 = vmatprep.subr.mxu0 0.0
        %1572 = vmatpush1.msra.mxu0 0.0
        %1573 = vmatprep.subr.mxu0 0.0
        %1574 = vmatpush1.msra.mxu0 0.0
        %1575 = vmatprep.subr.mxu0 0.0
        %1576 = vmatpush1.msra.mxu0 0.0
        %1577 = vmatprep.subr.mxu0 0.0
        %1578 = vmatpush1.msra.mxu0 0.0
        %1579 = vmatprep.subr.mxu0 0.0
        %1580 = vmatpush1.msra.mxu0 0.0
        %1581 = vmatprep.subr.mxu0 0.0
        %1582 = vmatpush1.msra.mxu0 0.0
        %1583 = vmatprep.subr.mxu0 0.0
        %1584 = vmatpush1.msra.mxu0 0.0
        %1585 = vmatprep.subr.mxu0 0.0
        %1586 = vmatpush1.msra.mxu0 0.0
        %1587 = vmatprep.subr.mxu0 0.0
        %1588 = vmatpush1.msra.mxu0 0.0
        %1589 = vmatprep.subr.mxu0 0.0
        %1590 = vmatpush1.msra.mxu0 0.0
        %1591 = vmatprep.subr.mxu0 0.0
        %1592 = vmatpush1.msra.mxu0 0.0
        %1593 = vmatprep.subr.mxu0 0.0
        %1594 = vmatpush1.msra.mxu0 0.0
        %1595 = vmatprep.subr.mxu0 0.0
        %1596 = vmatpush1.msra.mxu0 0.0
        %1597 = vmatprep.subr.mxu0 0.0
        %1598 = vmatpush1.msra.mxu0 0.0
        %1599 = vmatprep.subr.mxu0 0.0
        %1600 = vmatpush1.msra.mxu0 0.0
        %1601 = vmatprep.subr.mxu0 0.0
        %1602 = vmatpush1.msra.mxu0 0.0
        %1603 = vmatprep.subr.mxu0 0.0
        %1604 = vmatpush1.msra.mxu0 0.0
        %1605 = vmatprep.subr.mxu0 0.0
        %1606 = vmatpush1.msra.mxu0 0.0
        %1607 = vmatprep.subr.mxu0 0.0
        %1608 = vmatpush1.msra.mxu0 0.0
        %1609 = vmatprep.subr.mxu0 0.0
        %1610 = vmatpush1.msra.mxu0 0.0
        %1611 = vmatprep.subr.mxu0 0.0
        %1612 = vmatpush1.msra.mxu0 0.0
        %1613 = vmatprep.subr.mxu0 0.0
        %1614 = vmatpush1.msra.mxu0 0.0
        %1615 = vmatprep.mubr.f32.mxu0 0.0
        %1616 = vmatmul.mubr.f32.gmra.mrb[0].mxu0 %v1549
        %v1617 = vpop.f32.mrb[0].mxu0
        %v1618 = vadd.f32 0.0, %v1617
        %v1619 = vpop.f32.mrb[0].mxu0
        %1620 = vdwg.mxu0
        %v1621 = vld [vmem:[%s1375 + $0x8] sm:$0xff]
        %v1623 = vsel %vm1214, %v1618, 0
        %1625 = vmatprep.subr.mxu0 0.0
        %1626 = vmatpush1.msra.mxu0 %v1621
        %1627 = vmatprep.subr.mxu0 0.0
        %1628 = vmatpush1.msra.mxu0 0.0
        %1629 = vmatprep.subr.mxu0 0.0
        %1630 = vmatpush1.msra.mxu0 0.0
        %1631 = vmatprep.subr.mxu0 0.0
        %1632 = vmatpush1.msra.mxu0 0.0
        %1633 = vmatprep.subr.mxu0 0.0
        %1634 = vmatpush1.msra.mxu0 0.0
        %1635 = vmatprep.subr.mxu0 0.0
        %1636 = vmatpush1.msra.mxu0 0.0
        %1637 = vmatprep.subr.mxu0 0.0
        %1638 = vmatpush1.msra.mxu0 0.0
        %1639 = vmatprep.subr.mxu0 0.0
        %1640 = vmatpush1.msra.mxu0 0.0
        %1641 = vmatprep.subr.mxu0 0.0
        %1642 = vmatpush1.msra.mxu0 0.0
        %1643 = vmatprep.subr.mxu0 0.0
        %1644 = vmatpush1.msra.mxu0 0.0
        %1645 = vmatprep.subr.mxu0 0.0
        %1646 = vmatpush1.msra.mxu0 0.0
        %1647 = vmatprep.subr.mxu0 0.0
        %1648 = vmatpush1.msra.mxu0 0.0
        %1649 = vmatprep.subr.mxu0 0.0
        %1650 = vmatpush1.msra.mxu0 0.0
        %1651 = vmatprep.subr.mxu0 0.0
        %1652 = vmatpush1.msra.mxu0 0.0
        %1653 = vmatprep.subr.mxu0 0.0
        %1654 = vmatpush1.msra.mxu0 0.0
        %1655 = vmatprep.subr.mxu0 0.0
        %1656 = vmatpush1.msra.mxu0 0.0
        %1657 = vmatprep.subr.mxu0 0.0
        %1658 = vmatpush1.msra.mxu0 0.0
        %1659 = vmatprep.subr.mxu0 0.0
        %1660 = vmatpush1.msra.mxu0 0.0
        %1661 = vmatprep.subr.mxu0 0.0
        %1662 = vmatpush1.msra.mxu0 0.0
        %1663 = vmatprep.subr.mxu0 0.0
        %1664 = vmatpush1.msra.mxu0 0.0
        %1665 = vmatprep.subr.mxu0 0.0
        %1666 = vmatpush1.msra.mxu0 0.0
        %1667 = vmatprep.subr.mxu0 0.0
        %1668 = vmatpush1.msra.mxu0 0.0
        %1669 = vmatprep.subr.mxu0 0.0
        %1670 = vmatpush1.msra.mxu0 0.0
        %1671 = vmatprep.subr.mxu0 0.0
        %1672 = vmatpush1.msra.mxu0 0.0
        %1673 = vmatprep.subr.mxu0 0.0
        %1674 = vmatpush1.msra.mxu0 0.0
        %1675 = vmatprep.subr.mxu0 0.0
        %1676 = vmatpush1.msra.mxu0 0.0
        %1677 = vmatprep.subr.mxu0 0.0
        %1678 = vmatpush1.msra.mxu0 0.0
        %1679 = vmatprep.subr.mxu0 0.0
        %1680 = vmatpush1.msra.mxu0 0.0
        %1681 = vmatprep.subr.mxu0 0.0
        %1682 = vmatpush1.msra.mxu0 0.0
        %1683 = vmatprep.subr.mxu0 0.0
        %1684 = vmatpush1.msra.mxu0 0.0
        %1685 = vmatprep.subr.mxu0 0.0
        %1686 = vmatpush1.msra.mxu0 0.0
        %1687 = vmatprep.subr.mxu0 0.0
        %1688 = vmatpush1.msra.mxu0 0.0
        %1689 = vmatprep.mubr.f32.mxu0 0.0
        %1690 = vmatmul.mubr.f32.gmra.mrb[0].mxu0 %v1623
        %v1691 = vpop.f32.mrb[0].mxu0
        %v1692 = vadd.f32 0.0, %v1691
        %v1693 = vpop.f32.mrb[0].mxu0
        %1694 = vdwg.mxu0
        %v1695 = vadd.f32 %v1454, %v1692
        %1696 = vrot.lane.b32.xlu0 %v1210, 112
        %v1697 = vpop.permute.xlu0 %1696
        %1698 = vrot.lane.b32.xlu0 %v1128, 112
        %v1699 = vpop.permute.xlu0 %1698
        %v1700 = vsel %vm1214, %v1697, 0
        %v1702 = vsel %vm1214, %v1699, 0
        %1704 = vmatprep.subr.mxu0 0.0
        %1705 = vmatpush1.xpose.msra.mxu0 %v1702
        %1706 = vmatprep.subr.mxu0 0.0
        %1707 = vmatpush1.xpose.msra.mxu0 0.0
        %1708 = vmatprep.subr.mxu0 0.0
        %1709 = vmatpush1.xpose.msra.mxu0 0.0
        %1710 = vmatprep.subr.mxu0 0.0
        %1711 = vmatpush1.xpose.msra.mxu0 0.0
        %1712 = vmatprep.subr.mxu0 0.0
        %1713 = vmatpush1.xpose.msra.mxu0 0.0
        %1714 = vmatprep.subr.mxu0 0.0
        %1715 = vmatpush1.xpose.msra.mxu0 0.0
        %1716 = vmatprep.subr.mxu0 0.0
        %1717 = vmatpush1.xpose.msra.mxu0 0.0
        %1718 = vmatprep.subr.mxu0 0.0
        %1719 = vmatpush1.xpose.msra.mxu0 0.0
        %1720 = vmatprep.subr.mxu0 0.0
        %1721 = vmatpush1.xpose.msra.mxu0 0.0
        %1722 = vmatprep.subr.mxu0 0.0
        %1723 = vmatpush1.xpose.msra.mxu0 0.0
        %1724 = vmatprep.subr.mxu0 0.0
        %1725 = vmatpush1.xpose.msra.mxu0 0.0
        %1726 = vmatprep.subr.mxu0 0.0
        %1727 = vmatpush1.xpose.msra.mxu0 0.0
        %1728 = vmatprep.subr.mxu0 0.0
        %1729 = vmatpush1.xpose.msra.mxu0 0.0
        %1730 = vmatprep.subr.mxu0 0.0
        %1731 = vmatpush1.xpose.msra.mxu0 0.0
        %1732 = vmatprep.subr.mxu0 0.0
        %1733 = vmatpush1.xpose.msra.mxu0 0.0
        %1734 = vmatprep.subr.mxu0 0.0
        %1735 = vmatpush1.xpose.msra.mxu0 0.0
        %1736 = vmatprep.subr.mxu0 0.0
        %1737 = vmatpush1.xpose.msra.mxu0 0.0
        %1738 = vmatprep.subr.mxu0 0.0
        %1739 = vmatpush1.xpose.msra.mxu0 0.0
        %1740 = vmatprep.subr.mxu0 0.0
        %1741 = vmatpush1.xpose.msra.mxu0 0.0
        %1742 = vmatprep.subr.mxu0 0.0
        %1743 = vmatpush1.xpose.msra.mxu0 0.0
        %1744 = vmatprep.subr.mxu0 0.0
        %1745 = vmatpush1.xpose.msra.mxu0 0.0
        %1746 = vmatprep.subr.mxu0 0.0
        %1747 = vmatpush1.xpose.msra.mxu0 0.0
        %1748 = vmatprep.subr.mxu0 0.0
        %1749 = vmatpush1.xpose.msra.mxu0 0.0
        %1750 = vmatprep.subr.mxu0 0.0
        %1751 = vmatpush1.xpose.msra.mxu0 0.0
        %1752 = vmatprep.subr.mxu0 0.0
        %1753 = vmatpush1.xpose.msra.mxu0 0.0
        %1754 = vmatprep.subr.mxu0 0.0
        %1755 = vmatpush1.xpose.msra.mxu0 0.0
        %1756 = vmatprep.subr.mxu0 0.0
        %1757 = vmatpush1.xpose.msra.mxu0 0.0
        %1758 = vmatprep.subr.mxu0 0.0
        %1759 = vmatpush1.xpose.msra.mxu0 0.0
        %1760 = vmatprep.subr.mxu0 0.0
        %1761 = vmatpush1.xpose.msra.mxu0 0.0
        %1762 = vmatprep.subr.mxu0 0.0
        %1763 = vmatpush1.xpose.msra.mxu0 0.0
        %1764 = vmatprep.subr.mxu0 0.0
        %1765 = vmatpush1.xpose.msra.mxu0 0.0
        %1766 = vmatprep.subr.mxu0 0.0
        %1767 = vmatpush1.xpose.msra.mxu0 0.0
        %1768 = vmatprep.mubr.f32.mxu0 0.0
        %1769 = vmatmul.mubr.f32.gmra.mrb[0].mxu0 %v1700
        %v1770 = vpop.f32.mrb[0].mxu0
        %v1771 = vadd.f32 %v1122, %v1770
        %v1772 = vpop.f32.mrb[0].mxu0
        %1773 = vdwg.mxu0
        %v1774 = vsel %vm1214, %v1771, -inf
        %1775 = vmax.xlane.f32.xlu0 %v1774
        %v1776 = vpop.xlane.xlu0 %1775
        %v1777 = vsub.f32 %v1771, %v1776
        %v1778 = vmul.f32 %v1777, 1.442695
        %v1779 = vpow.pop %v1778
        %v1780 = vsel %vm1214, %v1779, 0.0
        %1781 = vadd.xlane.f32.xlu0 %v1780
        %v1782 = vpop.xlane.xlu0 %1781
        %v1783 = vrcp.pop %v1782
        %v1784 = vmul.f32 %v1779, %v1783
        %1785 = vrot.lane.b32.xlu0 %v1129, 112
        %v1786 = vpop.permute.xlu0 %1785
        %v1789 = vsel %vm1214, %v1784, 0
        %1791 = vmatprep.subr.mxu0 0.0
        %1792 = vmatpush1.msra.mxu0 %v1786
        %1793 = vmatprep.subr.mxu0 0.0
        %1794 = vmatpush1.msra.mxu0 0.0
        %1795 = vmatprep.subr.mxu0 0.0
        %1796 = vmatpush1.msra.mxu0 0.0
        %1797 = vmatprep.subr.mxu0 0.0
        %1798 = vmatpush1.msra.mxu0 0.0
        %1799 = vmatprep.subr.mxu0 0.0
        %1800 = vmatpush1.msra.mxu0 0.0
        %1801 = vmatprep.subr.mxu0 0.0
        %1802 = vmatpush1.msra.mxu0 0.0
        %1803 = vmatprep.subr.mxu0 0.0
        %1804 = vmatpush1.msra.mxu0 0.0
        %1805 = vmatprep.subr.mxu0 0.0
        %1806 = vmatpush1.msra.mxu0 0.0
        %1807 = vmatprep.subr.mxu0 0.0
        %1808 = vmatpush1.msra.mxu0 0.0
        %1809 = vmatprep.subr.mxu0 0.0
        %1810 = vmatpush1.msra.mxu0 0.0
        %1811 = vmatprep.subr.mxu0 0.0
        %1812 = vmatpush1.msra.mxu0 0.0
        %1813 = vmatprep.subr.mxu0 0.0
        %1814 = vmatpush1.msra.mxu0 0.0
        %1815 = vmatprep.subr.mxu0 0.0
        %1816 = vmatpush1.msra.mxu0 0.0
        %1817 = vmatprep.subr.mxu0 0.0
        %1818 = vmatpush1.msra.mxu0 0.0
        %1819 = vmatprep.subr.mxu0 0.0
        %1820 = vmatpush1.msra.mxu0 0.0
        %1821 = vmatprep.subr.mxu0 0.0
        %1822 = vmatpush1.msra.mxu0 0.0
        %1823 = vmatprep.subr.mxu0 0.0
        %1824 = vmatpush1.msra.mxu0 0.0
        %1825 = vmatprep.subr.mxu0 0.0
        %1826 = vmatpush1.msra.mxu0 0.0
        %1827 = vmatprep.subr.mxu0 0.0
        %1828 = vmatpush1.msra.mxu0 0.0
        %1829 = vmatprep.subr.mxu0 0.0
        %1830 = vmatpush1.msra.mxu0 0.0
        %1831 = vmatprep.subr.mxu0 0.0
        %1832 = vmatpush1.msra.mxu0 0.0
        %1833 = vmatprep.subr.mxu0 0.0
        %1834 = vmatpush1.msra.mxu0 0.0
        %1835 = vmatprep.subr.mxu0 0.0
        %1836 = vmatpush1.msra.mxu0 0.0
        %1837 = vmatprep.subr.mxu0 0.0
        %1838 = vmatpush1.msra.mxu0 0.0
        %1839 = vmatprep.subr.mxu0 0.0
        %1840 = vmatpush1.msra.mxu0 0.0
        %1841 = vmatprep.subr.mxu0 0.0
        %1842 = vmatpush1.msra.mxu0 0.0
        %1843 = vmatprep.subr.mxu0 0.0
        %1844 = vmatpush1.msra.mxu0 0.0
        %1845 = vmatprep.subr.mxu0 0.0
        %1846 = vmatpush1.msra.mxu0 0.0
        %1847 = vmatprep.subr.mxu0 0.0
        %1848 = vmatpush1.msra.mxu0 0.0
        %1849 = vmatprep.subr.mxu0 0.0
        %1850 = vmatpush1.msra.mxu0 0.0
        %1851 = vmatprep.subr.mxu0 0.0
        %1852 = vmatpush1.msra.mxu0 0.0
        %1853 = vmatprep.subr.mxu0 0.0
        %1854 = vmatpush1.msra.mxu0 0.0
        %1855 = vmatprep.mubr.f32.mxu0 0.0
        %1856 = vmatmul.mubr.f32.gmra.mrb[0].mxu0 %v1789
        %v1857 = vpop.f32.mrb[0].mxu0
        %v1858 = vadd.f32 0.0, %v1857
        %v1859 = vpop.f32.mrb[0].mxu0
        %1860 = vdwg.mxu0
        %v1861 = vld [vmem:[%s1375 + $0x10] sm:$0xff]
        %v1863 = vsel %vm1214, %v1858, 0
        %1865 = vmatprep.subr.mxu0 0.0
        %1866 = vmatpush1.msra.mxu0 %v1861
        %1867 = vmatprep.subr.mxu0 0.0
        %1868 = vmatpush1.msra.mxu0 0.0
        %1869 = vmatprep.subr.mxu0 0.0
        %1870 = vmatpush1.msra.mxu0 0.0
        %1871 = vmatprep.subr.mxu0 0.0
        %1872 = vmatpush1.msra.mxu0 0.0
        %1873 = vmatprep.subr.mxu0 0.0
        %1874 = vmatpush1.msra.mxu0 0.0
        %1875 = vmatprep.subr.mxu0 0.0
        %1876 = vmatpush1.msra.mxu0 0.0
        %1877 = vmatprep.subr.mxu0 0.0
        %1878 = vmatpush1.msra.mxu0 0.0
        %1879 = vmatprep.subr.mxu0 0.0
        %1880 = vmatpush1.msra.mxu0 0.0
        %1881 = vmatprep.subr.mxu0 0.0
        %1882 = vmatpush1.msra.mxu0 0.0
        %1883 = vmatprep.subr.mxu0 0.0
        %1884 = vmatpush1.msra.mxu0 0.0
        %1885 = vmatprep.subr.mxu0 0.0
        %1886 = vmatpush1.msra.mxu0 0.0
        %1887 = vmatprep.subr.mxu0 0.0
        %1888 = vmatpush1.msra.mxu0 0.0
        %1889 = vmatprep.subr.mxu0 0.0
        %1890 = vmatpush1.msra.mxu0 0.0
        %1891 = vmatprep.subr.mxu0 0.0
        %1892 = vmatpush1.msra.mxu0 0.0
        %1893 = vmatprep.subr.mxu0 0.0
        %1894 = vmatpush1.msra.mxu0 0.0
        %1895 = vmatprep.subr.mxu0 0.0
        %1896 = vmatpush1.msra.mxu0 0.0
        %1897 = vmatprep.subr.mxu0 0.0
        %1898 = vmatpush1.msra.mxu0 0.0
        %1899 = vmatprep.subr.mxu0 0.0
        %1900 = vmatpush1.msra.mxu0 0.0
        %1901 = vmatprep.subr.mxu0 0.0
        %1902 = vmatpush1.msra.mxu0 0.0
        %1903 = vmatprep.subr.mxu0 0.0
        %1904 = vmatpush1.msra.mxu0 0.0
        %1905 = vmatprep.subr.mxu0 0.0
        %1906 = vmatpush1.msra.mxu0 0.0
        %1907 = vmatprep.subr.mxu0 0.0
        %1908 = vmatpush1.msra.mxu0 0.0
        %1909 = vmatprep.subr.mxu0 0.0
        %1910 = vmatpush1.msra.mxu0 0.0
        %1911 = vmatprep.subr.mxu0 0.0
        %1912 = vmatpush1.msra.mxu0 0.0
        %1913 = vmatprep.subr.mxu0 0.0
        %1914 = vmatpush1.msra.mxu0 0.0
        %1915 = vmatprep.subr.mxu0 0.0
        %1916 = vmatpush1.msra.mxu0 0.0
        %1917 = vmatprep.subr.mxu0 0.0
        %1918 = vmatpush1.msra.mxu0 0.0
        %1919 = vmatprep.subr.mxu0 0.0
        %1920 = vmatpush1.msra.mxu0 0.0
        %1921 = vmatprep.subr.mxu0 0.0
        %1922 = vmatpush1.msra.mxu0 0.0
        %1923 = vmatprep.subr.mxu0 0.0
        %1924 = vmatpush1.msra.mxu0 0.0
        %1925 = vmatprep.subr.mxu0 0.0
        %1926 = vmatpush1.msra.mxu0 0.0
        %1927 = vmatprep.subr.mxu0 0.0
        %1928 = vmatpush1.msra.mxu0 0.0
        %1929 = vmatprep.mubr.f32.mxu0 0.0
        %1930 = vmatmul.mubr.f32.gmra.mrb[0].mxu0 %v1863
        %v1931 = vpop.f32.mrb[0].mxu0
        %v1932 = vadd.f32 0.0, %v1931
        %v1933 = vpop.f32.mrb[0].mxu0
        %1934 = vdwg.mxu0
        %v1935 = vadd.f32 %v1695, %v1932
        %1936 = vrot.lane.b32.xlu0 %v1210, 104
        %v1937 = vpop.permute.xlu0 %1936
        %1938 = vrot.lane.b32.xlu0 %v1128, 104
        %v1939 = vpop.permute.xlu0 %1938
        %v1940 = vsel %vm1214, %v1937, 0
        %v1942 = vsel %vm1214, %v1939, 0
        %1944 = vmatprep.subr.mxu0 0.0
        %1945 = vmatpush1.xpose.msra.mxu0 %v1942
        %1946 = vmatprep.subr.mxu0 0.0
        %1947 = vmatpush1.xpose.msra.mxu0 0.0
        %1948 = vmatprep.subr.mxu0 0.0
        %1949 = vmatpush1.xpose.msra.mxu0 0.0
        %1950 = vmatprep.subr.mxu0 0.0
        %1951 = vmatpush1.xpose.msra.mxu0 0.0
        %1952 = vmatprep.subr.mxu0 0.0
        %1953 = vmatpush1.xpose.msra.mxu0 0.0
        %1954 = vmatprep.subr.mxu0 0.0
        %1955 = vmatpush1.xpose.msra.mxu0 0.0
        %1956 = vmatprep.subr.mxu0 0.0
        %1957 = vmatpush1.xpose.msra.mxu0 0.0
        %1958 = vmatprep.subr.mxu0 0.0
        %1959 = vmatpush1.xpose.msra.mxu0 0.0
        %1960 = vmatprep.subr.mxu0 0.0
        %1961 = vmatpush1.xpose.msra.mxu0 0.0
        %1962 = vmatprep.subr.mxu0 0.0
        %1963 = vmatpush1.xpose.msra.mxu0 0.0
        %1964 = vmatprep.subr.mxu0 0.0
        %1965 = vmatpush1.xpose.msra.mxu0 0.0
        %1966 = vmatprep.subr.mxu0 0.0
        %1967 = vmatpush1.xpose.msra.mxu0 0.0
        %1968 = vmatprep.subr.mxu0 0.0
        %1969 = vmatpush1.xpose.msra.mxu0 0.0
        %1970 = vmatprep.subr.mxu0 0.0
        %1971 = vmatpush1.xpose.msra.mxu0 0.0
        %1972 = vmatprep.subr.mxu0 0.0
        %1973 = vmatpush1.xpose.msra.mxu0 0.0
        %1974 = vmatprep.subr.mxu0 0.0
        %1975 = vmatpush1.xpose.msra.mxu0 0.0
        %1976 = vmatprep.subr.mxu0 0.0
        %1977 = vmatpush1.xpose.msra.mxu0 0.0
        %1978 = vmatprep.subr.mxu0 0.0
        %1979 = vmatpush1.xpose.msra.mxu0 0.0
        %1980 = vmatprep.subr.mxu0 0.0
        %1981 = vmatpush1.xpose.msra.mxu0 0.0
        %1982 = vmatprep.subr.mxu0 0.0
        %1983 = vmatpush1.xpose.msra.mxu0 0.0
        %1984 = vmatprep.subr.mxu0 0.0
        %1985 = vmatpush1.xpose.msra.mxu0 0.0
        %1986 = vmatprep.subr.mxu0 0.0
        %1987 = vmatpush1.xpose.msra.mxu0 0.0
        %1988 = vmatprep.subr.mxu0 0.0
        %1989 = vmatpush1.xpose.msra.mxu0 0.0
        %1990 = vmatprep.subr.mxu0 0.0
        %1991 = vmatpush1.xpose.msra.mxu0 0.0
        %1992 = vmatprep.subr.mxu0 0.0
        %1993 = vmatpush1.xpose.msra.mxu0 0.0
        %1994 = vmatprep.subr.mxu0 0.0
        %1995 = vmatpush1.xpose.msra.mxu0 0.0
        %1996 = vmatprep.subr.mxu0 0.0
        %1997 = vmatpush1.xpose.msra.mxu0 0.0
        %1998 = vmatprep.subr.mxu0 0.0
        %1999 = vmatpush1.xpose.msra.mxu0 0.0
        %2000 = vmatprep.subr.mxu0 0.0
        %2001 = vmatpush1.xpose.msra.mxu0 0.0
        %2002 = vmatprep.subr.mxu0 0.0
        %2003 = vmatpush1.xpose.msra.mxu0 0.0
        %2004 = vmatprep.subr.mxu0 0.0
        %2005 = vmatpush1.xpose.msra.mxu0 0.0
        %2006 = vmatprep.subr.mxu0 0.0
        %2007 = vmatpush1.xpose.msra.mxu0 0.0
        %2008 = vmatprep.mubr.f32.mxu0 0.0
        %2009 = vmatmul.mubr.f32.gmra.mrb[0].mxu0 %v1940
        %v2010 = vpop.f32.mrb[0].mxu0
        %v2011 = vadd.f32 %v1122, %v2010
        %v2012 = vpop.f32.mrb[0].mxu0
        %2013 = vdwg.mxu0
        %v2014 = vsel %vm1214, %v2011, -inf
        %2015 = vmax.xlane.f32.xlu0 %v2014
        %v2016 = vpop.xlane.xlu0 %2015
        %v2017 = vsub.f32 %v2011, %v2016
        %v2018 = vmul.f32 %v2017, 1.442695
        %v2019 = vpow.pop %v2018
        %v2020 = vsel %vm1214, %v2019, 0.0
        %2021 = vadd.xlane.f32.xlu0 %v2020
        %v2022 = vpop.xlane.xlu0 %2021
        %v2023 = vrcp.pop %v2022
        %v2024 = vmul.f32 %v2019, %v2023
        %2025 = vrot.lane.b32.xlu0 %v1129, 104
        %v2026 = vpop.permute.xlu0 %2025
        %v2029 = vsel %vm1214, %v2024, 0
        %2031 = vmatprep.subr.mxu0 0.0
        %2032 = vmatpush1.msra.mxu0 %v2026
        %2033 = vmatprep.subr.mxu0 0.0
        %2034 = vmatpush1.msra.mxu0 0.0
        %2035 = vmatprep.subr.mxu0 0.0
        %2036 = vmatpush1.msra.mxu0 0.0
        %2037 = vmatprep.subr.mxu0 0.0
        %2038 = vmatpush1.msra.mxu0 0.0
        %2039 = vmatprep.subr.mxu0 0.0
        %2040 = vmatpush1.msra.mxu0 0.0
        %2041 = vmatprep.subr.mxu0 0.0
        %2042 = vmatpush1.msra.mxu0 0.0
        %2043 = vmatprep.subr.mxu0 0.0
        %2044 = vmatpush1.msra.mxu0 0.0
        %2045 = vmatprep.subr.mxu0 0.0
        %2046 = vmatpush1.msra.mxu0 0.0
        %2047 = vmatprep.subr.mxu0 0.0
        %2048 = vmatpush1.msra.mxu0 0.0
        %2049 = vmatprep.subr.mxu0 0.0
        %2050 = vmatpush1.msra.mxu0 0.0
        %2051 = vmatprep.subr.mxu0 0.0
        %2052 = vmatpush1.msra.mxu0 0.0
        %2053 = vmatprep.subr.mxu0 0.0
        %2054 = vmatpush1.msra.mxu0 0.0
        %2055 = vmatprep.subr.mxu0 0.0
        %2056 = vmatpush1.msra.mxu0 0.0
        %2057 = vmatprep.subr.mxu0 0.0
        %2058 = vmatpush1.msra.mxu0 0.0
        %2059 = vmatprep.subr.mxu0 0.0
        %2060 = vmatpush1.msra.mxu0 0.0
        %2061 = vmatprep.subr.mxu0 0.0
        %2062 = vmatpush1.msra.mxu0 0.0
        %2063 = vmatprep.subr.mxu0 0.0
        %2064 = vmatpush1.msra.mxu0 0.0
        %2065 = vmatprep.subr.mxu0 0.0
        %2066 = vmatpush1.msra.mxu0 0.0
        %2067 = vmatprep.subr.mxu0 0.0
        %2068 = vmatpush1.msra.mxu0 0.0
        %2069 = vmatprep.subr.mxu0 0.0
        %2070 = vmatpush1.msra.mxu0 0.0
        %2071 = vmatprep.subr.mxu0 0.0
        %2072 = vmatpush1.msra.mxu0 0.0
        %2073 = vmatprep.subr.mxu0 0.0
        %2074 = vmatpush1.msra.mxu0 0.0
        %2075 = vmatprep.subr.mxu0 0.0
        %2076 = vmatpush1.msra.mxu0 0.0
        %2077 = vmatprep.subr.mxu0 0.0
        %2078 = vmatpush1.msra.mxu0 0.0
        %2079 = vmatprep.subr.mxu0 0.0
        %2080 = vmatpush1.msra.mxu0 0.0
        %2081 = vmatprep.subr.mxu0 0.0
        %2082 = vmatpush1.msra.mxu0 0.0
        %2083 = vmatprep.subr.mxu0 0.0
        %2084 = vmatpush1.msra.mxu0 0.0
        %2085 = vmatprep.subr.mxu0 0.0
        %2086 = vmatpush1.msra.mxu0 0.0
        %2087 = vmatprep.subr.mxu0 0.0
        %2088 = vmatpush1.msra.mxu0 0.0
        %2089 = vmatprep.subr.mxu0 0.0
        %2090 = vmatpush1.msra.mxu0 0.0
        %2091 = vmatprep.subr.mxu0 0.0
        %2092 = vmatpush1.msra.mxu0 0.0
        %2093 = vmatprep.subr.mxu0 0.0
        %2094 = vmatpush1.msra.mxu0 0.0
        %2095 = vmatprep.mubr.f32.mxu0 0.0
        %2096 = vmatmul.mubr.f32.gmra.mrb[0].mxu0 %v2029
        %v2097 = vpop.f32.mrb[0].mxu0
        %v2098 = vadd.f32 0.0, %v2097
        %v2099 = vpop.f32.mrb[0].mxu0
        %2100 = vdwg.mxu0
        %v2101 = vld [vmem:[%s1375 + $0x18] sm:$0xff]
        %v2103 = vsel %vm1214, %v2098, 0
        %2105 = vmatprep.subr.mxu0 0.0
        %2106 = vmatpush1.msra.mxu0 %v2101
        %2107 = vmatprep.subr.mxu0 0.0
        %2108 = vmatpush1.msra.mxu0 0.0
        %2109 = vmatprep.subr.mxu0 0.0
        %2110 = vmatpush1.msra.mxu0 0.0
        %2111 = vmatprep.subr.mxu0 0.0
        %2112 = vmatpush1.msra.mxu0 0.0
        %2113 = vmatprep.subr.mxu0 0.0
        %2114 = vmatpush1.msra.mxu0 0.0
        %2115 = vmatprep.subr.mxu0 0.0
        %2116 = vmatpush1.msra.mxu0 0.0
        %2117 = vmatprep.subr.mxu0 0.0
        %2118 = vmatpush1.msra.mxu0 0.0
        %2119 = vmatprep.subr.mxu0 0.0
        %2120 = vmatpush1.msra.mxu0 0.0
        %2121 = vmatprep.subr.mxu0 0.0
        %2122 = vmatpush1.msra.mxu0 0.0
        %2123 = vmatprep.subr.mxu0 0.0
        %2124 = vmatpush1.msra.mxu0 0.0
        %2125 = vmatprep.subr.mxu0 0.0
        %2126 = vmatpush1.msra.mxu0 0.0
        %2127 = vmatprep.subr.mxu0 0.0
        %2128 = vmatpush1.msra.mxu0 0.0
        %2129 = vmatprep.subr.mxu0 0.0
        %2130 = vmatpush1.msra.mxu0 0.0
        %2131 = vmatprep.subr.mxu0 0.0
        %2132 = vmatpush1.msra.mxu0 0.0
        %2133 = vmatprep.subr.mxu0 0.0
        %2134 = vmatpush1.msra.mxu0 0.0
        %2135 = vmatprep.subr.mxu0 0.0
        %2136 = vmatpush1.msra.mxu0 0.0
        %2137 = vmatprep.subr.mxu0 0.0
        %2138 = vmatpush1.msra.mxu0 0.0
        %2139 = vmatprep.subr.mxu0 0.0
        %2140 = vmatpush1.msra.mxu0 0.0
        %2141 = vmatprep.subr.mxu0 0.0
        %2142 = vmatpush1.msra.mxu0 0.0
        %2143 = vmatprep.subr.mxu0 0.0
        %2144 = vmatpush1.msra.mxu0 0.0
        %2145 = vmatprep.subr.mxu0 0.0
        %2146 = vmatpush1.msra.mxu0 0.0
        %2147 = vmatprep.subr.mxu0 0.0
        %2148 = vmatpush1.msra.mxu0 0.0
        %2149 = vmatprep.subr.mxu0 0.0
        %2150 = vmatpush1.msra.mxu0 0.0
        %2151 = vmatprep.subr.mxu0 0.0
        %2152 = vmatpush1.msra.mxu0 0.0
        %2153 = vmatprep.subr.mxu0 0.0
        %2154 = vmatpush1.msra.mxu0 0.0
        %2155 = vmatprep.subr.mxu0 0.0
        %2156 = vmatpush1.msra.mxu0 0.0
        %2157 = vmatprep.subr.mxu0 0.0
        %2158 = vmatpush1.msra.mxu0 0.0
        %2159 = vmatprep.subr.mxu0 0.0
        %2160 = vmatpush1.msra.mxu0 0.0
        %2161 = vmatprep.subr.mxu0 0.0
        %2162 = vmatpush1.msra.mxu0 0.0
        %2163 = vmatprep.subr.mxu0 0.0
        %2164 = vmatpush1.msra.mxu0 0.0
        %2165 = vmatprep.subr.mxu0 0.0
        %2166 = vmatpush1.msra.mxu0 0.0
        %2167 = vmatprep.subr.mxu0 0.0
        %2168 = vmatpush1.msra.mxu0 0.0
        %2169 = vmatprep.mubr.f32.mxu0 0.0
        %2170 = vmatmul.mubr.f32.gmra.mrb[0].mxu0 %v2103
        %v2171 = vpop.f32.mrb[0].mxu0
        %v2172 = vadd.f32 0.0, %v2171
        %v2173 = vpop.f32.mrb[0].mxu0
        %2174 = vdwg.mxu0
        %v2175 = vadd.f32 %v1935, %v2172
        %v2176 = vadd.f32 %v1117, %v2175
        %v2177 = vld [vmem:[#allocation27 + $0x1] sm:$0x1]
        %v2178 = vld [vmem:[#allocation28 + $0x1] sm:$0x1]
        %v2179 = vsel %vm1139, %v2176, 0.0
        %2180 = vadd.xlane.f32.xlu0 %v2179
        %v2181 = vpop.xlane.xlu0 %2180
        %v2182 = vrcp.pop 32.0
        %v2183 = vmul.f32 %v2181, %v2182
        %v2184 = vsub.f32 %v2176, %v2183
        %v2185 = vmul.f32 %v2184, %v2184
        %v2186 = vsel %vm1139, %v2185, 0.0
        %2187 = vadd.xlane.f32.xlu0 %v2186
        %v2188 = vpop.xlane.xlu0 %2187
        %v2189 = vmul.f32 %v2188, 0.032258064
        %v2190 = vrsqrt.pop %v2189
        %v2191 = vmul.f32 %v2189, %v2190
        %vm2192 = vcmp.eq.f32.partialorder %v2189, inf
        %v2193 = vsel %vm2192, %v2189, %v2191
        %vm2194 = vcmp.eq.f32.partialorder %v2189, 0.0
        %v2195 = vand.u32 %v2189, 2147483648
        %v2196 = vsel %vm2194, %v2195, %v2193
        %v2197 = vadd.f32 %v2196, 1e-06
        %v2198 = vrcp.pop %v2197
        %v2199 = vmul.f32 %v2184, %v2198
        %v2200 = vlaneseq
        %v2201 = vshrl.u32 %v2200, 7
        %v2202 = vsub.s32 0, %v2201
        %v2203 = vrot.slane %v2177, %v2202
        %v2204 = vmul.f32 %v2203, %v2199
        %v2205 = vlaneseq
        %v2206 = vshrl.u32 %v2205, 7
        %v2207 = vsub.s32 0, %v2206
        %v2208 = vrot.slane %v2178, %v2207
        %v2209 = vadd.f32 %v2204, %v2208
        %v2210 = vld [vmem:[#allocation5] sm:$0xff]
        %v2211 = vld [vmem:[#allocation6] sm:$0xff]
        %v2212 = vld [vmem:[#allocation18] sm:$0xff]
        %v2213 = vld [vmem:[#allocation18 + $0x8] sm:$0xff]
        %v2214 = vld [vmem:[#allocation18 + $0x10] sm:$0xff]
        %v2215 = vld [vmem:[#allocation18 + $0x18] sm:$0xff]
        %v2216 = vld [vmem:[#allocation19] sm:$0x1]
        %v2217 = vlaneseq
        %v2218 = vshrl.u32 %v2217, 7
        %v2219 = vsub.s32 0, %v2218
        %v2220 = vrot.slane %v2216, %v2219
        %v2222 = vsel %vm1139, %v2209, 0
        %2224 = vmatprep.subr.mxu0 0.0
        %2225 = vmatpush1.msra.mxu0 %v2212
        %2226 = vmatprep.subr.mxu0 0.0
        %2227 = vmatpush1.msra.mxu0 %v2213
        %2228 = vmatprep.subr.mxu0 0.0
        %2229 = vmatpush1.msra.mxu0 %v2214
        %2230 = vmatprep.subr.mxu0 0.0
        %2231 = vmatpush1.msra.mxu0 %v2215
        %2232 = vmatprep.subr.mxu0 0.0
        %2233 = vmatpush1.msra.mxu0 0.0
        %2234 = vmatprep.subr.mxu0 0.0
        %2235 = vmatpush1.msra.mxu0 0.0
        %2236 = vmatprep.subr.mxu0 0.0
        %2237 = vmatpush1.msra.mxu0 0.0
        %2238 = vmatprep.subr.mxu0 0.0
        %2239 = vmatpush1.msra.mxu0 0.0
        %2240 = vmatprep.subr.mxu0 0.0
        %2241 = vmatpush1.msra.mxu0 0.0
        %2242 = vmatprep.subr.mxu0 0.0
        %2243 = vmatpush1.msra.mxu0 0.0
        %2244 = vmatprep.subr.mxu0 0.0
        %2245 = vmatpush1.msra.mxu0 0.0
        %2246 = vmatprep.subr.mxu0 0.0
        %2247 = vmatpush1.msra.mxu0 0.0
        %2248 = vmatprep.subr.mxu0 0.0
        %2249 = vmatpush1.msra.mxu0 0.0
        %2250 = vmatprep.subr.mxu0 0.0
        %2251 = vmatpush1.msra.mxu0 0.0
        %2252 = vmatprep.subr.mxu0 0.0
        %2253 = vmatpush1.msra.mxu0 0.0
        %2254 = vmatprep.subr.mxu0 0.0
        %2255 = vmatpush1.msra.mxu0 0.0
        %2256 = vmatprep.subr.mxu0 0.0
        %2257 = vmatpush1.msra.mxu0 0.0
        %2258 = vmatprep.subr.mxu0 0.0
        %2259 = vmatpush1.msra.mxu0 0.0
        %2260 = vmatprep.subr.mxu0 0.0
        %2261 = vmatpush1.msra.mxu0 0.0
        %2262 = vmatprep.subr.mxu0 0.0
        %2263 = vmatpush1.msra.mxu0 0.0
        %2264 = vmatprep.subr.mxu0 0.0
        %2265 = vmatpush1.msra.mxu0 0.0
        %2266 = vmatprep.subr.mxu0 0.0
        %2267 = vmatpush1.msra.mxu0 0.0
        %2268 = vmatprep.subr.mxu0 0.0
        %2269 = vmatpush1.msra.mxu0 0.0
        %2270 = vmatprep.subr.mxu0 0.0
        %2271 = vmatpush1.msra.mxu0 0.0
        %2272 = vmatprep.subr.mxu0 0.0
        %2273 = vmatpush1.msra.mxu0 0.0
        %2274 = vmatprep.subr.mxu0 0.0
        %2275 = vmatpush1.msra.mxu0 0.0
        %2276 = vmatprep.subr.mxu0 0.0
        %2277 = vmatpush1.msra.mxu0 0.0
        %2278 = vmatprep.subr.mxu0 0.0
        %2279 = vmatpush1.msra.mxu0 0.0
        %2280 = vmatprep.subr.mxu0 0.0
        %2281 = vmatpush1.msra.mxu0 0.0
        %2282 = vmatprep.subr.mxu0 0.0
        %2283 = vmatpush1.msra.mxu0 0.0
        %2284 = vmatprep.subr.mxu0 0.0
        %2285 = vmatpush1.msra.mxu0 0.0
        %2286 = vmatprep.subr.mxu0 0.0
        %2287 = vmatpush1.msra.mxu0 0.0
        %2288 = vmatprep.mubr.f32.mxu0 0.0
        %2289 = vmatmul.mubr.f32.gmra.mrb[0].mxu0 %v2222
        %v2290 = vpop.f32.mrb[0].mxu0
        %v2291 = vadd.f32 %v2220, %v2290
        %v2292 = vpop.f32.mrb[0].mxu0
        %2293 = vdwg.mxu0
        %v2294 = vld [vmem:[#allocation19 + $0x3] sm:$0x1]
        %v2296 = vsel %vm1214, %v2291, 0
        %v2299 = vsel %vm1214, %v2210, 0
        %2301 = vmatprep.subr.mxu0 0.0
        %2302 = vmatpush1.xpose.msra.mxu0 %v2299
        %2303 = vmatprep.subr.mxu0 0.0
        %2304 = vmatpush1.xpose.msra.mxu0 0.0
        %2305 = vmatprep.subr.mxu0 0.0
        %2306 = vmatpush1.xpose.msra.mxu0 0.0
        %2307 = vmatprep.subr.mxu0 0.0
        %2308 = vmatpush1.xpose.msra.mxu0 0.0
        %2309 = vmatprep.subr.mxu0 0.0
        %2310 = vmatpush1.xpose.msra.mxu0 0.0
        %2311 = vmatprep.subr.mxu0 0.0
        %2312 = vmatpush1.xpose.msra.mxu0 0.0
        %2313 = vmatprep.subr.mxu0 0.0
        %2314 = vmatpush1.xpose.msra.mxu0 0.0
        %2315 = vmatprep.subr.mxu0 0.0
        %2316 = vmatpush1.xpose.msra.mxu0 0.0
        %2317 = vmatprep.subr.mxu0 0.0
        %2318 = vmatpush1.xpose.msra.mxu0 0.0
        %2319 = vmatprep.subr.mxu0 0.0
        %2320 = vmatpush1.xpose.msra.mxu0 0.0
        %2321 = vmatprep.subr.mxu0 0.0
        %2322 = vmatpush1.xpose.msra.mxu0 0.0
        %2323 = vmatprep.subr.mxu0 0.0
        %2324 = vmatpush1.xpose.msra.mxu0 0.0
        %2325 = vmatprep.subr.mxu0 0.0
        %2326 = vmatpush1.xpose.msra.mxu0 0.0
        %2327 = vmatprep.subr.mxu0 0.0
        %2328 = vmatpush1.xpose.msra.mxu0 0.0
        %2329 = vmatprep.subr.mxu0 0.0
        %2330 = vmatpush1.xpose.msra.mxu0 0.0
        %2331 = vmatprep.subr.mxu0 0.0
        %2332 = vmatpush1.xpose.msra.mxu0 0.0
        %2333 = vmatprep.subr.mxu0 0.0
        %2334 = vmatpush1.xpose.msra.mxu0 0.0
        %2335 = vmatprep.subr.mxu0 0.0
        %2336 = vmatpush1.xpose.msra.mxu0 0.0
        %2337 = vmatprep.subr.mxu0 0.0
        %2338 = vmatpush1.xpose.msra.mxu0 0.0
        %2339 = vmatprep.subr.mxu0 0.0
        %2340 = vmatpush1.xpose.msra.mxu0 0.0
        %2341 = vmatprep.subr.mxu0 0.0
        %2342 = vmatpush1.xpose.msra.mxu0 0.0
        %2343 = vmatprep.subr.mxu0 0.0
        %2344 = vmatpush1.xpose.msra.mxu0 0.0
        %2345 = vmatprep.subr.mxu0 0.0
        %2346 = vmatpush1.xpose.msra.mxu0 0.0
        %2347 = vmatprep.subr.mxu0 0.0
        %2348 = vmatpush1.xpose.msra.mxu0 0.0
        %2349 = vmatprep.subr.mxu0 0.0
        %2350 = vmatpush1.xpose.msra.mxu0 0.0
        %2351 = vmatprep.subr.mxu0 0.0
        %2352 = vmatpush1.xpose.msra.mxu0 0.0
        %2353 = vmatprep.subr.mxu0 0.0
        %2354 = vmatpush1.xpose.msra.mxu0 0.0
        %2355 = vmatprep.subr.mxu0 0.0
        %2356 = vmatpush1.xpose.msra.mxu0 0.0
        %2357 = vmatprep.subr.mxu0 0.0
        %2358 = vmatpush1.xpose.msra.mxu0 0.0
        %2359 = vmatprep.subr.mxu0 0.0
        %2360 = vmatpush1.xpose.msra.mxu0 0.0
        %2361 = vmatprep.subr.mxu0 0.0
        %2362 = vmatpush1.xpose.msra.mxu0 0.0
        %2363 = vmatprep.subr.mxu0 0.0
        %2364 = vmatpush1.xpose.msra.mxu0 0.0
        %2365 = vmatprep.mubr.f32.mxu0 0.0
        %2366 = vmatmul.mubr.f32.gmra.mrb[0].mxu0 %v2296
        %v2367 = vpop.f32.mrb[0].mxu0
        %v2368 = vadd.f32 %v1125, %v2367
        %v2369 = vpop.f32.mrb[0].mxu0
        %2370 = vdwg.mxu0
        %v2371 = vsel %vm1214, %v2368, -inf
        %2372 = vmax.xlane.f32.xlu0 %v2371
        %v2373 = vpop.xlane.xlu0 %2372
        %v2374 = vsub.f32 %v2368, %v2373
        %v2375 = vmul.f32 %v2374, 1.442695
        %v2376 = vpow.pop %v2375
        %v2377 = vsel %vm1214, %v2376, 0.0
        %2378 = vadd.xlane.f32.xlu0 %v2377
        %v2379 = vpop.xlane.xlu0 %2378
        %v2380 = vrcp.pop %v2379
        %v2381 = vmul.f32 %v2376, %v2380
        %v2383 = vsel %vm1214, %v2381, 0
        %2385 = vmatprep.subr.mxu0 0.0
        %2386 = vmatpush1.msra.mxu0 %v2211
        %2387 = vmatprep.subr.mxu0 0.0
        %2388 = vmatpush1.msra.mxu0 0.0
        %2389 = vmatprep.subr.mxu0 0.0
        %2390 = vmatpush1.msra.mxu0 0.0
        %2391 = vmatprep.subr.mxu0 0.0
        %2392 = vmatpush1.msra.mxu0 0.0
        %2393 = vmatprep.subr.mxu0 0.0
        %2394 = vmatpush1.msra.mxu0 0.0
        %2395 = vmatprep.subr.mxu0 0.0
        %2396 = vmatpush1.msra.mxu0 0.0
        %2397 = vmatprep.subr.mxu0 0.0
        %2398 = vmatpush1.msra.mxu0 0.0
        %2399 = vmatprep.subr.mxu0 0.0
        %2400 = vmatpush1.msra.mxu0 0.0
        %2401 = vmatprep.subr.mxu0 0.0
        %2402 = vmatpush1.msra.mxu0 0.0
        %2403 = vmatprep.subr.mxu0 0.0
        %2404 = vmatpush1.msra.mxu0 0.0
        %2405 = vmatprep.subr.mxu0 0.0
        %2406 = vmatpush1.msra.mxu0 0.0
        %2407 = vmatprep.subr.mxu0 0.0
        %2408 = vmatpush1.msra.mxu0 0.0
        %2409 = vmatprep.subr.mxu0 0.0
        %2410 = vmatpush1.msra.mxu0 0.0
        %2411 = vmatprep.subr.mxu0 0.0
        %2412 = vmatpush1.msra.mxu0 0.0
        %2413 = vmatprep.subr.mxu0 0.0
        %2414 = vmatpush1.msra.mxu0 0.0
        %2415 = vmatprep.subr.mxu0 0.0
        %2416 = vmatpush1.msra.mxu0 0.0
        %2417 = vmatprep.subr.mxu0 0.0
        %2418 = vmatpush1.msra.mxu0 0.0
        %2419 = vmatprep.subr.mxu0 0.0
        %2420 = vmatpush1.msra.mxu0 0.0
        %2421 = vmatprep.subr.mxu0 0.0
        %2422 = vmatpush1.msra.mxu0 0.0
        %2423 = vmatprep.subr.mxu0 0.0
        %2424 = vmatpush1.msra.mxu0 0.0
        %2425 = vmatprep.subr.mxu0 0.0
        %2426 = vmatpush1.msra.mxu0 0.0
        %2427 = vmatprep.subr.mxu0 0.0
        %2428 = vmatpush1.msra.mxu0 0.0
        %2429 = vmatprep.subr.mxu0 0.0
        %2430 = vmatpush1.msra.mxu0 0.0
        %2431 = vmatprep.subr.mxu0 0.0
        %2432 = vmatpush1.msra.mxu0 0.0
        %2433 = vmatprep.subr.mxu0 0.0
        %2434 = vmatpush1.msra.mxu0 0.0
        %2435 = vmatprep.subr.mxu0 0.0
        %2436 = vmatpush1.msra.mxu0 0.0
        %2437 = vmatprep.subr.mxu0 0.0
        %2438 = vmatpush1.msra.mxu0 0.0
        %2439 = vmatprep.subr.mxu0 0.0
        %2440 = vmatpush1.msra.mxu0 0.0
        %2441 = vmatprep.subr.mxu0 0.0
        %2442 = vmatpush1.msra.mxu0 0.0
        %2443 = vmatprep.subr.mxu0 0.0
        %2444 = vmatpush1.msra.mxu0 0.0
        %2445 = vmatprep.subr.mxu0 0.0
        %2446 = vmatpush1.msra.mxu0 0.0
        %2447 = vmatprep.subr.mxu0 0.0
        %2448 = vmatpush1.msra.mxu0 0.0
        %2449 = vmatprep.mubr.f32.mxu0 0.0
        %2450 = vmatmul.mubr.f32.gmra.mrb[0].mxu0 %v2383
        %v2451 = vpop.f32.mrb[0].mxu0
        %v2452 = vadd.f32 0.0, %v2451
        %v2453 = vpop.f32.mrb[0].mxu0
        %2454 = vdwg.mxu0
        %s2455 = scalar_lea.vmem [#allocation18], 96
        %v2456 = vld [vmem:[%s2455] sm:$0xff]
        %v2458 = vsel %vm1214, %v2452, 0
        %2460 = vmatprep.subr.mxu0 0.0
        %2461 = vmatpush1.msra.mxu0 %v2456
        %2462 = vmatprep.subr.mxu0 0.0
        %2463 = vmatpush1.msra.mxu0 0.0
        %2464 = vmatprep.subr.mxu0 0.0
        %2465 = vmatpush1.msra.mxu0 0.0
        %2466 = vmatprep.subr.mxu0 0.0
        %2467 = vmatpush1.msra.mxu0 0.0
        %2468 = vmatprep.subr.mxu0 0.0
        %2469 = vmatpush1.msra.mxu0 0.0
        %2470 = vmatprep.subr.mxu0 0.0
        %2471 = vmatpush1.msra.mxu0 0.0
        %2472 = vmatprep.subr.mxu0 0.0
        %2473 = vmatpush1.msra.mxu0 0.0
        %2474 = vmatprep.subr.mxu0 0.0
        %2475 = vmatpush1.msra.mxu0 0.0
        %2476 = vmatprep.subr.mxu0 0.0
        %2477 = vmatpush1.msra.mxu0 0.0
        %2478 = vmatprep.subr.mxu0 0.0
        %2479 = vmatpush1.msra.mxu0 0.0
        %2480 = vmatprep.subr.mxu0 0.0
        %2481 = vmatpush1.msra.mxu0 0.0
        %2482 = vmatprep.subr.mxu0 0.0
        %2483 = vmatpush1.msra.mxu0 0.0
        %2484 = vmatprep.subr.mxu0 0.0
        %2485 = vmatpush1.msra.mxu0 0.0
        %2486 = vmatprep.subr.mxu0 0.0
        %2487 = vmatpush1.msra.mxu0 0.0
        %2488 = vmatprep.subr.mxu0 0.0
        %2489 = vmatpush1.msra.mxu0 0.0
        %2490 = vmatprep.subr.mxu0 0.0
        %2491 = vmatpush1.msra.mxu0 0.0
        %2492 = vmatprep.subr.mxu0 0.0
        %2493 = vmatpush1.msra.mxu0 0.0
        %2494 = vmatprep.subr.mxu0 0.0
        %2495 = vmatpush1.msra.mxu0 0.0
        %2496 = vmatprep.subr.mxu0 0.0
        %2497 = vmatpush1.msra.mxu0 0.0
        %2498 = vmatprep.subr.mxu0 0.0
        %2499 = vmatpush1.msra.mxu0 0.0
        %2500 = vmatprep.subr.mxu0 0.0
        %2501 = vmatpush1.msra.mxu0 0.0
        %2502 = vmatprep.subr.mxu0 0.0
        %2503 = vmatpush1.msra.mxu0 0.0
        %2504 = vmatprep.subr.mxu0 0.0
        %2505 = vmatpush1.msra.mxu0 0.0
        %2506 = vmatprep.subr.mxu0 0.0
        %2507 = vmatpush1.msra.mxu0 0.0
        %2508 = vmatprep.subr.mxu0 0.0
        %2509 = vmatpush1.msra.mxu0 0.0
        %2510 = vmatprep.subr.mxu0 0.0
        %2511 = vmatpush1.msra.mxu0 0.0
        %2512 = vmatprep.subr.mxu0 0.0
        %2513 = vmatpush1.msra.mxu0 0.0
        %2514 = vmatprep.subr.mxu0 0.0
        %2515 = vmatpush1.msra.mxu0 0.0
        %2516 = vmatprep.subr.mxu0 0.0
        %2517 = vmatpush1.msra.mxu0 0.0
        %2518 = vmatprep.subr.mxu0 0.0
        %2519 = vmatpush1.msra.mxu0 0.0
        %2520 = vmatprep.subr.mxu0 0.0
        %2521 = vmatpush1.msra.mxu0 0.0
        %2522 = vmatprep.subr.mxu0 0.0
        %2523 = vmatpush1.msra.mxu0 0.0
        %2524 = vmatprep.mubr.f32.mxu0 0.0
        %2525 = vmatmul.mubr.f32.gmra.mrb[0].mxu0 %v2458
        %v2526 = vpop.f32.mrb[0].mxu0
        %v2527 = vadd.f32 0.0, %v2526
        %v2528 = vpop.f32.mrb[0].mxu0
        %2529 = vdwg.mxu0
        %v2530 = vlaneseq
        %v2531 = vshrl.u32 %v2530, 7
        %v2532 = vsub.s32 0, %v2531
        %v2533 = vrot.slane %v2294, %v2532
        %v2534 = vadd.f32 %v2533, %v2527
        %2535 = vrot.lane.b32.xlu0 %v2291, 120
        %v2536 = vpop.permute.xlu0 %2535
        %2537 = vrot.lane.b32.xlu0 %v2210, 120
        %v2538 = vpop.permute.xlu0 %2537
        %v2539 = vsel %vm1214, %v2536, 0
        %v2541 = vsel %vm1214, %v2538, 0
        %2543 = vmatprep.subr.mxu0 0.0
        %2544 = vmatpush1.xpose.msra.mxu0 %v2541
        %2545 = vmatprep.subr.mxu0 0.0
        %2546 = vmatpush1.xpose.msra.mxu0 0.0
        %2547 = vmatprep.subr.mxu0 0.0
        %2548 = vmatpush1.xpose.msra.mxu0 0.0
        %2549 = vmatprep.subr.mxu0 0.0
        %2550 = vmatpush1.xpose.msra.mxu0 0.0
        %2551 = vmatprep.subr.mxu0 0.0
        %2552 = vmatpush1.xpose.msra.mxu0 0.0
        %2553 = vmatprep.subr.mxu0 0.0
        %2554 = vmatpush1.xpose.msra.mxu0 0.0
        %2555 = vmatprep.subr.mxu0 0.0
        %2556 = vmatpush1.xpose.msra.mxu0 0.0
        %2557 = vmatprep.subr.mxu0 0.0
        %2558 = vmatpush1.xpose.msra.mxu0 0.0
        %2559 = vmatprep.subr.mxu0 0.0
        %2560 = vmatpush1.xpose.msra.mxu0 0.0
        %2561 = vmatprep.subr.mxu0 0.0
        %2562 = vmatpush1.xpose.msra.mxu0 0.0
        %2563 = vmatprep.subr.mxu0 0.0
        %2564 = vmatpush1.xpose.msra.mxu0 0.0
        %2565 = vmatprep.subr.mxu0 0.0
        %2566 = vmatpush1.xpose.msra.mxu0 0.0
        %2567 = vmatprep.subr.mxu0 0.0
        %2568 = vmatpush1.xpose.msra.mxu0 0.0
        %2569 = vmatprep.subr.mxu0 0.0
        %2570 = vmatpush1.xpose.msra.mxu0 0.0
        %2571 = vmatprep.subr.mxu0 0.0
        %2572 = vmatpush1.xpose.msra.mxu0 0.0
        %2573 = vmatprep.subr.mxu0 0.0
        %2574 = vmatpush1.xpose.msra.mxu0 0.0
        %2575 = vmatprep.subr.mxu0 0.0
        %2576 = vmatpush1.xpose.msra.mxu0 0.0
        %2577 = vmatprep.subr.mxu0 0.0
        %2578 = vmatpush1.xpose.msra.mxu0 0.0
        %2579 = vmatprep.subr.mxu0 0.0
        %2580 = vmatpush1.xpose.msra.mxu0 0.0
        %2581 = vmatprep.subr.mxu0 0.0
        %2582 = vmatpush1.xpose.msra.mxu0 0.0
        %2583 = vmatprep.subr.mxu0 0.0
        %2584 = vmatpush1.xpose.msra.mxu0 0.0
        %2585 = vmatprep.subr.mxu0 0.0
        %2586 = vmatpush1.xpose.msra.mxu0 0.0
        %2587 = vmatprep.subr.mxu0 0.0
        %2588 = vmatpush1.xpose.msra.mxu0 0.0
        %2589 = vmatprep.subr.mxu0 0.0
        %2590 = vmatpush1.xpose.msra.mxu0 0.0
        %2591 = vmatprep.subr.mxu0 0.0
        %2592 = vmatpush1.xpose.msra.mxu0 0.0
        %2593 = vmatprep.subr.mxu0 0.0
        %2594 = vmatpush1.xpose.msra.mxu0 0.0
        %2595 = vmatprep.subr.mxu0 0.0
        %2596 = vmatpush1.xpose.msra.mxu0 0.0
        %2597 = vmatprep.subr.mxu0 0.0
        %2598 = vmatpush1.xpose.msra.mxu0 0.0
        %2599 = vmatprep.subr.mxu0 0.0
        %2600 = vmatpush1.xpose.msra.mxu0 0.0
        %2601 = vmatprep.subr.mxu0 0.0
        %2602 = vmatpush1.xpose.msra.mxu0 0.0
        %2603 = vmatprep.subr.mxu0 0.0
        %2604 = vmatpush1.xpose.msra.mxu0 0.0
        %2605 = vmatprep.subr.mxu0 0.0
        %2606 = vmatpush1.xpose.msra.mxu0 0.0
        %2607 = vmatprep.mubr.f32.mxu0 0.0
        %2608 = vmatmul.mubr.f32.gmra.mrb[0].mxu0 %v2539
        %v2609 = vpop.f32.mrb[0].mxu0
        %v2610 = vadd.f32 %v1125, %v2609
        %v2611 = vpop.f32.mrb[0].mxu0
        %2612 = vdwg.mxu0
        %v2613 = vsel %vm1214, %v2610, -inf
        %2614 = vmax.xlane.f32.xlu0 %v2613
        %v2615 = vpop.xlane.xlu0 %2614
        %v2616 = vsub.f32 %v2610, %v2615
        %v2617 = vmul.f32 %v2616, 1.442695
        %v2618 = vpow.pop %v2617
        %v2619 = vsel %vm1214, %v2618, 0.0
        %2620 = vadd.xlane.f32.xlu0 %v2619
        %v2621 = vpop.xlane.xlu0 %2620
        %v2622 = vrcp.pop %v2621
        %v2623 = vmul.f32 %v2618, %v2622
        %2625 = vrot.lane.b32.xlu0 %v2211, 120
        %v2626 = vpop.permute.xlu0 %2625
        %v2629 = vsel %vm1214, %v2623, 0
        %2631 = vmatprep.subr.mxu0 0.0
        %2632 = vmatpush1.msra.mxu0 %v2626
        %2633 = vmatprep.subr.mxu0 0.0
        %2634 = vmatpush1.msra.mxu0 0.0
        %2635 = vmatprep.subr.mxu0 0.0
        %2636 = vmatpush1.msra.mxu0 0.0
        %2637 = vmatprep.subr.mxu0 0.0
        %2638 = vmatpush1.msra.mxu0 0.0
        %2639 = vmatprep.subr.mxu0 0.0
        %2640 = vmatpush1.msra.mxu0 0.0
        %2641 = vmatprep.subr.mxu0 0.0
        %2642 = vmatpush1.msra.mxu0 0.0
        %2643 = vmatprep.subr.mxu0 0.0
        %2644 = vmatpush1.msra.mxu0 0.0
        %2645 = vmatprep.subr.mxu0 0.0
        %2646 = vmatpush1.msra.mxu0 0.0
        %2647 = vmatprep.subr.mxu0 0.0
        %2648 = vmatpush1.msra.mxu0 0.0
        %2649 = vmatprep.subr.mxu0 0.0
        %2650 = vmatpush1.msra.mxu0 0.0
        %2651 = vmatprep.subr.mxu0 0.0
        %2652 = vmatpush1.msra.mxu0 0.0
        %2653 = vmatprep.subr.mxu0 0.0
        %2654 = vmatpush1.msra.mxu0 0.0
        %2655 = vmatprep.subr.mxu0 0.0
        %2656 = vmatpush1.msra.mxu0 0.0
        %2657 = vmatprep.subr.mxu0 0.0
        %2658 = vmatpush1.msra.mxu0 0.0
        %2659 = vmatprep.subr.mxu0 0.0
        %2660 = vmatpush1.msra.mxu0 0.0
        %2661 = vmatprep.subr.mxu0 0.0
        %2662 = vmatpush1.msra.mxu0 0.0
        %2663 = vmatprep.subr.mxu0 0.0
        %2664 = vmatpush1.msra.mxu0 0.0
        %2665 = vmatprep.subr.mxu0 0.0
        %2666 = vmatpush1.msra.mxu0 0.0
        %2667 = vmatprep.subr.mxu0 0.0
        %2668 = vmatpush1.msra.mxu0 0.0
        %2669 = vmatprep.subr.mxu0 0.0
        %2670 = vmatpush1.msra.mxu0 0.0
        %2671 = vmatprep.subr.mxu0 0.0
        %2672 = vmatpush1.msra.mxu0 0.0
        %2673 = vmatprep.subr.mxu0 0.0
        %2674 = vmatpush1.msra.mxu0 0.0
        %2675 = vmatprep.subr.mxu0 0.0
        %2676 = vmatpush1.msra.mxu0 0.0
        %2677 = vmatprep.subr.mxu0 0.0
        %2678 = vmatpush1.msra.mxu0 0.0
        %2679 = vmatprep.subr.mxu0 0.0
        %2680 = vmatpush1.msra.mxu0 0.0
        %2681 = vmatprep.subr.mxu0 0.0
        %2682 = vmatpush1.msra.mxu0 0.0
        %2683 = vmatprep.subr.mxu0 0.0
        %2684 = vmatpush1.msra.mxu0 0.0
        %2685 = vmatprep.subr.mxu0 0.0
        %2686 = vmatpush1.msra.mxu0 0.0
        %2687 = vmatprep.subr.mxu0 0.0
        %2688 = vmatpush1.msra.mxu0 0.0
        %2689 = vmatprep.subr.mxu0 0.0
        %2690 = vmatpush1.msra.mxu0 0.0
        %2691 = vmatprep.subr.mxu0 0.0
        %2692 = vmatpush1.msra.mxu0 0.0
        %2693 = vmatprep.subr.mxu0 0.0
        %2694 = vmatpush1.msra.mxu0 0.0
        %2695 = vmatprep.mubr.f32.mxu0 0.0
        %2696 = vmatmul.mubr.f32.gmra.mrb[0].mxu0 %v2629
        %v2697 = vpop.f32.mrb[0].mxu0
        %v2698 = vadd.f32 0.0, %v2697
        %v2699 = vpop.f32.mrb[0].mxu0
        %2700 = vdwg.mxu0
        %v2701 = vld [vmem:[%s2455 + $0x8] sm:$0xff]
        %v2703 = vsel %vm1214, %v2698, 0
        %2705 = vmatprep.subr.mxu0 0.0
        %2706 = vmatpush1.msra.mxu0 %v2701
        %2707 = vmatprep.subr.mxu0 0.0
        %2708 = vmatpush1.msra.mxu0 0.0
        %2709 = vmatprep.subr.mxu0 0.0
        %2710 = vmatpush1.msra.mxu0 0.0
        %2711 = vmatprep.subr.mxu0 0.0
        %2712 = vmatpush1.msra.mxu0 0.0
        %2713 = vmatprep.subr.mxu0 0.0
        %2714 = vmatpush1.msra.mxu0 0.0
        %2715 = vmatprep.subr.mxu0 0.0
        %2716 = vmatpush1.msra.mxu0 0.0
        %2717 = vmatprep.subr.mxu0 0.0
        %2718 = vmatpush1.msra.mxu0 0.0
        %2719 = vmatprep.subr.mxu0 0.0
        %2720 = vmatpush1.msra.mxu0 0.0
        %2721 = vmatprep.subr.mxu0 0.0
        %2722 = vmatpush1.msra.mxu0 0.0
        %2723 = vmatprep.subr.mxu0 0.0
        %2724 = vmatpush1.msra.mxu0 0.0
        %2725 = vmatprep.subr.mxu0 0.0
        %2726 = vmatpush1.msra.mxu0 0.0
        %2727 = vmatprep.subr.mxu0 0.0
        %2728 = vmatpush1.msra.mxu0 0.0
        %2729 = vmatprep.subr.mxu0 0.0
        %2730 = vmatpush1.msra.mxu0 0.0
        %2731 = vmatprep.subr.mxu0 0.0
        %2732 = vmatpush1.msra.mxu0 0.0
        %2733 = vmatprep.subr.mxu0 0.0
        %2734 = vmatpush1.msra.mxu0 0.0
        %2735 = vmatprep.subr.mxu0 0.0
        %2736 = vmatpush1.msra.mxu0 0.0
        %2737 = vmatprep.subr.mxu0 0.0
        %2738 = vmatpush1.msra.mxu0 0.0
        %2739 = vmatprep.subr.mxu0 0.0
        %2740 = vmatpush1.msra.mxu0 0.0
        %2741 = vmatprep.subr.mxu0 0.0
        %2742 = vmatpush1.msra.mxu0 0.0
        %2743 = vmatprep.subr.mxu0 0.0
        %2744 = vmatpush1.msra.mxu0 0.0
        %2745 = vmatprep.subr.mxu0 0.0
        %2746 = vmatpush1.msra.mxu0 0.0
        %2747 = vmatprep.subr.mxu0 0.0
        %2748 = vmatpush1.msra.mxu0 0.0
        %2749 = vmatprep.subr.mxu0 0.0
        %2750 = vmatpush1.msra.mxu0 0.0
        %2751 = vmatprep.subr.mxu0 0.0
        %2752 = vmatpush1.msra.mxu0 0.0
        %2753 = vmatprep.subr.mxu0 0.0
        %2754 = vmatpush1.msra.mxu0 0.0
        %2755 = vmatprep.subr.mxu0 0.0
        %2756 = vmatpush1.msra.mxu0 0.0
        %2757 = vmatprep.subr.mxu0 0.0
        %2758 = vmatpush1.msra.mxu0 0.0
        %2759 = vmatprep.subr.mxu0 0.0
        %2760 = vmatpush1.msra.mxu0 0.0
        %2761 = vmatprep.subr.mxu0 0.0
        %2762 = vmatpush1.msra.mxu0 0.0
        %2763 = vmatprep.subr.mxu0 0.0
        %2764 = vmatpush1.msra.mxu0 0.0
        %2765 = vmatprep.subr.mxu0 0.0
        %2766 = vmatpush1.msra.mxu0 0.0
        %2767 = vmatprep.subr.mxu0 0.0
        %2768 = vmatpush1.msra.mxu0 0.0
        %2769 = vmatprep.mubr.f32.mxu0 0.0
        %2770 = vmatmul.mubr.f32.gmra.mrb[0].mxu0 %v2703
        %v2771 = vpop.f32.mrb[0].mxu0
        %v2772 = vadd.f32 0.0, %v2771
        %v2773 = vpop.f32.mrb[0].mxu0
        %2774 = vdwg.mxu0
        %v2775 = vadd.f32 %v2534, %v2772
        %2776 = vrot.lane.b32.xlu0 %v2291, 112
        %v2777 = vpop.permute.xlu0 %2776
        %2778 = vrot.lane.b32.xlu0 %v2210, 112
        %v2779 = vpop.permute.xlu0 %2778
        %v2780 = vsel %vm1214, %v2777, 0
        %v2782 = vsel %vm1214, %v2779, 0
        %2784 = vmatprep.subr.mxu0 0.0
        %2785 = vmatpush1.xpose.msra.mxu0 %v2782
        %2786 = vmatprep.subr.mxu0 0.0
        %2787 = vmatpush1.xpose.msra.mxu0 0.0
        %2788 = vmatprep.subr.mxu0 0.0
        %2789 = vmatpush1.xpose.msra.mxu0 0.0
        %2790 = vmatprep.subr.mxu0 0.0
        %2791 = vmatpush1.xpose.msra.mxu0 0.0
        %2792 = vmatprep.subr.mxu0 0.0
        %2793 = vmatpush1.xpose.msra.mxu0 0.0
        %2794 = vmatprep.subr.mxu0 0.0
        %2795 = vmatpush1.xpose.msra.mxu0 0.0
        %2796 = vmatprep.subr.mxu0 0.0
        %2797 = vmatpush1.xpose.msra.mxu0 0.0
        %2798 = vmatprep.subr.mxu0 0.0
        %2799 = vmatpush1.xpose.msra.mxu0 0.0
        %2800 = vmatprep.subr.mxu0 0.0
        %2801 = vmatpush1.xpose.msra.mxu0 0.0
        %2802 = vmatprep.subr.mxu0 0.0
        %2803 = vmatpush1.xpose.msra.mxu0 0.0
        %2804 = vmatprep.subr.mxu0 0.0
        %2805 = vmatpush1.xpose.msra.mxu0 0.0
        %2806 = vmatprep.subr.mxu0 0.0
        %2807 = vmatpush1.xpose.msra.mxu0 0.0
        %2808 = vmatprep.subr.mxu0 0.0
        %2809 = vmatpush1.xpose.msra.mxu0 0.0
        %2810 = vmatprep.subr.mxu0 0.0
        %2811 = vmatpush1.xpose.msra.mxu0 0.0
        %2812 = vmatprep.subr.mxu0 0.0
        %2813 = vmatpush1.xpose.msra.mxu0 0.0
        %2814 = vmatprep.subr.mxu0 0.0
        %2815 = vmatpush1.xpose.msra.mxu0 0.0
        %2816 = vmatprep.subr.mxu0 0.0
        %2817 = vmatpush1.xpose.msra.mxu0 0.0
        %2818 = vmatprep.subr.mxu0 0.0
        %2819 = vmatpush1.xpose.msra.mxu0 0.0
        %2820 = vmatprep.subr.mxu0 0.0
        %2821 = vmatpush1.xpose.msra.mxu0 0.0
        %2822 = vmatprep.subr.mxu0 0.0
        %2823 = vmatpush1.xpose.msra.mxu0 0.0
        %2824 = vmatprep.subr.mxu0 0.0
        %2825 = vmatpush1.xpose.msra.mxu0 0.0
        %2826 = vmatprep.subr.mxu0 0.0
        %2827 = vmatpush1.xpose.msra.mxu0 0.0
        %2828 = vmatprep.subr.mxu0 0.0
        %2829 = vmatpush1.xpose.msra.mxu0 0.0
        %2830 = vmatprep.subr.mxu0 0.0
        %2831 = vmatpush1.xpose.msra.mxu0 0.0
        %2832 = vmatprep.subr.mxu0 0.0
        %2833 = vmatpush1.xpose.msra.mxu0 0.0
        %2834 = vmatprep.subr.mxu0 0.0
        %2835 = vmatpush1.xpose.msra.mxu0 0.0
        %2836 = vmatprep.subr.mxu0 0.0
        %2837 = vmatpush1.xpose.msra.mxu0 0.0
        %2838 = vmatprep.subr.mxu0 0.0
        %2839 = vmatpush1.xpose.msra.mxu0 0.0
        %2840 = vmatprep.subr.mxu0 0.0
        %2841 = vmatpush1.xpose.msra.mxu0 0.0
        %2842 = vmatprep.subr.mxu0 0.0
        %2843 = vmatpush1.xpose.msra.mxu0 0.0
        %2844 = vmatprep.subr.mxu0 0.0
        %2845 = vmatpush1.xpose.msra.mxu0 0.0
        %2846 = vmatprep.subr.mxu0 0.0
        %2847 = vmatpush1.xpose.msra.mxu0 0.0
        %2848 = vmatprep.mubr.f32.mxu0 0.0
        %2849 = vmatmul.mubr.f32.gmra.mrb[0].mxu0 %v2780
        %v2850 = vpop.f32.mrb[0].mxu0
        %v2851 = vadd.f32 %v1125, %v2850
        %v2852 = vpop.f32.mrb[0].mxu0
        %2853 = vdwg.mxu0
        %v2854 = vsel %vm1214, %v2851, -inf
        %2855 = vmax.xlane.f32.xlu0 %v2854
        %v2856 = vpop.xlane.xlu0 %2855
        %v2857 = vsub.f32 %v2851, %v2856
        %v2858 = vmul.f32 %v2857, 1.442695
        %v2859 = vpow.pop %v2858
        %v2860 = vsel %vm1214, %v2859, 0.0
        %2861 = vadd.xlane.f32.xlu0 %v2860
        %v2862 = vpop.xlane.xlu0 %2861
        %v2863 = vrcp.pop %v2862
        %v2864 = vmul.f32 %v2859, %v2863
        %2865 = vrot.lane.b32.xlu0 %v2211, 112
        %v2866 = vpop.permute.xlu0 %2865
        %v2869 = vsel %vm1214, %v2864, 0
        %2871 = vmatprep.subr.mxu0 0.0
        %2872 = vmatpush1.msra.mxu0 %v2866
        %2873 = vmatprep.subr.mxu0 0.0
        %2874 = vmatpush1.msra.mxu0 0.0
        %2875 = vmatprep.subr.mxu0 0.0
        %2876 = vmatpush1.msra.mxu0 0.0
        %2877 = vmatprep.subr.mxu0 0.0
        %2878 = vmatpush1.msra.mxu0 0.0
        %2879 = vmatprep.subr.mxu0 0.0
        %2880 = vmatpush1.msra.mxu0 0.0
        %2881 = vmatprep.subr.mxu0 0.0
        %2882 = vmatpush1.msra.mxu0 0.0
        %2883 = vmatprep.subr.mxu0 0.0
        %2884 = vmatpush1.msra.mxu0 0.0
        %2885 = vmatprep.subr.mxu0 0.0
        %2886 = vmatpush1.msra.mxu0 0.0
        %2887 = vmatprep.subr.mxu0 0.0
        %2888 = vmatpush1.msra.mxu0 0.0
        %2889 = vmatprep.subr.mxu0 0.0
        %2890 = vmatpush1.msra.mxu0 0.0
        %2891 = vmatprep.subr.mxu0 0.0
        %2892 = vmatpush1.msra.mxu0 0.0
        %2893 = vmatprep.subr.mxu0 0.0
        %2894 = vmatpush1.msra.mxu0 0.0
        %2895 = vmatprep.subr.mxu0 0.0
        %2896 = vmatpush1.msra.mxu0 0.0
        %2897 = vmatprep.subr.mxu0 0.0
        %2898 = vmatpush1.msra.mxu0 0.0
        %2899 = vmatprep.subr.mxu0 0.0
        %2900 = vmatpush1.msra.mxu0 0.0
        %2901 = vmatprep.subr.mxu0 0.0
        %2902 = vmatpush1.msra.mxu0 0.0
        %2903 = vmatprep.subr.mxu0 0.0
        %2904 = vmatpush1.msra.mxu0 0.0
        %2905 = vmatprep.subr.mxu0 0.0
        %2906 = vmatpush1.msra.mxu0 0.0
        %2907 = vmatprep.subr.mxu0 0.0
        %2908 = vmatpush1.msra.mxu0 0.0
        %2909 = vmatprep.subr.mxu0 0.0
        %2910 = vmatpush1.msra.mxu0 0.0
        %2911 = vmatprep.subr.mxu0 0.0
        %2912 = vmatpush1.msra.mxu0 0.0
        %2913 = vmatprep.subr.mxu0 0.0
        %2914 = vmatpush1.msra.mxu0 0.0
        %2915 = vmatprep.subr.mxu0 0.0
        %2916 = vmatpush1.msra.mxu0 0.0
        %2917 = vmatprep.subr.mxu0 0.0
        %2918 = vmatpush1.msra.mxu0 0.0
        %2919 = vmatprep.subr.mxu0 0.0
        %2920 = vmatpush1.msra.mxu0 0.0
        %2921 = vmatprep.subr.mxu0 0.0
        %2922 = vmatpush1.msra.mxu0 0.0
        %2923 = vmatprep.subr.mxu0 0.0
        %2924 = vmatpush1.msra.mxu0 0.0
        %2925 = vmatprep.subr.mxu0 0.0
        %2926 = vmatpush1.msra.mxu0 0.0
        %2927 = vmatprep.subr.mxu0 0.0
        %2928 = vmatpush1.msra.mxu0 0.0
        %2929 = vmatprep.subr.mxu0 0.0
        %2930 = vmatpush1.msra.mxu0 0.0
        %2931 = vmatprep.subr.mxu0 0.0
        %2932 = vmatpush1.msra.mxu0 0.0
        %2933 = vmatprep.subr.mxu0 0.0
        %2934 = vmatpush1.msra.mxu0 0.0
        %2935 = vmatprep.mubr.f32.mxu0 0.0
        %2936 = vmatmul.mubr.f32.gmra.mrb[0].mxu0 %v2869
        %v2937 = vpop.f32.mrb[0].mxu0
        %v2938 = vadd.f32 0.0, %v2937
        %v2939 = vpop.f32.mrb[0].mxu0
        %2940 = vdwg.mxu0
        %v2941 = vld [vmem:[%s2455 + $0x10] sm:$0xff]
        %v2943 = vsel %vm1214, %v2938, 0
        %2945 = vmatprep.subr.mxu0 0.0
        %2946 = vmatpush1.msra.mxu0 %v2941
        %2947 = vmatprep.subr.mxu0 0.0
        %2948 = vmatpush1.msra.mxu0 0.0
        %2949 = vmatprep.subr.mxu0 0.0
        %2950 = vmatpush1.msra.mxu0 0.0
        %2951 = vmatprep.subr.mxu0 0.0
        %2952 = vmatpush1.msra.mxu0 0.0
        %2953 = vmatprep.subr.mxu0 0.0
        %2954 = vmatpush1.msra.mxu0 0.0
        %2955 = vmatprep.subr.mxu0 0.0
        %2956 = vmatpush1.msra.mxu0 0.0
        %2957 = vmatprep.subr.mxu0 0.0
        %2958 = vmatpush1.msra.mxu0 0.0
        %2959 = vmatprep.subr.mxu0 0.0
        %2960 = vmatpush1.msra.mxu0 0.0
        %2961 = vmatprep.subr.mxu0 0.0
        %2962 = vmatpush1.msra.mxu0 0.0
        %2963 = vmatprep.subr.mxu0 0.0
        %2964 = vmatpush1.msra.mxu0 0.0
        %2965 = vmatprep.subr.mxu0 0.0
        %2966 = vmatpush1.msra.mxu0 0.0
        %2967 = vmatprep.subr.mxu0 0.0
        %2968 = vmatpush1.msra.mxu0 0.0
        %2969 = vmatprep.subr.mxu0 0.0
        %2970 = vmatpush1.msra.mxu0 0.0
        %2971 = vmatprep.subr.mxu0 0.0
        %2972 = vmatpush1.msra.mxu0 0.0
        %2973 = vmatprep.subr.mxu0 0.0
        %2974 = vmatpush1.msra.mxu0 0.0
        %2975 = vmatprep.subr.mxu0 0.0
        %2976 = vmatpush1.msra.mxu0 0.0
        %2977 = vmatprep.subr.mxu0 0.0
        %2978 = vmatpush1.msra.mxu0 0.0
        %2979 = vmatprep.subr.mxu0 0.0
        %2980 = vmatpush1.msra.mxu0 0.0
        %2981 = vmatprep.subr.mxu0 0.0
        %2982 = vmatpush1.msra.mxu0 0.0
        %2983 = vmatprep.subr.mxu0 0.0
        %2984 = vmatpush1.msra.mxu0 0.0
        %2985 = vmatprep.subr.mxu0 0.0
        %2986 = vmatpush1.msra.mxu0 0.0
        %2987 = vmatprep.subr.mxu0 0.0
        %2988 = vmatpush1.msra.mxu0 0.0
        %2989 = vmatprep.subr.mxu0 0.0
        %2990 = vmatpush1.msra.mxu0 0.0
        %2991 = vmatprep.subr.mxu0 0.0
        %2992 = vmatpush1.msra.mxu0 0.0
        %2993 = vmatprep.subr.mxu0 0.0
        %2994 = vmatpush1.msra.mxu0 0.0
        %2995 = vmatprep.subr.mxu0 0.0
        %2996 = vmatpush1.msra.mxu0 0.0
        %2997 = vmatprep.subr.mxu0 0.0
        %2998 = vmatpush1.msra.mxu0 0.0
        %2999 = vmatprep.subr.mxu0 0.0
        %3000 = vmatpush1.msra.mxu0 0.0
        %3001 = vmatprep.subr.mxu0 0.0
        %3002 = vmatpush1.msra.mxu0 0.0
        %3003 = vmatprep.subr.mxu0 0.0
        %3004 = vmatpush1.msra.mxu0 0.0
        %3005 = vmatprep.subr.mxu0 0.0
        %3006 = vmatpush1.msra.mxu0 0.0
        %3007 = vmatprep.subr.mxu0 0.0
        %3008 = vmatpush1.msra.mxu0 0.0
        %3009 = vmatprep.mubr.f32.mxu0 0.0
        %3010 = vmatmul.mubr.f32.gmra.mrb[0].mxu0 %v2943
        %v3011 = vpop.f32.mrb[0].mxu0
        %v3012 = vadd.f32 0.0, %v3011
        %v3013 = vpop.f32.mrb[0].mxu0
        %3014 = vdwg.mxu0
        %v3015 = vadd.f32 %v2775, %v3012
        %3016 = vrot.lane.b32.xlu0 %v2291, 104
        %v3017 = vpop.permute.xlu0 %3016
        %3018 = vrot.lane.b32.xlu0 %v2210, 104
        %v3019 = vpop.permute.xlu0 %3018
        %v3020 = vsel %vm1214, %v3017, 0
        %v3022 = vsel %vm1214, %v3019, 0
        %3024 = vmatprep.subr.mxu0 0.0
        %3025 = vmatpush1.xpose.msra.mxu0 %v3022
        %3026 = vmatprep.subr.mxu0 0.0
        %3027 = vmatpush1.xpose.msra.mxu0 0.0
        %3028 = vmatprep.subr.mxu0 0.0
        %3029 = vmatpush1.xpose.msra.mxu0 0.0
        %3030 = vmatprep.subr.mxu0 0.0
        %3031 = vmatpush1.xpose.msra.mxu0 0.0
        %3032 = vmatprep.subr.mxu0 0.0
        %3033 = vmatpush1.xpose.msra.mxu0 0.0
        %3034 = vmatprep.subr.mxu0 0.0
        %3035 = vmatpush1.xpose.msra.mxu0 0.0
        %3036 = vmatprep.subr.mxu0 0.0
        %3037 = vmatpush1.xpose.msra.mxu0 0.0
        %3038 = vmatprep.subr.mxu0 0.0
        %3039 = vmatpush1.xpose.msra.mxu0 0.0
        %3040 = vmatprep.subr.mxu0 0.0
        %3041 = vmatpush1.xpose.msra.mxu0 0.0
        %3042 = vmatprep.subr.mxu0 0.0
        %3043 = vmatpush1.xpose.msra.mxu0 0.0
        %3044 = vmatprep.subr.mxu0 0.0
        %3045 = vmatpush1.xpose.msra.mxu0 0.0
        %3046 = vmatprep.subr.mxu0 0.0
        %3047 = vmatpush1.xpose.msra.mxu0 0.0
        %3048 = vmatprep.subr.mxu0 0.0
        %3049 = vmatpush1.xpose.msra.mxu0 0.0
        %3050 = vmatprep.subr.mxu0 0.0
        %3051 = vmatpush1.xpose.msra.mxu0 0.0
        %3052 = vmatprep.subr.mxu0 0.0
        %3053 = vmatpush1.xpose.msra.mxu0 0.0
        %3054 = vmatprep.subr.mxu0 0.0
        %3055 = vmatpush1.xpose.msra.mxu0 0.0
        %3056 = vmatprep.subr.mxu0 0.0
        %3057 = vmatpush1.xpose.msra.mxu0 0.0
        %3058 = vmatprep.subr.mxu0 0.0
        %3059 = vmatpush1.xpose.msra.mxu0 0.0
        %3060 = vmatprep.subr.mxu0 0.0
        %3061 = vmatpush1.xpose.msra.mxu0 0.0
        %3062 = vmatprep.subr.mxu0 0.0
        %3063 = vmatpush1.xpose.msra.mxu0 0.0
        %3064 = vmatprep.subr.mxu0 0.0
        %3065 = vmatpush1.xpose.msra.mxu0 0.0
        %3066 = vmatprep.subr.mxu0 0.0
        %3067 = vmatpush1.xpose.msra.mxu0 0.0
        %3068 = vmatprep.subr.mxu0 0.0
        %3069 = vmatpush1.xpose.msra.mxu0 0.0
        %3070 = vmatprep.subr.mxu0 0.0
        %3071 = vmatpush1.xpose.msra.mxu0 0.0
        %3072 = vmatprep.subr.mxu0 0.0
        %3073 = vmatpush1.xpose.msra.mxu0 0.0
        %3074 = vmatprep.subr.mxu0 0.0
        %3075 = vmatpush1.xpose.msra.mxu0 0.0
        %3076 = vmatprep.subr.mxu0 0.0
        %3077 = vmatpush1.xpose.msra.mxu0 0.0
        %3078 = vmatprep.subr.mxu0 0.0
        %3079 = vmatpush1.xpose.msra.mxu0 0.0
        %3080 = vmatprep.subr.mxu0 0.0
        %3081 = vmatpush1.xpose.msra.mxu0 0.0
        %3082 = vmatprep.subr.mxu0 0.0
        %3083 = vmatpush1.xpose.msra.mxu0 0.0
        %3084 = vmatprep.subr.mxu0 0.0
        %3085 = vmatpush1.xpose.msra.mxu0 0.0
        %3086 = vmatprep.subr.mxu0 0.0
        %3087 = vmatpush1.xpose.msra.mxu0 0.0
        %3088 = vmatprep.mubr.f32.mxu0 0.0
        %3089 = vmatmul.mubr.f32.gmra.mrb[0].mxu0 %v3020
        %v3090 = vpop.f32.mrb[0].mxu0
        %v3091 = vadd.f32 %v1125, %v3090
        %v3092 = vpop.f32.mrb[0].mxu0
        %3093 = vdwg.mxu0
        %v3094 = vsel %vm1214, %v3091, -inf
        %3095 = vmax.xlane.f32.xlu0 %v3094
        %v3096 = vpop.xlane.xlu0 %3095
        %v3097 = vsub.f32 %v3091, %v3096
        %v3098 = vmul.f32 %v3097, 1.442695
        %v3099 = vpow.pop %v3098
        %v3100 = vsel %vm1214, %v3099, 0.0
        %3101 = vadd.xlane.f32.xlu0 %v3100
        %v3102 = vpop.xlane.xlu0 %3101
        %v3103 = vrcp.pop %v3102
        %v3104 = vmul.f32 %v3099, %v3103
        %3105 = vrot.lane.b32.xlu0 %v2211, 104
        %v3106 = vpop.permute.xlu0 %3105
        %v3109 = vsel %vm1214, %v3104, 0
        %3111 = vmatprep.subr.mxu0 0.0
        %3112 = vmatpush1.msra.mxu0 %v3106
        %3113 = vmatprep.subr.mxu0 0.0
        %3114 = vmatpush1.msra.mxu0 0.0
        %3115 = vmatprep.subr.mxu0 0.0
        %3116 = vmatpush1.msra.mxu0 0.0
        %3117 = vmatprep.subr.mxu0 0.0
        %3118 = vmatpush1.msra.mxu0 0.0
        %3119 = vmatprep.subr.mxu0 0.0
        %3120 = vmatpush1.msra.mxu0 0.0
        %3121 = vmatprep.subr.mxu0 0.0
        %3122 = vmatpush1.msra.mxu0 0.0
        %3123 = vmatprep.subr.mxu0 0.0
        %3124 = vmatpush1.msra.mxu0 0.0
        %3125 = vmatprep.subr.mxu0 0.0
        %3126 = vmatpush1.msra.mxu0 0.0
        %3127 = vmatprep.subr.mxu0 0.0
        %3128 = vmatpush1.msra.mxu0 0.0
        %3129 = vmatprep.subr.mxu0 0.0
        %3130 = vmatpush1.msra.mxu0 0.0
        %3131 = vmatprep.subr.mxu0 0.0
        %3132 = vmatpush1.msra.mxu0 0.0
        %3133 = vmatprep.subr.mxu0 0.0
        %3134 = vmatpush1.msra.mxu0 0.0
        %3135 = vmatprep.subr.mxu0 0.0
        %3136 = vmatpush1.msra.mxu0 0.0
        %3137 = vmatprep.subr.mxu0 0.0
        %3138 = vmatpush1.msra.mxu0 0.0
        %3139 = vmatprep.subr.mxu0 0.0
        %3140 = vmatpush1.msra.mxu0 0.0
        %3141 = vmatprep.subr.mxu0 0.0
        %3142 = vmatpush1.msra.mxu0 0.0
        %3143 = vmatprep.subr.mxu0 0.0
        %3144 = vmatpush1.msra.mxu0 0.0
        %3145 = vmatprep.subr.mxu0 0.0
        %3146 = vmatpush1.msra.mxu0 0.0
        %3147 = vmatprep.subr.mxu0 0.0
        %3148 = vmatpush1.msra.mxu0 0.0
        %3149 = vmatprep.subr.mxu0 0.0
        %3150 = vmatpush1.msra.mxu0 0.0
        %3151 = vmatprep.subr.mxu0 0.0
        %3152 = vmatpush1.msra.mxu0 0.0
        %3153 = vmatprep.subr.mxu0 0.0
        %3154 = vmatpush1.msra.mxu0 0.0
        %3155 = vmatprep.subr.mxu0 0.0
        %3156 = vmatpush1.msra.mxu0 0.0
        %3157 = vmatprep.subr.mxu0 0.0
        %3158 = vmatpush1.msra.mxu0 0.0
        %3159 = vmatprep.subr.mxu0 0.0
        %3160 = vmatpush1.msra.mxu0 0.0
        %3161 = vmatprep.subr.mxu0 0.0
        %3162 = vmatpush1.msra.mxu0 0.0
        %3163 = vmatprep.subr.mxu0 0.0
        %3164 = vmatpush1.msra.mxu0 0.0
        %3165 = vmatprep.subr.mxu0 0.0
        %3166 = vmatpush1.msra.mxu0 0.0
        %3167 = vmatprep.subr.mxu0 0.0
        %3168 = vmatpush1.msra.mxu0 0.0
        %3169 = vmatprep.subr.mxu0 0.0
        %3170 = vmatpush1.msra.mxu0 0.0
        %3171 = vmatprep.subr.mxu0 0.0
        %3172 = vmatpush1.msra.mxu0 0.0
        %3173 = vmatprep.subr.mxu0 0.0
        %3174 = vmatpush1.msra.mxu0 0.0
        %3175 = vmatprep.mubr.f32.mxu0 0.0
        %3176 = vmatmul.mubr.f32.gmra.mrb[0].mxu0 %v3109
        %v3177 = vpop.f32.mrb[0].mxu0
        %v3178 = vadd.f32 0.0, %v3177
        %v3179 = vpop.f32.mrb[0].mxu0
        %3180 = vdwg.mxu0
        %v3181 = vld [vmem:[%s2455 + $0x18] sm:$0xff]
        %v3183 = vsel %vm1214, %v3178, 0
        %3185 = vmatprep.subr.mxu0 0.0
        %3186 = vmatpush1.msra.mxu0 %v3181
        %3187 = vmatprep.subr.mxu0 0.0
        %3188 = vmatpush1.msra.mxu0 0.0
        %3189 = vmatprep.subr.mxu0 0.0
        %3190 = vmatpush1.msra.mxu0 0.0
        %3191 = vmatprep.subr.mxu0 0.0
        %3192 = vmatpush1.msra.mxu0 0.0
        %3193 = vmatprep.subr.mxu0 0.0
        %3194 = vmatpush1.msra.mxu0 0.0
        %3195 = vmatprep.subr.mxu0 0.0
        %3196 = vmatpush1.msra.mxu0 0.0
        %3197 = vmatprep.subr.mxu0 0.0
        %3198 = vmatpush1.msra.mxu0 0.0
        %3199 = vmatprep.subr.mxu0 0.0
        %3200 = vmatpush1.msra.mxu0 0.0
        %3201 = vmatprep.subr.mxu0 0.0
        %3202 = vmatpush1.msra.mxu0 0.0
        %3203 = vmatprep.subr.mxu0 0.0
        %3204 = vmatpush1.msra.mxu0 0.0
        %3205 = vmatprep.subr.mxu0 0.0
        %3206 = vmatpush1.msra.mxu0 0.0
        %3207 = vmatprep.subr.mxu0 0.0
        %3208 = vmatpush1.msra.mxu0 0.0
        %3209 = vmatprep.subr.mxu0 0.0
        %3210 = vmatpush1.msra.mxu0 0.0
        %3211 = vmatprep.subr.mxu0 0.0
        %3212 = vmatpush1.msra.mxu0 0.0
        %3213 = vmatprep.subr.mxu0 0.0
        %3214 = vmatpush1.msra.mxu0 0.0
        %3215 = vmatprep.subr.mxu0 0.0
        %3216 = vmatpush1.msra.mxu0 0.0
        %3217 = vmatprep.subr.mxu0 0.0
        %3218 = vmatpush1.msra.mxu0 0.0
        %3219 = vmatprep.subr.mxu0 0.0
        %3220 = vmatpush1.msra.mxu0 0.0
        %3221 = vmatprep.subr.mxu0 0.0
        %3222 = vmatpush1.msra.mxu0 0.0
        %3223 = vmatprep.subr.mxu0 0.0
        %3224 = vmatpush1.msra.mxu0 0.0
        %3225 = vmatprep.subr.mxu0 0.0
        %3226 = vmatpush1.msra.mxu0 0.0
        %3227 = vmatprep.subr.mxu0 0.0
        %3228 = vmatpush1.msra.mxu0 0.0
        %3229 = vmatprep.subr.mxu0 0.0
        %3230 = vmatpush1.msra.mxu0 0.0
        %3231 = vmatprep.subr.mxu0 0.0
        %3232 = vmatpush1.msra.mxu0 0.0
        %3233 = vmatprep.subr.mxu0 0.0
        %3234 = vmatpush1.msra.mxu0 0.0
        %3235 = vmatprep.subr.mxu0 0.0
        %3236 = vmatpush1.msra.mxu0 0.0
        %3237 = vmatprep.subr.mxu0 0.0
        %3238 = vmatpush1.msra.mxu0 0.0
        %3239 = vmatprep.subr.mxu0 0.0
        %3240 = vmatpush1.msra.mxu0 0.0
        %3241 = vmatprep.subr.mxu0 0.0
        %3242 = vmatpush1.msra.mxu0 0.0
        %3243 = vmatprep.subr.mxu0 0.0
        %3244 = vmatpush1.msra.mxu0 0.0
        %3245 = vmatprep.subr.mxu0 0.0
        %3246 = vmatpush1.msra.mxu0 0.0
        %3247 = vmatprep.subr.mxu0 0.0
        %3248 = vmatpush1.msra.mxu0 0.0
        %3249 = vmatprep.mubr.f32.mxu0 0.0
        %3250 = vmatmul.mubr.f32.gmra.mrb[0].mxu0 %v3183
        %v3251 = vpop.f32.mrb[0].mxu0
        %v3252 = vadd.f32 0.0, %v3251
        %v3253 = vpop.f32.mrb[0].mxu0
        %3254 = vdwg.mxu0
        %v3255 = vadd.f32 %v3015, %v3252
        %v3256 = vadd.f32 %v2176, %v3255
        %v3257 = vld [vmem:[#allocation27 + $0x2] sm:$0x1]
        %v3258 = vld [vmem:[#allocation28 + $0x2] sm:$0x1]
        %v3259 = vsel %vm1139, %v3256, 0.0
        %3260 = vadd.xlane.f32.xlu0 %v3259
        %v3261 = vpop.xlane.xlu0 %3260
        %v3262 = vmul.f32 %v3261, %v2182
        %v3263 = vsub.f32 %v3256, %v3262
        %v3264 = vmul.f32 %v3263, %v3263
        %v3265 = vsel %vm1139, %v3264, 0.0
        %3266 = vadd.xlane.f32.xlu0 %v3265
        %v3267 = vpop.xlane.xlu0 %3266
        %v3268 = vmul.f32 %v3267, 0.032258064
        %v3269 = vrsqrt.pop %v3268
        %v3270 = vmul.f32 %v3268, %v3269
        %vm3271 = vcmp.eq.f32.partialorder %v3268, inf
        %v3272 = vsel %vm3271, %v3268, %v3270
        %vm3273 = vcmp.eq.f32.partialorder %v3268, 0.0
        %v3274 = vand.u32 %v3268, 2147483648
        %v3275 = vsel %vm3273, %v3274, %v3272
        %v3276 = vadd.f32 %v3275, 1e-06
        %v3277 = vrcp.pop %v3276
        %v3278 = vmul.f32 %v3263, %v3277
        %v3279 = vlaneseq
        %v3280 = vshrl.u32 %v3279, 7
        %v3281 = vsub.s32 0, %v3280
        %v3282 = vrot.slane %v3257, %v3281
        %v3283 = vmul.f32 %v3282, %v3278
        %v3284 = vlaneseq
        %v3285 = vshrl.u32 %v3284, 7
        %v3286 = vsub.s32 0, %v3285
        %v3287 = vrot.slane %v3258, %v3286
        %v3288 = vadd.f32 %v3283, %v3287
        %v3289 = vld [vmem:[#allocation21] sm:$0xff]
        %v3290 = vld [vmem:[#allocation21 + $0x8] sm:$0xff]
        %v3291 = vld [vmem:[#allocation21 + $0x10] sm:$0xff]
        %v3292 = vld [vmem:[#allocation21 + $0x18] sm:$0xff]
        %v3294 = vlaneseq
        %v3295 = vshrl.u32 %v3294, 7
        %v3296 = vsub.s32 0, %v3295
        %v3297 = vrot.slane %v1126, %v3296
        %v3300 = vsel %vm1139, %v3288, 0
        %3302 = vmatprep.subr.mxu0 0.0
        %3303 = vmatpush1.msra.mxu0 %v3289
        %3304 = vmatprep.subr.mxu0 0.0
        %3305 = vmatpush1.msra.mxu0 %v3290
        %3306 = vmatprep.subr.mxu0 0.0
        %3307 = vmatpush1.msra.mxu0 %v3291
        %3308 = vmatprep.subr.mxu0 0.0
        %3309 = vmatpush1.msra.mxu0 %v3292
        %3310 = vmatprep.subr.mxu0 0.0
        %3311 = vmatpush1.msra.mxu0 0.0
        %3312 = vmatprep.subr.mxu0 0.0
        %3313 = vmatpush1.msra.mxu0 0.0
        %3314 = vmatprep.subr.mxu0 0.0
        %3315 = vmatpush1.msra.mxu0 0.0
        %3316 = vmatprep.subr.mxu0 0.0
        %3317 = vmatpush1.msra.mxu0 0.0
        %3318 = vmatprep.subr.mxu0 0.0
        %3319 = vmatpush1.msra.mxu0 0.0
        %3320 = vmatprep.subr.mxu0 0.0
        %3321 = vmatpush1.msra.mxu0 0.0
        %3322 = vmatprep.subr.mxu0 0.0
        %3323 = vmatpush1.msra.mxu0 0.0
        %3324 = vmatprep.subr.mxu0 0.0
        %3325 = vmatpush1.msra.mxu0 0.0
        %3326 = vmatprep.subr.mxu0 0.0
        %3327 = vmatpush1.msra.mxu0 0.0
        %3328 = vmatprep.subr.mxu0 0.0
        %3329 = vmatpush1.msra.mxu0 0.0
        %3330 = vmatprep.subr.mxu0 0.0
        %3331 = vmatpush1.msra.mxu0 0.0
        %3332 = vmatprep.subr.mxu0 0.0
        %3333 = vmatpush1.msra.mxu0 0.0
        %3334 = vmatprep.subr.mxu0 0.0
        %3335 = vmatpush1.msra.mxu0 0.0
        %3336 = vmatprep.subr.mxu0 0.0
        %3337 = vmatpush1.msra.mxu0 0.0
        %3338 = vmatprep.subr.mxu0 0.0
        %3339 = vmatpush1.msra.mxu0 0.0
        %3340 = vmatprep.subr.mxu0 0.0
        %3341 = vmatpush1.msra.mxu0 0.0
        %3342 = vmatprep.subr.mxu0 0.0
        %3343 = vmatpush1.msra.mxu0 0.0
        %3344 = vmatprep.subr.mxu0 0.0
        %3345 = vmatpush1.msra.mxu0 0.0
        %3346 = vmatprep.subr.mxu0 0.0
        %3347 = vmatpush1.msra.mxu0 0.0
        %3348 = vmatprep.subr.mxu0 0.0
        %3349 = vmatpush1.msra.mxu0 0.0
        %3350 = vmatprep.subr.mxu0 0.0
        %3351 = vmatpush1.msra.mxu0 0.0
        %3352 = vmatprep.subr.mxu0 0.0
        %3353 = vmatpush1.msra.mxu0 0.0
        %3354 = vmatprep.subr.mxu0 0.0
        %3355 = vmatpush1.msra.mxu0 0.0
        %3356 = vmatprep.subr.mxu0 0.0
        %3357 = vmatpush1.msra.mxu0 0.0
        %3358 = vmatprep.subr.mxu0 0.0
        %3359 = vmatpush1.msra.mxu0 0.0
        %3360 = vmatprep.subr.mxu0 0.0
        %3361 = vmatpush1.msra.mxu0 0.0
        %3362 = vmatprep.subr.mxu0 0.0
        %3363 = vmatpush1.msra.mxu0 0.0
        %3364 = vmatprep.subr.mxu0 0.0
        %3365 = vmatpush1.msra.mxu0 0.0
        %3366 = vmatprep.mubr.f32.mxu0 0.0
        %3367 = vmatmul.mubr.f32.gmra.mrb[0].mxu0 %v3300
        %v3368 = vpop.f32.mrb[0].mxu0
        %v3369 = vadd.f32 %v3297, %v3368
        %v3370 = vpop.f32.mrb[0].mxu0
        %3371 = vdwg.mxu0
        %v3372 = vmax.f32 %v3369, 0.0
        %v3373 = vld [vmem:[#allocation24] sm:$0xff]
        %v3374 = vld [vmem:[#allocation24 + $0x8] sm:$0xff]
        %v3375 = vld [vmem:[#allocation24 + $0x10] sm:$0xff]
        %v3376 = vld [vmem:[#allocation24 + $0x18] sm:$0xff]
        %v3377 = vld [vmem:[#allocation24 + $0x20] sm:$0xff]
        %v3378 = vld [vmem:[#allocation24 + $0x28] sm:$0xff]
        %v3379 = vld [vmem:[#allocation24 + $0x30] sm:$0xff]
        %v3380 = vld [vmem:[#allocation24 + $0x38] sm:$0xff]
        %vm3381 = vcmask 523264
        %v3383 = vsel %vm3381, %v3372, 0
        %3385 = vmatprep.subr.mxu0 0.0
        %3386 = vmatpush1.msra.mxu0 %v3373
        %3387 = vmatprep.subr.mxu0 0.0
        %3388 = vmatpush1.msra.mxu0 %v3374
        %3389 = vmatprep.subr.mxu0 0.0
        %3390 = vmatpush1.msra.mxu0 %v3375
        %3391 = vmatprep.subr.mxu0 0.0
        %3392 = vmatpush1.msra.mxu0 %v3376
        %3393 = vmatprep.subr.mxu0 0.0
        %3394 = vmatpush1.msra.mxu0 %v3377
        %3395 = vmatprep.subr.mxu0 0.0
        %3396 = vmatpush1.msra.mxu0 %v3378
        %3397 = vmatprep.subr.mxu0 0.0
        %3398 = vmatpush1.msra.mxu0 %v3379
        %3399 = vmatprep.subr.mxu0 0.0
        %3400 = vmatpush1.msra.mxu0 %v3380
        %3401 = vmatprep.subr.mxu0 0.0
        %3402 = vmatpush1.msra.mxu0 0.0
        %3403 = vmatprep.subr.mxu0 0.0
        %3404 = vmatpush1.msra.mxu0 0.0
        %3405 = vmatprep.subr.mxu0 0.0
        %3406 = vmatpush1.msra.mxu0 0.0
        %3407 = vmatprep.subr.mxu0 0.0
        %3408 = vmatpush1.msra.mxu0 0.0
        %3409 = vmatprep.subr.mxu0 0.0
        %3410 = vmatpush1.msra.mxu0 0.0
        %3411 = vmatprep.subr.mxu0 0.0
        %3412 = vmatpush1.msra.mxu0 0.0
        %3413 = vmatprep.subr.mxu0 0.0
        %3414 = vmatpush1.msra.mxu0 0.0
        %3415 = vmatprep.subr.mxu0 0.0
        %3416 = vmatpush1.msra.mxu0 0.0
        %3417 = vmatprep.subr.mxu0 0.0
        %3418 = vmatpush1.msra.mxu0 0.0
        %3419 = vmatprep.subr.mxu0 0.0
        %3420 = vmatpush1.msra.mxu0 0.0
        %3421 = vmatprep.subr.mxu0 0.0
        %3422 = vmatpush1.msra.mxu0 0.0
        %3423 = vmatprep.subr.mxu0 0.0
        %3424 = vmatpush1.msra.mxu0 0.0
        %3425 = vmatprep.subr.mxu0 0.0
        %3426 = vmatpush1.msra.mxu0 0.0
        %3427 = vmatprep.subr.mxu0 0.0
        %3428 = vmatpush1.msra.mxu0 0.0
        %3429 = vmatprep.subr.mxu0 0.0
        %3430 = vmatpush1.msra.mxu0 0.0
        %3431 = vmatprep.subr.mxu0 0.0
        %3432 = vmatpush1.msra.mxu0 0.0
        %3433 = vmatprep.subr.mxu0 0.0
        %3434 = vmatpush1.msra.mxu0 0.0
        %3435 = vmatprep.subr.mxu0 0.0
        %3436 = vmatpush1.msra.mxu0 0.0
        %3437 = vmatprep.subr.mxu0 0.0
        %3438 = vmatpush1.msra.mxu0 0.0
        %3439 = vmatprep.subr.mxu0 0.0
        %3440 = vmatpush1.msra.mxu0 0.0
        %3441 = vmatprep.subr.mxu0 0.0
        %3442 = vmatpush1.msra.mxu0 0.0
        %3443 = vmatprep.subr.mxu0 0.0
        %3444 = vmatpush1.msra.mxu0 0.0
        %3445 = vmatprep.subr.mxu0 0.0
        %3446 = vmatpush1.msra.mxu0 0.0
        %3447 = vmatprep.subr.mxu0 0.0
        %3448 = vmatpush1.msra.mxu0 0.0
        %3449 = vmatprep.mubr.f32.mxu0 0.0
        %3450 = vmatmul.mubr.f32.gmra.mrb[0].mxu0 %v3383
        %v3451 = vpop.f32.mrb[0].mxu0
        %v3452 = vadd.f32 0.0, %v3451
        %v3453 = vpop.f32.mrb[0].mxu0
        %3454 = vdwg.mxu0
        %v3455 = vadd.f32 %v3256, %v3452
        %v3457 = vlaneseq
        %v3458 = vshrl.u32 %v3457, 7
        %v3459 = vsub.s32 0, %v3458
        %v3460 = vrot.slane %v1127, %v3459
        %v3462 = vadd.f32 %v3455, %v3460
        %3463 = vst.msk [vmem:[%s743] sm:$0xff] %vm1139, %v3462
        %s3464 = sand.u32 %s382, 1
        %s3465 = scalar_lea.sflag [#allocation9], %s3464
        %s3466 = sand.u32 %s382, 1
        %s3467 = smul.addr %s3466, 8
        %s3468 = scalar_lea.vmem [#allocation30], %s3467
        // Predicated region
        $region137: #{tpu_custom_call.1} parent=75 // pred_check
          %p3469 = pneg %p392
        $region138: #{tpu_custom_call.1} parent=75 // pred_check_branch
          %3471 = sbr.rel (%p3469) target = $region140
        $region139: #{tpu_custom_call.1} parent=75 // pred_region
          %s3473 = ssub.s32 128, 128
          %3474 = vsyncadd %s3465, %s3473
          %s3475 = sadd.s32 %s47, %s46
          %s3476 = smul.addr %s3475, 128
          %s3477 = scalar_lea.hbm %s14, %s3476
          %s3479 = sshll.u32 %s3468, 4
          %s3480 = int_to_ptr.vmem [resolvable:$true] %s3479
          %3482 = dma.vmem_to_hbm [thread:$0]  %s3480, 128, %s3477, %s3465
        $region140: #{tpu_custom_call.1} parent=75 // pred_fallthru
          _
      $region76: #{tpu_custom_call.1} parent=5 // pred_fallthru
        _
      %p3483 = scmp.le.s32.totalorder 2, %s37
      // Predicated region
      $region141: #{tpu_custom_call.1} parent=5 // pred_check
        %p3484 = pneg %p3483
      $region142: #{tpu_custom_call.1} parent=5 // pred_check_branch
        %3486 = sbr.rel (%p3484) target = $region144
      $region143: #{tpu_custom_call.1} parent=5 // pred_region
        %s3487 = ssub.s32 %s37, 2
        // Predicated region
        $region145: #{tpu_custom_call.1} parent=143 // pred_check
          %p3488 = pneg %p398
        $region146: #{tpu_custom_call.1} parent=143 // pred_check_branch
          %3490 = sbr.rel (%p3488) target = $region148
        $region147: #{tpu_custom_call.1} parent=143 // pred_region
          %s3491 = sand.u32 %s383, 1
          %s3492 = scalar_lea.sflag [#allocation9], %s3491
          %s3493 = sand.u32 %s383, 1
          %s3494 = smul.addr %s3493, 8
          %s3495 = scalar_lea.vmem [#allocation30], %s3494
          %3496 = dma.done %s3492, 128
        $region148: #{tpu_custom_call.1} parent=143 // pred_fallthru
          _
      $region144: #{tpu_custom_call.1} parent=5 // pred_fallthru
        _
    $region6: #{tpu_custom_call.1} parent=1 // loop_footer
      %s41 = sadd.s32 1, %s37
    $region7: #{tpu_custom_call.1} parent=1 // loop_footer_branch
      %36 = sbr.rel target = $region3
    $region8: #{tpu_custom_call.1} parent=1 // loop_exit
      _
    %3497 = vsyncpa [#allocation8], 1
    %s3498 = scalar_lea.sflag [#allocation8], 1
    %3499 = vsyncpa %s3498, 1
    %3500 = vsyncpa [#allocation11], 1
    %s3501 = scalar_lea.sflag [#allocation11], 1
    %3502 = vsyncpa %s3501, 1
    %3503 = vsyncpa [#allocation14], 1
    %s3504 = scalar_lea.sflag [#allocation14], 1
    %3505 = vsyncpa %s3504, 1
    %3506 = vsyncpa [#allocation17], 1
    %3507 = vsyncpa [#allocation20], 1
    %3508 = vsyncpa [#allocation23], 1
    %3509 = vsyncpa [#allocation26], 1
    %3510 = vsyncpa [#allocation29], 1
    %3511 = vsyncpa [#allocation9], 1
    %s3512 = scalar_lea.sflag [#allocation9], 1
    %3513 = vsyncpa %s3512, 1

</llo_original>
